<compile_context>
chip_gen: v6e
topology: v6e:2x2x1
jax: 0.10.0
libtpu: 0.0.40
codegen_flags: <defaults>
</compile_context>

<pallas_src>
import numpy as np
import jax
import jax.numpy as jnp
from jax import lax
from jax.experimental import pallas as pl
from jax.experimental.pallas import tpu as pltpu

C1, C2 = 32, 64  # channel widths fixed by the module definition


# ----------------------------------------------------------------------------
# In-kernel helpers
# ----------------------------------------------------------------------------
def _zero_halo(buf):
    """Zero only the 1-wide padding halo of a (Hp, Wp, C) VMEM buffer."""
    hp, wp, c = buf.shape
    buf[0:1, :, :] = jnp.zeros((1, wp, c), buf.dtype)
    buf[hp - 1:hp, :, :] = jnp.zeros((1, wp, c), buf.dtype)
    buf[:, 0:1, :] = jnp.zeros((hp, 1, c), buf.dtype)
    buf[:, wp - 1:wp, :] = jnp.zeros((hp, 1, c), buf.dtype)


def _im2col3x3(pad_refs, out_h, out_w):
    """Build one (out_h*out_w, 9*sum(cin)) bf16 im2col patch.

    `pad_refs` is a list of padded VMEM refs whose channels are concatenated
    per tap (this folds the decoder's torch.cat skip into the K dimension).
    Column order matches conv_mat(): (ky, kx, ci) with ci = [ref0 | ref1 ...].
    """
    parts = []
    for ky in range(3):
        for kx in range(3):
            for r in pad_refs:
                parts.append(r[ky:ky + out_h, kx:kx + out_w, :])
    k = 9 * sum(r.shape[-1] for r in pad_refs)
    patch = jnp.concatenate(parts, axis=-1).reshape(out_h * out_w, k)
    return patch.astype(jnp.bfloat16)


# ----------------------------------------------------------------------------
# Fused UNetSimple forward kernel (one grid step per batch element).
# ----------------------------------------------------------------------------
def _unet_fused_kernel(x_ref, w_ref, b_ref, bf_ref, o_ref,
                       xpad, e1pad, p1pad, uppad):
    _, H, W, Cin = x_ref.shape
    Hh, Wh = H // 2, W // 2
    Cout = bf_ref.shape[0]
    K1, K2, KD = 9 * Cin, 9 * C1, 9 * (2 * C1)

    # lane offsets into the packed bias vector: [b1 | b2 | bu(x4) | bd]
    o1, o2, ou, od = 0, C1, C1 + C2, C1 + C2 + 4 * C1

    # -- encoder conv1 (3x3, pad=1) + ReLU: single im2col dot, K = 9*Cin -----
    _zero_halo(xpad)
    xpad[1:H + 1, 1:W + 1, :] = x_ref[0]
    p = _im2col3x3([xpad], H, W)
    enc1 = jnp.maximum(
        jnp.dot(p, w_ref[0, 0:K1, 0:C1], preferred_element_type=jnp.float32)
        + b_ref[:, o1:o1 + C1], 0.0)                          # (H*W, 32) f32

    _zero_halo(e1pad)
    e1pad[1:H + 1, 1:W + 1, :] = enc1.reshape(H, W, C1)

    # -- 2x2 max-pool, stride 2: four strided window views of the skip ------
    t00 = e1pad[pl.ds(1, Hh, 2), pl.ds(1, Wh, 2), :]
    t01 = e1pad[pl.ds(1, Hh, 2), pl.ds(2, Wh, 2), :]
    t10 = e1pad[pl.ds(2, Hh, 2), pl.ds(1, Wh, 2), :]
    t11 = e1pad[pl.ds(2, Hh, 2), pl.ds(2, Wh, 2), :]
    _zero_halo(p1pad)
    p1pad[1:Hh + 1, 1:Wh + 1, :] = jnp.maximum(jnp.maximum(t00, t01),
                                               jnp.maximum(t10, t11))

    # -- encoder conv2 (3x3, pad=1) + ReLU: single dot, K = 288 --------------
    p = _im2col3x3([p1pad], Hh, Wh)
    enc2 = jnp.maximum(
        jnp.dot(p, w_ref[1, 0:K2, 0:C2], preferred_element_type=jnp.float32)
        + b_ref[:, o2:o2 + C2], 0.0)                          # (Hh*Wh, 64) f32

    # -- ConvTranspose2d(k=2, s=2): one packed matmul (lane = 4*32 = 128),
    #    then 4 parity taps scattered into the padded upconv buffer ----------
    up = (jnp.dot(enc2.astype(jnp.bfloat16), w_ref[2, 0:C2, 0:4 * C1],
                  preferred_element_type=jnp.float32)
          + b_ref[:, ou:ou + 4 * C1])                         # (Hh*Wh, 128)
    _zero_halo(uppad)
    for t in range(4):
        dy, dx = t // 2, t % 2
        uppad[pl.ds(1 + dy, Hh, 2), pl.ds(1 + dx, Wh, 2), :] = (
            up[:, t * C1:(t + 1) * C1].reshape(Hh, Wh, C1))

    # -- decoder conv (3x3, pad=1) + ReLU: skip cat folded into K = 576 ------
    p = _im2col3x3([uppad, e1pad], H, W)
    dec2 = jnp.maximum(
        jnp.dot(p, w_ref[3, 0:KD, 0:C1], preferred_element_type=jnp.float32)
        + b_ref[:, od:od + C1], 0.0)                          # (H*W, 32) f32

    # -- final 1x1 conv + sigmoid, lane-dense (Cout, H*W) output -------------
    logits = lax.dot_general(
        w_ref[4, 0:Cout, 0:C1], dec2.astype(jnp.bfloat16),
        (((1,), (1,)), ((), ())), preferred_element_type=jnp.float32)
    o_ref[0] = jax.nn.sigmoid(logits + bf_ref[...])


# ----------------------------------------------------------------------------
# Public wrapper: accepts / returns NCHW like the PyTorch module.
# ----------------------------------------------------------------------------
def unet_simple_forward(params, x_nchw):
    x_nchw = x_nchw.astype(jnp.float32)
    B, Cin, H, W = x_nchw.shape
    Cout = params["fin_w"].shape[0]
    Hh, Wh = H // 2, W // 2
    HW = H * W

    # ---- weight re-packing (tiny, one-off XLA ops) --------------------------
    def conv_mat(w):  # torch OIHW (co,ci,3,3) -> (9*ci, co), row=(ky*3+kx)*ci+ci
        co, ci = w.shape[0], w.shape[1]
        return jnp.transpose(w, (2, 3, 1, 0)).reshape(9 * ci, co)

    w1 = conv_mat(params["enc1_w"])                               # (9*Cin, 32)
    w2 = conv_mat(params["enc2_w"])                               # (288, 64)
    # ConvTranspose2d IOHW (64,32,2,2) -> (64, 128), lane = (dy*2+dx)*32 + co
    wu = jnp.transpose(params["up1_w"], (0, 2, 3, 1)).reshape(C2, 4 * C1)
    wd = conv_mat(params["dec1_w"])                               # (576, 32)
    wf = params["fin_w"].reshape(Cout, C1)                        # (Cout, 32)

    # one bf16 weight stack (5, 576, 128): fewer DMA descriptors, bf16 MXU ops
    KMAX, NMAX = 9 * 2 * C1, 4 * C1
    def padw(w):
        return jnp.pad(w, ((0, KMAX - w.shape[0]), (0, NMAX - w.shape[1])))
    wstack = jnp.stack([padw(w1), padw(w2), padw(wu), padw(wd),
                        padw(wf)]).astype(jnp.bfloat16)

    # packed f32 biases: [b1(32) | b2(64) | up1_b tiled x4 (128) | bd(32)]
    b_all = jnp.concatenate([params["enc1_b"], params["enc2_b"],
                             jnp.tile(params["up1_b"], 4),
                             params["dec1_b"]]).reshape(1, -1)    # (1, 256)
    bf = params["fin_b"].reshape(Cout, 1)                         # (Cout, 1)

    x_nhwc = jnp.transpose(x_nchw, (0, 2, 3, 1))  # tiny one-off input transpose

    out_flat = pl.pallas_call(
        _unet_fused_kernel,
        out_shape=jax.ShapeDtypeStruct((B, Cout, HW), jnp.float32),
        grid=(B,),
        in_specs=[
            pl.BlockSpec((1, H, W, Cin), lambda i: (i, 0, 0, 0)),
            pl.BlockSpec(wstack.shape, lambda i: (0, 0, 0)),
            pl.BlockSpec(b_all.shape, lambda i: (0, 0)),
            pl.BlockSpec(bf.shape, lambda i: (0, 0)),
        ],
        out_specs=pl.BlockSpec((1, Cout, HW), lambda i: (i, 0, 0)),
        scratch_shapes=[
            pltpu.VMEM((H + 2, W + 2, Cin), jnp.float32),   # padded input
            pltpu.VMEM((H + 2, W + 2, C1), jnp.float32),    # padded enc1 (skip)
            pltpu.VMEM((Hh + 2, Wh + 2, C1), jnp.float32),  # padded pooled
            pltpu.VMEM((H + 2, W + 2, C1), jnp.float32),    # padded upconv out
        ],
        compiler_params=pltpu.CompilerParams(dimension_semantics=("parallel",)),
    )(x_nhwc, wstack, b_all, bf)

    # (B, Cout, H*W) -> (B, Cout, H, W): pure reshape, already NCHW.
    return out_flat.reshape(B, Cout, H, W)


# ----------------------------------------------------------------------------
# Deterministic parameter init (PyTorch-default-style uniform, synthetic).
# ----------------------------------------------------------------------------
def init_params(key, in_channels, out_channels):
    ks = jax.random.split(key, 10)

    def uni(k, shape, fan_in):
        bound = 1.0 / float(np.sqrt(fan_in))
        return jax.random.uniform(k, shape, jnp.float32, -bound, bound)

    return {
        "enc1_w": uni(ks[0], (32, in_channels, 3, 3), in_channels * 9),
        "enc1_b": uni(ks[1], (32,), in_channels * 9),
        "enc2_w": uni(ks[2], (64, 32, 3, 3), 32 * 9),
        "enc2_b": uni(ks[3], (64,), 32 * 9),
        "up1_w":  uni(ks[4], (64, 32, 2, 2), 32 * 4),   # ConvTranspose2d IOHW
        "up1_b":  uni(ks[5], (32,), 32 * 4),
        "dec1_w": uni(ks[6], (32, 64, 3, 3), 64 * 9),
        "dec1_b": uni(ks[7], (32,), 64 * 9),
        "fin_w":  uni(ks[8], (out_channels, 32, 1, 1), 32),
        "fin_b":  uni(ks[9], (out_channels,), 32),
    }


# ----------------------------------------------------------------------------
# Pure-JAX reference (XLA conv ops, f32) for correctness checking.
# ----------------------------------------------------------------------------
def ref_forward(params, x_nchw):
    def conv(x, w, b, pad):
        dn = jax.lax.conv_dimension_numbers(x.shape, w.shape,
                                            ("NCHW", "OIHW", "NCHW"))
        y = jax.lax.conv_general_dilated(x, w, (1, 1), [(pad, pad), (pad, pad)],
                                         dimension_numbers=dn)
        return y + b[None, :, None, None]

    enc1 = jax.nn.relu(conv(x_nchw, params["enc1_w"], params["enc1_b"], 1))
    p1 = jax.lax.reduce_window(enc1, -jnp.inf, jax.lax.max,
                               (1, 1, 2, 2), (1, 1, 2, 2), "VALID")
    enc2 = jax.nn.relu(conv(p1, params["enc2_w"], params["enc2_b"], 1))
    w = params["up1_w"]                                  # (Cin, Cout, 2, 2)
    B, _, Hh, Wh = enc2.shape
    Cout = w.shape[1]
    dec1 = jnp.einsum("bchw,cofg->bohfwg", enc2, w).reshape(B, Cout, 2 * Hh, 2 * Wh)
    dec1 = dec1 + params["up1_b"][None, :, None, None]
    cat = jnp.concatenate([dec1, enc1], axis=1)
    dec2 = jax.nn.relu(conv(cat, params["dec1_w"], params["dec1_b"], 1))
    wf = params["fin_w"].reshape(params["fin_w"].shape[0], -1)
    out = jnp.einsum("bchw,oc->bohw", dec2, wf) + params["fin_b"][None, :, None, None]
    return jax.nn.sigmoid(out)


if __name__ == "__main__":
    in_channels, out_channels = 4, 4
    B, H, W = 2, 16, 16

    key = jax.random.PRNGKey(0)
    kx, kp = jax.random.split(key)
    params = init_params(kp, in_channels, out_channels)
    x = jax.random.normal(kx, (B, in_channels, H, W), jnp.float32)

    out = jax.jit(unet_simple_forward)(params, x)
    out = jax.block_until_ready(out)

    ref = ref_forward(params, x)
    assert out.shape == (B, out_channels, H, W)
    # bf16 MXU operands with f32 accumulation -> slightly looser tolerance
    np.testing.assert_allclose(np.asarray(out), np.asarray(ref),
                               rtol=1e-2, atol=2e-3)
    print("KERNEL_OK")
</pallas_src>

<mosaic_0001>
module attributes {stable_mosaic.version = 11 : i64} {
  func.func @_unet_fused_kernel(%arg0: i32, %arg1: memref<1x16x16x4xf32, #tpu.memory_space<vmem>>, %arg2: memref<5x576x128xbf16, #tpu.memory_space<vmem>>, %arg3: memref<1x256xf32, #tpu.memory_space<vmem>>, %arg4: memref<4x1xf32, #tpu.memory_space<vmem>>, %arg5: memref<1x4x256xf32, #tpu.memory_space<vmem>>, %arg6: memref<18x18x4xf32, #tpu.memory_space<vmem>>, %arg7: memref<18x18x32xf32, #tpu.memory_space<vmem>>, %arg8: memref<10x10x32xf32, #tpu.memory_space<vmem>>, %arg9: memref<18x18x32xf32, #tpu.memory_space<vmem>>) attributes {dimension_semantics = [#tpu.dimension_semantics<parallel>], iteration_bounds = array<i64: 2>, scalar_prefetch = 0 : i64, scratch_operands = 4 : i64, tpu.core_type = #tpu.core_type<tc>, window_params = [{transform_indices = @transform_0, window_bounds = array<i64: 1, 16, 16, 4>}, {pipeline_mode = #tpu.pipeline_mode<synchronous>, transform_indices = @transform_1, window_bounds = array<i64: 5, 576, 128>}, {pipeline_mode = #tpu.pipeline_mode<synchronous>, transform_indices = @transform_2, window_bounds = array<i64: 1, 256>}, {pipeline_mode = #tpu.pipeline_mode<synchronous>, transform_indices = @transform_3, window_bounds = array<i64: 4, 1>}, {transform_indices = @transform_4, window_bounds = array<i64: 1, 4, 256>}]} {
    %cst = arith.constant 0.000000e+00 : f32
    %0 = vector.broadcast %cst : f32 to vector<1x18x4xf32>
    %c0 = arith.constant 0 : index
    %c0_0 = arith.constant 0 : index
    %c0_1 = arith.constant 0 : index
    %1 = vector.load %arg6[%c0, %c0_0, %c0_1] : memref<18x18x4xf32, #tpu.memory_space<vmem>>, vector<1x18x4xf32>
    tpu.vector_store %arg6[%c0, %c0_0, %c0_1], %0 {strides = array<i32>} : memref<18x18x4xf32, #tpu.memory_space<vmem>>, vector<1x18x4xf32>,
    %cst_2 = arith.constant 0.000000e+00 : f32
    %2 = vector.broadcast %cst_2 : f32 to vector<1x18x4xf32>
    %c17 = arith.constant 17 : index
    %c0_3 = arith.constant 0 : index
    %c0_4 = arith.constant 0 : index
    %3 = vector.load %arg6[%c17, %c0_3, %c0_4] : memref<18x18x4xf32, #tpu.memory_space<vmem>>, vector<1x18x4xf32>
    tpu.vector_store %arg6[%c17, %c0_3, %c0_4], %2 {strides = array<i32>} : memref<18x18x4xf32, #tpu.memory_space<vmem>>, vector<1x18x4xf32>,
    %cst_5 = arith.constant 0.000000e+00 : f32
    %4 = vector.broadcast %cst_5 : f32 to vector<18x1x4xf32>
    %c0_6 = arith.constant 0 : index
    %c0_7 = arith.constant 0 : index
    %c0_8 = arith.constant 0 : index
    %5 = vector.load %arg6[%c0_6, %c0_7, %c0_8] : memref<18x18x4xf32, #tpu.memory_space<vmem>>, vector<18x1x4xf32>
    tpu.vector_store %arg6[%c0_6, %c0_7, %c0_8], %4 {strides = array<i32>} : memref<18x18x4xf32, #tpu.memory_space<vmem>>, vector<18x1x4xf32>,
    %cst_9 = arith.constant 0.000000e+00 : f32
    %6 = vector.broadcast %cst_9 : f32 to vector<18x1x4xf32>
    %c0_10 = arith.constant 0 : index
    %c17_11 = arith.constant 17 : index
    %c0_12 = arith.constant 0 : index
    %7 = vector.load %arg6[%c0_10, %c17_11, %c0_12] : memref<18x18x4xf32, #tpu.memory_space<vmem>>, vector<18x1x4xf32>
    tpu.vector_store %arg6[%c0_10, %c17_11, %c0_12], %6 {strides = array<i32>} : memref<18x18x4xf32, #tpu.memory_space<vmem>>, vector<18x1x4xf32>,
    %c0_13 = arith.constant 0 : index
    %c0_14 = arith.constant 0 : index
    %c0_15 = arith.constant 0 : index
    %c0_16 = arith.constant 0 : index
    %8 = vector.load %arg1[%c0_13, %c0_14, %c0_15, %c0_16] : memref<1x16x16x4xf32, #tpu.memory_space<vmem>>, vector<1x16x16x4xf32>
    %9 = vector.shape_cast %8 : vector<1x16x16x4xf32> to vector<16x16x4xf32>
    %c1 = arith.constant 1 : index
    %c1_17 = arith.constant 1 : index
    %c0_18 = arith.constant 0 : index
    %10 = vector.load %arg6[%c1, %c1_17, %c0_18] : memref<18x18x4xf32, #tpu.memory_space<vmem>>, vector<16x16x4xf32>
    tpu.vector_store %arg6[%c1, %c1_17, %c0_18], %9 {strides = array<i32>} : memref<18x18x4xf32, #tpu.memory_space<vmem>>, vector<16x16x4xf32>,
    %c0_19 = arith.constant 0 : index
    %c0_20 = arith.constant 0 : index
    %c0_21 = arith.constant 0 : index
    %11 = vector.load %arg6[%c0_19, %c0_20, %c0_21] : memref<18x18x4xf32, #tpu.memory_space<vmem>>, vector<16x16x4xf32>
    %c0_22 = arith.constant 0 : index
    %c1_23 = arith.constant 1 : index
    %c0_24 = arith.constant 0 : index
    %12 = vector.load %arg6[%c0_22, %c1_23, %c0_24] : memref<18x18x4xf32, #tpu.memory_space<vmem>>, vector<16x16x4xf32>
    %c0_25 = arith.constant 0 : index
    %c2 = arith.constant 2 : index
    %c0_26 = arith.constant 0 : index
    %13 = vector.load %arg6[%c0_25, %c2, %c0_26] : memref<18x18x4xf32, #tpu.memory_space<vmem>>, vector<16x16x4xf32>
    %c1_27 = arith.constant 1 : index
    %c0_28 = arith.constant 0 : index
    %c0_29 = arith.constant 0 : index
    %14 = vector.load %arg6[%c1_27, %c0_28, %c0_29] : memref<18x18x4xf32, #tpu.memory_space<vmem>>, vector<16x16x4xf32>
    %c1_30 = arith.constant 1 : index
    %c1_31 = arith.constant 1 : index
    %c0_32 = arith.constant 0 : index
    %15 = vector.load %arg6[%c1_30, %c1_31, %c0_32] : memref<18x18x4xf32, #tpu.memory_space<vmem>>, vector<16x16x4xf32>
    %c1_33 = arith.constant 1 : index
    %c2_34 = arith.constant 2 : index
    %c0_35 = arith.constant 0 : index
    %16 = vector.load %arg6[%c1_33, %c2_34, %c0_35] : memref<18x18x4xf32, #tpu.memory_space<vmem>>, vector<16x16x4xf32>
    %c2_36 = arith.constant 2 : index
    %c0_37 = arith.constant 0 : index
    %c0_38 = arith.constant 0 : index
    %17 = vector.load %arg6[%c2_36, %c0_37, %c0_38] : memref<18x18x4xf32, #tpu.memory_space<vmem>>, vector<16x16x4xf32>
    %c2_39 = arith.constant 2 : index
    %c1_40 = arith.constant 1 : index
    %c0_41 = arith.constant 0 : index
    %18 = vector.load %arg6[%c2_39, %c1_40, %c0_41] : memref<18x18x4xf32, #tpu.memory_space<vmem>>, vector<16x16x4xf32>
    %c2_42 = arith.constant 2 : index
    %c2_43 = arith.constant 2 : index
    %c0_44 = arith.constant 0 : index
    %19 = vector.load %arg6[%c2_42, %c2_43, %c0_44] : memref<18x18x4xf32, #tpu.memory_space<vmem>>, vector<16x16x4xf32>
    %20 = tpu.concatenate %11, %12, %13, %14, %15, %16, %17, %18, %19 in 2 : vector<16x16x4xf32>, vector<16x16x4xf32>, vector<16x16x4xf32>, vector<16x16x4xf32>, vector<16x16x4xf32>, vector<16x16x4xf32>, vector<16x16x4xf32>, vector<16x16x4xf32>, vector<16x16x4xf32> -> vector<16x16x36xf32>
    %21 = vector.shape_cast %20 : vector<16x16x36xf32> to vector<256x36xf32>
    %22 = arith.truncf %21 : vector<256x36xf32> to vector<256x36xbf16>
    %c0_45 = arith.constant 0 : index
    %c0_46 = arith.constant 0 : index
    %c0_47 = arith.constant 0 : index
    %23 = vector.load %arg2[%c0_45, %c0_46, %c0_47] : memref<5x576x128xbf16, #tpu.memory_space<vmem>>, vector<1x36x32xbf16>
    %24 = vector.shape_cast %23 : vector<1x36x32xbf16> to vector<36x32xbf16>
    %cst_48 = arith.constant dense<0.000000e+00> : vector<256x32xf32>
    %25 = tpu.matmul %22, %24, %cst_48 {dimension_numbers = #tpu.dot_dimension_numbers<[1], [0], [0], [1], [0, 0, 1, 1], [], []>} : vector<256x36xbf16>, vector<36x32xbf16>, vector<256x32xf32> -> vector<256x32xf32>
    %c0_49 = arith.constant 0 : index
    %c0_50 = arith.constant 0 : index
    %26 = vector.load %arg3[%c0_49, %c0_50] : memref<1x256xf32, #tpu.memory_space<vmem>>, vector<1x32xf32>
    %27 = vector.broadcast %26 : vector<1x32xf32> to vector<256x32xf32>
    %28 = arith.addf %25, %27 : vector<256x32xf32>
    %cst_51 = arith.constant 0.000000e+00 : f32
    %29 = vector.broadcast %cst_51 : f32 to vector<256x32xf32>
    %30 = arith.maximumf %28, %29 : vector<256x32xf32>
    %cst_52 = arith.constant 0.000000e+00 : f32
    %31 = vector.broadcast %cst_52 : f32 to vector<1x18x32xf32>
    %c0_53 = arith.constant 0 : index
    %c0_54 = arith.constant 0 : index
    %c0_55 = arith.constant 0 : index
    %32 = vector.load %arg7[%c0_53, %c0_54, %c0_55] : memref<18x18x32xf32, #tpu.memory_space<vmem>>, vector<1x18x32xf32>
    tpu.vector_store %arg7[%c0_53, %c0_54, %c0_55], %31 {strides = array<i32>} : memref<18x18x32xf32, #tpu.memory_space<vmem>>, vector<1x18x32xf32>,
    %cst_56 = arith.constant 0.000000e+00 : f32
    %33 = vector.broadcast %cst_56 : f32 to vector<1x18x32xf32>
    %c17_57 = arith.constant 17 : index
    %c0_58 = arith.constant 0 : index
    %c0_59 = arith.constant 0 : index
    %34 = vector.load %arg7[%c17_57, %c0_58, %c0_59] : memref<18x18x32xf32, #tpu.memory_space<vmem>>, vector<1x18x32xf32>
    tpu.vector_store %arg7[%c17_57, %c0_58, %c0_59], %33 {strides = array<i32>} : memref<18x18x32xf32, #tpu.memory_space<vmem>>, vector<1x18x32xf32>,
    %cst_60 = arith.constant 0.000000e+00 : f32
    %35 = vector.broadcast %cst_60 : f32 to vector<18x1x32xf32>
    %c0_61 = arith.constant 0 : index
    %c0_62 = arith.constant 0 : index
    %c0_63 = arith.constant 0 : index
    %36 = vector.load %arg7[%c0_61, %c0_62, %c0_63] : memref<18x18x32xf32, #tpu.memory_space<vmem>>, vector<18x1x32xf32>
    tpu.vector_store %arg7[%c0_61, %c0_62, %c0_63], %35 {strides = array<i32>} : memref<18x18x32xf32, #tpu.memory_space<vmem>>, vector<18x1x32xf32>,
    %cst_64 = arith.constant 0.000000e+00 : f32
    %37 = vector.broadcast %cst_64 : f32 to vector<18x1x32xf32>
    %c0_65 = arith.constant 0 : index
    %c17_66 = arith.constant 17 : index
    %c0_67 = arith.constant 0 : index
    %38 = vector.load %arg7[%c0_65, %c17_66, %c0_67] : memref<18x18x32xf32, #tpu.memory_space<vmem>>, vector<18x1x32xf32>
    tpu.vector_store %arg7[%c0_65, %c17_66, %c0_67], %37 {strides = array<i32>} : memref<18x18x32xf32, #tpu.memory_space<vmem>>, vector<18x1x32xf32>,
    %39 = vector.shape_cast %30 : vector<256x32xf32> to vector<16x16x32xf32>
    %c1_68 = arith.constant 1 : index
    %c1_69 = arith.constant 1 : index
    %c0_70 = arith.constant 0 : index
    %40 = vector.load %arg7[%c1_68, %c1_69, %c0_70] : memref<18x18x32xf32, #tpu.memory_space<vmem>>, vector<16x16x32xf32>
    tpu.vector_store %arg7[%c1_68, %c1_69, %c0_70], %39 {strides = array<i32>} : memref<18x18x32xf32, #tpu.memory_space<vmem>>, vector<16x16x32xf32>,
    %c1_71 = arith.constant 1 : index
    %c1_72 = arith.constant 1 : index
    %c0_73 = arith.constant 0 : index
    %41 = tpu.strided_load %arg7[%c1_71, %c1_72, %c0_73] {strides = array<i32: 2, 2, 1>} : memref<18x18x32xf32, #tpu.memory_space<vmem>>, vector<8x8x32xf32>
    %c1_74 = arith.constant 1 : index
    %c2_75 = arith.constant 2 : index
    %c0_76 = arith.constant 0 : index
    %42 = tpu.strided_load %arg7[%c1_74, %c2_75, %c0_76] {strides = array<i32: 2, 2, 1>} : memref<18x18x32xf32, #tpu.memory_space<vmem>>, vector<8x8x32xf32>
    %c2_77 = arith.constant 2 : index
    %c1_78 = arith.constant 1 : index
    %c0_79 = arith.constant 0 : index
    %43 = tpu.strided_load %arg7[%c2_77, %c1_78, %c0_79] {strides = array<i32: 2, 2, 1>} : memref<18x18x32xf32, #tpu.memory_space<vmem>>, vector<8x8x32xf32>
    %c2_80 = arith.constant 2 : index
    %c2_81 = arith.constant 2 : index
    %c0_82 = arith.constant 0 : index
    %44 = tpu.strided_load %arg7[%c2_80, %c2_81, %c0_82] {strides = array<i32: 2, 2, 1>} : memref<18x18x32xf32, #tpu.memory_space<vmem>>, vector<8x8x32xf32>
    %cst_83 = arith.constant 0.000000e+00 : f32
    %45 = vector.broadcast %cst_83 : f32 to vector<1x10x32xf32>
    %c0_84 = arith.constant 0 : index
    %c0_85 = arith.constant 0 : index
    %c0_86 = arith.constant 0 : index
    %46 = vector.load %arg8[%c0_84, %c0_85, %c0_86] : memref<10x10x32xf32, #tpu.memory_space<vmem>>, vector<1x10x32xf32>
    tpu.vector_store %arg8[%c0_84, %c0_85, %c0_86], %45 {strides = array<i32>} : memref<10x10x32xf32, #tpu.memory_space<vmem>>, vector<1x10x32xf32>,
    %cst_87 = arith.constant 0.000000e+00 : f32
    %47 = vector.broadcast %cst_87 : f32 to vector<1x10x32xf32>
    %c9 = arith.constant 9 : index
    %c0_88 = arith.constant 0 : index
    %c0_89 = arith.constant 0 : index
    %48 = vector.load %arg8[%c9, %c0_88, %c0_89] : memref<10x10x32xf32, #tpu.memory_space<vmem>>, vector<1x10x32xf32>
    tpu.vector_store %arg8[%c9, %c0_88, %c0_89], %47 {strides = array<i32>} : memref<10x10x32xf32, #tpu.memory_space<vmem>>, vector<1x10x32xf32>,
    %cst_90 = arith.constant 0.000000e+00 : f32
    %49 = vector.broadcast %cst_90 : f32 to vector<10x1x32xf32>
    %c0_91 = arith.constant 0 : index
    %c0_92 = arith.constant 0 : index
    %c0_93 = arith.constant 0 : index
    %50 = vector.load %arg8[%c0_91, %c0_92, %c0_93] : memref<10x10x32xf32, #tpu.memory_space<vmem>>, vector<10x1x32xf32>
    tpu.vector_store %arg8[%c0_91, %c0_92, %c0_93], %49 {strides = array<i32>} : memref<10x10x32xf32, #tpu.memory_space<vmem>>, vector<10x1x32xf32>,
    %cst_94 = arith.constant 0.000000e+00 : f32
    %51 = vector.broadcast %cst_94 : f32 to vector<10x1x32xf32>
    %c0_95 = arith.constant 0 : index
    %c9_96 = arith.constant 9 : index
    %c0_97 = arith.constant 0 : index
    %52 = vector.load %arg8[%c0_95, %c9_96, %c0_97] : memref<10x10x32xf32, #tpu.memory_space<vmem>>, vector<10x1x32xf32>
    tpu.vector_store %arg8[%c0_95, %c9_96, %c0_97], %51 {strides = array<i32>} : memref<10x10x32xf32, #tpu.memory_space<vmem>>, vector<10x1x32xf32>,
    %53 = arith.maximumf %41, %42 : vector<8x8x32xf32>
    %54 = arith.maximumf %43, %44 : vector<8x8x32xf32>
    %55 = arith.maximumf %53, %54 : vector<8x8x32xf32>
    %c1_98 = arith.constant 1 : index
    %c1_99 = arith.constant 1 : index
    %c0_100 = arith.constant 0 : index
    %56 = vector.load %arg8[%c1_98, %c1_99, %c0_100] : memref<10x10x32xf32, #tpu.memory_space<vmem>>, vector<8x8x32xf32>
    tpu.vector_store %arg8[%c1_98, %c1_99, %c0_100], %55 {strides = array<i32>} : memref<10x10x32xf32, #tpu.memory_space<vmem>>, vector<8x8x32xf32>,
    %c0_101 = arith.constant 0 : index
    %c0_102 = arith.constant 0 : index
    %c0_103 = arith.constant 0 : index
    %57 = vector.load %arg8[%c0_101, %c0_102, %c0_103] : memref<10x10x32xf32, #tpu.memory_space<vmem>>, vector<8x8x32xf32>
    %c0_104 = arith.constant 0 : index
    %c1_105 = arith.constant 1 : index
    %c0_106 = arith.constant 0 : index
    %58 = vector.load %arg8[%c0_104, %c1_105, %c0_106] : memref<10x10x32xf32, #tpu.memory_space<vmem>>, vector<8x8x32xf32>
    %c0_107 = arith.constant 0 : index
    %c2_108 = arith.constant 2 : index
    %c0_109 = arith.constant 0 : index
    %59 = vector.load %arg8[%c0_107, %c2_108, %c0_109] : memref<10x10x32xf32, #tpu.memory_space<vmem>>, vector<8x8x32xf32>
    %c1_110 = arith.constant 1 : index
    %c0_111 = arith.constant 0 : index
    %c0_112 = arith.constant 0 : index
    %60 = vector.load %arg8[%c1_110, %c0_111, %c0_112] : memref<10x10x32xf32, #tpu.memory_space<vmem>>, vector<8x8x32xf32>
    %c1_113 = arith.constant 1 : index
    %c1_114 = arith.constant 1 : index
    %c0_115 = arith.constant 0 : index
    %61 = vector.load %arg8[%c1_113, %c1_114, %c0_115] : memref<10x10x32xf32, #tpu.memory_space<vmem>>, vector<8x8x32xf32>
    %c1_116 = arith.constant 1 : index
    %c2_117 = arith.constant 2 : index
    %c0_118 = arith.constant 0 : index
    %62 = vector.load %arg8[%c1_116, %c2_117, %c0_118] : memref<10x10x32xf32, #tpu.memory_space<vmem>>, vector<8x8x32xf32>
    %c2_119 = arith.constant 2 : index
    %c0_120 = arith.constant 0 : index
    %c0_121 = arith.constant 0 : index
    %63 = vector.load %arg8[%c2_119, %c0_120, %c0_121] : memref<10x10x32xf32, #tpu.memory_space<vmem>>, vector<8x8x32xf32>
    %c2_122 = arith.constant 2 : index
    %c1_123 = arith.constant 1 : index
    %c0_124 = arith.constant 0 : index
    %64 = vector.load %arg8[%c2_122, %c1_123, %c0_124] : memref<10x10x32xf32, #tpu.memory_space<vmem>>, vector<8x8x32xf32>
    %c2_125 = arith.constant 2 : index
    %c2_126 = arith.constant 2 : index
    %c0_127 = arith.constant 0 : index
    %65 = vector.load %arg8[%c2_125, %c2_126, %c0_127] : memref<10x10x32xf32, #tpu.memory_space<vmem>>, vector<8x8x32xf32>
    %66 = tpu.concatenate %57, %58, %59, %60, %61, %62, %63, %64, %65 in 2 : vector<8x8x32xf32>, vector<8x8x32xf32>, vector<8x8x32xf32>, vector<8x8x32xf32>, vector<8x8x32xf32>, vector<8x8x32xf32>, vector<8x8x32xf32>, vector<8x8x32xf32>, vector<8x8x32xf32> -> vector<8x8x288xf32>
    %67 = vector.shape_cast %66 : vector<8x8x288xf32> to vector<64x288xf32>
    %68 = arith.truncf %67 : vector<64x288xf32> to vector<64x288xbf16>
    %c1_128 = arith.constant 1 : index
    %c0_129 = arith.constant 0 : index
    %c0_130 = arith.constant 0 : index
    %69 = vector.load %arg2[%c1_128, %c0_129, %c0_130] : memref<5x576x128xbf16, #tpu.memory_space<vmem>>, vector<1x288x64xbf16>
    %70 = vector.shape_cast %69 : vector<1x288x64xbf16> to vector<288x64xbf16>
    %cst_131 = arith.constant dense<0.000000e+00> : vector<64x64xf32>
    %71 = tpu.matmul %68, %70, %cst_131 {dimension_numbers = #tpu.dot_dimension_numbers<[1], [0], [0], [1], [0, 0, 1, 1], [], []>} : vector<64x288xbf16>, vector<288x64xbf16>, vector<64x64xf32> -> vector<64x64xf32>
    %c0_132 = arith.constant 0 : index
    %c32 = arith.constant 32 : index
    %72 = vector.load %arg3[%c0_132, %c32] : memref<1x256xf32, #tpu.memory_space<vmem>>, vector<1x64xf32>
    %73 = vector.broadcast %72 : vector<1x64xf32> to vector<64x64xf32>
    %74 = arith.addf %71, %73 : vector<64x64xf32>
    %cst_133 = arith.constant 0.000000e+00 : f32
    %75 = vector.broadcast %cst_133 : f32 to vector<64x64xf32>
    %76 = arith.maximumf %74, %75 : vector<64x64xf32>
    %77 = arith.truncf %76 : vector<64x64xf32> to vector<64x64xbf16>
    %c2_134 = arith.constant 2 : index
    %c0_135 = arith.constant 0 : index
    %c0_136 = arith.constant 0 : index
    %78 = vector.load %arg2[%c2_134, %c0_135, %c0_136] : memref<5x576x128xbf16, #tpu.memory_space<vmem>>, vector<1x64x128xbf16>
    %79 = vector.shape_cast %78 : vector<1x64x128xbf16> to vector<64x128xbf16>
    %cst_137 = arith.constant dense<0.000000e+00> : vector<64x128xf32>
    %80 = tpu.matmul %77, %79, %cst_137 {dimension_numbers = #tpu.dot_dimension_numbers<[1], [0], [0], [1], [0, 0, 1, 1], [], []>} : vector<64x64xbf16>, vector<64x128xbf16>, vector<64x128xf32> -> vector<64x128xf32>
    %c0_138 = arith.constant 0 : index
    %c96 = arith.constant 96 : index
    %81 = vector.load %arg3[%c0_138, %c96] : memref<1x256xf32, #tpu.memory_space<vmem>>, vector<1x128xf32>
    %82 = vector.broadcast %81 : vector<1x128xf32> to vector<64x128xf32>
    %83 = arith.addf %80, %82 : vector<64x128xf32>
    %cst_139 = arith.constant 0.000000e+00 : f32
    %84 = vector.broadcast %cst_139 : f32 to vector<1x18x32xf32>
    %c0_140 = arith.constant 0 : index
    %c0_141 = arith.constant 0 : index
    %c0_142 = arith.constant 0 : index
    %85 = vector.load %arg9[%c0_140, %c0_141, %c0_142] : memref<18x18x32xf32, #tpu.memory_space<vmem>>, vector<1x18x32xf32>
    tpu.vector_store %arg9[%c0_140, %c0_141, %c0_142], %84 {strides = array<i32>} : memref<18x18x32xf32, #tpu.memory_space<vmem>>, vector<1x18x32xf32>,
    %cst_143 = arith.constant 0.000000e+00 : f32
    %86 = vector.broadcast %cst_143 : f32 to vector<1x18x32xf32>
    %c17_144 = arith.constant 17 : index
    %c0_145 = arith.constant 0 : index
    %c0_146 = arith.constant 0 : index
    %87 = vector.load %arg9[%c17_144, %c0_145, %c0_146] : memref<18x18x32xf32, #tpu.memory_space<vmem>>, vector<1x18x32xf32>
    tpu.vector_store %arg9[%c17_144, %c0_145, %c0_146], %86 {strides = array<i32>} : memref<18x18x32xf32, #tpu.memory_space<vmem>>, vector<1x18x32xf32>,
    %cst_147 = arith.constant 0.000000e+00 : f32
    %88 = vector.broadcast %cst_147 : f32 to vector<18x1x32xf32>
    %c0_148 = arith.constant 0 : index
    %c0_149 = arith.constant 0 : index
    %c0_150 = arith.constant 0 : index
    %89 = vector.load %arg9[%c0_148, %c0_149, %c0_150] : memref<18x18x32xf32, #tpu.memory_space<vmem>>, vector<18x1x32xf32>
    tpu.vector_store %arg9[%c0_148, %c0_149, %c0_150], %88 {strides = array<i32>} : memref<18x18x32xf32, #tpu.memory_space<vmem>>, vector<18x1x32xf32>,
    %cst_151 = arith.constant 0.000000e+00 : f32
    %90 = vector.broadcast %cst_151 : f32 to vector<18x1x32xf32>
    %c0_152 = arith.constant 0 : index
    %c17_153 = arith.constant 17 : index
    %c0_154 = arith.constant 0 : index
    %91 = vector.load %arg9[%c0_152, %c17_153, %c0_154] : memref<18x18x32xf32, #tpu.memory_space<vmem>>, vector<18x1x32xf32>
    tpu.vector_store %arg9[%c0_152, %c17_153, %c0_154], %90 {strides = array<i32>} : memref<18x18x32xf32, #tpu.memory_space<vmem>>, vector<18x1x32xf32>,
    %92 = vector.extract_strided_slice %83 {offsets = [0, 0], sizes = [64, 32], strides = [1, 1]} : vector<64x128xf32> to vector<64x32xf32>
    %93 = vector.shape_cast %92 : vector<64x32xf32> to vector<8x8x32xf32>
    %c1_155 = arith.constant 1 : index
    %c1_156 = arith.constant 1 : index
    %c0_157 = arith.constant 0 : index
    %94 = tpu.strided_load %arg9[%c1_155, %c1_156, %c0_157] {strides = array<i32: 2, 2, 1>} : memref<18x18x32xf32, #tpu.memory_space<vmem>>, vector<8x8x32xf32>
    tpu.strided_store %arg9[%c1_155, %c1_156, %c0_157], %93 {strides = array<i32: 2, 2, 1>} : memref<18x18x32xf32, #tpu.memory_space<vmem>>, vector<8x8x32xf32>
    %95 = vector.extract_strided_slice %83 {offsets = [0, 32], sizes = [64, 32], strides = [1, 1]} : vector<64x128xf32> to vector<64x32xf32>
    %96 = vector.shape_cast %95 : vector<64x32xf32> to vector<8x8x32xf32>
    %c1_158 = arith.constant 1 : index
    %c2_159 = arith.constant 2 : index
    %c0_160 = arith.constant 0 : index
    %97 = tpu.strided_load %arg9[%c1_158, %c2_159, %c0_160] {strides = array<i32: 2, 2, 1>} : memref<18x18x32xf32, #tpu.memory_space<vmem>>, vector<8x8x32xf32>
    tpu.strided_store %arg9[%c1_158, %c2_159, %c0_160], %96 {strides = array<i32: 2, 2, 1>} : memref<18x18x32xf32, #tpu.memory_space<vmem>>, vector<8x8x32xf32>
    %98 = vector.extract_strided_slice %83 {offsets = [0, 64], sizes = [64, 32], strides = [1, 1]} : vector<64x128xf32> to vector<64x32xf32>
    %99 = vector.shape_cast %98 : vector<64x32xf32> to vector<8x8x32xf32>
    %c2_161 = arith.constant 2 : index
    %c1_162 = arith.constant 1 : index
    %c0_163 = arith.constant 0 : index
    %100 = tpu.strided_load %arg9[%c2_161, %c1_162, %c0_163] {strides = array<i32: 2, 2, 1>} : memref<18x18x32xf32, #tpu.memory_space<vmem>>, vector<8x8x32xf32>
    tpu.strided_store %arg9[%c2_161, %c1_162, %c0_163], %99 {strides = array<i32: 2, 2, 1>} : memref<18x18x32xf32, #tpu.memory_space<vmem>>, vector<8x8x32xf32>
    %101 = vector.extract_strided_slice %83 {offsets = [0, 96], sizes = [64, 32], strides = [1, 1]} : vector<64x128xf32> to vector<64x32xf32>
    %102 = vector.shape_cast %101 : vector<64x32xf32> to vector<8x8x32xf32>
    %c2_164 = arith.constant 2 : index
    %c2_165 = arith.constant 2 : index
    %c0_166 = arith.constant 0 : index
    %103 = tpu.strided_load %arg9[%c2_164, %c2_165, %c0_166] {strides = array<i32: 2, 2, 1>} : memref<18x18x32xf32, #tpu.memory_space<vmem>>, vector<8x8x32xf32>
    tpu.strided_store %arg9[%c2_164, %c2_165, %c0_166], %102 {strides = array<i32: 2, 2, 1>} : memref<18x18x32xf32, #tpu.memory_space<vmem>>, vector<8x8x32xf32>
    %c0_167 = arith.constant 0 : index
    %c0_168 = arith.constant 0 : index
    %c0_169 = arith.constant 0 : index
    %104 = vector.load %arg9[%c0_167, %c0_168, %c0_169] : memref<18x18x32xf32, #tpu.memory_space<vmem>>, vector<16x16x32xf32>
    %c0_170 = arith.constant 0 : index
    %c0_171 = arith.constant 0 : index
    %c0_172 = arith.constant 0 : index
    %105 = vector.load %arg7[%c0_170, %c0_171, %c0_172] : memref<18x18x32xf32, #tpu.memory_space<vmem>>, vector<16x16x32xf32>
    %c0_173 = arith.constant 0 : index
    %c1_174 = arith.constant 1 : index
    %c0_175 = arith.constant 0 : index
    %106 = vector.load %arg9[%c0_173, %c1_174, %c0_175] : memref<18x18x32xf32, #tpu.memory_space<vmem>>, vector<16x16x32xf32>
    %c0_176 = arith.constant 0 : index
    %c1_177 = arith.constant 1 : index
    %c0_178 = arith.constant 0 : index
    %107 = vector.load %arg7[%c0_176, %c1_177, %c0_178] : memref<18x18x32xf32, #tpu.memory_space<vmem>>, vector<16x16x32xf32>
    %c0_179 = arith.constant 0 : index
    %c2_180 = arith.constant 2 : index
    %c0_181 = arith.constant 0 : index
    %108 = vector.load %arg9[%c0_179, %c2_180, %c0_181] : memref<18x18x32xf32, #tpu.memory_space<vmem>>, vector<16x16x32xf32>
    %c0_182 = arith.constant 0 : index
    %c2_183 = arith.constant 2 : index
    %c0_184 = arith.constant 0 : index
    %109 = vector.load %arg7[%c0_182, %c2_183, %c0_184] : memref<18x18x32xf32, #tpu.memory_space<vmem>>, vector<16x16x32xf32>
    %c1_185 = arith.constant 1 : index
    %c0_186 = arith.constant 0 : index
    %c0_187 = arith.constant 0 : index
    %110 = vector.load %arg9[%c1_185, %c0_186, %c0_187] : memref<18x18x32xf32, #tpu.memory_space<vmem>>, vector<16x16x32xf32>
    %c1_188 = arith.constant 1 : index
    %c0_189 = arith.constant 0 : index
    %c0_190 = arith.constant 0 : index
    %111 = vector.load %arg7[%c1_188, %c0_189, %c0_190] : memref<18x18x32xf32, #tpu.memory_space<vmem>>, vector<16x16x32xf32>
    %c1_191 = arith.constant 1 : index
    %c1_192 = arith.constant 1 : index
    %c0_193 = arith.constant 0 : index
    %112 = vector.load %arg9[%c1_191, %c1_192, %c0_193] : memref<18x18x32xf32, #tpu.memory_space<vmem>>, vector<16x16x32xf32>
    %c1_194 = arith.constant 1 : index
    %c1_195 = arith.constant 1 : index
    %c0_196 = arith.constant 0 : index
    %113 = vector.load %arg7[%c1_194, %c1_195, %c0_196] : memref<18x18x32xf32, #tpu.memory_space<vmem>>, vector<16x16x32xf32>
    %c1_197 = arith.constant 1 : index
    %c2_198 = arith.constant 2 : index
    %c0_199 = arith.constant 0 : index
    %114 = vector.load %arg9[%c1_197, %c2_198, %c0_199] : memref<18x18x32xf32, #tpu.memory_space<vmem>>, vector<16x16x32xf32>
    %c1_200 = arith.constant 1 : index
    %c2_201 = arith.constant 2 : index
    %c0_202 = arith.constant 0 : index
    %115 = vector.load %arg7[%c1_200, %c2_201, %c0_202] : memref<18x18x32xf32, #tpu.memory_space<vmem>>, vector<16x16x32xf32>
    %c2_203 = arith.constant 2 : index
    %c0_204 = arith.constant 0 : index
    %c0_205 = arith.constant 0 : index
    %116 = vector.load %arg9[%c2_203, %c0_204, %c0_205] : memref<18x18x32xf32, #tpu.memory_space<vmem>>, vector<16x16x32xf32>
    %c2_206 = arith.constant 2 : index
    %c0_207 = arith.constant 0 : index
    %c0_208 = arith.constant 0 : index
    %117 = vector.load %arg7[%c2_206, %c0_207, %c0_208] : memref<18x18x32xf32, #tpu.memory_space<vmem>>, vector<16x16x32xf32>
    %c2_209 = arith.constant 2 : index
    %c1_210 = arith.constant 1 : index
    %c0_211 = arith.constant 0 : index
    %118 = vector.load %arg9[%c2_209, %c1_210, %c0_211] : memref<18x18x32xf32, #tpu.memory_space<vmem>>, vector<16x16x32xf32>
    %c2_212 = arith.constant 2 : index
    %c1_213 = arith.constant 1 : index
    %c0_214 = arith.constant 0 : index
    %119 = vector.load %arg7[%c2_212, %c1_213, %c0_214] : memref<18x18x32xf32, #tpu.memory_space<vmem>>, vector<16x16x32xf32>
    %c2_215 = arith.constant 2 : index
    %c2_216 = arith.constant 2 : index
    %c0_217 = arith.constant 0 : index
    %120 = vector.load %arg9[%c2_215, %c2_216, %c0_217] : memref<18x18x32xf32, #tpu.memory_space<vmem>>, vector<16x16x32xf32>
    %c2_218 = arith.constant 2 : index
    %c2_219 = arith.constant 2 : index
    %c0_220 = arith.constant 0 : index
    %121 = vector.load %arg7[%c2_218, %c2_219, %c0_220] : memref<18x18x32xf32, #tpu.memory_space<vmem>>, vector<16x16x32xf32>
    %122 = tpu.concatenate %104, %105, %106, %107, %108, %109, %110, %111, %112, %113, %114, %115, %116, %117, %118, %119 in 2 : vector<16x16x32xf32>, vector<16x16x32xf32>, vector<16x16x32xf32>, vector<16x16x32xf32>, vector<16x16x32xf32>, vector<16x16x32xf32>, vector<16x16x32xf32>, vector<16x16x32xf32>, vector<16x16x32xf32>, vector<16x16x32xf32>, vector<16x16x32xf32>, vector<16x16x32xf32>, vector<16x16x32xf32>, vector<16x16x32xf32>, vector<16x16x32xf32>, vector<16x16x32xf32> -> vector<16x16x512xf32>
    %123 = tpu.concatenate %120, %121 in 2 : vector<16x16x32xf32>, vector<16x16x32xf32> -> vector<16x16x64xf32>
    %124 = tpu.concatenate %122, %123 in 2 : vector<16x16x512xf32>, vector<16x16x64xf32> -> vector<16x16x576xf32>
    %125 = vector.shape_cast %124 : vector<16x16x576xf32> to vector<256x576xf32>
    %126 = arith.truncf %125 : vector<256x576xf32> to vector<256x576xbf16>
    %c3 = arith.constant 3 : index
    %c0_221 = arith.constant 0 : index
    %c0_222 = arith.constant 0 : index
    %127 = vector.load %arg2[%c3, %c0_221, %c0_222] : memref<5x576x128xbf16, #tpu.memory_space<vmem>>, vector<1x576x32xbf16>
    %128 = vector.shape_cast %127 : vector<1x576x32xbf16> to vector<576x32xbf16>
    %cst_223 = arith.constant dense<0.000000e+00> : vector<256x32xf32>
    %129 = tpu.matmul %126, %128, %cst_223 {dimension_numbers = #tpu.dot_dimension_numbers<[1], [0], [0], [1], [0, 0, 1, 1], [], []>} : vector<256x576xbf16>, vector<576x32xbf16>, vector<256x32xf32> -> vector<256x32xf32>
    %c0_224 = arith.constant 0 : index
    %c224 = arith.constant 224 : index
    %130 = vector.load %arg3[%c0_224, %c224] : memref<1x256xf32, #tpu.memory_space<vmem>>, vector<1x32xf32>
    %131 = vector.broadcast %130 : vector<1x32xf32> to vector<256x32xf32>
    %132 = arith.addf %129, %131 : vector<256x32xf32>
    %cst_225 = arith.constant 0.000000e+00 : f32
    %133 = vector.broadcast %cst_225 : f32 to vector<256x32xf32>
    %134 = arith.maximumf %132, %133 : vector<256x32xf32>
    %c4 = arith.constant 4 : index
    %c0_226 = arith.constant 0 : index
    %c0_227 = arith.constant 0 : index
    %135 = vector.load %arg2[%c4, %c0_226, %c0_227] : memref<5x576x128xbf16, #tpu.memory_space<vmem>>, vector<1x4x32xbf16>
    %136 = vector.shape_cast %135 : vector<1x4x32xbf16> to vector<4x32xbf16>
    %137 = arith.truncf %134 : vector<256x32xf32> to vector<256x32xbf16>
    %cst_228 = arith.constant dense<0.000000e+00> : vector<4x256xf32>
    %138 = tpu.matmul %136, %137, %cst_228 {dimension_numbers = #tpu.dot_dimension_numbers<[1], [1], [0], [0], [0, 0, 1, 0], [], []>} : vector<4x32xbf16>, vector<256x32xbf16>, vector<4x256xf32> -> vector<4x256xf32>
    %c0_229 = arith.constant 0 : index
    %c0_230 = arith.constant 0 : index
    %139 = vector.load %arg4[%c0_229, %c0_230] : memref<4x1xf32, #tpu.memory_space<vmem>>, vector<4x1xf32>
    %140 = vector.broadcast %139 : vector<4x1xf32> to vector<4x256xf32>
    %141 = arith.addf %138, %140 : vector<4x256xf32>
    %142 = arith.negf %141 : vector<4x256xf32>
    %143 = math.exp %142 : vector<4x256xf32>
    %cst_231 = arith.constant 1.000000e+00 : f32
    %144 = vector.broadcast %cst_231 : f32 to vector<4x256xf32>
    %145 = arith.addf %144, %143 : vector<4x256xf32>
    %146 = arith.divf %144, %145 : vector<4x256xf32>
    %c0_232 = arith.constant 0 : index
    %c0_233 = arith.constant 0 : index
    %c0_234 = arith.constant 0 : index
    %147 = vector.load %arg5[%c0_232, %c0_233, %c0_234] : memref<1x4x256xf32, #tpu.memory_space<vmem>>, vector<1x4x256xf32>
    %148 = vector.shape_cast %147 : vector<1x4x256xf32> to vector<4x256xf32>
    %149 = vector.shape_cast %146 : vector<4x256xf32> to vector<1x4x256xf32>
    tpu.vector_store %arg5[%c0_232, %c0_233, %c0_234], %149 {strides = array<i32>} : memref<1x4x256xf32, #tpu.memory_space<vmem>>, vector<1x4x256xf32>,
    return
  }
  func.func @transform_0(%arg0: i32) -> (i32, i32, i32, i32) {
    %c0_i32 = arith.constant 0 : i32
    %c0_i32_0 = arith.constant 0 : i32
    %c0_i32_1 = arith.constant 0 : i32
    %c0_i32_2 = arith.constant 0 : i32
    return %arg0, %c0_i32, %c0_i32_0, %c0_i32_1 : i32, i32, i32, i32
  }
  func.func @transform_1(%arg0: i32) -> (i32, i32, i32) {
    %c0_i32 = arith.constant 0 : i32
    %c0_i32_0 = arith.constant 0 : i32
    %c0_i32_1 = arith.constant 0 : i32
    %c0_i32_2 = arith.constant 0 : i32
    return %c0_i32, %c0_i32_0, %c0_i32_1 : i32, i32, i32
  }
  func.func @transform_2(%arg0: i32) -> (i32, i32) {
    %c0_i32 = arith.constant 0 : i32
    %c0_i32_0 = arith.constant 0 : i32
    %c0_i32_1 = arith.constant 0 : i32
    return %c0_i32, %c0_i32_0 : i32, i32
  }
  func.func @transform_3(%arg0: i32) -> (i32, i32) {
    %c0_i32 = arith.constant 0 : i32
    %c0_i32_0 = arith.constant 0 : i32
    %c0_i32_1 = arith.constant 0 : i32
    return %c0_i32, %c0_i32_0 : i32, i32
  }
  func.func @transform_4(%arg0: i32) -> (i32, i32, i32) {
    %c0_i32 = arith.constant 0 : i32
    %c0_i32_0 = arith.constant 0 : i32
    %c0_i32_1 = arith.constant 0 : i32
    return %arg0, %c0_i32, %c0_i32_0 : i32, i32, i32
  }
}

</mosaic_0001>

<llo_original>
// kernel: tile.8
$region0: #{tile.8}
  #allocation0 [shape = 's32[1]{0}', space=sflag, size = 0x4, scoped, tag = 'scoped memory for tile.8']
  %s0 = inlined_call_operand.vmem [shape: f32[32], index: 0, kind: input, shape index: {}]
  %s1 = inlined_call_operand.vmem [shape: f32[4,32], index: 1, kind: output, shape index: {}]
  // Predicated region
  $region2: #{tile.8} parent=0 // pred_check
    _
  $region3: #{tile.8} parent=0 // pred_check_branch
    %3 = sbr.rel (0) target = $region5
  $region4: #{tile.8} parent=0 // pred_region
    _
  $region5: #{tile.8} parent=0 // pred_fallthru
    _
  %v4 = vld [vmem:[%s0] ss:$0 sm:$0xff]
  %5 = vst [vmem:[%s1] sm:$0xf] %v4

// kernel: tile.9
$region0: #{tile.9}
  %s0 = inlined_call_operand.vmem [shape: f32[4,32], index: 0, kind: input, shape index: {}]
  %s1 = inlined_call_operand.vmem [shape: f32[128], index: 1, kind: output, shape index: {}]
  $region1: #{tile.9} parent=0
    #allocation0 [shape = 'u8[4096]{0}', space=vmem, size = 0x1000, scoped, tag = 'scoped mem for output reshape']
    #allocation1 [shape = 'u8[4096]{0}', space=vmem, size = 0x1000, scoped, tag = 'scoped mem for input reshape']
    %s3 = sshll.u32 1, 4
    %s4 = ssub.s32 %s3, 1
    %v5 = vld [vmem:[%s0] sm:%s4]
    %6 = vst [vmem:[#allocation1] sm:%s4] %v5
    %v7 = vld [vmem:[#allocation1] sm:$0x1]
    %vm8 = vcmask 261120
    %9 = vst.msk [vmem:[#allocation0] sm:$0x1] %vm8, %v7
    %s10 = scalar_lea.vmem [#allocation1], 3
    %v11 = vld [vmem:[%s10] sm:$0x1]
    %12 = vrot.lane.b32.xlu0 %v11, 96
    %v13 = vpop.permute.xlu0 %12
    %vm14 = vcmask 1048320
    %15 = vst.msk [vmem:[#allocation0] sm:$0x1] %vm14, %v13
    %s16 = scalar_lea.vmem [#allocation1], 2
    %v17 = vld [vmem:[%s16] sm:$0x1]
    %18 = vrot.lane.b32.xlu0 %v17, 64
    %v19 = vpop.permute.xlu0 %18
    %vm20 = vcmask 785920
    %21 = vst.msk [vmem:[#allocation0] sm:$0x1] %vm20, %v19
    %s22 = scalar_lea.vmem [#allocation1], 1
    %v23 = vld [vmem:[%s22] sm:$0x1]
    %24 = vrot.lane.b32.xlu0 %v23, 32
    %v25 = vpop.permute.xlu0 %24
    %vm26 = vcmask 523520
    %27 = vst.msk [vmem:[#allocation0] sm:$0x1] %vm26, %v25
    %s29 = sshll.u32 1, 1
    %s30 = ssub.s32 %s29, 1
    %v32 = vld [vmem:[#allocation0] sm:%s30]
    %s33 = sshll.u32 1, 1
    %s34 = ssub.s32 %s33, 1
    %35 = vst [vmem:[%s1] sm:%s34] %v32

// kernel: unet_simple_forward.1
$region0: #{unet_simple_forward.1}
  #allocation0 [shape = 'u32[]', space=smem, size = 0x4, offset = 0x4, fixed_abs, tag = 'smem constant byte address 0x4 - core index']
  #allocation1 [shape = 'u32[144,128]{1,0:T(1,128)}', space=vmem, size = 0x12000, scoped, tag = 'internal scratch']
  #allocation2 [shape = 'f32[18,18,4]{2,1,0:T(8,128)}', space=vmem, size = 0x36000, scoped, tag = 'scratch operand']
  #allocation3 [shape = 'f32[18,18,32]{2,1,0:T(8,128)}', space=vmem, size = 0x36000, scoped, tag = 'scratch operand']
  #allocation4 [shape = 'f32[10,10,32]{2,1,0:T(8,128)}', space=vmem, size = 0x14000, scoped, tag = 'scratch operand']
  #allocation5 [shape = 'f32[18,18,32]{2,1,0:T(8,128)}', space=vmem, size = 0x36000, scoped, tag = 'scratch operand']
  %s0 = inlined_call_operand.vmem [shape: f32[2,16,16,4], index: 0, kind: input, shape index: {}]
  %s1 = inlined_call_operand.vmem [shape: bf16[5,576,128], index: 1, kind: input, shape index: {}]
  %s2 = inlined_call_operand.vmem [shape: f32[1,256], index: 2, kind: input, shape index: {}]
  %s3 = inlined_call_operand.vmem [shape: f32[4,1], index: 3, kind: input, shape index: {}]
  %s4 = inlined_call_operand.vmem [shape: f32[2,4,256], index: 4, kind: output, shape index: {}]
  %s5 = sld [smem:[#allocation0]]
  $region49: #{unet_simple_forward.1} parent=0
    _
  %s7 = ssub.s32 1, %s5
  %s8 = scalar_select 0, %s7, %s5
  loop: start=0, step=1, limit=4
  $region2: #{unet_simple_forward.1} parent=0 // loop_pre_header
    _
  $region3: #{unet_simple_forward.1} parent=0 // loop_header
    %s10 = sphi 0, %s14
    %p11 = scmp.ge.s32.totalorder %s10, 4
    %s20 = sphi 0, %s22
    %s23 = sphi 0, %s20
    %s24 = sphi 0, %s23
    %s40 = sphi 0, %s24
    %s44 = sphi 0, %s44
    %s46 = sphi 0, %s44
    %s47 = sphi 0, %s46
    %s61 = sphi 0, %s47
    %s65 = sphi 0, %s65
    %s67 = sphi 0, %s65
    %s68 = sphi 0, %s67
    %s82 = sphi 0, %s68
    %s86 = sphi 0, %s86
    %s88 = sphi 0, %s86
    %s89 = sphi 0, %s88
    %s103 = sphi 0, %s89
    %s109 = sphi 0, %s111
    %s112 = sphi 0, %s109
    %s113 = sphi 0, %s112
    %s129 = sphi 0, %s113
  $region4: #{unet_simple_forward.1} parent=0 // loop_header_branch
    %13 = sbr.rel (%p11) target = $region8
  $region5: #{unet_simple_forward.1} parent=0 // loop_body
    %s15 = ssub.s32 %s10, 1
    %s16 = ssub.s32 %s10, 2
    %s17 = sadd.s32 %s10, 1
    %s18 = ssub.s32 %s10, %s17
    %p19 = scmp.eq.s32.totalorder %s18, 0
    %s21 = sadd.s32 %s20, 1
    %s22 = scalar_select %p19, %s20, %s21
    %p25 = pneg %p19
    %p26 = scmp.eq.s32.totalorder %s10, 1
    %p27 = por %p25, %p26
    %p28 = scmp.ne.s32.totalorder %s20, %s23
    %p29 = scmp.eq.s32.totalorder %s10, 0
    %p30 = por %p28, %p29
    %p31 = scmp.ne.s32.totalorder %s20, %s23
    %p32 = scmp.eq.s32.totalorder %s15, 1
    %p33 = por %p31, %p32
    %p34 = scmp.ne.s32.totalorder %s23, %s24
    %p35 = scmp.eq.s32.totalorder %s15, 0
    %p36 = por %p34, %p35
    %p37 = scmp.ne.s32.totalorder %s23, %s24
    %p38 = scmp.eq.s32.totalorder %s16, 1
    %p39 = por %p37, %p38
    %p41 = scmp.ne.s32.totalorder %s24, %s40
    %p42 = scmp.eq.s32.totalorder %s16, 0
    %p43 = por %p41, %p42
    %s45 = sadd.s32 %s44, 1
    %p48 = scmp.eq.s32.totalorder %s10, 1
    %p49 = scmp.ne.s32.totalorder %s44, %s46
    %p50 = scmp.eq.s32.totalorder %s10, 0
    %p51 = por %p49, %p50
    %p52 = scmp.ne.s32.totalorder %s44, %s46
    %p53 = scmp.eq.s32.totalorder %s15, 1
    %p54 = por %p52, %p53
    %p55 = scmp.ne.s32.totalorder %s46, %s47
    %p56 = scmp.eq.s32.totalorder %s15, 0
    %p57 = por %p55, %p56
    %p58 = scmp.ne.s32.totalorder %s46, %s47
    %p59 = scmp.eq.s32.totalorder %s16, 1
    %p60 = por %p58, %p59
    %p62 = scmp.ne.s32.totalorder %s47, %s61
    %p63 = scmp.eq.s32.totalorder %s16, 0
    %p64 = por %p62, %p63
    %s66 = sadd.s32 %s65, 1
    %p69 = scmp.eq.s32.totalorder %s10, 1
    %p70 = scmp.ne.s32.totalorder %s65, %s67
    %p71 = scmp.eq.s32.totalorder %s10, 0
    %p72 = por %p70, %p71
    %p73 = scmp.ne.s32.totalorder %s65, %s67
    %p74 = scmp.eq.s32.totalorder %s15, 1
    %p75 = por %p73, %p74
    %p76 = scmp.ne.s32.totalorder %s67, %s68
    %p77 = scmp.eq.s32.totalorder %s15, 0
    %p78 = por %p76, %p77
    %p79 = scmp.ne.s32.totalorder %s67, %s68
    %p80 = scmp.eq.s32.totalorder %s16, 1
    %p81 = por %p79, %p80
    %p83 = scmp.ne.s32.totalorder %s68, %s82
    %p84 = scmp.eq.s32.totalorder %s16, 0
    %p85 = por %p83, %p84
    %s87 = sadd.s32 %s86, 1
    %p90 = scmp.eq.s32.totalorder %s10, 1
    %p91 = scmp.ne.s32.totalorder %s86, %s88
    %p92 = scmp.eq.s32.totalorder %s10, 0
    %p93 = por %p91, %p92
    %p94 = scmp.ne.s32.totalorder %s86, %s88
    %p95 = scmp.eq.s32.totalorder %s15, 1
    %p96 = por %p94, %p95
    %p97 = scmp.ne.s32.totalorder %s88, %s89
    %p98 = scmp.eq.s32.totalorder %s15, 0
    %p99 = por %p97, %p98
    %p100 = scmp.ne.s32.totalorder %s88, %s89
    %p101 = scmp.eq.s32.totalorder %s16, 1
    %p102 = por %p100, %p101
    %p104 = scmp.ne.s32.totalorder %s89, %s103
    %p105 = scmp.eq.s32.totalorder %s16, 0
    %p106 = por %p104, %p105
    %s107 = ssub.s32 %s10, %s17
    %p108 = scmp.eq.s32.totalorder %s107, 0
    %s110 = sadd.s32 %s109, 1
    %s111 = scalar_select %p108, %s109, %s110
    %p114 = pneg %p108
    %p115 = scmp.eq.s32.totalorder %s10, 1
    %p116 = por %p114, %p115
    %p117 = scmp.ne.s32.totalorder %s109, %s112
    %p118 = scmp.eq.s32.totalorder %s10, 0
    %p119 = por %p117, %p118
    %p120 = scmp.ne.s32.totalorder %s109, %s112
    %p121 = scmp.eq.s32.totalorder %s15, 1
    %p122 = por %p120, %p121
    %p123 = scmp.ne.s32.totalorder %s112, %s113
    %p124 = scmp.eq.s32.totalorder %s15, 0
    %p125 = por %p123, %p124
    %p126 = scmp.ne.s32.totalorder %s112, %s113
    %p127 = scmp.eq.s32.totalorder %s16, 1
    %p128 = por %p126, %p127
    %p130 = scmp.ne.s32.totalorder %s113, %s129
    %p131 = scmp.eq.s32.totalorder %s16, 0
    %p132 = por %p130, %p131
    %p133 = scmp.le.s32.totalorder 1, %s10
    %p134 = scmp.lt.s32.totalorder %s10, 3
    %p135 = pnand %p133, %p134
    %p136 = pneg %p135
    // Predicated region
    $region9: #{unet_simple_forward.1} parent=5 // pred_check
      _
    $region10: #{unet_simple_forward.1} parent=5 // pred_check_branch
      %138 = sbr.rel (%p135) target = $region12
    $region11: #{unet_simple_forward.1} parent=5 // pred_region
      %s139 = ssub.s32 %s10, 1
      // Predicated region
      $region13: #{unet_simple_forward.1} parent=11 // pred_check
        %p140 = pneg %p57
      $region14: #{unet_simple_forward.1} parent=11 // pred_check_branch
        %142 = sbr.rel (%p140) target = $region16
      $region15: #{unet_simple_forward.1} parent=11 // pred_region
        _
      $region16: #{unet_simple_forward.1} parent=11 // pred_fallthru
        _
      // Predicated region
      $region17: #{unet_simple_forward.1} parent=11 // pred_check
        %p143 = pneg %p78
      $region18: #{unet_simple_forward.1} parent=11 // pred_check_branch
        %145 = sbr.rel (%p143) target = $region20
      $region19: #{unet_simple_forward.1} parent=11 // pred_region
        _
      $region20: #{unet_simple_forward.1} parent=11 // pred_fallthru
        _
      // Predicated region
      $region21: #{unet_simple_forward.1} parent=11 // pred_check
        %p146 = pneg %p99
      $region22: #{unet_simple_forward.1} parent=11 // pred_check_branch
        %148 = sbr.rel (%p146) target = $region24
      $region23: #{unet_simple_forward.1} parent=11 // pred_region
        _
      $region24: #{unet_simple_forward.1} parent=11 // pred_fallthru
        _
    $region12: #{unet_simple_forward.1} parent=5 // pred_fallthru
      _
    %p149 = scmp.lt.s32.totalorder %s10, 2
    // Predicated region
    $region25: #{unet_simple_forward.1} parent=5 // pred_check
      %p150 = pneg %p149
    $region26: #{unet_simple_forward.1} parent=5 // pred_check_branch
      %152 = sbr.rel (%p150) target = $region28
    $region27: #{unet_simple_forward.1} parent=5 // pred_region
      // Predicated region
      $region29: #{unet_simple_forward.1} parent=27 // pred_check
        %p153 = pneg %p30
      $region30: #{unet_simple_forward.1} parent=27 // pred_check_branch
        %155 = sbr.rel (%p153) target = $region32
      $region31: #{unet_simple_forward.1} parent=27 // pred_region
        %p156 = scmp.lt.s32.totalorder %s10, 1
        %s157 = scalar_select %p156, %s10, 1
        %s158 = smul.addr %s157, 32
        %s159 = smul.addr %s158, 8
        %s160 = scalar_lea.vmem %s0, %s159
      $region32: #{unet_simple_forward.1} parent=27 // pred_fallthru
        _
    $region28: #{unet_simple_forward.1} parent=5 // pred_fallthru
      _
    %p161 = scmp.le.s32.totalorder 1, %s10
    %p162 = scmp.lt.s32.totalorder %s10, 3
    %p163 = pnand %p161, %p162
    %p164 = pneg %p163
    // Predicated region
    $region33: #{unet_simple_forward.1} parent=5 // pred_check
      _
    $region34: #{unet_simple_forward.1} parent=5 // pred_check_branch
      %166 = sbr.rel (%p163) target = $region36
    $region35: #{unet_simple_forward.1} parent=5 // pred_region
      %s167 = ssub.s32 %s10, 1
      %p168 = scmp.lt.s32.totalorder %s15, 1
      %s169 = scalar_select %p168, %s15, 1
      %s170 = smul.addr %s169, 32
      %s171 = smul.addr %s170, 8
      %s172 = scalar_lea.vmem %s0, %s171
      %p173 = pneg %p36
      %p174 = pneg %p33
      %p175 = pneg %p57
      %p176 = pneg %p54
      %p177 = pneg %p78
      %p178 = pneg %p75
      %p179 = pneg %p99
      %p180 = pneg %p96
      %p181 = pneg %p125
      %p182 = pneg %p122
      %p183 = scmp.lt.s32.totalorder %s15, 1
      %s184 = scalar_select %p183, %s15, 1
      %s185 = smul.addr %s184, 2
      %s186 = smul.addr %s185, 4
      %s187 = scalar_lea.vmem %s4, %s186
      %p188 = scmp.lt.s32.totalorder %s15, 1
      %s189 = scalar_select %p188, %s15, 1
      %s190 = smul.addr %s189, 32
      %s191 = smul.addr %s190, 8
      %s192 = scalar_lea.vmem %s0, %s191
      %p193 = scmp.lt.s32.totalorder %s15, 1
      %s194 = scalar_select %p193, %s15, 1
      %s195 = smul.addr %s194, 2
      %s196 = smul.addr %s195, 4
      %s197 = scalar_lea.vmem %s4, %s196
      %vm199 = vcmask 31744
      %200 = vst.msk [vmem:[#allocation2] sm:$0xff] %vm199, 0.0
      %201 = vst.msk [vmem:[#allocation2 + $0x8] sm:$0xff] %vm199, 0.0
      %vm202 = vcmask 25600
      %203 = vst.msk [vmem:[#allocation2 + $0x10] sm:$0x3] %vm202, 0.0
      %s204 = scalar_lea.vmem [#allocation2], 408
      %205 = vst.msk [vmem:[%s204] sm:$0xff] %vm199, 0.0
      %206 = vst.msk [vmem:[%s204 + $0x8] sm:$0xff] %vm199, 0.0
      %207 = vst.msk [vmem:[%s204 + $0x10] sm:$0x3] %vm202, 0.0
      %vm208 = vcmask 24576
      %209 = vst.msk [vmem:[#allocation2] sm:$0x1] %vm208, 0.0
      %210 = vst.msk [vmem:[#allocation2 + $0x18] sm:$0x1] %vm208, 0.0
      %211 = vst.msk [vmem:[#allocation2 + $0x30] sm:$0x1] %vm208, 0.0
      %212 = vst.msk [vmem:[#allocation2 + $0x48] sm:$0x1] %vm208, 0.0
      %213 = vst.msk [vmem:[#allocation2 + $0x60] sm:$0x1] %vm208, 0.0
      %214 = vst.msk [vmem:[#allocation2 + $0x78] sm:$0x1] %vm208, 0.0
      %215 = vst.msk [vmem:[#allocation2 + $0x90] sm:$0x1] %vm208, 0.0
      %216 = vst.msk [vmem:[#allocation2 + $0xa8] sm:$0x1] %vm208, 0.0
      %217 = vst.msk [vmem:[#allocation2 + $0xc0] sm:$0x1] %vm208, 0.0
      %218 = vst.msk [vmem:[#allocation2 + $0xd8] sm:$0x1] %vm208, 0.0
      %219 = vst.msk [vmem:[#allocation2 + $0xf0] sm:$0x1] %vm208, 0.0
      %220 = vst.msk [vmem:[#allocation2 + $0x108] sm:$0x1] %vm208, 0.0
      %221 = vst.msk [vmem:[#allocation2 + $0x120] sm:$0x1] %vm208, 0.0
      %222 = vst.msk [vmem:[#allocation2 + $0x138] sm:$0x1] %vm208, 0.0
      %223 = vst.msk [vmem:[#allocation2 + $0x150] sm:$0x1] %vm208, 0.0
      %224 = vst.msk [vmem:[#allocation2 + $0x168] sm:$0x1] %vm208, 0.0
      %225 = vst.msk [vmem:[#allocation2 + $0x180] sm:$0x1] %vm208, 0.0
      %226 = vst.msk [vmem:[#allocation2 + $0x198] sm:$0x1] %vm208, 0.0
      %227 = vst.msk [vmem:[#allocation2 + $0x11] sm:$0x1] %vm208, 0.0
      %228 = vst.msk [vmem:[#allocation2 + $0x29] sm:$0x1] %vm208, 0.0
      %229 = vst.msk [vmem:[#allocation2 + $0x41] sm:$0x1] %vm208, 0.0
      %230 = vst.msk [vmem:[#allocation2 + $0x59] sm:$0x1] %vm208, 0.0
      %231 = vst.msk [vmem:[#allocation2 + $0x71] sm:$0x1] %vm208, 0.0
      %232 = vst.msk [vmem:[#allocation2 + $0x89] sm:$0x1] %vm208, 0.0
      %233 = vst.msk [vmem:[#allocation2 + $0xa1] sm:$0x1] %vm208, 0.0
      %234 = vst.msk [vmem:[#allocation2 + $0xb9] sm:$0x1] %vm208, 0.0
      %235 = vst.msk [vmem:[#allocation2 + $0xd1] sm:$0x1] %vm208, 0.0
      %236 = vst.msk [vmem:[#allocation2 + $0xe9] sm:$0x1] %vm208, 0.0
      %237 = vst.msk [vmem:[#allocation2 + $0x101] sm:$0x1] %vm208, 0.0
      %238 = vst.msk [vmem:[#allocation2 + $0x119] sm:$0x1] %vm208, 0.0
      %239 = vst.msk [vmem:[#allocation2 + $0x131] sm:$0x1] %vm208, 0.0
      %240 = vst.msk [vmem:[#allocation2 + $0x149] sm:$0x1] %vm208, 0.0
      %241 = vst.msk [vmem:[#allocation2 + $0x161] sm:$0x1] %vm208, 0.0
      %242 = vst.msk [vmem:[#allocation2 + $0x179] sm:$0x1] %vm208, 0.0
      %243 = vst.msk [vmem:[#allocation2 + $0x191] sm:$0x1] %vm208, 0.0
      %244 = vst.msk [vmem:[#allocation2 + $0x1a9] sm:$0x1] %vm208, 0.0
      %v245 = vld [vmem:[%s192] sm:$0xff]
      %v246 = vld [vmem:[%s192 + $0x8] sm:$0xff]
      %v247 = vld [vmem:[%s192 + $0x10] sm:$0xff]
      %v248 = vld [vmem:[%s192 + $0x18] sm:$0xff]
      %v249 = vld [vmem:[%s192 + $0x20] sm:$0xff]
      %v250 = vld [vmem:[%s192 + $0x28] sm:$0xff]
      %v251 = vld [vmem:[%s192 + $0x30] sm:$0xff]
      %v252 = vld [vmem:[%s192 + $0x38] sm:$0xff]
      %v253 = vld [vmem:[%s192 + $0x40] sm:$0xff]
      %v254 = vld [vmem:[%s192 + $0x48] sm:$0xff]
      %v255 = vld [vmem:[%s192 + $0x50] sm:$0xff]
      %v256 = vld [vmem:[%s192 + $0x58] sm:$0xff]
      %v257 = vld [vmem:[%s192 + $0x60] sm:$0xff]
      %v258 = vld [vmem:[%s192 + $0x68] sm:$0xff]
      %v259 = vld [vmem:[%s192 + $0x70] sm:$0xff]
      %v260 = vld [vmem:[%s192 + $0x78] sm:$0xff]
      %v261 = vld [vmem:[%s192 + $0x80] sm:$0xff]
      %v262 = vld [vmem:[%s192 + $0x88] sm:$0xff]
      %v263 = vld [vmem:[%s192 + $0x90] sm:$0xff]
      %v264 = vld [vmem:[%s192 + $0x98] sm:$0xff]
      %v265 = vld [vmem:[%s192 + $0xa0] sm:$0xff]
      %v266 = vld [vmem:[%s192 + $0xa8] sm:$0xff]
      %v267 = vld [vmem:[%s192 + $0xb0] sm:$0xff]
      %v268 = vld [vmem:[%s192 + $0xb8] sm:$0xff]
      %v269 = vld [vmem:[%s192 + $0xc0] sm:$0xff]
      %v270 = vld [vmem:[%s192 + $0xc8] sm:$0xff]
      %v271 = vld [vmem:[%s192 + $0xd0] sm:$0xff]
      %v272 = vld [vmem:[%s192 + $0xd8] sm:$0xff]
      %v273 = vld [vmem:[%s192 + $0xe0] sm:$0xff]
      %v274 = vld [vmem:[%s192 + $0xe8] sm:$0xff]
      %v275 = vld [vmem:[%s192 + $0xf0] sm:$0xff]
      %v276 = vld [vmem:[%s192 + $0xf8] sm:$0xff]
      %s277 = scalar_lea.vmem [#allocation2], 24
      %278 = vst.msk [vmem:[%s277 + $0x1] sm:$0xff] %vm199, %v245
      %279 = vst.msk [vmem:[%s277 + $0x9] sm:$0xff] %vm199, %v246
      %280 = vst.msk [vmem:[%s277 + $0x19] sm:$0xff] %vm199, %v247
      %281 = vst.msk [vmem:[%s277 + $0x21] sm:$0xff] %vm199, %v248
      %282 = vst.msk [vmem:[%s277 + $0x31] sm:$0xff] %vm199, %v249
      %283 = vst.msk [vmem:[%s277 + $0x39] sm:$0xff] %vm199, %v250
      %284 = vst.msk [vmem:[%s277 + $0x49] sm:$0xff] %vm199, %v251
      %285 = vst.msk [vmem:[%s277 + $0x51] sm:$0xff] %vm199, %v252
      %286 = vst.msk [vmem:[%s277 + $0x61] sm:$0xff] %vm199, %v253
      %287 = vst.msk [vmem:[%s277 + $0x69] sm:$0xff] %vm199, %v254
      %288 = vst.msk [vmem:[%s277 + $0x79] sm:$0xff] %vm199, %v255
      %289 = vst.msk [vmem:[%s277 + $0x81] sm:$0xff] %vm199, %v256
      %290 = vst.msk [vmem:[%s277 + $0x91] sm:$0xff] %vm199, %v257
      %291 = vst.msk [vmem:[%s277 + $0x99] sm:$0xff] %vm199, %v258
      %292 = vst.msk [vmem:[%s277 + $0xa9] sm:$0xff] %vm199, %v259
      %293 = vst.msk [vmem:[%s277 + $0xb1] sm:$0xff] %vm199, %v260
      %294 = vst.msk [vmem:[%s277 + $0xc1] sm:$0xff] %vm199, %v261
      %295 = vst.msk [vmem:[%s277 + $0xc9] sm:$0xff] %vm199, %v262
      %296 = vst.msk [vmem:[%s277 + $0xd9] sm:$0xff] %vm199, %v263
      %297 = vst.msk [vmem:[%s277 + $0xe1] sm:$0xff] %vm199, %v264
      %298 = vst.msk [vmem:[%s277 + $0xf1] sm:$0xff] %vm199, %v265
      %299 = vst.msk [vmem:[%s277 + $0xf9] sm:$0xff] %vm199, %v266
      %300 = vst.msk [vmem:[%s277 + $0x109] sm:$0xff] %vm199, %v267
      %301 = vst.msk [vmem:[%s277 + $0x111] sm:$0xff] %vm199, %v268
      %302 = vst.msk [vmem:[%s277 + $0x121] sm:$0xff] %vm199, %v269
      %303 = vst.msk [vmem:[%s277 + $0x129] sm:$0xff] %vm199, %v270
      %304 = vst.msk [vmem:[%s277 + $0x139] sm:$0xff] %vm199, %v271
      %305 = vst.msk [vmem:[%s277 + $0x141] sm:$0xff] %vm199, %v272
      %306 = vst.msk [vmem:[%s277 + $0x151] sm:$0xff] %vm199, %v273
      %307 = vst.msk [vmem:[%s277 + $0x159] sm:$0xff] %vm199, %v274
      %308 = vst.msk [vmem:[%s277 + $0x169] sm:$0xff] %vm199, %v275
      %309 = vst.msk [vmem:[%s277 + $0x171] sm:$0xff] %vm199, %v276
      %v310 = vld [vmem:[#allocation2] sm:$0xff]
      %v311 = vld [vmem:[#allocation2 + $0x8] sm:$0xff]
      %v312 = vld [vmem:[#allocation2 + $0x18] sm:$0xff]
      %v313 = vld [vmem:[#allocation2 + $0x20] sm:$0xff]
      %v314 = vld [vmem:[#allocation2 + $0x30] sm:$0xff]
      %v315 = vld [vmem:[#allocation2 + $0x38] sm:$0xff]
      %v316 = vld [vmem:[#allocation2 + $0x48] sm:$0xff]
      %v317 = vld [vmem:[#allocation2 + $0x50] sm:$0xff]
      %v318 = vld [vmem:[#allocation2 + $0x60] sm:$0xff]
      %v319 = vld [vmem:[#allocation2 + $0x68] sm:$0xff]
      %v320 = vld [vmem:[#allocation2 + $0x78] sm:$0xff]
      %v321 = vld [vmem:[#allocation2 + $0x80] sm:$0xff]
      %v322 = vld [vmem:[#allocation2 + $0x90] sm:$0xff]
      %v323 = vld [vmem:[#allocation2 + $0x98] sm:$0xff]
      %v324 = vld [vmem:[#allocation2 + $0xa8] sm:$0xff]
      %v325 = vld [vmem:[#allocation2 + $0xb0] sm:$0xff]
      %v326 = vld [vmem:[#allocation2 + $0xc0] sm:$0xff]
      %v327 = vld [vmem:[#allocation2 + $0xc8] sm:$0xff]
      %v328 = vld [vmem:[#allocation2 + $0xd8] sm:$0xff]
      %v329 = vld [vmem:[#allocation2 + $0xe0] sm:$0xff]
      %v330 = vld [vmem:[#allocation2 + $0xf0] sm:$0xff]
      %v331 = vld [vmem:[#allocation2 + $0xf8] sm:$0xff]
      %v332 = vld [vmem:[#allocation2 + $0x108] sm:$0xff]
      %v333 = vld [vmem:[#allocation2 + $0x110] sm:$0xff]
      %v334 = vld [vmem:[#allocation2 + $0x120] sm:$0xff]
      %v335 = vld [vmem:[#allocation2 + $0x128] sm:$0xff]
      %v336 = vld [vmem:[#allocation2 + $0x138] sm:$0xff]
      %v337 = vld [vmem:[#allocation2 + $0x140] sm:$0xff]
      %v338 = vld [vmem:[#allocation2 + $0x150] sm:$0xff]
      %v339 = vld [vmem:[#allocation2 + $0x158] sm:$0xff]
      %v340 = vld [vmem:[#allocation2 + $0x168] sm:$0xff]
      %v341 = vld [vmem:[#allocation2 + $0x170] sm:$0xff]
      %v342 = vld [vmem:[#allocation2 + $0x1] sm:$0xff]
      %v343 = vld [vmem:[#allocation2 + $0x9] sm:$0xff]
      %v344 = vld [vmem:[#allocation2 + $0x19] sm:$0xff]
      %v345 = vld [vmem:[#allocation2 + $0x21] sm:$0xff]
      %v346 = vld [vmem:[#allocation2 + $0x31] sm:$0xff]
      %v347 = vld [vmem:[#allocation2 + $0x39] sm:$0xff]
      %v348 = vld [vmem:[#allocation2 + $0x49] sm:$0xff]
      %v349 = vld [vmem:[#allocation2 + $0x51] sm:$0xff]
      %v350 = vld [vmem:[#allocation2 + $0x61] sm:$0xff]
      %v351 = vld [vmem:[#allocation2 + $0x69] sm:$0xff]
      %v352 = vld [vmem:[#allocation2 + $0x79] sm:$0xff]
      %v353 = vld [vmem:[#allocation2 + $0x81] sm:$0xff]
      %v354 = vld [vmem:[#allocation2 + $0x91] sm:$0xff]
      %v355 = vld [vmem:[#allocation2 + $0x99] sm:$0xff]
      %v356 = vld [vmem:[#allocation2 + $0xa9] sm:$0xff]
      %v357 = vld [vmem:[#allocation2 + $0xb1] sm:$0xff]
      %v358 = vld [vmem:[#allocation2 + $0xc1] sm:$0xff]
      %v359 = vld [vmem:[#allocation2 + $0xc9] sm:$0xff]
      %v360 = vld [vmem:[#allocation2 + $0xd9] sm:$0xff]
      %v361 = vld [vmem:[#allocation2 + $0xe1] sm:$0xff]
      %v362 = vld [vmem:[#allocation2 + $0xf1] sm:$0xff]
      %v363 = vld [vmem:[#allocation2 + $0xf9] sm:$0xff]
      %v364 = vld [vmem:[#allocation2 + $0x109] sm:$0xff]
      %v365 = vld [vmem:[#allocation2 + $0x111] sm:$0xff]
      %v366 = vld [vmem:[#allocation2 + $0x121] sm:$0xff]
      %v367 = vld [vmem:[#allocation2 + $0x129] sm:$0xff]
      %v368 = vld [vmem:[#allocation2 + $0x139] sm:$0xff]
      %v369 = vld [vmem:[#allocation2 + $0x141] sm:$0xff]
      %v370 = vld [vmem:[#allocation2 + $0x151] sm:$0xff]
      %v371 = vld [vmem:[#allocation2 + $0x159] sm:$0xff]
      %v372 = vld [vmem:[#allocation2 + $0x169] sm:$0xff]
      %v373 = vld [vmem:[#allocation2 + $0x171] sm:$0xff]
      %v374 = vld [vmem:[#allocation2 + $0x2] sm:$0xff]
      %v375 = vld [vmem:[#allocation2 + $0xa] sm:$0xff]
      %v376 = vld [vmem:[#allocation2 + $0x1a] sm:$0xff]
      %v377 = vld [vmem:[#allocation2 + $0x22] sm:$0xff]
      %v378 = vld [vmem:[#allocation2 + $0x32] sm:$0xff]
      %v379 = vld [vmem:[#allocation2 + $0x3a] sm:$0xff]
      %v380 = vld [vmem:[#allocation2 + $0x4a] sm:$0xff]
      %v381 = vld [vmem:[#allocation2 + $0x52] sm:$0xff]
      %v382 = vld [vmem:[#allocation2 + $0x62] sm:$0xff]
      %v383 = vld [vmem:[#allocation2 + $0x6a] sm:$0xff]
      %v384 = vld [vmem:[#allocation2 + $0x7a] sm:$0xff]
      %v385 = vld [vmem:[#allocation2 + $0x82] sm:$0xff]
      %v386 = vld [vmem:[#allocation2 + $0x92] sm:$0xff]
      %v387 = vld [vmem:[#allocation2 + $0x9a] sm:$0xff]
      %v388 = vld [vmem:[#allocation2 + $0xaa] sm:$0xff]
      %v389 = vld [vmem:[#allocation2 + $0xb2] sm:$0xff]
      %v390 = vld [vmem:[#allocation2 + $0xc2] sm:$0xff]
      %v391 = vld [vmem:[#allocation2 + $0xca] sm:$0xff]
      %v392 = vld [vmem:[#allocation2 + $0xda] sm:$0xff]
      %v393 = vld [vmem:[#allocation2 + $0xe2] sm:$0xff]
      %v394 = vld [vmem:[#allocation2 + $0xf2] sm:$0xff]
      %v395 = vld [vmem:[#allocation2 + $0xfa] sm:$0xff]
      %v396 = vld [vmem:[#allocation2 + $0x10a] sm:$0xff]
      %v397 = vld [vmem:[#allocation2 + $0x112] sm:$0xff]
      %v398 = vld [vmem:[#allocation2 + $0x122] sm:$0xff]
      %v399 = vld [vmem:[#allocation2 + $0x12a] sm:$0xff]
      %v400 = vld [vmem:[#allocation2 + $0x13a] sm:$0xff]
      %v401 = vld [vmem:[#allocation2 + $0x142] sm:$0xff]
      %v402 = vld [vmem:[#allocation2 + $0x152] sm:$0xff]
      %v403 = vld [vmem:[#allocation2 + $0x15a] sm:$0xff]
      %v404 = vld [vmem:[#allocation2 + $0x16a] sm:$0xff]
      %v405 = vld [vmem:[#allocation2 + $0x172] sm:$0xff]
      %v406 = vld [vmem:[%s277] sm:$0xff]
      %v407 = vld [vmem:[%s277 + $0x8] sm:$0xff]
      %v408 = vld [vmem:[%s277 + $0x18] sm:$0xff]
      %v409 = vld [vmem:[%s277 + $0x20] sm:$0xff]
      %v410 = vld [vmem:[%s277 + $0x30] sm:$0xff]
      %v411 = vld [vmem:[%s277 + $0x38] sm:$0xff]
      %v412 = vld [vmem:[%s277 + $0x48] sm:$0xff]
      %v413 = vld [vmem:[%s277 + $0x50] sm:$0xff]
      %v414 = vld [vmem:[%s277 + $0x60] sm:$0xff]
      %v415 = vld [vmem:[%s277 + $0x68] sm:$0xff]
      %v416 = vld [vmem:[%s277 + $0x78] sm:$0xff]
      %v417 = vld [vmem:[%s277 + $0x80] sm:$0xff]
      %v418 = vld [vmem:[%s277 + $0x90] sm:$0xff]
      %v419 = vld [vmem:[%s277 + $0x98] sm:$0xff]
      %v420 = vld [vmem:[%s277 + $0xa8] sm:$0xff]
      %v421 = vld [vmem:[%s277 + $0xb0] sm:$0xff]
      %v422 = vld [vmem:[%s277 + $0xc0] sm:$0xff]
      %v423 = vld [vmem:[%s277 + $0xc8] sm:$0xff]
      %v424 = vld [vmem:[%s277 + $0xd8] sm:$0xff]
      %v425 = vld [vmem:[%s277 + $0xe0] sm:$0xff]
      %v426 = vld [vmem:[%s277 + $0xf0] sm:$0xff]
      %v427 = vld [vmem:[%s277 + $0xf8] sm:$0xff]
      %v428 = vld [vmem:[%s277 + $0x108] sm:$0xff]
      %v429 = vld [vmem:[%s277 + $0x110] sm:$0xff]
      %v430 = vld [vmem:[%s277 + $0x120] sm:$0xff]
      %v431 = vld [vmem:[%s277 + $0x128] sm:$0xff]
      %v432 = vld [vmem:[%s277 + $0x138] sm:$0xff]
      %v433 = vld [vmem:[%s277 + $0x140] sm:$0xff]
      %v434 = vld [vmem:[%s277 + $0x150] sm:$0xff]
      %v435 = vld [vmem:[%s277 + $0x158] sm:$0xff]
      %v436 = vld [vmem:[%s277 + $0x168] sm:$0xff]
      %v437 = vld [vmem:[%s277 + $0x170] sm:$0xff]
      %v438 = vld [vmem:[%s277 + $0x1] sm:$0xff]
      %v439 = vld [vmem:[%s277 + $0x9] sm:$0xff]
      %v440 = vld [vmem:[%s277 + $0x19] sm:$0xff]
      %v441 = vld [vmem:[%s277 + $0x21] sm:$0xff]
      %v442 = vld [vmem:[%s277 + $0x31] sm:$0xff]
      %v443 = vld [vmem:[%s277 + $0x39] sm:$0xff]
      %v444 = vld [vmem:[%s277 + $0x49] sm:$0xff]
      %v445 = vld [vmem:[%s277 + $0x51] sm:$0xff]
      %v446 = vld [vmem:[%s277 + $0x61] sm:$0xff]
      %v447 = vld [vmem:[%s277 + $0x69] sm:$0xff]
      %v448 = vld [vmem:[%s277 + $0x79] sm:$0xff]
      %v449 = vld [vmem:[%s277 + $0x81] sm:$0xff]
      %v450 = vld [vmem:[%s277 + $0x91] sm:$0xff]
      %v451 = vld [vmem:[%s277 + $0x99] sm:$0xff]
      %v452 = vld [vmem:[%s277 + $0xa9] sm:$0xff]
      %v453 = vld [vmem:[%s277 + $0xb1] sm:$0xff]
      %v454 = vld [vmem:[%s277 + $0xc1] sm:$0xff]
      %v455 = vld [vmem:[%s277 + $0xc9] sm:$0xff]
      %v456 = vld [vmem:[%s277 + $0xd9] sm:$0xff]
      %v457 = vld [vmem:[%s277 + $0xe1] sm:$0xff]
      %v458 = vld [vmem:[%s277 + $0xf1] sm:$0xff]
      %v459 = vld [vmem:[%s277 + $0xf9] sm:$0xff]
      %v460 = vld [vmem:[%s277 + $0x109] sm:$0xff]
      %v461 = vld [vmem:[%s277 + $0x111] sm:$0xff]
      %v462 = vld [vmem:[%s277 + $0x121] sm:$0xff]
      %v463 = vld [vmem:[%s277 + $0x129] sm:$0xff]
      %v464 = vld [vmem:[%s277 + $0x139] sm:$0xff]
      %v465 = vld [vmem:[%s277 + $0x141] sm:$0xff]
      %v466 = vld [vmem:[%s277 + $0x151] sm:$0xff]
      %v467 = vld [vmem:[%s277 + $0x159] sm:$0xff]
      %v468 = vld [vmem:[%s277 + $0x169] sm:$0xff]
      %v469 = vld [vmem:[%s277 + $0x171] sm:$0xff]
      %v470 = vld [vmem:[%s277 + $0x2] sm:$0xff]
      %v471 = vld [vmem:[%s277 + $0xa] sm:$0xff]
      %v472 = vld [vmem:[%s277 + $0x1a] sm:$0xff]
      %v473 = vld [vmem:[%s277 + $0x22] sm:$0xff]
      %v474 = vld [vmem:[%s277 + $0x32] sm:$0xff]
      %v475 = vld [vmem:[%s277 + $0x3a] sm:$0xff]
      %v476 = vld [vmem:[%s277 + $0x4a] sm:$0xff]
      %v477 = vld [vmem:[%s277 + $0x52] sm:$0xff]
      %v478 = vld [vmem:[%s277 + $0x62] sm:$0xff]
      %v479 = vld [vmem:[%s277 + $0x6a] sm:$0xff]
      %v480 = vld [vmem:[%s277 + $0x7a] sm:$0xff]
      %v481 = vld [vmem:[%s277 + $0x82] sm:$0xff]
      %v482 = vld [vmem:[%s277 + $0x92] sm:$0xff]
      %v483 = vld [vmem:[%s277 + $0x9a] sm:$0xff]
      %v484 = vld [vmem:[%s277 + $0xaa] sm:$0xff]
      %v485 = vld [vmem:[%s277 + $0xb2] sm:$0xff]
      %v486 = vld [vmem:[%s277 + $0xc2] sm:$0xff]
      %v487 = vld [vmem:[%s277 + $0xca] sm:$0xff]
      %v488 = vld [vmem:[%s277 + $0xda] sm:$0xff]
      %v489 = vld [vmem:[%s277 + $0xe2] sm:$0xff]
      %v490 = vld [vmem:[%s277 + $0xf2] sm:$0xff]
      %v491 = vld [vmem:[%s277 + $0xfa] sm:$0xff]
      %v492 = vld [vmem:[%s277 + $0x10a] sm:$0xff]
      %v493 = vld [vmem:[%s277 + $0x112] sm:$0xff]
      %v494 = vld [vmem:[%s277 + $0x122] sm:$0xff]
      %v495 = vld [vmem:[%s277 + $0x12a] sm:$0xff]
      %v496 = vld [vmem:[%s277 + $0x13a] sm:$0xff]
      %v497 = vld [vmem:[%s277 + $0x142] sm:$0xff]
      %v498 = vld [vmem:[%s277 + $0x152] sm:$0xff]
      %v499 = vld [vmem:[%s277 + $0x15a] sm:$0xff]
      %v500 = vld [vmem:[%s277 + $0x16a] sm:$0xff]
      %v501 = vld [vmem:[%s277 + $0x172] sm:$0xff]
      %s502 = scalar_lea.vmem [#allocation2], 48
      %v503 = vld [vmem:[%s502] sm:$0xff]
      %v504 = vld [vmem:[%s502 + $0x8] sm:$0xff]
      %v505 = vld [vmem:[%s502 + $0x18] sm:$0xff]
      %v506 = vld [vmem:[%s502 + $0x20] sm:$0xff]
      %v507 = vld [vmem:[%s502 + $0x30] sm:$0xff]
      %v508 = vld [vmem:[%s502 + $0x38] sm:$0xff]
      %v509 = vld [vmem:[%s502 + $0x48] sm:$0xff]
      %v510 = vld [vmem:[%s502 + $0x50] sm:$0xff]
      %v511 = vld [vmem:[%s502 + $0x60] sm:$0xff]
      %v512 = vld [vmem:[%s502 + $0x68] sm:$0xff]
      %v513 = vld [vmem:[%s502 + $0x78] sm:$0xff]
      %v514 = vld [vmem:[%s502 + $0x80] sm:$0xff]
      %v515 = vld [vmem:[%s502 + $0x90] sm:$0xff]
      %v516 = vld [vmem:[%s502 + $0x98] sm:$0xff]
      %v517 = vld [vmem:[%s502 + $0xa8] sm:$0xff]
      %v518 = vld [vmem:[%s502 + $0xb0] sm:$0xff]
      %v519 = vld [vmem:[%s502 + $0xc0] sm:$0xff]
      %v520 = vld [vmem:[%s502 + $0xc8] sm:$0xff]
      %v521 = vld [vmem:[%s502 + $0xd8] sm:$0xff]
      %v522 = vld [vmem:[%s502 + $0xe0] sm:$0xff]
      %v523 = vld [vmem:[%s502 + $0xf0] sm:$0xff]
      %v524 = vld [vmem:[%s502 + $0xf8] sm:$0xff]
      %v525 = vld [vmem:[%s502 + $0x108] sm:$0xff]
      %v526 = vld [vmem:[%s502 + $0x110] sm:$0xff]
      %v527 = vld [vmem:[%s502 + $0x120] sm:$0xff]
      %v528 = vld [vmem:[%s502 + $0x128] sm:$0xff]
      %v529 = vld [vmem:[%s502 + $0x138] sm:$0xff]
      %v530 = vld [vmem:[%s502 + $0x140] sm:$0xff]
      %v531 = vld [vmem:[%s502 + $0x150] sm:$0xff]
      %v532 = vld [vmem:[%s502 + $0x158] sm:$0xff]
      %v533 = vld [vmem:[%s502 + $0x168] sm:$0xff]
      %v534 = vld [vmem:[%s502 + $0x170] sm:$0xff]
      %v535 = vld [vmem:[%s502 + $0x1] sm:$0xff]
      %v536 = vld [vmem:[%s502 + $0x9] sm:$0xff]
      %v537 = vld [vmem:[%s502 + $0x19] sm:$0xff]
      %v538 = vld [vmem:[%s502 + $0x21] sm:$0xff]
      %v539 = vld [vmem:[%s502 + $0x31] sm:$0xff]
      %v540 = vld [vmem:[%s502 + $0x39] sm:$0xff]
      %v541 = vld [vmem:[%s502 + $0x49] sm:$0xff]
      %v542 = vld [vmem:[%s502 + $0x51] sm:$0xff]
      %v543 = vld [vmem:[%s502 + $0x61] sm:$0xff]
      %v544 = vld [vmem:[%s502 + $0x69] sm:$0xff]
      %v545 = vld [vmem:[%s502 + $0x79] sm:$0xff]
      %v546 = vld [vmem:[%s502 + $0x81] sm:$0xff]
      %v547 = vld [vmem:[%s502 + $0x91] sm:$0xff]
      %v548 = vld [vmem:[%s502 + $0x99] sm:$0xff]
      %v549 = vld [vmem:[%s502 + $0xa9] sm:$0xff]
      %v550 = vld [vmem:[%s502 + $0xb1] sm:$0xff]
      %v551 = vld [vmem:[%s502 + $0xc1] sm:$0xff]
      %v552 = vld [vmem:[%s502 + $0xc9] sm:$0xff]
      %v553 = vld [vmem:[%s502 + $0xd9] sm:$0xff]
      %v554 = vld [vmem:[%s502 + $0xe1] sm:$0xff]
      %v555 = vld [vmem:[%s502 + $0xf1] sm:$0xff]
      %v556 = vld [vmem:[%s502 + $0xf9] sm:$0xff]
      %v557 = vld [vmem:[%s502 + $0x109] sm:$0xff]
      %v558 = vld [vmem:[%s502 + $0x111] sm:$0xff]
      %v559 = vld [vmem:[%s502 + $0x121] sm:$0xff]
      %v560 = vld [vmem:[%s502 + $0x129] sm:$0xff]
      %v561 = vld [vmem:[%s502 + $0x139] sm:$0xff]
      %v562 = vld [vmem:[%s502 + $0x141] sm:$0xff]
      %v563 = vld [vmem:[%s502 + $0x151] sm:$0xff]
      %v564 = vld [vmem:[%s502 + $0x159] sm:$0xff]
      %v565 = vld [vmem:[%s502 + $0x169] sm:$0xff]
      %v566 = vld [vmem:[%s502 + $0x171] sm:$0xff]
      %v567 = vld [vmem:[%s502 + $0x2] sm:$0xff]
      %v568 = vld [vmem:[%s502 + $0xa] sm:$0xff]
      %v569 = vld [vmem:[%s502 + $0x1a] sm:$0xff]
      %v570 = vld [vmem:[%s502 + $0x22] sm:$0xff]
      %v571 = vld [vmem:[%s502 + $0x32] sm:$0xff]
      %v572 = vld [vmem:[%s502 + $0x3a] sm:$0xff]
      %v573 = vld [vmem:[%s502 + $0x4a] sm:$0xff]
      %v574 = vld [vmem:[%s502 + $0x52] sm:$0xff]
      %v575 = vld [vmem:[%s502 + $0x62] sm:$0xff]
      %v576 = vld [vmem:[%s502 + $0x6a] sm:$0xff]
      %v577 = vld [vmem:[%s502 + $0x7a] sm:$0xff]
      %v578 = vld [vmem:[%s502 + $0x82] sm:$0xff]
      %v579 = vld [vmem:[%s502 + $0x92] sm:$0xff]
      %v580 = vld [vmem:[%s502 + $0x9a] sm:$0xff]
      %v581 = vld [vmem:[%s502 + $0xaa] sm:$0xff]
      %v582 = vld [vmem:[%s502 + $0xb2] sm:$0xff]
      %v583 = vld [vmem:[%s502 + $0xc2] sm:$0xff]
      %v584 = vld [vmem:[%s502 + $0xca] sm:$0xff]
      %v585 = vld [vmem:[%s502 + $0xda] sm:$0xff]
      %v586 = vld [vmem:[%s502 + $0xe2] sm:$0xff]
      %v587 = vld [vmem:[%s502 + $0xf2] sm:$0xff]
      %v588 = vld [vmem:[%s502 + $0xfa] sm:$0xff]
      %v589 = vld [vmem:[%s502 + $0x10a] sm:$0xff]
      %v590 = vld [vmem:[%s502 + $0x112] sm:$0xff]
      %v591 = vld [vmem:[%s502 + $0x122] sm:$0xff]
      %v592 = vld [vmem:[%s502 + $0x12a] sm:$0xff]
      %v593 = vld [vmem:[%s502 + $0x13a] sm:$0xff]
      %v594 = vld [vmem:[%s502 + $0x142] sm:$0xff]
      %v595 = vld [vmem:[%s502 + $0x152] sm:$0xff]
      %v596 = vld [vmem:[%s502 + $0x15a] sm:$0xff]
      %v597 = vld [vmem:[%s502 + $0x16a] sm:$0xff]
      %v598 = vld [vmem:[%s502 + $0x172] sm:$0xff]
      %631 = vrot.lane.b32.xlu0 %v342, 4
      %v632 = vpop.permute.xlu0 %631
      %633 = vrot.lane.b32.xlu0 %v343, 4
      %v634 = vpop.permute.xlu0 %633
      %635 = vrot.lane.b32.xlu0 %v344, 4
      %v636 = vpop.permute.xlu0 %635
      %637 = vrot.lane.b32.xlu0 %v345, 4
      %v638 = vpop.permute.xlu0 %637
      %639 = vrot.lane.b32.xlu0 %v346, 4
      %v640 = vpop.permute.xlu0 %639
      %641 = vrot.lane.b32.xlu0 %v347, 4
      %v642 = vpop.permute.xlu0 %641
      %643 = vrot.lane.b32.xlu0 %v348, 4
      %v644 = vpop.permute.xlu0 %643
      %645 = vrot.lane.b32.xlu0 %v349, 4
      %v646 = vpop.permute.xlu0 %645
      %647 = vrot.lane.b32.xlu0 %v350, 4
      %v648 = vpop.permute.xlu0 %647
      %649 = vrot.lane.b32.xlu0 %v351, 4
      %v650 = vpop.permute.xlu0 %649
      %651 = vrot.lane.b32.xlu0 %v352, 4
      %v652 = vpop.permute.xlu0 %651
      %653 = vrot.lane.b32.xlu0 %v353, 4
      %v654 = vpop.permute.xlu0 %653
      %655 = vrot.lane.b32.xlu0 %v354, 4
      %v656 = vpop.permute.xlu0 %655
      %657 = vrot.lane.b32.xlu0 %v355, 4
      %v658 = vpop.permute.xlu0 %657
      %659 = vrot.lane.b32.xlu0 %v356, 4
      %v660 = vpop.permute.xlu0 %659
      %661 = vrot.lane.b32.xlu0 %v357, 4
      %v662 = vpop.permute.xlu0 %661
      %663 = vrot.lane.b32.xlu0 %v358, 4
      %v664 = vpop.permute.xlu0 %663
      %665 = vrot.lane.b32.xlu0 %v359, 4
      %v666 = vpop.permute.xlu0 %665
      %667 = vrot.lane.b32.xlu0 %v360, 4
      %v668 = vpop.permute.xlu0 %667
      %669 = vrot.lane.b32.xlu0 %v361, 4
      %v670 = vpop.permute.xlu0 %669
      %671 = vrot.lane.b32.xlu0 %v362, 4
      %v672 = vpop.permute.xlu0 %671
      %673 = vrot.lane.b32.xlu0 %v363, 4
      %v674 = vpop.permute.xlu0 %673
      %675 = vrot.lane.b32.xlu0 %v364, 4
      %v676 = vpop.permute.xlu0 %675
      %677 = vrot.lane.b32.xlu0 %v365, 4
      %v678 = vpop.permute.xlu0 %677
      %679 = vrot.lane.b32.xlu0 %v366, 4
      %v680 = vpop.permute.xlu0 %679
      %681 = vrot.lane.b32.xlu0 %v367, 4
      %v682 = vpop.permute.xlu0 %681
      %683 = vrot.lane.b32.xlu0 %v368, 4
      %v684 = vpop.permute.xlu0 %683
      %685 = vrot.lane.b32.xlu0 %v369, 4
      %v686 = vpop.permute.xlu0 %685
      %687 = vrot.lane.b32.xlu0 %v370, 4
      %v688 = vpop.permute.xlu0 %687
      %689 = vrot.lane.b32.xlu0 %v371, 4
      %v690 = vpop.permute.xlu0 %689
      %691 = vrot.lane.b32.xlu0 %v372, 4
      %v692 = vpop.permute.xlu0 %691
      %693 = vrot.lane.b32.xlu0 %v373, 4
      %v694 = vpop.permute.xlu0 %693
      %759 = vrot.lane.b32.xlu0 %v374, 8
      %v760 = vpop.permute.xlu0 %759
      %761 = vrot.lane.b32.xlu0 %v375, 8
      %v762 = vpop.permute.xlu0 %761
      %763 = vrot.lane.b32.xlu0 %v376, 8
      %v764 = vpop.permute.xlu0 %763
      %765 = vrot.lane.b32.xlu0 %v377, 8
      %v766 = vpop.permute.xlu0 %765
      %767 = vrot.lane.b32.xlu0 %v378, 8
      %v768 = vpop.permute.xlu0 %767
      %769 = vrot.lane.b32.xlu0 %v379, 8
      %v770 = vpop.permute.xlu0 %769
      %771 = vrot.lane.b32.xlu0 %v380, 8
      %v772 = vpop.permute.xlu0 %771
      %773 = vrot.lane.b32.xlu0 %v381, 8
      %v774 = vpop.permute.xlu0 %773
      %775 = vrot.lane.b32.xlu0 %v382, 8
      %v776 = vpop.permute.xlu0 %775
      %777 = vrot.lane.b32.xlu0 %v383, 8
      %v778 = vpop.permute.xlu0 %777
      %779 = vrot.lane.b32.xlu0 %v384, 8
      %v780 = vpop.permute.xlu0 %779
      %781 = vrot.lane.b32.xlu0 %v385, 8
      %v782 = vpop.permute.xlu0 %781
      %783 = vrot.lane.b32.xlu0 %v386, 8
      %v784 = vpop.permute.xlu0 %783
      %785 = vrot.lane.b32.xlu0 %v387, 8
      %v786 = vpop.permute.xlu0 %785
      %787 = vrot.lane.b32.xlu0 %v388, 8
      %v788 = vpop.permute.xlu0 %787
      %789 = vrot.lane.b32.xlu0 %v389, 8
      %v790 = vpop.permute.xlu0 %789
      %791 = vrot.lane.b32.xlu0 %v390, 8
      %v792 = vpop.permute.xlu0 %791
      %793 = vrot.lane.b32.xlu0 %v391, 8
      %v794 = vpop.permute.xlu0 %793
      %795 = vrot.lane.b32.xlu0 %v392, 8
      %v796 = vpop.permute.xlu0 %795
      %797 = vrot.lane.b32.xlu0 %v393, 8
      %v798 = vpop.permute.xlu0 %797
      %799 = vrot.lane.b32.xlu0 %v394, 8
      %v800 = vpop.permute.xlu0 %799
      %801 = vrot.lane.b32.xlu0 %v395, 8
      %v802 = vpop.permute.xlu0 %801
      %803 = vrot.lane.b32.xlu0 %v396, 8
      %v804 = vpop.permute.xlu0 %803
      %805 = vrot.lane.b32.xlu0 %v397, 8
      %v806 = vpop.permute.xlu0 %805
      %807 = vrot.lane.b32.xlu0 %v398, 8
      %v808 = vpop.permute.xlu0 %807
      %809 = vrot.lane.b32.xlu0 %v399, 8
      %v810 = vpop.permute.xlu0 %809
      %811 = vrot.lane.b32.xlu0 %v400, 8
      %v812 = vpop.permute.xlu0 %811
      %813 = vrot.lane.b32.xlu0 %v401, 8
      %v814 = vpop.permute.xlu0 %813
      %815 = vrot.lane.b32.xlu0 %v402, 8
      %v816 = vpop.permute.xlu0 %815
      %817 = vrot.lane.b32.xlu0 %v403, 8
      %v818 = vpop.permute.xlu0 %817
      %819 = vrot.lane.b32.xlu0 %v404, 8
      %v820 = vpop.permute.xlu0 %819
      %821 = vrot.lane.b32.xlu0 %v405, 8
      %v822 = vpop.permute.xlu0 %821
      %887 = vrot.lane.b32.xlu0 %v406, 12
      %v888 = vpop.permute.xlu0 %887
      %889 = vrot.lane.b32.xlu0 %v407, 12
      %v890 = vpop.permute.xlu0 %889
      %891 = vrot.lane.b32.xlu0 %v408, 12
      %v892 = vpop.permute.xlu0 %891
      %893 = vrot.lane.b32.xlu0 %v409, 12
      %v894 = vpop.permute.xlu0 %893
      %895 = vrot.lane.b32.xlu0 %v410, 12
      %v896 = vpop.permute.xlu0 %895
      %897 = vrot.lane.b32.xlu0 %v411, 12
      %v898 = vpop.permute.xlu0 %897
      %899 = vrot.lane.b32.xlu0 %v412, 12
      %v900 = vpop.permute.xlu0 %899
      %901 = vrot.lane.b32.xlu0 %v413, 12
      %v902 = vpop.permute.xlu0 %901
      %903 = vrot.lane.b32.xlu0 %v414, 12
      %v904 = vpop.permute.xlu0 %903
      %905 = vrot.lane.b32.xlu0 %v415, 12
      %v906 = vpop.permute.xlu0 %905
      %907 = vrot.lane.b32.xlu0 %v416, 12
      %v908 = vpop.permute.xlu0 %907
      %909 = vrot.lane.b32.xlu0 %v417, 12
      %v910 = vpop.permute.xlu0 %909
      %911 = vrot.lane.b32.xlu0 %v418, 12
      %v912 = vpop.permute.xlu0 %911
      %913 = vrot.lane.b32.xlu0 %v419, 12
      %v914 = vpop.permute.xlu0 %913
      %915 = vrot.lane.b32.xlu0 %v420, 12
      %v916 = vpop.permute.xlu0 %915
      %917 = vrot.lane.b32.xlu0 %v421, 12
      %v918 = vpop.permute.xlu0 %917
      %919 = vrot.lane.b32.xlu0 %v422, 12
      %v920 = vpop.permute.xlu0 %919
      %921 = vrot.lane.b32.xlu0 %v423, 12
      %v922 = vpop.permute.xlu0 %921
      %923 = vrot.lane.b32.xlu0 %v424, 12
      %v924 = vpop.permute.xlu0 %923
      %925 = vrot.lane.b32.xlu0 %v425, 12
      %v926 = vpop.permute.xlu0 %925
      %927 = vrot.lane.b32.xlu0 %v426, 12
      %v928 = vpop.permute.xlu0 %927
      %929 = vrot.lane.b32.xlu0 %v427, 12
      %v930 = vpop.permute.xlu0 %929
      %931 = vrot.lane.b32.xlu0 %v428, 12
      %v932 = vpop.permute.xlu0 %931
      %933 = vrot.lane.b32.xlu0 %v429, 12
      %v934 = vpop.permute.xlu0 %933
      %935 = vrot.lane.b32.xlu0 %v430, 12
      %v936 = vpop.permute.xlu0 %935
      %937 = vrot.lane.b32.xlu0 %v431, 12
      %v938 = vpop.permute.xlu0 %937
      %939 = vrot.lane.b32.xlu0 %v432, 12
      %v940 = vpop.permute.xlu0 %939
      %941 = vrot.lane.b32.xlu0 %v433, 12
      %v942 = vpop.permute.xlu0 %941
      %943 = vrot.lane.b32.xlu0 %v434, 12
      %v944 = vpop.permute.xlu0 %943
      %945 = vrot.lane.b32.xlu0 %v435, 12
      %v946 = vpop.permute.xlu0 %945
      %947 = vrot.lane.b32.xlu0 %v436, 12
      %v948 = vpop.permute.xlu0 %947
      %949 = vrot.lane.b32.xlu0 %v437, 12
      %v950 = vpop.permute.xlu0 %949
      %1015 = vrot.lane.b32.xlu0 %v438, 16
      %v1016 = vpop.permute.xlu0 %1015
      %1017 = vrot.lane.b32.xlu0 %v439, 16
      %v1018 = vpop.permute.xlu0 %1017
      %1019 = vrot.lane.b32.xlu0 %v440, 16
      %v1020 = vpop.permute.xlu0 %1019
      %1021 = vrot.lane.b32.xlu0 %v441, 16
      %v1022 = vpop.permute.xlu0 %1021
      %1023 = vrot.lane.b32.xlu0 %v442, 16
      %v1024 = vpop.permute.xlu0 %1023
      %1025 = vrot.lane.b32.xlu0 %v443, 16
      %v1026 = vpop.permute.xlu0 %1025
      %1027 = vrot.lane.b32.xlu0 %v444, 16
      %v1028 = vpop.permute.xlu0 %1027
      %1029 = vrot.lane.b32.xlu0 %v445, 16
      %v1030 = vpop.permute.xlu0 %1029
      %1031 = vrot.lane.b32.xlu0 %v446, 16
      %v1032 = vpop.permute.xlu0 %1031
      %1033 = vrot.lane.b32.xlu0 %v447, 16
      %v1034 = vpop.permute.xlu0 %1033
      %1035 = vrot.lane.b32.xlu0 %v448, 16
      %v1036 = vpop.permute.xlu0 %1035
      %1037 = vrot.lane.b32.xlu0 %v449, 16
      %v1038 = vpop.permute.xlu0 %1037
      %1039 = vrot.lane.b32.xlu0 %v450, 16
      %v1040 = vpop.permute.xlu0 %1039
      %1041 = vrot.lane.b32.xlu0 %v451, 16
      %v1042 = vpop.permute.xlu0 %1041
      %1043 = vrot.lane.b32.xlu0 %v452, 16
      %v1044 = vpop.permute.xlu0 %1043
      %1045 = vrot.lane.b32.xlu0 %v453, 16
      %v1046 = vpop.permute.xlu0 %1045
      %1047 = vrot.lane.b32.xlu0 %v454, 16
      %v1048 = vpop.permute.xlu0 %1047
      %1049 = vrot.lane.b32.xlu0 %v455, 16
      %v1050 = vpop.permute.xlu0 %1049
      %1051 = vrot.lane.b32.xlu0 %v456, 16
      %v1052 = vpop.permute.xlu0 %1051
      %1053 = vrot.lane.b32.xlu0 %v457, 16
      %v1054 = vpop.permute.xlu0 %1053
      %1055 = vrot.lane.b32.xlu0 %v458, 16
      %v1056 = vpop.permute.xlu0 %1055
      %1057 = vrot.lane.b32.xlu0 %v459, 16
      %v1058 = vpop.permute.xlu0 %1057
      %1059 = vrot.lane.b32.xlu0 %v460, 16
      %v1060 = vpop.permute.xlu0 %1059
      %1061 = vrot.lane.b32.xlu0 %v461, 16
      %v1062 = vpop.permute.xlu0 %1061
      %1063 = vrot.lane.b32.xlu0 %v462, 16
      %v1064 = vpop.permute.xlu0 %1063
      %1065 = vrot.lane.b32.xlu0 %v463, 16
      %v1066 = vpop.permute.xlu0 %1065
      %1067 = vrot.lane.b32.xlu0 %v464, 16
      %v1068 = vpop.permute.xlu0 %1067
      %1069 = vrot.lane.b32.xlu0 %v465, 16
      %v1070 = vpop.permute.xlu0 %1069
      %1071 = vrot.lane.b32.xlu0 %v466, 16
      %v1072 = vpop.permute.xlu0 %1071
      %1073 = vrot.lane.b32.xlu0 %v467, 16
      %v1074 = vpop.permute.xlu0 %1073
      %1075 = vrot.lane.b32.xlu0 %v468, 16
      %v1076 = vpop.permute.xlu0 %1075
      %1077 = vrot.lane.b32.xlu0 %v469, 16
      %v1078 = vpop.permute.xlu0 %1077
      %1143 = vrot.lane.b32.xlu0 %v470, 20
      %v1144 = vpop.permute.xlu0 %1143
      %1145 = vrot.lane.b32.xlu0 %v471, 20
      %v1146 = vpop.permute.xlu0 %1145
      %1147 = vrot.lane.b32.xlu0 %v472, 20
      %v1148 = vpop.permute.xlu0 %1147
      %1149 = vrot.lane.b32.xlu0 %v473, 20
      %v1150 = vpop.permute.xlu0 %1149
      %1151 = vrot.lane.b32.xlu0 %v474, 20
      %v1152 = vpop.permute.xlu0 %1151
      %1153 = vrot.lane.b32.xlu0 %v475, 20
      %v1154 = vpop.permute.xlu0 %1153
      %1155 = vrot.lane.b32.xlu0 %v476, 20
      %v1156 = vpop.permute.xlu0 %1155
      %1157 = vrot.lane.b32.xlu0 %v477, 20
      %v1158 = vpop.permute.xlu0 %1157
      %1159 = vrot.lane.b32.xlu0 %v478, 20
      %v1160 = vpop.permute.xlu0 %1159
      %1161 = vrot.lane.b32.xlu0 %v479, 20
      %v1162 = vpop.permute.xlu0 %1161
      %1163 = vrot.lane.b32.xlu0 %v480, 20
      %v1164 = vpop.permute.xlu0 %1163
      %1165 = vrot.lane.b32.xlu0 %v481, 20
      %v1166 = vpop.permute.xlu0 %1165
      %1167 = vrot.lane.b32.xlu0 %v482, 20
      %v1168 = vpop.permute.xlu0 %1167
      %1169 = vrot.lane.b32.xlu0 %v483, 20
      %v1170 = vpop.permute.xlu0 %1169
      %1171 = vrot.lane.b32.xlu0 %v484, 20
      %v1172 = vpop.permute.xlu0 %1171
      %1173 = vrot.lane.b32.xlu0 %v485, 20
      %v1174 = vpop.permute.xlu0 %1173
      %1175 = vrot.lane.b32.xlu0 %v486, 20
      %v1176 = vpop.permute.xlu0 %1175
      %1177 = vrot.lane.b32.xlu0 %v487, 20
      %v1178 = vpop.permute.xlu0 %1177
      %1179 = vrot.lane.b32.xlu0 %v488, 20
      %v1180 = vpop.permute.xlu0 %1179
      %1181 = vrot.lane.b32.xlu0 %v489, 20
      %v1182 = vpop.permute.xlu0 %1181
      %1183 = vrot.lane.b32.xlu0 %v490, 20
      %v1184 = vpop.permute.xlu0 %1183
      %1185 = vrot.lane.b32.xlu0 %v491, 20
      %v1186 = vpop.permute.xlu0 %1185
      %1187 = vrot.lane.b32.xlu0 %v492, 20
      %v1188 = vpop.permute.xlu0 %1187
      %1189 = vrot.lane.b32.xlu0 %v493, 20
      %v1190 = vpop.permute.xlu0 %1189
      %1191 = vrot.lane.b32.xlu0 %v494, 20
      %v1192 = vpop.permute.xlu0 %1191
      %1193 = vrot.lane.b32.xlu0 %v495, 20
      %v1194 = vpop.permute.xlu0 %1193
      %1195 = vrot.lane.b32.xlu0 %v496, 20
      %v1196 = vpop.permute.xlu0 %1195
      %1197 = vrot.lane.b32.xlu0 %v497, 20
      %v1198 = vpop.permute.xlu0 %1197
      %1199 = vrot.lane.b32.xlu0 %v498, 20
      %v1200 = vpop.permute.xlu0 %1199
      %1201 = vrot.lane.b32.xlu0 %v499, 20
      %v1202 = vpop.permute.xlu0 %1201
      %1203 = vrot.lane.b32.xlu0 %v500, 20
      %v1204 = vpop.permute.xlu0 %1203
      %1205 = vrot.lane.b32.xlu0 %v501, 20
      %v1206 = vpop.permute.xlu0 %1205
      %1271 = vrot.lane.b32.xlu0 %v503, 24
      %v1272 = vpop.permute.xlu0 %1271
      %1273 = vrot.lane.b32.xlu0 %v504, 24
      %v1274 = vpop.permute.xlu0 %1273
      %1275 = vrot.lane.b32.xlu0 %v505, 24
      %v1276 = vpop.permute.xlu0 %1275
      %1277 = vrot.lane.b32.xlu0 %v506, 24
      %v1278 = vpop.permute.xlu0 %1277
      %1279 = vrot.lane.b32.xlu0 %v507, 24
      %v1280 = vpop.permute.xlu0 %1279
      %1281 = vrot.lane.b32.xlu0 %v508, 24
      %v1282 = vpop.permute.xlu0 %1281
      %1283 = vrot.lane.b32.xlu0 %v509, 24
      %v1284 = vpop.permute.xlu0 %1283
      %1285 = vrot.lane.b32.xlu0 %v510, 24
      %v1286 = vpop.permute.xlu0 %1285
      %1287 = vrot.lane.b32.xlu0 %v511, 24
      %v1288 = vpop.permute.xlu0 %1287
      %1289 = vrot.lane.b32.xlu0 %v512, 24
      %v1290 = vpop.permute.xlu0 %1289
      %1291 = vrot.lane.b32.xlu0 %v513, 24
      %v1292 = vpop.permute.xlu0 %1291
      %1293 = vrot.lane.b32.xlu0 %v514, 24
      %v1294 = vpop.permute.xlu0 %1293
      %1295 = vrot.lane.b32.xlu0 %v515, 24
      %v1296 = vpop.permute.xlu0 %1295
      %1297 = vrot.lane.b32.xlu0 %v516, 24
      %v1298 = vpop.permute.xlu0 %1297
      %1299 = vrot.lane.b32.xlu0 %v517, 24
      %v1300 = vpop.permute.xlu0 %1299
      %1301 = vrot.lane.b32.xlu0 %v518, 24
      %v1302 = vpop.permute.xlu0 %1301
      %1303 = vrot.lane.b32.xlu0 %v519, 24
      %v1304 = vpop.permute.xlu0 %1303
      %1305 = vrot.lane.b32.xlu0 %v520, 24
      %v1306 = vpop.permute.xlu0 %1305
      %1307 = vrot.lane.b32.xlu0 %v521, 24
      %v1308 = vpop.permute.xlu0 %1307
      %1309 = vrot.lane.b32.xlu0 %v522, 24
      %v1310 = vpop.permute.xlu0 %1309
      %1311 = vrot.lane.b32.xlu0 %v523, 24
      %v1312 = vpop.permute.xlu0 %1311
      %1313 = vrot.lane.b32.xlu0 %v524, 24
      %v1314 = vpop.permute.xlu0 %1313
      %1315 = vrot.lane.b32.xlu0 %v525, 24
      %v1316 = vpop.permute.xlu0 %1315
      %1317 = vrot.lane.b32.xlu0 %v526, 24
      %v1318 = vpop.permute.xlu0 %1317
      %1319 = vrot.lane.b32.xlu0 %v527, 24
      %v1320 = vpop.permute.xlu0 %1319
      %1321 = vrot.lane.b32.xlu0 %v528, 24
      %v1322 = vpop.permute.xlu0 %1321
      %1323 = vrot.lane.b32.xlu0 %v529, 24
      %v1324 = vpop.permute.xlu0 %1323
      %1325 = vrot.lane.b32.xlu0 %v530, 24
      %v1326 = vpop.permute.xlu0 %1325
      %1327 = vrot.lane.b32.xlu0 %v531, 24
      %v1328 = vpop.permute.xlu0 %1327
      %1329 = vrot.lane.b32.xlu0 %v532, 24
      %v1330 = vpop.permute.xlu0 %1329
      %1331 = vrot.lane.b32.xlu0 %v533, 24
      %v1332 = vpop.permute.xlu0 %1331
      %1333 = vrot.lane.b32.xlu0 %v534, 24
      %v1334 = vpop.permute.xlu0 %1333
      %1399 = vrot.lane.b32.xlu0 %v535, 28
      %v1400 = vpop.permute.xlu0 %1399
      %1401 = vrot.lane.b32.xlu0 %v536, 28
      %v1402 = vpop.permute.xlu0 %1401
      %1403 = vrot.lane.b32.xlu0 %v537, 28
      %v1404 = vpop.permute.xlu0 %1403
      %1405 = vrot.lane.b32.xlu0 %v538, 28
      %v1406 = vpop.permute.xlu0 %1405
      %1407 = vrot.lane.b32.xlu0 %v539, 28
      %v1408 = vpop.permute.xlu0 %1407
      %1409 = vrot.lane.b32.xlu0 %v540, 28
      %v1410 = vpop.permute.xlu0 %1409
      %1411 = vrot.lane.b32.xlu0 %v541, 28
      %v1412 = vpop.permute.xlu0 %1411
      %1413 = vrot.lane.b32.xlu0 %v542, 28
      %v1414 = vpop.permute.xlu0 %1413
      %1415 = vrot.lane.b32.xlu0 %v543, 28
      %v1416 = vpop.permute.xlu0 %1415
      %1417 = vrot.lane.b32.xlu0 %v544, 28
      %v1418 = vpop.permute.xlu0 %1417
      %1419 = vrot.lane.b32.xlu0 %v545, 28
      %v1420 = vpop.permute.xlu0 %1419
      %1421 = vrot.lane.b32.xlu0 %v546, 28
      %v1422 = vpop.permute.xlu0 %1421
      %1423 = vrot.lane.b32.xlu0 %v547, 28
      %v1424 = vpop.permute.xlu0 %1423
      %1425 = vrot.lane.b32.xlu0 %v548, 28
      %v1426 = vpop.permute.xlu0 %1425
      %1427 = vrot.lane.b32.xlu0 %v549, 28
      %v1428 = vpop.permute.xlu0 %1427
      %1429 = vrot.lane.b32.xlu0 %v550, 28
      %v1430 = vpop.permute.xlu0 %1429
      %1431 = vrot.lane.b32.xlu0 %v551, 28
      %v1432 = vpop.permute.xlu0 %1431
      %1433 = vrot.lane.b32.xlu0 %v552, 28
      %v1434 = vpop.permute.xlu0 %1433
      %1435 = vrot.lane.b32.xlu0 %v553, 28
      %v1436 = vpop.permute.xlu0 %1435
      %1437 = vrot.lane.b32.xlu0 %v554, 28
      %v1438 = vpop.permute.xlu0 %1437
      %1439 = vrot.lane.b32.xlu0 %v555, 28
      %v1440 = vpop.permute.xlu0 %1439
      %1441 = vrot.lane.b32.xlu0 %v556, 28
      %v1442 = vpop.permute.xlu0 %1441
      %1443 = vrot.lane.b32.xlu0 %v557, 28
      %v1444 = vpop.permute.xlu0 %1443
      %1445 = vrot.lane.b32.xlu0 %v558, 28
      %v1446 = vpop.permute.xlu0 %1445
      %1447 = vrot.lane.b32.xlu0 %v559, 28
      %v1448 = vpop.permute.xlu0 %1447
      %1449 = vrot.lane.b32.xlu0 %v560, 28
      %v1450 = vpop.permute.xlu0 %1449
      %1451 = vrot.lane.b32.xlu0 %v561, 28
      %v1452 = vpop.permute.xlu0 %1451
      %1453 = vrot.lane.b32.xlu0 %v562, 28
      %v1454 = vpop.permute.xlu0 %1453
      %1455 = vrot.lane.b32.xlu0 %v563, 28
      %v1456 = vpop.permute.xlu0 %1455
      %1457 = vrot.lane.b32.xlu0 %v564, 28
      %v1458 = vpop.permute.xlu0 %1457
      %1459 = vrot.lane.b32.xlu0 %v565, 28
      %v1460 = vpop.permute.xlu0 %1459
      %1461 = vrot.lane.b32.xlu0 %v566, 28
      %v1462 = vpop.permute.xlu0 %1461
      %1527 = vrot.lane.b32.xlu0 %v567, 32
      %v1528 = vpop.permute.xlu0 %1527
      %1529 = vrot.lane.b32.xlu0 %v568, 32
      %v1530 = vpop.permute.xlu0 %1529
      %1531 = vrot.lane.b32.xlu0 %v569, 32
      %v1532 = vpop.permute.xlu0 %1531
      %1533 = vrot.lane.b32.xlu0 %v570, 32
      %v1534 = vpop.permute.xlu0 %1533
      %1535 = vrot.lane.b32.xlu0 %v571, 32
      %v1536 = vpop.permute.xlu0 %1535
      %1537 = vrot.lane.b32.xlu0 %v572, 32
      %v1538 = vpop.permute.xlu0 %1537
      %1539 = vrot.lane.b32.xlu0 %v573, 32
      %v1540 = vpop.permute.xlu0 %1539
      %1541 = vrot.lane.b32.xlu0 %v574, 32
      %v1542 = vpop.permute.xlu0 %1541
      %1543 = vrot.lane.b32.xlu0 %v575, 32
      %v1544 = vpop.permute.xlu0 %1543
      %1545 = vrot.lane.b32.xlu0 %v576, 32
      %v1546 = vpop.permute.xlu0 %1545
      %1547 = vrot.lane.b32.xlu0 %v577, 32
      %v1548 = vpop.permute.xlu0 %1547
      %1549 = vrot.lane.b32.xlu0 %v578, 32
      %v1550 = vpop.permute.xlu0 %1549
      %1551 = vrot.lane.b32.xlu0 %v579, 32
      %v1552 = vpop.permute.xlu0 %1551
      %1553 = vrot.lane.b32.xlu0 %v580, 32
      %v1554 = vpop.permute.xlu0 %1553
      %1555 = vrot.lane.b32.xlu0 %v581, 32
      %v1556 = vpop.permute.xlu0 %1555
      %1557 = vrot.lane.b32.xlu0 %v582, 32
      %v1558 = vpop.permute.xlu0 %1557
      %1559 = vrot.lane.b32.xlu0 %v583, 32
      %v1560 = vpop.permute.xlu0 %1559
      %1561 = vrot.lane.b32.xlu0 %v584, 32
      %v1562 = vpop.permute.xlu0 %1561
      %1563 = vrot.lane.b32.xlu0 %v585, 32
      %v1564 = vpop.permute.xlu0 %1563
      %1565 = vrot.lane.b32.xlu0 %v586, 32
      %v1566 = vpop.permute.xlu0 %1565
      %1567 = vrot.lane.b32.xlu0 %v587, 32
      %v1568 = vpop.permute.xlu0 %1567
      %1569 = vrot.lane.b32.xlu0 %v588, 32
      %v1570 = vpop.permute.xlu0 %1569
      %1571 = vrot.lane.b32.xlu0 %v589, 32
      %v1572 = vpop.permute.xlu0 %1571
      %1573 = vrot.lane.b32.xlu0 %v590, 32
      %v1574 = vpop.permute.xlu0 %1573
      %1575 = vrot.lane.b32.xlu0 %v591, 32
      %v1576 = vpop.permute.xlu0 %1575
      %1577 = vrot.lane.b32.xlu0 %v592, 32
      %v1578 = vpop.permute.xlu0 %1577
      %1579 = vrot.lane.b32.xlu0 %v593, 32
      %v1580 = vpop.permute.xlu0 %1579
      %1581 = vrot.lane.b32.xlu0 %v594, 32
      %v1582 = vpop.permute.xlu0 %1581
      %1583 = vrot.lane.b32.xlu0 %v595, 32
      %v1584 = vpop.permute.xlu0 %1583
      %1585 = vrot.lane.b32.xlu0 %v596, 32
      %v1586 = vpop.permute.xlu0 %1585
      %1587 = vrot.lane.b32.xlu0 %v597, 32
      %v1588 = vpop.permute.xlu0 %1587
      %1589 = vrot.lane.b32.xlu0 %v598, 32
      %v1590 = vpop.permute.xlu0 %1589
      %v1623 = vsel %vm199, %v310, %v632
      %v1624 = vsel %vm199, %v311, %v634
      %v1625 = vsel %vm199, %v312, %v636
      %v1626 = vsel %vm199, %v313, %v638
      %v1627 = vsel %vm199, %v314, %v640
      %v1628 = vsel %vm199, %v315, %v642
      %v1629 = vsel %vm199, %v316, %v644
      %v1630 = vsel %vm199, %v317, %v646
      %v1631 = vsel %vm199, %v318, %v648
      %v1632 = vsel %vm199, %v319, %v650
      %v1633 = vsel %vm199, %v320, %v652
      %v1634 = vsel %vm199, %v321, %v654
      %v1635 = vsel %vm199, %v322, %v656
      %v1636 = vsel %vm199, %v323, %v658
      %v1637 = vsel %vm199, %v324, %v660
      %v1638 = vsel %vm199, %v325, %v662
      %v1639 = vsel %vm199, %v326, %v664
      %v1640 = vsel %vm199, %v327, %v666
      %v1641 = vsel %vm199, %v328, %v668
      %v1642 = vsel %vm199, %v329, %v670
      %v1643 = vsel %vm199, %v330, %v672
      %v1644 = vsel %vm199, %v331, %v674
      %v1645 = vsel %vm199, %v332, %v676
      %v1646 = vsel %vm199, %v333, %v678
      %v1647 = vsel %vm199, %v334, %v680
      %v1648 = vsel %vm199, %v335, %v682
      %v1649 = vsel %vm199, %v336, %v684
      %v1650 = vsel %vm199, %v337, %v686
      %v1651 = vsel %vm199, %v338, %v688
      %v1652 = vsel %vm199, %v339, %v690
      %v1653 = vsel %vm199, %v340, %v692
      %v1654 = vsel %vm199, %v341, %v694
      %vm1655 = vcmask 64512
      %v1656 = vsel %vm1655, %v1623, %v760
      %v1657 = vsel %vm1655, %v1624, %v762
      %v1658 = vsel %vm1655, %v1625, %v764
      %v1659 = vsel %vm1655, %v1626, %v766
      %v1660 = vsel %vm1655, %v1627, %v768
      %v1661 = vsel %vm1655, %v1628, %v770
      %v1662 = vsel %vm1655, %v1629, %v772
      %v1663 = vsel %vm1655, %v1630, %v774
      %v1664 = vsel %vm1655, %v1631, %v776
      %v1665 = vsel %vm1655, %v1632, %v778
      %v1666 = vsel %vm1655, %v1633, %v780
      %v1667 = vsel %vm1655, %v1634, %v782
      %v1668 = vsel %vm1655, %v1635, %v784
      %v1669 = vsel %vm1655, %v1636, %v786
      %v1670 = vsel %vm1655, %v1637, %v788
      %v1671 = vsel %vm1655, %v1638, %v790
      %v1672 = vsel %vm1655, %v1639, %v792
      %v1673 = vsel %vm1655, %v1640, %v794
      %v1674 = vsel %vm1655, %v1641, %v796
      %v1675 = vsel %vm1655, %v1642, %v798
      %v1676 = vsel %vm1655, %v1643, %v800
      %v1677 = vsel %vm1655, %v1644, %v802
      %v1678 = vsel %vm1655, %v1645, %v804
      %v1679 = vsel %vm1655, %v1646, %v806
      %v1680 = vsel %vm1655, %v1647, %v808
      %v1681 = vsel %vm1655, %v1648, %v810
      %v1682 = vsel %vm1655, %v1649, %v812
      %v1683 = vsel %vm1655, %v1650, %v814
      %v1684 = vsel %vm1655, %v1651, %v816
      %v1685 = vsel %vm1655, %v1652, %v818
      %v1686 = vsel %vm1655, %v1653, %v820
      %v1687 = vsel %vm1655, %v1654, %v822
      %vm1688 = vcmask 97280
      %v1689 = vsel %vm1688, %v1656, %v888
      %v1690 = vsel %vm1688, %v1657, %v890
      %v1691 = vsel %vm1688, %v1658, %v892
      %v1692 = vsel %vm1688, %v1659, %v894
      %v1693 = vsel %vm1688, %v1660, %v896
      %v1694 = vsel %vm1688, %v1661, %v898
      %v1695 = vsel %vm1688, %v1662, %v900
      %v1696 = vsel %vm1688, %v1663, %v902
      %v1697 = vsel %vm1688, %v1664, %v904
      %v1698 = vsel %vm1688, %v1665, %v906
      %v1699 = vsel %vm1688, %v1666, %v908
      %v1700 = vsel %vm1688, %v1667, %v910
      %v1701 = vsel %vm1688, %v1668, %v912
      %v1702 = vsel %vm1688, %v1669, %v914
      %v1703 = vsel %vm1688, %v1670, %v916
      %v1704 = vsel %vm1688, %v1671, %v918
      %v1705 = vsel %vm1688, %v1672, %v920
      %v1706 = vsel %vm1688, %v1673, %v922
      %v1707 = vsel %vm1688, %v1674, %v924
      %v1708 = vsel %vm1688, %v1675, %v926
      %v1709 = vsel %vm1688, %v1676, %v928
      %v1710 = vsel %vm1688, %v1677, %v930
      %v1711 = vsel %vm1688, %v1678, %v932
      %v1712 = vsel %vm1688, %v1679, %v934
      %v1713 = vsel %vm1688, %v1680, %v936
      %v1714 = vsel %vm1688, %v1681, %v938
      %v1715 = vsel %vm1688, %v1682, %v940
      %v1716 = vsel %vm1688, %v1683, %v942
      %v1717 = vsel %vm1688, %v1684, %v944
      %v1718 = vsel %vm1688, %v1685, %v946
      %v1719 = vsel %vm1688, %v1686, %v948
      %v1720 = vsel %vm1688, %v1687, %v950
      %vm1721 = vcmask 130048
      %v1722 = vsel %vm1721, %v1689, %v1016
      %v1723 = vsel %vm1721, %v1690, %v1018
      %v1724 = vsel %vm1721, %v1691, %v1020
      %v1725 = vsel %vm1721, %v1692, %v1022
      %v1726 = vsel %vm1721, %v1693, %v1024
      %v1727 = vsel %vm1721, %v1694, %v1026
      %v1728 = vsel %vm1721, %v1695, %v1028
      %v1729 = vsel %vm1721, %v1696, %v1030
      %v1730 = vsel %vm1721, %v1697, %v1032
      %v1731 = vsel %vm1721, %v1698, %v1034
      %v1732 = vsel %vm1721, %v1699, %v1036
      %v1733 = vsel %vm1721, %v1700, %v1038
      %v1734 = vsel %vm1721, %v1701, %v1040
      %v1735 = vsel %vm1721, %v1702, %v1042
      %v1736 = vsel %vm1721, %v1703, %v1044
      %v1737 = vsel %vm1721, %v1704, %v1046
      %v1738 = vsel %vm1721, %v1705, %v1048
      %v1739 = vsel %vm1721, %v1706, %v1050
      %v1740 = vsel %vm1721, %v1707, %v1052
      %v1741 = vsel %vm1721, %v1708, %v1054
      %v1742 = vsel %vm1721, %v1709, %v1056
      %v1743 = vsel %vm1721, %v1710, %v1058
      %v1744 = vsel %vm1721, %v1711, %v1060
      %v1745 = vsel %vm1721, %v1712, %v1062
      %v1746 = vsel %vm1721, %v1713, %v1064
      %v1747 = vsel %vm1721, %v1714, %v1066
      %v1748 = vsel %vm1721, %v1715, %v1068
      %v1749 = vsel %vm1721, %v1716, %v1070
      %v1750 = vsel %vm1721, %v1717, %v1072
      %v1751 = vsel %vm1721, %v1718, %v1074
      %v1752 = vsel %vm1721, %v1719, %v1076
      %v1753 = vsel %vm1721, %v1720, %v1078
      %vm1754 = vcmask 162816
      %v1755 = vsel %vm1754, %v1722, %v1144
      %v1756 = vsel %vm1754, %v1723, %v1146
      %v1757 = vsel %vm1754, %v1724, %v1148
      %v1758 = vsel %vm1754, %v1725, %v1150
      %v1759 = vsel %vm1754, %v1726, %v1152
      %v1760 = vsel %vm1754, %v1727, %v1154
      %v1761 = vsel %vm1754, %v1728, %v1156
      %v1762 = vsel %vm1754, %v1729, %v1158
      %v1763 = vsel %vm1754, %v1730, %v1160
      %v1764 = vsel %vm1754, %v1731, %v1162
      %v1765 = vsel %vm1754, %v1732, %v1164
      %v1766 = vsel %vm1754, %v1733, %v1166
      %v1767 = vsel %vm1754, %v1734, %v1168
      %v1768 = vsel %vm1754, %v1735, %v1170
      %v1769 = vsel %vm1754, %v1736, %v1172
      %v1770 = vsel %vm1754, %v1737, %v1174
      %v1771 = vsel %vm1754, %v1738, %v1176
      %v1772 = vsel %vm1754, %v1739, %v1178
      %v1773 = vsel %vm1754, %v1740, %v1180
      %v1774 = vsel %vm1754, %v1741, %v1182
      %v1775 = vsel %vm1754, %v1742, %v1184
      %v1776 = vsel %vm1754, %v1743, %v1186
      %v1777 = vsel %vm1754, %v1744, %v1188
      %v1778 = vsel %vm1754, %v1745, %v1190
      %v1779 = vsel %vm1754, %v1746, %v1192
      %v1780 = vsel %vm1754, %v1747, %v1194
      %v1781 = vsel %vm1754, %v1748, %v1196
      %v1782 = vsel %vm1754, %v1749, %v1198
      %v1783 = vsel %vm1754, %v1750, %v1200
      %v1784 = vsel %vm1754, %v1751, %v1202
      %v1785 = vsel %vm1754, %v1752, %v1204
      %v1786 = vsel %vm1754, %v1753, %v1206
      %vm1787 = vcmask 195584
      %v1788 = vsel %vm1787, %v1755, %v1272
      %v1789 = vsel %vm1787, %v1756, %v1274
      %v1790 = vsel %vm1787, %v1757, %v1276
      %v1791 = vsel %vm1787, %v1758, %v1278
      %v1792 = vsel %vm1787, %v1759, %v1280
      %v1793 = vsel %vm1787, %v1760, %v1282
      %v1794 = vsel %vm1787, %v1761, %v1284
      %v1795 = vsel %vm1787, %v1762, %v1286
      %v1796 = vsel %vm1787, %v1763, %v1288
      %v1797 = vsel %vm1787, %v1764, %v1290
      %v1798 = vsel %vm1787, %v1765, %v1292
      %v1799 = vsel %vm1787, %v1766, %v1294
      %v1800 = vsel %vm1787, %v1767, %v1296
      %v1801 = vsel %vm1787, %v1768, %v1298
      %v1802 = vsel %vm1787, %v1769, %v1300
      %v1803 = vsel %vm1787, %v1770, %v1302
      %v1804 = vsel %vm1787, %v1771, %v1304
      %v1805 = vsel %vm1787, %v1772, %v1306
      %v1806 = vsel %vm1787, %v1773, %v1308
      %v1807 = vsel %vm1787, %v1774, %v1310
      %v1808 = vsel %vm1787, %v1775, %v1312
      %v1809 = vsel %vm1787, %v1776, %v1314
      %v1810 = vsel %vm1787, %v1777, %v1316
      %v1811 = vsel %vm1787, %v1778, %v1318
      %v1812 = vsel %vm1787, %v1779, %v1320
      %v1813 = vsel %vm1787, %v1780, %v1322
      %v1814 = vsel %vm1787, %v1781, %v1324
      %v1815 = vsel %vm1787, %v1782, %v1326
      %v1816 = vsel %vm1787, %v1783, %v1328
      %v1817 = vsel %vm1787, %v1784, %v1330
      %v1818 = vsel %vm1787, %v1785, %v1332
      %v1819 = vsel %vm1787, %v1786, %v1334
      %vm1820 = vcmask 228352
      %v1821 = vsel %vm1820, %v1788, %v1400
      %v1822 = vsel %vm1820, %v1789, %v1402
      %v1823 = vsel %vm1820, %v1790, %v1404
      %v1824 = vsel %vm1820, %v1791, %v1406
      %v1825 = vsel %vm1820, %v1792, %v1408
      %v1826 = vsel %vm1820, %v1793, %v1410
      %v1827 = vsel %vm1820, %v1794, %v1412
      %v1828 = vsel %vm1820, %v1795, %v1414
      %v1829 = vsel %vm1820, %v1796, %v1416
      %v1830 = vsel %vm1820, %v1797, %v1418
      %v1831 = vsel %vm1820, %v1798, %v1420
      %v1832 = vsel %vm1820, %v1799, %v1422
      %v1833 = vsel %vm1820, %v1800, %v1424
      %v1834 = vsel %vm1820, %v1801, %v1426
      %v1835 = vsel %vm1820, %v1802, %v1428
      %v1836 = vsel %vm1820, %v1803, %v1430
      %v1837 = vsel %vm1820, %v1804, %v1432
      %v1838 = vsel %vm1820, %v1805, %v1434
      %v1839 = vsel %vm1820, %v1806, %v1436
      %v1840 = vsel %vm1820, %v1807, %v1438
      %v1841 = vsel %vm1820, %v1808, %v1440
      %v1842 = vsel %vm1820, %v1809, %v1442
      %v1843 = vsel %vm1820, %v1810, %v1444
      %v1844 = vsel %vm1820, %v1811, %v1446
      %v1845 = vsel %vm1820, %v1812, %v1448
      %v1846 = vsel %vm1820, %v1813, %v1450
      %v1847 = vsel %vm1820, %v1814, %v1452
      %v1848 = vsel %vm1820, %v1815, %v1454
      %v1849 = vsel %vm1820, %v1816, %v1456
      %v1850 = vsel %vm1820, %v1817, %v1458
      %v1851 = vsel %vm1820, %v1818, %v1460
      %v1852 = vsel %vm1820, %v1819, %v1462
      %vm1853 = vcmask 261120
      %v1854 = vsel %vm1853, %v1821, %v1528
      %v1855 = vsel %vm1853, %v1822, %v1530
      %v1856 = vsel %vm1853, %v1823, %v1532
      %v1857 = vsel %vm1853, %v1824, %v1534
      %v1858 = vsel %vm1853, %v1825, %v1536
      %v1859 = vsel %vm1853, %v1826, %v1538
      %v1860 = vsel %vm1853, %v1827, %v1540
      %v1861 = vsel %vm1853, %v1828, %v1542
      %v1862 = vsel %vm1853, %v1829, %v1544
      %v1863 = vsel %vm1853, %v1830, %v1546
      %v1864 = vsel %vm1853, %v1831, %v1548
      %v1865 = vsel %vm1853, %v1832, %v1550
      %v1866 = vsel %vm1853, %v1833, %v1552
      %v1867 = vsel %vm1853, %v1834, %v1554
      %v1868 = vsel %vm1853, %v1835, %v1556
      %v1869 = vsel %vm1853, %v1836, %v1558
      %v1870 = vsel %vm1853, %v1837, %v1560
      %v1871 = vsel %vm1853, %v1838, %v1562
      %v1872 = vsel %vm1853, %v1839, %v1564
      %v1873 = vsel %vm1853, %v1840, %v1566
      %v1874 = vsel %vm1853, %v1841, %v1568
      %v1875 = vsel %vm1853, %v1842, %v1570
      %v1876 = vsel %vm1853, %v1843, %v1572
      %v1877 = vsel %vm1853, %v1844, %v1574
      %v1878 = vsel %vm1853, %v1845, %v1576
      %v1879 = vsel %vm1853, %v1846, %v1578
      %v1880 = vsel %vm1853, %v1847, %v1580
      %v1881 = vsel %vm1853, %v1848, %v1582
      %v1882 = vsel %vm1853, %v1849, %v1584
      %v1883 = vsel %vm1853, %v1850, %v1586
      %v1884 = vsel %vm1853, %v1851, %v1588
      %v1885 = vsel %vm1853, %v1852, %v1590
      %v1886 = vpack.c.bf16 %v1855, %v1854
      %v1887 = vpack.c.bf16 %v1857, %v1856
      %v1888 = vpack.c.bf16 %v1859, %v1858
      %v1889 = vpack.c.bf16 %v1861, %v1860
      %v1890 = vpack.c.bf16 %v1863, %v1862
      %v1891 = vpack.c.bf16 %v1865, %v1864
      %v1892 = vpack.c.bf16 %v1867, %v1866
      %v1893 = vpack.c.bf16 %v1869, %v1868
      %v1894 = vpack.c.bf16 %v1871, %v1870
      %v1895 = vpack.c.bf16 %v1873, %v1872
      %v1896 = vpack.c.bf16 %v1875, %v1874
      %v1897 = vpack.c.bf16 %v1877, %v1876
      %v1898 = vpack.c.bf16 %v1879, %v1878
      %v1899 = vpack.c.bf16 %v1881, %v1880
      %v1900 = vpack.c.bf16 %v1883, %v1882
      %v1901 = vpack.c.bf16 %v1885, %v1884
      %v1902 = vld [vmem:[%s1] sm:$0xf]
      %v1903 = vld [vmem:[%s1 + $0x4] sm:$0xf]
      %v1904 = vld [vmem:[%s1 + $0x8] sm:$0xf]
      %v1905 = vld [vmem:[%s1 + $0xc] sm:$0xf]
      %v1906 = vld [vmem:[%s1 + $0x10] sm:$0x3]
      %v1907 = vld [vmem:[%s2] sm:$0x1]
      %v1909 = vlaneseq
      %v1910 = vshrl.u32 %v1909, 7
      %v1911 = vsub.s32 0, %v1910
      %v1912 = vrot.slane %v1907, %v1911
      %v1919 = vunpack.c.l.b16 %v1902
      %v1920 = vunpack.c.l.b16 %v1903
      %v1921 = vunpack.c.l.b16 %v1904
      %v1922 = vunpack.c.l.b16 %v1905
      %v1923 = vunpack.c.l.b16 %v1906
      %v1924 = vpack.c.b16 %v1920, %v1919
      %v1925 = vpack.c.b16 %v1922, %v1921
      %v1926 = vpack.c.b16 %v1923, %v1923
      %vm1929 = vcmask 293888
      %v1931 = vsel %vm1929, %v1886, 0
      %v1934 = vsel %vm1929, %v1887, 0
      %v1937 = vsel %vm1929, %v1888, 0
      %v1940 = vsel %vm1929, %v1889, 0
      %v1943 = vsel %vm1929, %v1890, 0
      %v1946 = vsel %vm1929, %v1891, 0
      %v1949 = vsel %vm1929, %v1892, 0
      %v1952 = vsel %vm1929, %v1893, 0
      %v1955 = vsel %vm1929, %v1894, 0
      %v1958 = vsel %vm1929, %v1895, 0
      %v1961 = vsel %vm1929, %v1896, 0
      %v1964 = vsel %vm1929, %v1897, 0
      %v1967 = vsel %vm1929, %v1898, 0
      %v1970 = vsel %vm1929, %v1899, 0
      %v1973 = vsel %vm1929, %v1900, 0
      %v1976 = vsel %vm1929, %v1901, 0
      %vm1978 = vcmask 1041408
      %v1980 = vsel %vm1978, %v1926, 0
      %1982 = vmatprep.subr.bf16.mxu0 0
      %1983 = vmatpush1.bf16.msra.mxu0 0
      %1984 = vmatprep.subr.bf16.mxu0 0
      %1985 = vmatpush1.bf16.msra.mxu0 0
      %1986 = vmatprep.subr.bf16.mxu0 0
      %1987 = vmatpush1.bf16.msra.mxu0 0
      %1988 = vmatprep.subr.bf16.mxu0 0
      %1989 = vmatpush1.bf16.msra.mxu0 0
      %1990 = vmatprep.subr.bf16.mxu0 0
      %1991 = vmatpush1.bf16.msra.mxu0 0
      %1992 = vmatprep.subr.bf16.mxu0 0
      %1993 = vmatpush1.bf16.msra.mxu0 %v1980
      %1994 = vmatprep.subr.bf16.mxu0 0
      %1995 = vmatpush1.bf16.msra.mxu0 %v1925
      %1996 = vmatprep.subr.bf16.mxu0 0
      %1997 = vmatpush1.bf16.msra.mxu0 %v1924
      %1998 = vmatprep.subr.bf16.mxu0 0
      %1999 = vmatpush2.bf16.msra.mxu0 0
      %2000 = vmatprep.subr.bf16.mxu0 0
      %2001 = vmatpush2.bf16.msra.mxu0 0
      %2002 = vmatprep.subr.bf16.mxu0 0
      %2003 = vmatpush2.bf16.msra.mxu0 0
      %2004 = vmatprep.subr.bf16.mxu0 0
      %2005 = vmatpush2.bf16.msra.mxu0 0
      %2006 = vmatprep.subr.bf16.mxu0 0
      %2007 = vmatpush2.bf16.msra.mxu0 0
      %2008 = vmatprep.subr.bf16.mxu0 0
      %2009 = vmatpush2.bf16.msra.mxu0 0
      %2010 = vmatprep.subr.bf16.mxu0 0
      %2011 = vmatpush2.bf16.msra.mxu0 0
      %2012 = vmatprep.subr.bf16.mxu0 0
      %2013 = vmatpush2.bf16.msra.mxu0 0
      %2014 = vmatprep.mubr.bf16.mxu0 0
      %2015 = vmatmul.mubr.bf16.gmra.mxu0 %v1931
      %v2016 = vpop.f32.mrf.mxu0
      %v2017 = vadd.f32 %v1912, %v2016
      %v2018 = vpop.f32.mrf.mxu0
      %v2019 = vpop.f32.mrf.mxu0
      %v2020 = vadd.f32 %v1912, %v2019
      %v2021 = vpop.f32.mrf.mxu0
      %2022 = vmatprep.mubr.bf16.mxu0 0
      %2023 = vmatmul.mubr.bf16.gmra.mxu0 %v1934
      %v2024 = vpop.f32.mrf.mxu0
      %v2025 = vadd.f32 %v1912, %v2024
      %v2026 = vpop.f32.mrf.mxu0
      %v2027 = vpop.f32.mrf.mxu0
      %v2028 = vadd.f32 %v1912, %v2027
      %v2029 = vpop.f32.mrf.mxu0
      %2030 = vmatprep.mubr.bf16.mxu0 0
      %2031 = vmatmul.mubr.bf16.gmra.mxu0 %v1937
      %v2032 = vpop.f32.mrf.mxu0
      %v2033 = vadd.f32 %v1912, %v2032
      %v2034 = vpop.f32.mrf.mxu0
      %v2035 = vpop.f32.mrf.mxu0
      %v2036 = vadd.f32 %v1912, %v2035
      %v2037 = vpop.f32.mrf.mxu0
      %2038 = vmatprep.mubr.bf16.mxu0 0
      %2039 = vmatmul.mubr.bf16.gmra.mxu0 %v1940
      %v2040 = vpop.f32.mrf.mxu0
      %v2041 = vadd.f32 %v1912, %v2040
      %v2042 = vpop.f32.mrf.mxu0
      %v2043 = vpop.f32.mrf.mxu0
      %v2044 = vadd.f32 %v1912, %v2043
      %v2045 = vpop.f32.mrf.mxu0
      %2046 = vmatprep.mubr.bf16.mxu0 0
      %2047 = vmatmul.mubr.bf16.gmra.mxu0 %v1943
      %v2048 = vpop.f32.mrf.mxu0
      %v2049 = vadd.f32 %v1912, %v2048
      %v2050 = vpop.f32.mrf.mxu0
      %v2051 = vpop.f32.mrf.mxu0
      %v2052 = vadd.f32 %v1912, %v2051
      %v2053 = vpop.f32.mrf.mxu0
      %2054 = vmatprep.mubr.bf16.mxu0 0
      %2055 = vmatmul.mubr.bf16.gmra.mxu0 %v1946
      %v2056 = vpop.f32.mrf.mxu0
      %v2057 = vadd.f32 %v1912, %v2056
      %v2058 = vpop.f32.mrf.mxu0
      %v2059 = vpop.f32.mrf.mxu0
      %v2060 = vadd.f32 %v1912, %v2059
      %v2061 = vpop.f32.mrf.mxu0
      %2062 = vmatprep.mubr.bf16.mxu0 0
      %2063 = vmatmul.mubr.bf16.gmra.mxu0 %v1949
      %v2064 = vpop.f32.mrf.mxu0
      %v2065 = vadd.f32 %v1912, %v2064
      %v2066 = vpop.f32.mrf.mxu0
      %v2067 = vpop.f32.mrf.mxu0
      %v2068 = vadd.f32 %v1912, %v2067
      %v2069 = vpop.f32.mrf.mxu0
      %2070 = vmatprep.mubr.bf16.mxu0 0
      %2071 = vmatmul.mubr.bf16.gmra.mxu0 %v1952
      %v2072 = vpop.f32.mrf.mxu0
      %v2073 = vadd.f32 %v1912, %v2072
      %v2074 = vpop.f32.mrf.mxu0
      %v2075 = vpop.f32.mrf.mxu0
      %v2076 = vadd.f32 %v1912, %v2075
      %v2077 = vpop.f32.mrf.mxu0
      %2078 = vmatprep.mubr.bf16.mxu0 0
      %2079 = vmatmul.mubr.bf16.gmra.mxu0 %v1955
      %v2080 = vpop.f32.mrf.mxu0
      %v2081 = vadd.f32 %v1912, %v2080
      %v2082 = vpop.f32.mrf.mxu0
      %v2083 = vpop.f32.mrf.mxu0
      %v2084 = vadd.f32 %v1912, %v2083
      %v2085 = vpop.f32.mrf.mxu0
      %2086 = vmatprep.mubr.bf16.mxu0 0
      %2087 = vmatmul.mubr.bf16.gmra.mxu0 %v1958
      %v2088 = vpop.f32.mrf.mxu0
      %v2089 = vadd.f32 %v1912, %v2088
      %v2090 = vpop.f32.mrf.mxu0
      %v2091 = vpop.f32.mrf.mxu0
      %v2092 = vadd.f32 %v1912, %v2091
      %v2093 = vpop.f32.mrf.mxu0
      %2094 = vmatprep.mubr.bf16.mxu0 0
      %2095 = vmatmul.mubr.bf16.gmra.mxu0 %v1961
      %v2096 = vpop.f32.mrf.mxu0
      %v2097 = vadd.f32 %v1912, %v2096
      %v2098 = vpop.f32.mrf.mxu0
      %v2099 = vpop.f32.mrf.mxu0
      %v2100 = vadd.f32 %v1912, %v2099
      %v2101 = vpop.f32.mrf.mxu0
      %2102 = vmatprep.mubr.bf16.mxu0 0
      %2103 = vmatmul.mubr.bf16.gmra.mxu0 %v1964
      %v2104 = vpop.f32.mrf.mxu0
      %v2105 = vadd.f32 %v1912, %v2104
      %v2106 = vpop.f32.mrf.mxu0
      %v2107 = vpop.f32.mrf.mxu0
      %v2108 = vadd.f32 %v1912, %v2107
      %v2109 = vpop.f32.mrf.mxu0
      %2110 = vmatprep.mubr.bf16.mxu0 0
      %2111 = vmatmul.mubr.bf16.gmra.mxu0 %v1967
      %v2112 = vpop.f32.mrf.mxu0
      %v2113 = vadd.f32 %v1912, %v2112
      %v2114 = vpop.f32.mrf.mxu0
      %v2115 = vpop.f32.mrf.mxu0
      %v2116 = vadd.f32 %v1912, %v2115
      %v2117 = vpop.f32.mrf.mxu0
      %2118 = vmatprep.mubr.bf16.mxu0 0
      %2119 = vmatmul.mubr.bf16.gmra.mxu0 %v1970
      %v2120 = vpop.f32.mrf.mxu0
      %v2121 = vadd.f32 %v1912, %v2120
      %v2122 = vpop.f32.mrf.mxu0
      %v2123 = vpop.f32.mrf.mxu0
      %v2124 = vadd.f32 %v1912, %v2123
      %v2125 = vpop.f32.mrf.mxu0
      %2126 = vmatprep.mubr.bf16.mxu0 0
      %2127 = vmatmul.mubr.bf16.gmra.mxu0 %v1973
      %v2128 = vpop.f32.mrf.mxu0
      %v2129 = vadd.f32 %v1912, %v2128
      %v2130 = vpop.f32.mrf.mxu0
      %v2131 = vpop.f32.mrf.mxu0
      %v2132 = vadd.f32 %v1912, %v2131
      %v2133 = vpop.f32.mrf.mxu0
      %2134 = vmatprep.mubr.bf16.mxu0 0
      %2135 = vmatmul.mubr.bf16.gmra.mxu0 %v1976
      %v2136 = vpop.f32.mrf.mxu0
      %v2137 = vadd.f32 %v1912, %v2136
      %v2138 = vpop.f32.mrf.mxu0
      %v2139 = vpop.f32.mrf.mxu0
      %v2140 = vadd.f32 %v1912, %v2139
      %v2141 = vpop.f32.mrf.mxu0
      %2142 = vdwg.mxu0
      %v2143 = vmax.f32 %v2017, 0.0
      %v2144 = vmax.f32 %v2020, 0.0
      %v2145 = vmax.f32 %v2025, 0.0
      %v2146 = vmax.f32 %v2028, 0.0
      %v2147 = vmax.f32 %v2033, 0.0
      %v2148 = vmax.f32 %v2036, 0.0
      %v2149 = vmax.f32 %v2041, 0.0
      %v2150 = vmax.f32 %v2044, 0.0
      %v2151 = vmax.f32 %v2049, 0.0
      %v2152 = vmax.f32 %v2052, 0.0
      %v2153 = vmax.f32 %v2057, 0.0
      %v2154 = vmax.f32 %v2060, 0.0
      %v2155 = vmax.f32 %v2065, 0.0
      %v2156 = vmax.f32 %v2068, 0.0
      %v2157 = vmax.f32 %v2073, 0.0
      %v2158 = vmax.f32 %v2076, 0.0
      %v2159 = vmax.f32 %v2081, 0.0
      %v2160 = vmax.f32 %v2084, 0.0
      %v2161 = vmax.f32 %v2089, 0.0
      %v2162 = vmax.f32 %v2092, 0.0
      %v2163 = vmax.f32 %v2097, 0.0
      %v2164 = vmax.f32 %v2100, 0.0
      %v2165 = vmax.f32 %v2105, 0.0
      %v2166 = vmax.f32 %v2108, 0.0
      %v2167 = vmax.f32 %v2113, 0.0
      %v2168 = vmax.f32 %v2116, 0.0
      %v2169 = vmax.f32 %v2121, 0.0
      %v2170 = vmax.f32 %v2124, 0.0
      %v2171 = vmax.f32 %v2129, 0.0
      %v2172 = vmax.f32 %v2132, 0.0
      %v2173 = vmax.f32 %v2137, 0.0
      %v2174 = vmax.f32 %v2140, 0.0
      %2175 = vst.msk [vmem:[#allocation3] sm:$0xff] %vm1853, 0.0
      %2176 = vst.msk [vmem:[#allocation3 + $0x8] sm:$0xff] %vm1853, 0.0
      %vm2177 = vcmask 254976
      %2178 = vst.msk [vmem:[#allocation3 + $0x10] sm:$0x3] %vm2177, 0.0
      %s2179 = scalar_lea.vmem [#allocation3], 408
      %2180 = vst.msk [vmem:[%s2179] sm:$0xff] %vm1853, 0.0
      %2181 = vst.msk [vmem:[%s2179 + $0x8] sm:$0xff] %vm1853, 0.0
      %2182 = vst.msk [vmem:[%s2179 + $0x10] sm:$0x3] %vm2177, 0.0
      %vm2183 = vcmask 253952
      %2184 = vst.msk [vmem:[#allocation3] sm:$0x1] %vm2183, 0.0
      %2185 = vst.msk [vmem:[#allocation3 + $0x18] sm:$0x1] %vm2183, 0.0
      %2186 = vst.msk [vmem:[#allocation3 + $0x30] sm:$0x1] %vm2183, 0.0
      %2187 = vst.msk [vmem:[#allocation3 + $0x48] sm:$0x1] %vm2183, 0.0
      %2188 = vst.msk [vmem:[#allocation3 + $0x60] sm:$0x1] %vm2183, 0.0
      %2189 = vst.msk [vmem:[#allocation3 + $0x78] sm:$0x1] %vm2183, 0.0
      %2190 = vst.msk [vmem:[#allocation3 + $0x90] sm:$0x1] %vm2183, 0.0
      %2191 = vst.msk [vmem:[#allocation3 + $0xa8] sm:$0x1] %vm2183, 0.0
      %2192 = vst.msk [vmem:[#allocation3 + $0xc0] sm:$0x1] %vm2183, 0.0
      %2193 = vst.msk [vmem:[#allocation3 + $0xd8] sm:$0x1] %vm2183, 0.0
      %2194 = vst.msk [vmem:[#allocation3 + $0xf0] sm:$0x1] %vm2183, 0.0
      %2195 = vst.msk [vmem:[#allocation3 + $0x108] sm:$0x1] %vm2183, 0.0
      %2196 = vst.msk [vmem:[#allocation3 + $0x120] sm:$0x1] %vm2183, 0.0
      %2197 = vst.msk [vmem:[#allocation3 + $0x138] sm:$0x1] %vm2183, 0.0
      %2198 = vst.msk [vmem:[#allocation3 + $0x150] sm:$0x1] %vm2183, 0.0
      %2199 = vst.msk [vmem:[#allocation3 + $0x168] sm:$0x1] %vm2183, 0.0
      %2200 = vst.msk [vmem:[#allocation3 + $0x180] sm:$0x1] %vm2183, 0.0
      %2201 = vst.msk [vmem:[#allocation3 + $0x198] sm:$0x1] %vm2183, 0.0
      %2202 = vst.msk [vmem:[#allocation3 + $0x11] sm:$0x1] %vm2183, 0.0
      %2203 = vst.msk [vmem:[#allocation3 + $0x29] sm:$0x1] %vm2183, 0.0
      %2204 = vst.msk [vmem:[#allocation3 + $0x41] sm:$0x1] %vm2183, 0.0
      %2205 = vst.msk [vmem:[#allocation3 + $0x59] sm:$0x1] %vm2183, 0.0
      %2206 = vst.msk [vmem:[#allocation3 + $0x71] sm:$0x1] %vm2183, 0.0
      %2207 = vst.msk [vmem:[#allocation3 + $0x89] sm:$0x1] %vm2183, 0.0
      %2208 = vst.msk [vmem:[#allocation3 + $0xa1] sm:$0x1] %vm2183, 0.0
      %2209 = vst.msk [vmem:[#allocation3 + $0xb9] sm:$0x1] %vm2183, 0.0
      %2210 = vst.msk [vmem:[#allocation3 + $0xd1] sm:$0x1] %vm2183, 0.0
      %2211 = vst.msk [vmem:[#allocation3 + $0xe9] sm:$0x1] %vm2183, 0.0
      %2212 = vst.msk [vmem:[#allocation3 + $0x101] sm:$0x1] %vm2183, 0.0
      %2213 = vst.msk [vmem:[#allocation3 + $0x119] sm:$0x1] %vm2183, 0.0
      %2214 = vst.msk [vmem:[#allocation3 + $0x131] sm:$0x1] %vm2183, 0.0
      %2215 = vst.msk [vmem:[#allocation3 + $0x149] sm:$0x1] %vm2183, 0.0
      %2216 = vst.msk [vmem:[#allocation3 + $0x161] sm:$0x1] %vm2183, 0.0
      %2217 = vst.msk [vmem:[#allocation3 + $0x179] sm:$0x1] %vm2183, 0.0
      %2218 = vst.msk [vmem:[#allocation3 + $0x191] sm:$0x1] %vm2183, 0.0
      %2219 = vst.msk [vmem:[#allocation3 + $0x1a9] sm:$0x1] %vm2183, 0.0
      %s2220 = scalar_lea.vmem [#allocation3], 24
      %2221 = vst.msk [vmem:[%s2220 + $0x1] sm:$0xff] %vm1853, %v2143
      %2222 = vst.msk [vmem:[%s2220 + $0x9] sm:$0xff] %vm1853, %v2144
      %2223 = vst.msk [vmem:[%s2220 + $0x19] sm:$0xff] %vm1853, %v2145
      %2224 = vst.msk [vmem:[%s2220 + $0x21] sm:$0xff] %vm1853, %v2146
      %2225 = vst.msk [vmem:[%s2220 + $0x31] sm:$0xff] %vm1853, %v2147
      %2226 = vst.msk [vmem:[%s2220 + $0x39] sm:$0xff] %vm1853, %v2148
      %2227 = vst.msk [vmem:[%s2220 + $0x49] sm:$0xff] %vm1853, %v2149
      %2228 = vst.msk [vmem:[%s2220 + $0x51] sm:$0xff] %vm1853, %v2150
      %2229 = vst.msk [vmem:[%s2220 + $0x61] sm:$0xff] %vm1853, %v2151
      %2230 = vst.msk [vmem:[%s2220 + $0x69] sm:$0xff] %vm1853, %v2152
      %2231 = vst.msk [vmem:[%s2220 + $0x79] sm:$0xff] %vm1853, %v2153
      %2232 = vst.msk [vmem:[%s2220 + $0x81] sm:$0xff] %vm1853, %v2154
      %2233 = vst.msk [vmem:[%s2220 + $0x91] sm:$0xff] %vm1853, %v2155
      %2234 = vst.msk [vmem:[%s2220 + $0x99] sm:$0xff] %vm1853, %v2156
      %2235 = vst.msk [vmem:[%s2220 + $0xa9] sm:$0xff] %vm1853, %v2157
      %2236 = vst.msk [vmem:[%s2220 + $0xb1] sm:$0xff] %vm1853, %v2158
      %2237 = vst.msk [vmem:[%s2220 + $0xc1] sm:$0xff] %vm1853, %v2159
      %2238 = vst.msk [vmem:[%s2220 + $0xc9] sm:$0xff] %vm1853, %v2160
      %2239 = vst.msk [vmem:[%s2220 + $0xd9] sm:$0xff] %vm1853, %v2161
      %2240 = vst.msk [vmem:[%s2220 + $0xe1] sm:$0xff] %vm1853, %v2162
      %2241 = vst.msk [vmem:[%s2220 + $0xf1] sm:$0xff] %vm1853, %v2163
      %2242 = vst.msk [vmem:[%s2220 + $0xf9] sm:$0xff] %vm1853, %v2164
      %2243 = vst.msk [vmem:[%s2220 + $0x109] sm:$0xff] %vm1853, %v2165
      %2244 = vst.msk [vmem:[%s2220 + $0x111] sm:$0xff] %vm1853, %v2166
      %2245 = vst.msk [vmem:[%s2220 + $0x121] sm:$0xff] %vm1853, %v2167
      %2246 = vst.msk [vmem:[%s2220 + $0x129] sm:$0xff] %vm1853, %v2168
      %2247 = vst.msk [vmem:[%s2220 + $0x139] sm:$0xff] %vm1853, %v2169
      %2248 = vst.msk [vmem:[%s2220 + $0x141] sm:$0xff] %vm1853, %v2170
      %2249 = vst.msk [vmem:[%s2220 + $0x151] sm:$0xff] %vm1853, %v2171
      %2250 = vst.msk [vmem:[%s2220 + $0x159] sm:$0xff] %vm1853, %v2172
      %2251 = vst.msk [vmem:[%s2220 + $0x169] sm:$0xff] %vm1853, %v2173
      %2252 = vst.msk [vmem:[%s2220 + $0x171] sm:$0xff] %vm1853, %v2174
      %s2253 = scalar_lea.vmem %s2220, 1 [#allocation3]
      %v2254 = vld [vmem:[%s2253] ss:$2 sm:$0xff]
      %s2255 = scalar_lea.vmem %s2220, 49 [#allocation3]
      %v2256 = vld [vmem:[%s2255] ss:$2 sm:$0xff]
      %s2257 = scalar_lea.vmem %s2220, 97 [#allocation3]
      %v2258 = vld [vmem:[%s2257] ss:$2 sm:$0xff]
      %s2259 = scalar_lea.vmem %s2220, 145 [#allocation3]
      %v2260 = vld [vmem:[%s2259] ss:$2 sm:$0xff]
      %s2261 = scalar_lea.vmem %s2220, 193 [#allocation3]
      %v2262 = vld [vmem:[%s2261] ss:$2 sm:$0xff]
      %s2263 = scalar_lea.vmem %s2220, 241 [#allocation3]
      %v2264 = vld [vmem:[%s2263] ss:$2 sm:$0xff]
      %s2265 = scalar_lea.vmem %s2220, 289 [#allocation3]
      %v2266 = vld [vmem:[%s2265] ss:$2 sm:$0xff]
      %s2267 = scalar_lea.vmem %s2220, 337 [#allocation3]
      %v2268 = vld [vmem:[%s2267] ss:$2 sm:$0xff]
      %s2269 = scalar_lea.vmem %s2220, 2 [#allocation3]
      %v2270 = vld [vmem:[%s2269] ss:$2 sm:$0xff]
      %s2271 = scalar_lea.vmem %s2220, 50 [#allocation3]
      %v2272 = vld [vmem:[%s2271] ss:$2 sm:$0xff]
      %s2273 = scalar_lea.vmem %s2220, 98 [#allocation3]
      %v2274 = vld [vmem:[%s2273] ss:$2 sm:$0xff]
      %s2275 = scalar_lea.vmem %s2220, 146 [#allocation3]
      %v2276 = vld [vmem:[%s2275] ss:$2 sm:$0xff]
      %s2277 = scalar_lea.vmem %s2220, 194 [#allocation3]
      %v2278 = vld [vmem:[%s2277] ss:$2 sm:$0xff]
      %s2279 = scalar_lea.vmem %s2220, 242 [#allocation3]
      %v2280 = vld [vmem:[%s2279] ss:$2 sm:$0xff]
      %s2281 = scalar_lea.vmem %s2220, 290 [#allocation3]
      %v2282 = vld [vmem:[%s2281] ss:$2 sm:$0xff]
      %s2283 = scalar_lea.vmem %s2220, 338 [#allocation3]
      %v2284 = vld [vmem:[%s2283] ss:$2 sm:$0xff]
      %s2285 = scalar_lea.vmem [#allocation3], 48
      %s2286 = scalar_lea.vmem %s2285, 1 [#allocation3]
      %v2287 = vld [vmem:[%s2286] ss:$2 sm:$0xff]
      %s2288 = scalar_lea.vmem %s2285, 49 [#allocation3]
      %v2289 = vld [vmem:[%s2288] ss:$2 sm:$0xff]
      %s2290 = scalar_lea.vmem %s2285, 97 [#allocation3]
      %v2291 = vld [vmem:[%s2290] ss:$2 sm:$0xff]
      %s2292 = scalar_lea.vmem %s2285, 145 [#allocation3]
      %v2293 = vld [vmem:[%s2292] ss:$2 sm:$0xff]
      %s2294 = scalar_lea.vmem %s2285, 193 [#allocation3]
      %v2295 = vld [vmem:[%s2294] ss:$2 sm:$0xff]
      %s2296 = scalar_lea.vmem %s2285, 241 [#allocation3]
      %v2297 = vld [vmem:[%s2296] ss:$2 sm:$0xff]
      %s2298 = scalar_lea.vmem %s2285, 289 [#allocation3]
      %v2299 = vld [vmem:[%s2298] ss:$2 sm:$0xff]
      %s2300 = scalar_lea.vmem %s2285, 337 [#allocation3]
      %v2301 = vld [vmem:[%s2300] ss:$2 sm:$0xff]
      %s2302 = scalar_lea.vmem %s2285, 2 [#allocation3]
      %v2303 = vld [vmem:[%s2302] ss:$2 sm:$0xff]
      %s2304 = scalar_lea.vmem %s2285, 50 [#allocation3]
      %v2305 = vld [vmem:[%s2304] ss:$2 sm:$0xff]
      %s2306 = scalar_lea.vmem %s2285, 98 [#allocation3]
      %v2307 = vld [vmem:[%s2306] ss:$2 sm:$0xff]
      %s2308 = scalar_lea.vmem %s2285, 146 [#allocation3]
      %v2309 = vld [vmem:[%s2308] ss:$2 sm:$0xff]
      %s2310 = scalar_lea.vmem %s2285, 194 [#allocation3]
      %v2311 = vld [vmem:[%s2310] ss:$2 sm:$0xff]
      %s2312 = scalar_lea.vmem %s2285, 242 [#allocation3]
      %v2313 = vld [vmem:[%s2312] ss:$2 sm:$0xff]
      %s2314 = scalar_lea.vmem %s2285, 290 [#allocation3]
      %v2315 = vld [vmem:[%s2314] ss:$2 sm:$0xff]
      %s2316 = scalar_lea.vmem %s2285, 338 [#allocation3]
      %v2317 = vld [vmem:[%s2316] ss:$2 sm:$0xff]
      %2318 = vst.msk [vmem:[#allocation4] sm:$0xff] %vm1853, 0.0
      %2319 = vst.msk [vmem:[#allocation4 + $0x8] sm:$0x3] %vm2177, 0.0
      %s2320 = scalar_lea.vmem [#allocation4], 144
      %2321 = vst.msk [vmem:[%s2320] sm:$0xff] %vm1853, 0.0
      %2322 = vst.msk [vmem:[%s2320 + $0x8] sm:$0x3] %vm2177, 0.0
      %2323 = vst.msk [vmem:[#allocation4] sm:$0x1] %vm2183, 0.0
      %2324 = vst.msk [vmem:[#allocation4 + $0x10] sm:$0x1] %vm2183, 0.0
      %2325 = vst.msk [vmem:[#allocation4 + $0x20] sm:$0x1] %vm2183, 0.0
      %2326 = vst.msk [vmem:[#allocation4 + $0x30] sm:$0x1] %vm2183, 0.0
      %2327 = vst.msk [vmem:[#allocation4 + $0x40] sm:$0x1] %vm2183, 0.0
      %2328 = vst.msk [vmem:[#allocation4 + $0x50] sm:$0x1] %vm2183, 0.0
      %2329 = vst.msk [vmem:[#allocation4 + $0x60] sm:$0x1] %vm2183, 0.0
      %2330 = vst.msk [vmem:[#allocation4 + $0x70] sm:$0x1] %vm2183, 0.0
      %2331 = vst.msk [vmem:[#allocation4 + $0x80] sm:$0x1] %vm2183, 0.0
      %2332 = vst.msk [vmem:[#allocation4 + $0x90] sm:$0x1] %vm2183, 0.0
      %2333 = vst.msk [vmem:[#allocation4 + $0x9] sm:$0x1] %vm2183, 0.0
      %2334 = vst.msk [vmem:[#allocation4 + $0x19] sm:$0x1] %vm2183, 0.0
      %2335 = vst.msk [vmem:[#allocation4 + $0x29] sm:$0x1] %vm2183, 0.0
      %2336 = vst.msk [vmem:[#allocation4 + $0x39] sm:$0x1] %vm2183, 0.0
      %2337 = vst.msk [vmem:[#allocation4 + $0x49] sm:$0x1] %vm2183, 0.0
      %2338 = vst.msk [vmem:[#allocation4 + $0x59] sm:$0x1] %vm2183, 0.0
      %2339 = vst.msk [vmem:[#allocation4 + $0x69] sm:$0x1] %vm2183, 0.0
      %2340 = vst.msk [vmem:[#allocation4 + $0x79] sm:$0x1] %vm2183, 0.0
      %2341 = vst.msk [vmem:[#allocation4 + $0x89] sm:$0x1] %vm2183, 0.0
      %2342 = vst.msk [vmem:[#allocation4 + $0x99] sm:$0x1] %vm2183, 0.0
      %v2343 = vmax.f32 %v2254, %v2270
      %v2344 = vmax.f32 %v2256, %v2272
      %v2345 = vmax.f32 %v2258, %v2274
      %v2346 = vmax.f32 %v2260, %v2276
      %v2347 = vmax.f32 %v2262, %v2278
      %v2348 = vmax.f32 %v2264, %v2280
      %v2349 = vmax.f32 %v2266, %v2282
      %v2350 = vmax.f32 %v2268, %v2284
      %v2351 = vmax.f32 %v2287, %v2303
      %v2352 = vmax.f32 %v2289, %v2305
      %v2353 = vmax.f32 %v2291, %v2307
      %v2354 = vmax.f32 %v2293, %v2309
      %v2355 = vmax.f32 %v2295, %v2311
      %v2356 = vmax.f32 %v2297, %v2313
      %v2357 = vmax.f32 %v2299, %v2315
      %v2358 = vmax.f32 %v2301, %v2317
      %v2359 = vmax.f32 %v2343, %v2351
      %v2360 = vmax.f32 %v2344, %v2352
      %v2361 = vmax.f32 %v2345, %v2353
      %v2362 = vmax.f32 %v2346, %v2354
      %v2363 = vmax.f32 %v2347, %v2355
      %v2364 = vmax.f32 %v2348, %v2356
      %v2365 = vmax.f32 %v2349, %v2357
      %v2366 = vmax.f32 %v2350, %v2358
      %s2367 = scalar_lea.vmem [#allocation4], 16
      %2368 = vst.msk [vmem:[%s2367 + $0x1] sm:$0xff] %vm1853, %v2359
      %2369 = vst.msk [vmem:[%s2367 + $0x11] sm:$0xff] %vm1853, %v2360
      %2370 = vst.msk [vmem:[%s2367 + $0x21] sm:$0xff] %vm1853, %v2361
      %2371 = vst.msk [vmem:[%s2367 + $0x31] sm:$0xff] %vm1853, %v2362
      %2372 = vst.msk [vmem:[%s2367 + $0x41] sm:$0xff] %vm1853, %v2363
      %2373 = vst.msk [vmem:[%s2367 + $0x51] sm:$0xff] %vm1853, %v2364
      %2374 = vst.msk [vmem:[%s2367 + $0x61] sm:$0xff] %vm1853, %v2365
      %2375 = vst.msk [vmem:[%s2367 + $0x71] sm:$0xff] %vm1853, %v2366
      %v2376 = vld [vmem:[#allocation4] sm:$0xff]
      %v2377 = vld [vmem:[#allocation4 + $0x10] sm:$0xff]
      %v2378 = vld [vmem:[#allocation4 + $0x20] sm:$0xff]
      %v2379 = vld [vmem:[#allocation4 + $0x30] sm:$0xff]
      %v2380 = vld [vmem:[#allocation4 + $0x40] sm:$0xff]
      %v2381 = vld [vmem:[#allocation4 + $0x50] sm:$0xff]
      %v2382 = vld [vmem:[#allocation4 + $0x60] sm:$0xff]
      %v2383 = vld [vmem:[#allocation4 + $0x70] sm:$0xff]
      %v2384 = vld [vmem:[#allocation4 + $0x1] sm:$0xff]
      %v2385 = vld [vmem:[#allocation4 + $0x11] sm:$0xff]
      %v2386 = vld [vmem:[#allocation4 + $0x21] sm:$0xff]
      %v2387 = vld [vmem:[#allocation4 + $0x31] sm:$0xff]
      %v2388 = vld [vmem:[#allocation4 + $0x41] sm:$0xff]
      %v2389 = vld [vmem:[#allocation4 + $0x51] sm:$0xff]
      %v2390 = vld [vmem:[#allocation4 + $0x61] sm:$0xff]
      %v2391 = vld [vmem:[#allocation4 + $0x71] sm:$0xff]
      %v2392 = vld [vmem:[#allocation4 + $0x2] sm:$0xff]
      %v2393 = vld [vmem:[#allocation4 + $0x12] sm:$0xff]
      %v2394 = vld [vmem:[#allocation4 + $0x22] sm:$0xff]
      %v2395 = vld [vmem:[#allocation4 + $0x32] sm:$0xff]
      %v2396 = vld [vmem:[#allocation4 + $0x42] sm:$0xff]
      %v2397 = vld [vmem:[#allocation4 + $0x52] sm:$0xff]
      %v2398 = vld [vmem:[#allocation4 + $0x62] sm:$0xff]
      %v2399 = vld [vmem:[#allocation4 + $0x72] sm:$0xff]
      %v2400 = vld [vmem:[%s2367] sm:$0xff]
      %v2401 = vld [vmem:[%s2367 + $0x10] sm:$0xff]
      %v2402 = vld [vmem:[%s2367 + $0x20] sm:$0xff]
      %v2403 = vld [vmem:[%s2367 + $0x30] sm:$0xff]
      %v2404 = vld [vmem:[%s2367 + $0x40] sm:$0xff]
      %v2405 = vld [vmem:[%s2367 + $0x50] sm:$0xff]
      %v2406 = vld [vmem:[%s2367 + $0x60] sm:$0xff]
      %v2407 = vld [vmem:[%s2367 + $0x70] sm:$0xff]
      %v2408 = vld [vmem:[%s2367 + $0x1] sm:$0xff]
      %v2409 = vld [vmem:[%s2367 + $0x11] sm:$0xff]
      %v2410 = vld [vmem:[%s2367 + $0x21] sm:$0xff]
      %v2411 = vld [vmem:[%s2367 + $0x31] sm:$0xff]
      %v2412 = vld [vmem:[%s2367 + $0x41] sm:$0xff]
      %v2413 = vld [vmem:[%s2367 + $0x51] sm:$0xff]
      %v2414 = vld [vmem:[%s2367 + $0x61] sm:$0xff]
      %v2415 = vld [vmem:[%s2367 + $0x71] sm:$0xff]
      %v2416 = vld [vmem:[%s2367 + $0x2] sm:$0xff]
      %v2417 = vld [vmem:[%s2367 + $0x12] sm:$0xff]
      %v2418 = vld [vmem:[%s2367 + $0x22] sm:$0xff]
      %v2419 = vld [vmem:[%s2367 + $0x32] sm:$0xff]
      %v2420 = vld [vmem:[%s2367 + $0x42] sm:$0xff]
      %v2421 = vld [vmem:[%s2367 + $0x52] sm:$0xff]
      %v2422 = vld [vmem:[%s2367 + $0x62] sm:$0xff]
      %v2423 = vld [vmem:[%s2367 + $0x72] sm:$0xff]
      %s2424 = scalar_lea.vmem [#allocation4], 32
      %v2425 = vld [vmem:[%s2424] sm:$0xff]
      %v2426 = vld [vmem:[%s2424 + $0x10] sm:$0xff]
      %v2427 = vld [vmem:[%s2424 + $0x20] sm:$0xff]
      %v2428 = vld [vmem:[%s2424 + $0x30] sm:$0xff]
      %v2429 = vld [vmem:[%s2424 + $0x40] sm:$0xff]
      %v2430 = vld [vmem:[%s2424 + $0x50] sm:$0xff]
      %v2431 = vld [vmem:[%s2424 + $0x60] sm:$0xff]
      %v2432 = vld [vmem:[%s2424 + $0x70] sm:$0xff]
      %v2433 = vld [vmem:[%s2424 + $0x1] sm:$0xff]
      %v2434 = vld [vmem:[%s2424 + $0x11] sm:$0xff]
      %v2435 = vld [vmem:[%s2424 + $0x21] sm:$0xff]
      %v2436 = vld [vmem:[%s2424 + $0x31] sm:$0xff]
      %v2437 = vld [vmem:[%s2424 + $0x41] sm:$0xff]
      %v2438 = vld [vmem:[%s2424 + $0x51] sm:$0xff]
      %v2439 = vld [vmem:[%s2424 + $0x61] sm:$0xff]
      %v2440 = vld [vmem:[%s2424 + $0x71] sm:$0xff]
      %v2441 = vld [vmem:[%s2424 + $0x2] sm:$0xff]
      %v2442 = vld [vmem:[%s2424 + $0x12] sm:$0xff]
      %v2443 = vld [vmem:[%s2424 + $0x22] sm:$0xff]
      %v2444 = vld [vmem:[%s2424 + $0x32] sm:$0xff]
      %v2445 = vld [vmem:[%s2424 + $0x42] sm:$0xff]
      %v2446 = vld [vmem:[%s2424 + $0x52] sm:$0xff]
      %v2447 = vld [vmem:[%s2424 + $0x62] sm:$0xff]
      %v2448 = vld [vmem:[%s2424 + $0x72] sm:$0xff]
      %2457 = vrot.lane.b32.xlu0 %v2384, 32
      %v2458 = vpop.permute.xlu0 %2457
      %2459 = vrot.lane.b32.xlu0 %v2385, 32
      %v2460 = vpop.permute.xlu0 %2459
      %2461 = vrot.lane.b32.xlu0 %v2386, 32
      %v2462 = vpop.permute.xlu0 %2461
      %2463 = vrot.lane.b32.xlu0 %v2387, 32
      %v2464 = vpop.permute.xlu0 %2463
      %2465 = vrot.lane.b32.xlu0 %v2388, 32
      %v2466 = vpop.permute.xlu0 %2465
      %2467 = vrot.lane.b32.xlu0 %v2389, 32
      %v2468 = vpop.permute.xlu0 %2467
      %2469 = vrot.lane.b32.xlu0 %v2390, 32
      %v2470 = vpop.permute.xlu0 %2469
      %2471 = vrot.lane.b32.xlu0 %v2391, 32
      %v2472 = vpop.permute.xlu0 %2471
      %2489 = vrot.lane.b32.xlu0 %v2392, 64
      %v2490 = vpop.permute.xlu0 %2489
      %2491 = vrot.lane.b32.xlu0 %v2393, 64
      %v2492 = vpop.permute.xlu0 %2491
      %2493 = vrot.lane.b32.xlu0 %v2394, 64
      %v2494 = vpop.permute.xlu0 %2493
      %2495 = vrot.lane.b32.xlu0 %v2395, 64
      %v2496 = vpop.permute.xlu0 %2495
      %2497 = vrot.lane.b32.xlu0 %v2396, 64
      %v2498 = vpop.permute.xlu0 %2497
      %2499 = vrot.lane.b32.xlu0 %v2397, 64
      %v2500 = vpop.permute.xlu0 %2499
      %2501 = vrot.lane.b32.xlu0 %v2398, 64
      %v2502 = vpop.permute.xlu0 %2501
      %2503 = vrot.lane.b32.xlu0 %v2399, 64
      %v2504 = vpop.permute.xlu0 %2503
      %2521 = vrot.lane.b32.xlu0 %v2400, 96
      %v2522 = vpop.permute.xlu0 %2521
      %2523 = vrot.lane.b32.xlu0 %v2401, 96
      %v2524 = vpop.permute.xlu0 %2523
      %2525 = vrot.lane.b32.xlu0 %v2402, 96
      %v2526 = vpop.permute.xlu0 %2525
      %2527 = vrot.lane.b32.xlu0 %v2403, 96
      %v2528 = vpop.permute.xlu0 %2527
      %2529 = vrot.lane.b32.xlu0 %v2404, 96
      %v2530 = vpop.permute.xlu0 %2529
      %2531 = vrot.lane.b32.xlu0 %v2405, 96
      %v2532 = vpop.permute.xlu0 %2531
      %2533 = vrot.lane.b32.xlu0 %v2406, 96
      %v2534 = vpop.permute.xlu0 %2533
      %2535 = vrot.lane.b32.xlu0 %v2407, 96
      %v2536 = vpop.permute.xlu0 %2535
      %2553 = vrot.lane.b32.xlu0 %v2416, 32
      %v2554 = vpop.permute.xlu0 %2553
      %2555 = vrot.lane.b32.xlu0 %v2417, 32
      %v2556 = vpop.permute.xlu0 %2555
      %2557 = vrot.lane.b32.xlu0 %v2418, 32
      %v2558 = vpop.permute.xlu0 %2557
      %2559 = vrot.lane.b32.xlu0 %v2419, 32
      %v2560 = vpop.permute.xlu0 %2559
      %2561 = vrot.lane.b32.xlu0 %v2420, 32
      %v2562 = vpop.permute.xlu0 %2561
      %2563 = vrot.lane.b32.xlu0 %v2421, 32
      %v2564 = vpop.permute.xlu0 %2563
      %2565 = vrot.lane.b32.xlu0 %v2422, 32
      %v2566 = vpop.permute.xlu0 %2565
      %2567 = vrot.lane.b32.xlu0 %v2423, 32
      %v2568 = vpop.permute.xlu0 %2567
      %2585 = vrot.lane.b32.xlu0 %v2425, 64
      %v2586 = vpop.permute.xlu0 %2585
      %2587 = vrot.lane.b32.xlu0 %v2426, 64
      %v2588 = vpop.permute.xlu0 %2587
      %2589 = vrot.lane.b32.xlu0 %v2427, 64
      %v2590 = vpop.permute.xlu0 %2589
      %2591 = vrot.lane.b32.xlu0 %v2428, 64
      %v2592 = vpop.permute.xlu0 %2591
      %2593 = vrot.lane.b32.xlu0 %v2429, 64
      %v2594 = vpop.permute.xlu0 %2593
      %2595 = vrot.lane.b32.xlu0 %v2430, 64
      %v2596 = vpop.permute.xlu0 %2595
      %2597 = vrot.lane.b32.xlu0 %v2431, 64
      %v2598 = vpop.permute.xlu0 %2597
      %2599 = vrot.lane.b32.xlu0 %v2432, 64
      %v2600 = vpop.permute.xlu0 %2599
      %2617 = vrot.lane.b32.xlu0 %v2433, 96
      %v2618 = vpop.permute.xlu0 %2617
      %2619 = vrot.lane.b32.xlu0 %v2434, 96
      %v2620 = vpop.permute.xlu0 %2619
      %2621 = vrot.lane.b32.xlu0 %v2435, 96
      %v2622 = vpop.permute.xlu0 %2621
      %2623 = vrot.lane.b32.xlu0 %v2436, 96
      %v2624 = vpop.permute.xlu0 %2623
      %2625 = vrot.lane.b32.xlu0 %v2437, 96
      %v2626 = vpop.permute.xlu0 %2625
      %2627 = vrot.lane.b32.xlu0 %v2438, 96
      %v2628 = vpop.permute.xlu0 %2627
      %2629 = vrot.lane.b32.xlu0 %v2439, 96
      %v2630 = vpop.permute.xlu0 %2629
      %2631 = vrot.lane.b32.xlu0 %v2440, 96
      %v2632 = vpop.permute.xlu0 %2631
      %v2641 = vsel %vm1853, %v2376, %v2458
      %v2642 = vsel %vm1853, %v2377, %v2460
      %v2643 = vsel %vm1853, %v2378, %v2462
      %v2644 = vsel %vm1853, %v2379, %v2464
      %v2645 = vsel %vm1853, %v2380, %v2466
      %v2646 = vsel %vm1853, %v2381, %v2468
      %v2647 = vsel %vm1853, %v2382, %v2470
      %v2648 = vsel %vm1853, %v2383, %v2472
      %vm2649 = vcmask 523264
      %v2650 = vsel %vm2649, %v2641, %v2490
      %v2651 = vsel %vm2649, %v2642, %v2492
      %v2652 = vsel %vm2649, %v2643, %v2494
      %v2653 = vsel %vm2649, %v2644, %v2496
      %v2654 = vsel %vm2649, %v2645, %v2498
      %v2655 = vsel %vm2649, %v2646, %v2500
      %v2656 = vsel %vm2649, %v2647, %v2502
      %v2657 = vsel %vm2649, %v2648, %v2504
      %vm2658 = vcmask 785408
      %v2659 = vsel %vm2658, %v2650, %v2522
      %v2660 = vsel %vm2658, %v2651, %v2524
      %v2661 = vsel %vm2658, %v2652, %v2526
      %v2662 = vsel %vm2658, %v2653, %v2528
      %v2663 = vsel %vm2658, %v2654, %v2530
      %v2664 = vsel %vm2658, %v2655, %v2532
      %v2665 = vsel %vm2658, %v2656, %v2534
      %v2666 = vsel %vm2658, %v2657, %v2536
      %v2667 = vsel %vm1853, %v2408, %v2554
      %v2668 = vsel %vm1853, %v2409, %v2556
      %v2669 = vsel %vm1853, %v2410, %v2558
      %v2670 = vsel %vm1853, %v2411, %v2560
      %v2671 = vsel %vm1853, %v2412, %v2562
      %v2672 = vsel %vm1853, %v2413, %v2564
      %v2673 = vsel %vm1853, %v2414, %v2566
      %v2674 = vsel %vm1853, %v2415, %v2568
      %v2675 = vsel %vm2649, %v2667, %v2586
      %v2676 = vsel %vm2649, %v2668, %v2588
      %v2677 = vsel %vm2649, %v2669, %v2590
      %v2678 = vsel %vm2649, %v2670, %v2592
      %v2679 = vsel %vm2649, %v2671, %v2594
      %v2680 = vsel %vm2649, %v2672, %v2596
      %v2681 = vsel %vm2649, %v2673, %v2598
      %v2682 = vsel %vm2649, %v2674, %v2600
      %v2683 = vsel %vm2658, %v2675, %v2618
      %v2684 = vsel %vm2658, %v2676, %v2620
      %v2685 = vsel %vm2658, %v2677, %v2622
      %v2686 = vsel %vm2658, %v2678, %v2624
      %v2687 = vsel %vm2658, %v2679, %v2626
      %v2688 = vsel %vm2658, %v2680, %v2628
      %v2689 = vsel %vm2658, %v2681, %v2630
      %v2690 = vsel %vm2658, %v2682, %v2632
      %v2691 = vpack.c.bf16 %v2660, %v2659
      %v2692 = vpack.c.bf16 %v2684, %v2683
      %v2693 = vpack.c.bf16 %v2442, %v2441
      %v2694 = vpack.c.bf16 %v2662, %v2661
      %v2695 = vpack.c.bf16 %v2686, %v2685
      %v2696 = vpack.c.bf16 %v2444, %v2443
      %v2697 = vpack.c.bf16 %v2664, %v2663
      %v2698 = vpack.c.bf16 %v2688, %v2687
      %v2699 = vpack.c.bf16 %v2446, %v2445
      %v2700 = vpack.c.bf16 %v2666, %v2665
      %v2701 = vpack.c.bf16 %v2690, %v2689
      %v2702 = vpack.c.bf16 %v2448, %v2447
      %s2703 = scalar_lea.vmem %s1, 288
      %v2704 = vld [vmem:[%s2703] sm:$0xf]
      %v2705 = vld [vmem:[%s2703 + $0x4] sm:$0xf]
      %v2706 = vld [vmem:[%s2703 + $0x8] sm:$0xf]
      %v2707 = vld [vmem:[%s2703 + $0xc] sm:$0xf]
      %v2708 = vld [vmem:[%s2703 + $0x10] sm:$0xf]
      %v2709 = vld [vmem:[%s2703 + $0x14] sm:$0xf]
      %v2710 = vld [vmem:[%s2703 + $0x18] sm:$0xf]
      %v2711 = vld [vmem:[%s2703 + $0x1c] sm:$0xf]
      %v2712 = vld [vmem:[%s2703 + $0x20] sm:$0xf]
      %v2713 = vld [vmem:[%s2703 + $0x24] sm:$0xf]
      %v2714 = vld [vmem:[%s2703 + $0x28] sm:$0xf]
      %v2715 = vld [vmem:[%s2703 + $0x2c] sm:$0xf]
      %v2716 = vld [vmem:[%s2703 + $0x30] sm:$0xf]
      %v2717 = vld [vmem:[%s2703 + $0x34] sm:$0xf]
      %v2718 = vld [vmem:[%s2703 + $0x38] sm:$0xf]
      %v2719 = vld [vmem:[%s2703 + $0x3c] sm:$0xf]
      %v2720 = vld [vmem:[%s2703 + $0x40] sm:$0xf]
      %v2721 = vld [vmem:[%s2703 + $0x44] sm:$0xf]
      %v2722 = vld [vmem:[%s2703 + $0x48] sm:$0xf]
      %v2723 = vld [vmem:[%s2703 + $0x4c] sm:$0xf]
      %v2724 = vld [vmem:[%s2703 + $0x50] sm:$0xf]
      %v2725 = vld [vmem:[%s2703 + $0x54] sm:$0xf]
      %v2726 = vld [vmem:[%s2703 + $0x58] sm:$0xf]
      %v2727 = vld [vmem:[%s2703 + $0x5c] sm:$0xf]
      %v2728 = vld [vmem:[%s2703 + $0x60] sm:$0xf]
      %v2729 = vld [vmem:[%s2703 + $0x64] sm:$0xf]
      %v2730 = vld [vmem:[%s2703 + $0x68] sm:$0xf]
      %v2731 = vld [vmem:[%s2703 + $0x6c] sm:$0xf]
      %v2732 = vld [vmem:[%s2703 + $0x70] sm:$0xf]
      %v2733 = vld [vmem:[%s2703 + $0x74] sm:$0xf]
      %v2734 = vld [vmem:[%s2703 + $0x78] sm:$0xf]
      %v2735 = vld [vmem:[%s2703 + $0x7c] sm:$0xf]
      %v2736 = vld [vmem:[%s2703 + $0x80] sm:$0xf]
      %v2737 = vld [vmem:[%s2703 + $0x84] sm:$0xf]
      %v2738 = vld [vmem:[%s2703 + $0x88] sm:$0xf]
      %v2739 = vld [vmem:[%s2703 + $0x8c] sm:$0xf]
      %v2740 = vld [vmem:[%s2] sm:$0x1]
      %v2742 = vlaneseq
      %v2743 = vshrl.u32 %v2742, 7
      %v2744 = vsub.s32 0, %v2743
      %v2745 = vrot.slane %v2740, %v2744
      %v2782 = vunpack.c.l.b16 %v2704
      %v2783 = vunpack.c.l.b16 %v2705
      %v2784 = vunpack.c.l.b16 %v2706
      %v2785 = vunpack.c.l.b16 %v2707
      %v2786 = vunpack.c.l.b16 %v2708
      %v2787 = vunpack.c.l.b16 %v2709
      %v2788 = vunpack.c.l.b16 %v2710
      %v2789 = vunpack.c.l.b16 %v2711
      %v2790 = vunpack.c.l.b16 %v2712
      %v2791 = vunpack.c.l.b16 %v2713
      %v2792 = vunpack.c.l.b16 %v2714
      %v2793 = vunpack.c.l.b16 %v2715
      %v2794 = vunpack.c.l.b16 %v2716
      %v2795 = vunpack.c.l.b16 %v2717
      %v2796 = vunpack.c.l.b16 %v2718
      %v2797 = vunpack.c.l.b16 %v2719
      %v2798 = vunpack.c.l.b16 %v2720
      %v2799 = vunpack.c.l.b16 %v2721
      %v2800 = vunpack.c.l.b16 %v2722
      %v2801 = vunpack.c.l.b16 %v2723
      %v2802 = vunpack.c.l.b16 %v2724
      %v2803 = vunpack.c.l.b16 %v2725
      %v2804 = vunpack.c.l.b16 %v2726
      %v2805 = vunpack.c.l.b16 %v2727
      %v2806 = vunpack.c.l.b16 %v2728
      %v2807 = vunpack.c.l.b16 %v2729
      %v2808 = vunpack.c.l.b16 %v2730
      %v2809 = vunpack.c.l.b16 %v2731
      %v2810 = vunpack.c.l.b16 %v2732
      %v2811 = vunpack.c.l.b16 %v2733
      %v2812 = vunpack.c.l.b16 %v2734
      %v2813 = vunpack.c.l.b16 %v2735
      %v2814 = vunpack.c.l.b16 %v2736
      %v2815 = vunpack.c.l.b16 %v2737
      %v2816 = vunpack.c.l.b16 %v2738
      %v2817 = vunpack.c.l.b16 %v2739
      %v2818 = vpack.c.b16 %v2783, %v2782
      %v2819 = vpack.c.b16 %v2785, %v2784
      %v2820 = vpack.c.b16 %v2787, %v2786
      %v2821 = vpack.c.b16 %v2789, %v2788
      %v2822 = vpack.c.b16 %v2791, %v2790
      %v2823 = vpack.c.b16 %v2793, %v2792
      %v2824 = vpack.c.b16 %v2795, %v2794
      %v2825 = vpack.c.b16 %v2797, %v2796
      %v2826 = vpack.c.b16 %v2799, %v2798
      %v2827 = vpack.c.b16 %v2801, %v2800
      %v2828 = vpack.c.b16 %v2803, %v2802
      %v2829 = vpack.c.b16 %v2805, %v2804
      %v2830 = vpack.c.b16 %v2807, %v2806
      %v2831 = vpack.c.b16 %v2809, %v2808
      %v2832 = vpack.c.b16 %v2811, %v2810
      %v2833 = vpack.c.b16 %v2813, %v2812
      %v2834 = vpack.c.b16 %v2815, %v2814
      %v2835 = vpack.c.b16 %v2817, %v2816
      %2854 = vrot.lane.b32.xlu0 %v2745, 96
      %v2855 = vpop.permute.xlu0 %2854
      %v2858 = vsel %vm1853, %v2693, 0
      %v2861 = vsel %vm1853, %v2696, 0
      %v2864 = vsel %vm1853, %v2699, 0
      %v2867 = vsel %vm1853, %v2702, 0
      %2869 = vmatprep.subr.bf16.mxu0 0
      %2870 = vmatpush1.bf16.msra.mxu0 %v2825
      %2871 = vmatprep.subr.bf16.mxu0 0
      %2872 = vmatpush1.bf16.msra.mxu0 %v2824
      %2873 = vmatprep.subr.bf16.mxu0 0
      %2874 = vmatpush1.bf16.msra.mxu0 %v2823
      %2875 = vmatprep.subr.bf16.mxu0 0
      %2876 = vmatpush1.bf16.msra.mxu0 %v2822
      %2877 = vmatprep.subr.bf16.mxu0 0
      %2878 = vmatpush1.bf16.msra.mxu0 %v2821
      %2879 = vmatprep.subr.bf16.mxu0 0
      %2880 = vmatpush1.bf16.msra.mxu0 %v2820
      %2881 = vmatprep.subr.bf16.mxu0 0
      %2882 = vmatpush1.bf16.msra.mxu0 %v2819
      %2883 = vmatprep.subr.bf16.mxu0 0
      %2884 = vmatpush1.bf16.msra.mxu0 %v2818
      %2885 = vmatprep.subr.bf16.mxu0 0
      %2886 = vmatpush2.bf16.msra.mxu0 %v2833
      %2887 = vmatprep.subr.bf16.mxu0 0
      %2888 = vmatpush2.bf16.msra.mxu0 %v2832
      %2889 = vmatprep.subr.bf16.mxu0 0
      %2890 = vmatpush2.bf16.msra.mxu0 %v2831
      %2891 = vmatprep.subr.bf16.mxu0 0
      %2892 = vmatpush2.bf16.msra.mxu0 %v2830
      %2893 = vmatprep.subr.bf16.mxu0 0
      %2894 = vmatpush2.bf16.msra.mxu0 %v2829
      %2895 = vmatprep.subr.bf16.mxu0 0
      %2896 = vmatpush2.bf16.msra.mxu0 %v2828
      %2897 = vmatprep.subr.bf16.mxu0 0
      %2898 = vmatpush2.bf16.msra.mxu0 %v2827
      %2899 = vmatprep.subr.bf16.mxu0 0
      %2900 = vmatpush2.bf16.msra.mxu0 %v2826
      %2901 = vmatprep.mubr.bf16.mxu0 %v2692
      %2902 = vmatmul.mubr.bf16.gmra.mxu0 %v2691
      %v2903 = vpop.f32.mrf.mxu0
      %v2904 = vadd.f32 %v2855, %v2903
      %v2905 = vpop.f32.mrf.mxu0
      %v2906 = vpop.f32.mrf.mxu0
      %v2907 = vadd.f32 %v2855, %v2906
      %v2908 = vpop.f32.mrf.mxu0
      %2909 = vmatprep.mubr.bf16.mxu0 %v2695
      %2910 = vmatmul.mubr.bf16.gmra.mxu0 %v2694
      %v2911 = vpop.f32.mrf.mxu0
      %v2912 = vadd.f32 %v2855, %v2911
      %v2913 = vpop.f32.mrf.mxu0
      %v2914 = vpop.f32.mrf.mxu0
      %v2915 = vadd.f32 %v2855, %v2914
      %v2916 = vpop.f32.mrf.mxu0
      %2917 = vmatprep.mubr.bf16.mxu0 %v2698
      %2918 = vmatmul.mubr.bf16.gmra.mxu0 %v2697
      %v2919 = vpop.f32.mrf.mxu0
      %v2920 = vadd.f32 %v2855, %v2919
      %v2921 = vpop.f32.mrf.mxu0
      %v2922 = vpop.f32.mrf.mxu0
      %v2923 = vadd.f32 %v2855, %v2922
      %v2924 = vpop.f32.mrf.mxu0
      %2925 = vmatprep.mubr.bf16.mxu0 %v2701
      %2926 = vmatmul.mubr.bf16.gmra.mxu0 %v2700
      %v2927 = vpop.f32.mrf.mxu0
      %v2928 = vadd.f32 %v2855, %v2927
      %v2929 = vpop.f32.mrf.mxu0
      %v2930 = vpop.f32.mrf.mxu0
      %v2931 = vadd.f32 %v2855, %v2930
      %v2932 = vpop.f32.mrf.mxu0
      %2933 = vdwg.mxu0
      %2934 = vmatprep.subr.bf16.mxu0 0
      %2935 = vmatpush1.bf16.msra.mxu0 0
      %2936 = vmatprep.subr.bf16.mxu0 0
      %2937 = vmatpush1.bf16.msra.mxu0 0
      %2938 = vmatprep.subr.bf16.mxu0 0
      %2939 = vmatpush1.bf16.msra.mxu0 0
      %2940 = vmatprep.subr.bf16.mxu0 0
      %2941 = vmatpush1.bf16.msra.mxu0 0
      %2942 = vmatprep.subr.bf16.mxu0 0
      %2943 = vmatpush1.bf16.msra.mxu0 0
      %2944 = vmatprep.subr.bf16.mxu0 0
      %2945 = vmatpush1.bf16.msra.mxu0 0
      %2946 = vmatprep.subr.bf16.mxu0 0
      %2947 = vmatpush1.bf16.msra.mxu0 %v2835
      %2948 = vmatprep.subr.bf16.mxu0 0
      %2949 = vmatpush1.bf16.msra.mxu0 %v2834
      %2950 = vmatprep.subr.bf16.mxu0 0
      %2951 = vmatpush2.bf16.msra.mxu0 0
      %2952 = vmatprep.subr.bf16.mxu0 0
      %2953 = vmatpush2.bf16.msra.mxu0 0
      %2954 = vmatprep.subr.bf16.mxu0 0
      %2955 = vmatpush2.bf16.msra.mxu0 0
      %2956 = vmatprep.subr.bf16.mxu0 0
      %2957 = vmatpush2.bf16.msra.mxu0 0
      %2958 = vmatprep.subr.bf16.mxu0 0
      %2959 = vmatpush2.bf16.msra.mxu0 0
      %2960 = vmatprep.subr.bf16.mxu0 0
      %2961 = vmatpush2.bf16.msra.mxu0 0
      %2962 = vmatprep.subr.bf16.mxu0 0
      %2963 = vmatpush2.bf16.msra.mxu0 0
      %2964 = vmatprep.subr.bf16.mxu0 0
      %2965 = vmatpush2.bf16.msra.mxu0 0
      %2966 = vmatprep.mubr.bf16.mxu0 0
      %2967 = vmatmul.mubr.bf16.gmra.mxu0 %v2858
      %v2968 = vpop.f32.mrf.mxu0
      %v2969 = vadd.f32 %v2904, %v2968
      %v2970 = vpop.f32.mrf.mxu0
      %v2971 = vpop.f32.mrf.mxu0
      %v2972 = vadd.f32 %v2907, %v2971
      %v2973 = vpop.f32.mrf.mxu0
      %2974 = vmatprep.mubr.bf16.mxu0 0
      %2975 = vmatmul.mubr.bf16.gmra.mxu0 %v2861
      %v2976 = vpop.f32.mrf.mxu0
      %v2977 = vadd.f32 %v2912, %v2976
      %v2978 = vpop.f32.mrf.mxu0
      %v2979 = vpop.f32.mrf.mxu0
      %v2980 = vadd.f32 %v2915, %v2979
      %v2981 = vpop.f32.mrf.mxu0
      %2982 = vmatprep.mubr.bf16.mxu0 0
      %2983 = vmatmul.mubr.bf16.gmra.mxu0 %v2864
      %v2984 = vpop.f32.mrf.mxu0
      %v2985 = vadd.f32 %v2920, %v2984
      %v2986 = vpop.f32.mrf.mxu0
      %v2987 = vpop.f32.mrf.mxu0
      %v2988 = vadd.f32 %v2923, %v2987
      %v2989 = vpop.f32.mrf.mxu0
      %2990 = vmatprep.mubr.bf16.mxu0 0
      %2991 = vmatmul.mubr.bf16.gmra.mxu0 %v2867
      %v2992 = vpop.f32.mrf.mxu0
      %v2993 = vadd.f32 %v2928, %v2992
      %v2994 = vpop.f32.mrf.mxu0
      %v2995 = vpop.f32.mrf.mxu0
      %v2996 = vadd.f32 %v2931, %v2995
      %v2997 = vpop.f32.mrf.mxu0
      %2998 = vdwg.mxu0
      %v2999 = vmax.f32 %v2969, 0.0
      %v3000 = vmax.f32 %v2972, 0.0
      %v3001 = vmax.f32 %v2977, 0.0
      %v3002 = vmax.f32 %v2980, 0.0
      %v3003 = vmax.f32 %v2985, 0.0
      %v3004 = vmax.f32 %v2988, 0.0
      %v3005 = vmax.f32 %v2993, 0.0
      %v3006 = vmax.f32 %v2996, 0.0
      %v3007 = vpack.c.bf16 %v3000, %v2999
      %v3008 = vpack.c.bf16 %v3002, %v3001
      %v3009 = vpack.c.bf16 %v3004, %v3003
      %v3010 = vpack.c.bf16 %v3006, %v3005
      %s3011 = scalar_lea.vmem %s1, 576
      %v3012 = vld [vmem:[%s3011] sm:$0xf]
      %v3013 = vld [vmem:[%s3011 + $0x4] sm:$0xf]
      %v3014 = vld [vmem:[%s3011 + $0x8] sm:$0xf]
      %v3015 = vld [vmem:[%s3011 + $0xc] sm:$0xf]
      %v3016 = vld [vmem:[%s3011 + $0x10] sm:$0xf]
      %v3017 = vld [vmem:[%s3011 + $0x14] sm:$0xf]
      %v3018 = vld [vmem:[%s3011 + $0x18] sm:$0xf]
      %v3019 = vld [vmem:[%s3011 + $0x1c] sm:$0xf]
      %v3020 = vld [vmem:[%s2] sm:$0x3]
      %v3022 = vlaneseq
      %v3023 = vshrl.u32 %v3022, 7
      %v3024 = vsub.s32 0, %v3023
      %v3025 = vrot.slane %v3020, %v3024
      %v3026 = vlaneseq
      %v3027 = vshrl.u32 %v3026, 7
      %v3028 = vsub.s32 1, %v3027
      %v3029 = vrot.slane %v3020, %v3028
      %v3038 = vunpack.c.l.b16 %v3012
      %v3039 = vunpack.c.l.b16 %v3013
      %v3040 = vunpack.c.l.b16 %v3014
      %v3041 = vunpack.c.l.b16 %v3015
      %v3042 = vunpack.c.l.b16 %v3016
      %v3043 = vunpack.c.l.b16 %v3017
      %v3044 = vunpack.c.l.b16 %v3018
      %v3045 = vunpack.c.l.b16 %v3019
      %v3046 = vpack.c.b16 %v3039, %v3038
      %v3047 = vpack.c.b16 %v3041, %v3040
      %v3048 = vpack.c.b16 %v3043, %v3042
      %v3049 = vpack.c.b16 %v3045, %v3044
      %3054 = vrot.lane.b32.xlu0 %v3025, 32
      %v3055 = vpop.permute.xlu0 %3054
      %3056 = vrot.lane.b32.xlu0 %v3029, 32
      %v3057 = vpop.permute.xlu0 %3056
      %v3058 = vsel %vm1853, %v3055, %v3057
      %v3061 = vsel %vm2649, %v3007, 0
      %v3064 = vsel %vm2649, %v3008, 0
      %v3067 = vsel %vm2649, %v3009, 0
      %v3070 = vsel %vm2649, %v3010, 0
      %3072 = vmatprep.subr.bf16.mxu0 0
      %3073 = vmatpush1.bf16.msra.mxu0 0
      %3074 = vmatprep.subr.bf16.mxu0 0
      %3075 = vmatpush1.bf16.msra.mxu0 0
      %3076 = vmatprep.subr.bf16.mxu0 0
      %3077 = vmatpush1.bf16.msra.mxu0 0
      %3078 = vmatprep.subr.bf16.mxu0 0
      %3079 = vmatpush1.bf16.msra.mxu0 0
      %3080 = vmatprep.subr.bf16.mxu0 0
      %3081 = vmatpush1.bf16.msra.mxu0 %v3049
      %3082 = vmatprep.subr.bf16.mxu0 0
      %3083 = vmatpush1.bf16.msra.mxu0 %v3048
      %3084 = vmatprep.subr.bf16.mxu0 0
      %3085 = vmatpush1.bf16.msra.mxu0 %v3047
      %3086 = vmatprep.subr.bf16.mxu0 0
      %3087 = vmatpush1.bf16.msra.mxu0 %v3046
      %3088 = vmatprep.subr.bf16.mxu0 0
      %3089 = vmatpush2.bf16.msra.mxu0 0
      %3090 = vmatprep.subr.bf16.mxu0 0
      %3091 = vmatpush2.bf16.msra.mxu0 0
      %3092 = vmatprep.subr.bf16.mxu0 0
      %3093 = vmatpush2.bf16.msra.mxu0 0
      %3094 = vmatprep.subr.bf16.mxu0 0
      %3095 = vmatpush2.bf16.msra.mxu0 0
      %3096 = vmatprep.subr.bf16.mxu0 0
      %3097 = vmatpush2.bf16.msra.mxu0 0
      %3098 = vmatprep.subr.bf16.mxu0 0
      %3099 = vmatpush2.bf16.msra.mxu0 0
      %3100 = vmatprep.subr.bf16.mxu0 0
      %3101 = vmatpush2.bf16.msra.mxu0 0
      %3102 = vmatprep.subr.bf16.mxu0 0
      %3103 = vmatpush2.bf16.msra.mxu0 0
      %3104 = vmatprep.mubr.bf16.mxu0 0
      %3105 = vmatmul.mubr.bf16.gmra.mxu0 %v3061
      %v3106 = vpop.f32.mrf.mxu0
      %v3107 = vadd.f32 %v3058, %v3106
      %v3108 = vpop.f32.mrf.mxu0
      %v3109 = vpop.f32.mrf.mxu0
      %v3110 = vadd.f32 %v3058, %v3109
      %v3111 = vpop.f32.mrf.mxu0
      %3112 = vmatprep.mubr.bf16.mxu0 0
      %3113 = vmatmul.mubr.bf16.gmra.mxu0 %v3064
      %v3114 = vpop.f32.mrf.mxu0
      %v3115 = vadd.f32 %v3058, %v3114
      %v3116 = vpop.f32.mrf.mxu0
      %v3117 = vpop.f32.mrf.mxu0
      %v3118 = vadd.f32 %v3058, %v3117
      %v3119 = vpop.f32.mrf.mxu0
      %3120 = vmatprep.mubr.bf16.mxu0 0
      %3121 = vmatmul.mubr.bf16.gmra.mxu0 %v3067
      %v3122 = vpop.f32.mrf.mxu0
      %v3123 = vadd.f32 %v3058, %v3122
      %v3124 = vpop.f32.mrf.mxu0
      %v3125 = vpop.f32.mrf.mxu0
      %v3126 = vadd.f32 %v3058, %v3125
      %v3127 = vpop.f32.mrf.mxu0
      %3128 = vmatprep.mubr.bf16.mxu0 0
      %3129 = vmatmul.mubr.bf16.gmra.mxu0 %v3070
      %v3130 = vpop.f32.mrf.mxu0
      %v3131 = vadd.f32 %v3058, %v3130
      %v3132 = vpop.f32.mrf.mxu0
      %v3133 = vpop.f32.mrf.mxu0
      %v3134 = vadd.f32 %v3058, %v3133
      %v3135 = vpop.f32.mrf.mxu0
      %3136 = vdwg.mxu0
      %3137 = vst.msk [vmem:[#allocation5] sm:$0xff] %vm1853, 0.0
      %3138 = vst.msk [vmem:[#allocation5 + $0x8] sm:$0xff] %vm1853, 0.0
      %3139 = vst.msk [vmem:[#allocation5 + $0x10] sm:$0x3] %vm2177, 0.0
      %s3140 = scalar_lea.vmem [#allocation5], 408
      %3141 = vst.msk [vmem:[%s3140] sm:$0xff] %vm1853, 0.0
      %3142 = vst.msk [vmem:[%s3140 + $0x8] sm:$0xff] %vm1853, 0.0
      %3143 = vst.msk [vmem:[%s3140 + $0x10] sm:$0x3] %vm2177, 0.0
      %3144 = vst.msk [vmem:[#allocation5] sm:$0x1] %vm2183, 0.0
      %3145 = vst.msk [vmem:[#allocation5 + $0x18] sm:$0x1] %vm2183, 0.0
      %3146 = vst.msk [vmem:[#allocation5 + $0x30] sm:$0x1] %vm2183, 0.0
      %3147 = vst.msk [vmem:[#allocation5 + $0x48] sm:$0x1] %vm2183, 0.0
      %3148 = vst.msk [vmem:[#allocation5 + $0x60] sm:$0x1] %vm2183, 0.0
      %3149 = vst.msk [vmem:[#allocation5 + $0x78] sm:$0x1] %vm2183, 0.0
      %3150 = vst.msk [vmem:[#allocation5 + $0x90] sm:$0x1] %vm2183, 0.0
      %3151 = vst.msk [vmem:[#allocation5 + $0xa8] sm:$0x1] %vm2183, 0.0
      %3152 = vst.msk [vmem:[#allocation5 + $0xc0] sm:$0x1] %vm2183, 0.0
      %3153 = vst.msk [vmem:[#allocation5 + $0xd8] sm:$0x1] %vm2183, 0.0
      %3154 = vst.msk [vmem:[#allocation5 + $0xf0] sm:$0x1] %vm2183, 0.0
      %3155 = vst.msk [vmem:[#allocation5 + $0x108] sm:$0x1] %vm2183, 0.0
      %3156 = vst.msk [vmem:[#allocation5 + $0x120] sm:$0x1] %vm2183, 0.0
      %3157 = vst.msk [vmem:[#allocation5 + $0x138] sm:$0x1] %vm2183, 0.0
      %3158 = vst.msk [vmem:[#allocation5 + $0x150] sm:$0x1] %vm2183, 0.0
      %3159 = vst.msk [vmem:[#allocation5 + $0x168] sm:$0x1] %vm2183, 0.0
      %3160 = vst.msk [vmem:[#allocation5 + $0x180] sm:$0x1] %vm2183, 0.0
      %3161 = vst.msk [vmem:[#allocation5 + $0x198] sm:$0x1] %vm2183, 0.0
      %3162 = vst.msk [vmem:[#allocation5 + $0x11] sm:$0x1] %vm2183, 0.0
      %3163 = vst.msk [vmem:[#allocation5 + $0x29] sm:$0x1] %vm2183, 0.0
      %3164 = vst.msk [vmem:[#allocation5 + $0x41] sm:$0x1] %vm2183, 0.0
      %3165 = vst.msk [vmem:[#allocation5 + $0x59] sm:$0x1] %vm2183, 0.0
      %3166 = vst.msk [vmem:[#allocation5 + $0x71] sm:$0x1] %vm2183, 0.0
      %3167 = vst.msk [vmem:[#allocation5 + $0x89] sm:$0x1] %vm2183, 0.0
      %3168 = vst.msk [vmem:[#allocation5 + $0xa1] sm:$0x1] %vm2183, 0.0
      %3169 = vst.msk [vmem:[#allocation5 + $0xb9] sm:$0x1] %vm2183, 0.0
      %3170 = vst.msk [vmem:[#allocation5 + $0xd1] sm:$0x1] %vm2183, 0.0
      %3171 = vst.msk [vmem:[#allocation5 + $0xe9] sm:$0x1] %vm2183, 0.0
      %3172 = vst.msk [vmem:[#allocation5 + $0x101] sm:$0x1] %vm2183, 0.0
      %3173 = vst.msk [vmem:[#allocation5 + $0x119] sm:$0x1] %vm2183, 0.0
      %3174 = vst.msk [vmem:[#allocation5 + $0x131] sm:$0x1] %vm2183, 0.0
      %3175 = vst.msk [vmem:[#allocation5 + $0x149] sm:$0x1] %vm2183, 0.0
      %3176 = vst.msk [vmem:[#allocation5 + $0x161] sm:$0x1] %vm2183, 0.0
      %3177 = vst.msk [vmem:[#allocation5 + $0x179] sm:$0x1] %vm2183, 0.0
      %3178 = vst.msk [vmem:[#allocation5 + $0x191] sm:$0x1] %vm2183, 0.0
      %3179 = vst.msk [vmem:[#allocation5 + $0x1a9] sm:$0x1] %vm2183, 0.0
      %s3180 = scalar_lea.vmem [#allocation5], 24
      %s3181 = scalar_lea.vmem %s3180, 1 [#allocation5]
      %3182 = vst [vmem:[%s3181] ss:$2 sm:$0xff] %v3107
      %s3183 = scalar_lea.vmem %s3180, 49 [#allocation5]
      %3184 = vst [vmem:[%s3183] ss:$2 sm:$0xff] %v3110
      %s3185 = scalar_lea.vmem %s3180, 97 [#allocation5]
      %3186 = vst [vmem:[%s3185] ss:$2 sm:$0xff] %v3115
      %s3187 = scalar_lea.vmem %s3180, 145 [#allocation5]
      %3188 = vst [vmem:[%s3187] ss:$2 sm:$0xff] %v3118
      %s3189 = scalar_lea.vmem %s3180, 193 [#allocation5]
      %3190 = vst [vmem:[%s3189] ss:$2 sm:$0xff] %v3123
      %s3191 = scalar_lea.vmem %s3180, 241 [#allocation5]
      %3192 = vst [vmem:[%s3191] ss:$2 sm:$0xff] %v3126
      %s3193 = scalar_lea.vmem %s3180, 289 [#allocation5]
      %3194 = vst [vmem:[%s3193] ss:$2 sm:$0xff] %v3131
      %s3195 = scalar_lea.vmem %s3180, 337 [#allocation5]
      %3196 = vst [vmem:[%s3195] ss:$2 sm:$0xff] %v3134
      %3205 = vrot.lane.b32.xlu0 %v3107, 96
      %v3206 = vpop.permute.xlu0 %3205
      %3207 = vrot.lane.b32.xlu0 %v3110, 96
      %v3208 = vpop.permute.xlu0 %3207
      %3209 = vrot.lane.b32.xlu0 %v3115, 96
      %v3210 = vpop.permute.xlu0 %3209
      %3211 = vrot.lane.b32.xlu0 %v3118, 96
      %v3212 = vpop.permute.xlu0 %3211
      %3213 = vrot.lane.b32.xlu0 %v3123, 96
      %v3214 = vpop.permute.xlu0 %3213
      %3215 = vrot.lane.b32.xlu0 %v3126, 96
      %v3216 = vpop.permute.xlu0 %3215
      %3217 = vrot.lane.b32.xlu0 %v3131, 96
      %v3218 = vpop.permute.xlu0 %3217
      %3219 = vrot.lane.b32.xlu0 %v3134, 96
      %v3220 = vpop.permute.xlu0 %3219
      %s3229 = scalar_lea.vmem %s3180, 2 [#allocation5]
      %3230 = vst [vmem:[%s3229] ss:$2 sm:$0xff] %v3206
      %s3231 = scalar_lea.vmem %s3180, 50 [#allocation5]
      %3232 = vst [vmem:[%s3231] ss:$2 sm:$0xff] %v3208
      %s3233 = scalar_lea.vmem %s3180, 98 [#allocation5]
      %3234 = vst [vmem:[%s3233] ss:$2 sm:$0xff] %v3210
      %s3235 = scalar_lea.vmem %s3180, 146 [#allocation5]
      %3236 = vst [vmem:[%s3235] ss:$2 sm:$0xff] %v3212
      %s3237 = scalar_lea.vmem %s3180, 194 [#allocation5]
      %3238 = vst [vmem:[%s3237] ss:$2 sm:$0xff] %v3214
      %s3239 = scalar_lea.vmem %s3180, 242 [#allocation5]
      %3240 = vst [vmem:[%s3239] ss:$2 sm:$0xff] %v3216
      %s3241 = scalar_lea.vmem %s3180, 290 [#allocation5]
      %3242 = vst [vmem:[%s3241] ss:$2 sm:$0xff] %v3218
      %s3243 = scalar_lea.vmem %s3180, 338 [#allocation5]
      %3244 = vst [vmem:[%s3243] ss:$2 sm:$0xff] %v3220
      %3245 = vrot.lane.b32.xlu0 %v3107, 64
      %v3246 = vpop.permute.xlu0 %3245
      %3247 = vrot.lane.b32.xlu0 %v3110, 64
      %v3248 = vpop.permute.xlu0 %3247
      %3249 = vrot.lane.b32.xlu0 %v3115, 64
      %v3250 = vpop.permute.xlu0 %3249
      %3251 = vrot.lane.b32.xlu0 %v3118, 64
      %v3252 = vpop.permute.xlu0 %3251
      %3253 = vrot.lane.b32.xlu0 %v3123, 64
      %v3254 = vpop.permute.xlu0 %3253
      %3255 = vrot.lane.b32.xlu0 %v3126, 64
      %v3256 = vpop.permute.xlu0 %3255
      %3257 = vrot.lane.b32.xlu0 %v3131, 64
      %v3258 = vpop.permute.xlu0 %3257
      %3259 = vrot.lane.b32.xlu0 %v3134, 64
      %v3260 = vpop.permute.xlu0 %3259
      %s3269 = scalar_lea.vmem [#allocation5], 48
      %s3270 = scalar_lea.vmem %s3269, 1 [#allocation5]
      %3271 = vst [vmem:[%s3270] ss:$2 sm:$0xff] %v3246
      %s3272 = scalar_lea.vmem %s3269, 49 [#allocation5]
      %3273 = vst [vmem:[%s3272] ss:$2 sm:$0xff] %v3248
      %s3274 = scalar_lea.vmem %s3269, 97 [#allocation5]
      %3275 = vst [vmem:[%s3274] ss:$2 sm:$0xff] %v3250
      %s3276 = scalar_lea.vmem %s3269, 145 [#allocation5]
      %3277 = vst [vmem:[%s3276] ss:$2 sm:$0xff] %v3252
      %s3278 = scalar_lea.vmem %s3269, 193 [#allocation5]
      %3279 = vst [vmem:[%s3278] ss:$2 sm:$0xff] %v3254
      %s3280 = scalar_lea.vmem %s3269, 241 [#allocation5]
      %3281 = vst [vmem:[%s3280] ss:$2 sm:$0xff] %v3256
      %s3282 = scalar_lea.vmem %s3269, 289 [#allocation5]
      %3283 = vst [vmem:[%s3282] ss:$2 sm:$0xff] %v3258
      %s3284 = scalar_lea.vmem %s3269, 337 [#allocation5]
      %3285 = vst [vmem:[%s3284] ss:$2 sm:$0xff] %v3260
      %3286 = vrot.lane.b32.xlu0 %v3107, 32
      %v3287 = vpop.permute.xlu0 %3286
      %3288 = vrot.lane.b32.xlu0 %v3110, 32
      %v3289 = vpop.permute.xlu0 %3288
      %3290 = vrot.lane.b32.xlu0 %v3115, 32
      %v3291 = vpop.permute.xlu0 %3290
      %3292 = vrot.lane.b32.xlu0 %v3118, 32
      %v3293 = vpop.permute.xlu0 %3292
      %3294 = vrot.lane.b32.xlu0 %v3123, 32
      %v3295 = vpop.permute.xlu0 %3294
      %3296 = vrot.lane.b32.xlu0 %v3126, 32
      %v3297 = vpop.permute.xlu0 %3296
      %3298 = vrot.lane.b32.xlu0 %v3131, 32
      %v3299 = vpop.permute.xlu0 %3298
      %3300 = vrot.lane.b32.xlu0 %v3134, 32
      %v3301 = vpop.permute.xlu0 %3300
      %s3310 = scalar_lea.vmem %s3269, 2 [#allocation5]
      %3311 = vst [vmem:[%s3310] ss:$2 sm:$0xff] %v3287
      %s3312 = scalar_lea.vmem %s3269, 50 [#allocation5]
      %3313 = vst [vmem:[%s3312] ss:$2 sm:$0xff] %v3289
      %s3314 = scalar_lea.vmem %s3269, 98 [#allocation5]
      %3315 = vst [vmem:[%s3314] ss:$2 sm:$0xff] %v3291
      %s3316 = scalar_lea.vmem %s3269, 146 [#allocation5]
      %3317 = vst [vmem:[%s3316] ss:$2 sm:$0xff] %v3293
      %s3318 = scalar_lea.vmem %s3269, 194 [#allocation5]
      %3319 = vst [vmem:[%s3318] ss:$2 sm:$0xff] %v3295
      %s3320 = scalar_lea.vmem %s3269, 242 [#allocation5]
      %3321 = vst [vmem:[%s3320] ss:$2 sm:$0xff] %v3297
      %s3322 = scalar_lea.vmem %s3269, 290 [#allocation5]
      %3323 = vst [vmem:[%s3322] ss:$2 sm:$0xff] %v3299
      %s3324 = scalar_lea.vmem %s3269, 338 [#allocation5]
      %3325 = vst [vmem:[%s3324] ss:$2 sm:$0xff] %v3301
      %v3326 = vld [vmem:[#allocation5] sm:$0xff]
      %v3327 = vld [vmem:[#allocation5 + $0x8] sm:$0xff]
      %v3328 = vld [vmem:[#allocation5 + $0x18] sm:$0xff]
      %v3329 = vld [vmem:[#allocation5 + $0x20] sm:$0xff]
      %v3330 = vld [vmem:[#allocation5 + $0x30] sm:$0xff]
      %v3331 = vld [vmem:[#allocation5 + $0x38] sm:$0xff]
      %v3332 = vld [vmem:[#allocation5 + $0x48] sm:$0xff]
      %v3333 = vld [vmem:[#allocation5 + $0x50] sm:$0xff]
      %v3334 = vld [vmem:[#allocation5 + $0x60] sm:$0xff]
      %v3335 = vld [vmem:[#allocation5 + $0x68] sm:$0xff]
      %v3336 = vld [vmem:[#allocation5 + $0x78] sm:$0xff]
      %v3337 = vld [vmem:[#allocation5 + $0x80] sm:$0xff]
      %v3338 = vld [vmem:[#allocation5 + $0x90] sm:$0xff]
      %v3339 = vld [vmem:[#allocation5 + $0x98] sm:$0xff]
      %v3340 = vld [vmem:[#allocation5 + $0xa8] sm:$0xff]
      %v3341 = vld [vmem:[#allocation5 + $0xb0] sm:$0xff]
      %v3342 = vld [vmem:[#allocation5 + $0xc0] sm:$0xff]
      %v3343 = vld [vmem:[#allocation5 + $0xc8] sm:$0xff]
      %v3344 = vld [vmem:[#allocation5 + $0xd8] sm:$0xff]
      %v3345 = vld [vmem:[#allocation5 + $0xe0] sm:$0xff]
      %v3346 = vld [vmem:[#allocation5 + $0xf0] sm:$0xff]
      %v3347 = vld [vmem:[#allocation5 + $0xf8] sm:$0xff]
      %v3348 = vld [vmem:[#allocation5 + $0x108] sm:$0xff]
      %v3349 = vld [vmem:[#allocation5 + $0x110] sm:$0xff]
      %v3350 = vld [vmem:[#allocation5 + $0x120] sm:$0xff]
      %v3351 = vld [vmem:[#allocation5 + $0x128] sm:$0xff]
      %v3352 = vld [vmem:[#allocation5 + $0x138] sm:$0xff]
      %v3353 = vld [vmem:[#allocation5 + $0x140] sm:$0xff]
      %v3354 = vld [vmem:[#allocation5 + $0x150] sm:$0xff]
      %v3355 = vld [vmem:[#allocation5 + $0x158] sm:$0xff]
      %v3356 = vld [vmem:[#allocation5 + $0x168] sm:$0xff]
      %v3357 = vld [vmem:[#allocation5 + $0x170] sm:$0xff]
      %v3358 = vld [vmem:[#allocation3] sm:$0xff]
      %v3359 = vld [vmem:[#allocation3 + $0x8] sm:$0xff]
      %v3360 = vld [vmem:[#allocation3 + $0x18] sm:$0xff]
      %v3361 = vld [vmem:[#allocation3 + $0x20] sm:$0xff]
      %v3362 = vld [vmem:[#allocation3 + $0x30] sm:$0xff]
      %v3363 = vld [vmem:[#allocation3 + $0x38] sm:$0xff]
      %v3364 = vld [vmem:[#allocation3 + $0x48] sm:$0xff]
      %v3365 = vld [vmem:[#allocation3 + $0x50] sm:$0xff]
      %v3366 = vld [vmem:[#allocation3 + $0x60] sm:$0xff]
      %v3367 = vld [vmem:[#allocation3 + $0x68] sm:$0xff]
      %v3368 = vld [vmem:[#allocation3 + $0x78] sm:$0xff]
      %v3369 = vld [vmem:[#allocation3 + $0x80] sm:$0xff]
      %v3370 = vld [vmem:[#allocation3 + $0x90] sm:$0xff]
      %v3371 = vld [vmem:[#allocation3 + $0x98] sm:$0xff]
      %v3372 = vld [vmem:[#allocation3 + $0xa8] sm:$0xff]
      %v3373 = vld [vmem:[#allocation3 + $0xb0] sm:$0xff]
      %v3374 = vld [vmem:[#allocation3 + $0xc0] sm:$0xff]
      %v3375 = vld [vmem:[#allocation3 + $0xc8] sm:$0xff]
      %v3376 = vld [vmem:[#allocation3 + $0xd8] sm:$0xff]
      %v3377 = vld [vmem:[#allocation3 + $0xe0] sm:$0xff]
      %v3378 = vld [vmem:[#allocation3 + $0xf0] sm:$0xff]
      %v3379 = vld [vmem:[#allocation3 + $0xf8] sm:$0xff]
      %v3380 = vld [vmem:[#allocation3 + $0x108] sm:$0xff]
      %v3381 = vld [vmem:[#allocation3 + $0x110] sm:$0xff]
      %v3382 = vld [vmem:[#allocation3 + $0x120] sm:$0xff]
      %v3383 = vld [vmem:[#allocation3 + $0x128] sm:$0xff]
      %v3384 = vld [vmem:[#allocation3 + $0x138] sm:$0xff]
      %v3385 = vld [vmem:[#allocation3 + $0x140] sm:$0xff]
      %v3386 = vld [vmem:[#allocation3 + $0x150] sm:$0xff]
      %v3387 = vld [vmem:[#allocation3 + $0x158] sm:$0xff]
      %v3388 = vld [vmem:[#allocation3 + $0x168] sm:$0xff]
      %v3389 = vld [vmem:[#allocation3 + $0x170] sm:$0xff]
      %v3390 = vld [vmem:[#allocation5 + $0x1] sm:$0xff]
      %v3391 = vld [vmem:[#allocation5 + $0x9] sm:$0xff]
      %v3392 = vld [vmem:[#allocation5 + $0x19] sm:$0xff]
      %v3393 = vld [vmem:[#allocation5 + $0x21] sm:$0xff]
      %v3394 = vld [vmem:[#allocation5 + $0x31] sm:$0xff]
      %v3395 = vld [vmem:[#allocation5 + $0x39] sm:$0xff]
      %v3396 = vld [vmem:[#allocation5 + $0x49] sm:$0xff]
      %v3397 = vld [vmem:[#allocation5 + $0x51] sm:$0xff]
      %v3398 = vld [vmem:[#allocation5 + $0x61] sm:$0xff]
      %v3399 = vld [vmem:[#allocation5 + $0x69] sm:$0xff]
      %v3400 = vld [vmem:[#allocation5 + $0x79] sm:$0xff]
      %v3401 = vld [vmem:[#allocation5 + $0x81] sm:$0xff]
      %v3402 = vld [vmem:[#allocation5 + $0x91] sm:$0xff]
      %v3403 = vld [vmem:[#allocation5 + $0x99] sm:$0xff]
      %v3404 = vld [vmem:[#allocation5 + $0xa9] sm:$0xff]
      %v3405 = vld [vmem:[#allocation5 + $0xb1] sm:$0xff]
      %v3406 = vld [vmem:[#allocation5 + $0xc1] sm:$0xff]
      %v3407 = vld [vmem:[#allocation5 + $0xc9] sm:$0xff]
      %v3408 = vld [vmem:[#allocation5 + $0xd9] sm:$0xff]
      %v3409 = vld [vmem:[#allocation5 + $0xe1] sm:$0xff]
      %v3410 = vld [vmem:[#allocation5 + $0xf1] sm:$0xff]
      %v3411 = vld [vmem:[#allocation5 + $0xf9] sm:$0xff]
      %v3412 = vld [vmem:[#allocation5 + $0x109] sm:$0xff]
      %v3413 = vld [vmem:[#allocation5 + $0x111] sm:$0xff]
      %v3414 = vld [vmem:[#allocation5 + $0x121] sm:$0xff]
      %v3415 = vld [vmem:[#allocation5 + $0x129] sm:$0xff]
      %v3416 = vld [vmem:[#allocation5 + $0x139] sm:$0xff]
      %v3417 = vld [vmem:[#allocation5 + $0x141] sm:$0xff]
      %v3418 = vld [vmem:[#allocation5 + $0x151] sm:$0xff]
      %v3419 = vld [vmem:[#allocation5 + $0x159] sm:$0xff]
      %v3420 = vld [vmem:[#allocation5 + $0x169] sm:$0xff]
      %v3421 = vld [vmem:[#allocation5 + $0x171] sm:$0xff]
      %v3422 = vld [vmem:[#allocation3 + $0x1] sm:$0xff]
      %v3423 = vld [vmem:[#allocation3 + $0x9] sm:$0xff]
      %v3424 = vld [vmem:[#allocation3 + $0x19] sm:$0xff]
      %v3425 = vld [vmem:[#allocation3 + $0x21] sm:$0xff]
      %v3426 = vld [vmem:[#allocation3 + $0x31] sm:$0xff]
      %v3427 = vld [vmem:[#allocation3 + $0x39] sm:$0xff]
      %v3428 = vld [vmem:[#allocation3 + $0x49] sm:$0xff]
      %v3429 = vld [vmem:[#allocation3 + $0x51] sm:$0xff]
      %v3430 = vld [vmem:[#allocation3 + $0x61] sm:$0xff]
      %v3431 = vld [vmem:[#allocation3 + $0x69] sm:$0xff]
      %v3432 = vld [vmem:[#allocation3 + $0x79] sm:$0xff]
      %v3433 = vld [vmem:[#allocation3 + $0x81] sm:$0xff]
      %v3434 = vld [vmem:[#allocation3 + $0x91] sm:$0xff]
      %v3435 = vld [vmem:[#allocation3 + $0x99] sm:$0xff]
      %v3436 = vld [vmem:[#allocation3 + $0xa9] sm:$0xff]
      %v3437 = vld [vmem:[#allocation3 + $0xb1] sm:$0xff]
      %v3438 = vld [vmem:[#allocation3 + $0xc1] sm:$0xff]
      %v3439 = vld [vmem:[#allocation3 + $0xc9] sm:$0xff]
      %v3440 = vld [vmem:[#allocation3 + $0xd9] sm:$0xff]
      %v3441 = vld [vmem:[#allocation3 + $0xe1] sm:$0xff]
      %v3442 = vld [vmem:[#allocation3 + $0xf1] sm:$0xff]
      %v3443 = vld [vmem:[#allocation3 + $0xf9] sm:$0xff]
      %v3444 = vld [vmem:[#allocation3 + $0x109] sm:$0xff]
      %v3445 = vld [vmem:[#allocation3 + $0x111] sm:$0xff]
      %v3446 = vld [vmem:[#allocation3 + $0x121] sm:$0xff]
      %v3447 = vld [vmem:[#allocation3 + $0x129] sm:$0xff]
      %v3448 = vld [vmem:[#allocation3 + $0x139] sm:$0xff]
      %v3449 = vld [vmem:[#allocation3 + $0x141] sm:$0xff]
      %v3450 = vld [vmem:[#allocation3 + $0x151] sm:$0xff]
      %v3451 = vld [vmem:[#allocation3 + $0x159] sm:$0xff]
      %v3452 = vld [vmem:[#allocation3 + $0x169] sm:$0xff]
      %v3453 = vld [vmem:[#allocation3 + $0x171] sm:$0xff]
      %v3454 = vld [vmem:[#allocation5 + $0x2] sm:$0xff]
      %v3455 = vld [vmem:[#allocation5 + $0xa] sm:$0xff]
      %v3456 = vld [vmem:[#allocation5 + $0x1a] sm:$0xff]
      %v3457 = vld [vmem:[#allocation5 + $0x22] sm:$0xff]
      %v3458 = vld [vmem:[#allocation5 + $0x32] sm:$0xff]
      %v3459 = vld [vmem:[#allocation5 + $0x3a] sm:$0xff]
      %v3460 = vld [vmem:[#allocation5 + $0x4a] sm:$0xff]
      %v3461 = vld [vmem:[#allocation5 + $0x52] sm:$0xff]
      %v3462 = vld [vmem:[#allocation5 + $0x62] sm:$0xff]
      %v3463 = vld [vmem:[#allocation5 + $0x6a] sm:$0xff]
      %v3464 = vld [vmem:[#allocation5 + $0x7a] sm:$0xff]
      %v3465 = vld [vmem:[#allocation5 + $0x82] sm:$0xff]
      %v3466 = vld [vmem:[#allocation5 + $0x92] sm:$0xff]
      %v3467 = vld [vmem:[#allocation5 + $0x9a] sm:$0xff]
      %v3468 = vld [vmem:[#allocation5 + $0xaa] sm:$0xff]
      %v3469 = vld [vmem:[#allocation5 + $0xb2] sm:$0xff]
      %v3470 = vld [vmem:[#allocation5 + $0xc2] sm:$0xff]
      %v3471 = vld [vmem:[#allocation5 + $0xca] sm:$0xff]
      %v3472 = vld [vmem:[#allocation5 + $0xda] sm:$0xff]
      %v3473 = vld [vmem:[#allocation5 + $0xe2] sm:$0xff]
      %v3474 = vld [vmem:[#allocation5 + $0xf2] sm:$0xff]
      %v3475 = vld [vmem:[#allocation5 + $0xfa] sm:$0xff]
      %v3476 = vld [vmem:[#allocation5 + $0x10a] sm:$0xff]
      %v3477 = vld [vmem:[#allocation5 + $0x112] sm:$0xff]
      %v3478 = vld [vmem:[#allocation5 + $0x122] sm:$0xff]
      %v3479 = vld [vmem:[#allocation5 + $0x12a] sm:$0xff]
      %v3480 = vld [vmem:[#allocation5 + $0x13a] sm:$0xff]
      %v3481 = vld [vmem:[#allocation5 + $0x142] sm:$0xff]
      %v3482 = vld [vmem:[#allocation5 + $0x152] sm:$0xff]
      %v3483 = vld [vmem:[#allocation5 + $0x15a] sm:$0xff]
      %v3484 = vld [vmem:[#allocation5 + $0x16a] sm:$0xff]
      %v3485 = vld [vmem:[#allocation5 + $0x172] sm:$0xff]
      %v3486 = vld [vmem:[#allocation3 + $0x2] sm:$0xff]
      %v3487 = vld [vmem:[#allocation3 + $0xa] sm:$0xff]
      %v3488 = vld [vmem:[#allocation3 + $0x1a] sm:$0xff]
      %v3489 = vld [vmem:[#allocation3 + $0x22] sm:$0xff]
      %v3490 = vld [vmem:[#allocation3 + $0x32] sm:$0xff]
      %v3491 = vld [vmem:[#allocation3 + $0x3a] sm:$0xff]
      %v3492 = vld [vmem:[#allocation3 + $0x4a] sm:$0xff]
      %v3493 = vld [vmem:[#allocation3 + $0x52] sm:$0xff]
      %v3494 = vld [vmem:[#allocation3 + $0x62] sm:$0xff]
      %v3495 = vld [vmem:[#allocation3 + $0x6a] sm:$0xff]
      %v3496 = vld [vmem:[#allocation3 + $0x7a] sm:$0xff]
      %v3497 = vld [vmem:[#allocation3 + $0x82] sm:$0xff]
      %v3498 = vld [vmem:[#allocation3 + $0x92] sm:$0xff]
      %v3499 = vld [vmem:[#allocation3 + $0x9a] sm:$0xff]
      %v3500 = vld [vmem:[#allocation3 + $0xaa] sm:$0xff]
      %v3501 = vld [vmem:[#allocation3 + $0xb2] sm:$0xff]
      %v3502 = vld [vmem:[#allocation3 + $0xc2] sm:$0xff]
      %v3503 = vld [vmem:[#allocation3 + $0xca] sm:$0xff]
      %v3504 = vld [vmem:[#allocation3 + $0xda] sm:$0xff]
      %v3505 = vld [vmem:[#allocation3 + $0xe2] sm:$0xff]
      %v3506 = vld [vmem:[#allocation3 + $0xf2] sm:$0xff]
      %v3507 = vld [vmem:[#allocation3 + $0xfa] sm:$0xff]
      %v3508 = vld [vmem:[#allocation3 + $0x10a] sm:$0xff]
      %v3509 = vld [vmem:[#allocation3 + $0x112] sm:$0xff]
      %v3510 = vld [vmem:[#allocation3 + $0x122] sm:$0xff]
      %v3511 = vld [vmem:[#allocation3 + $0x12a] sm:$0xff]
      %v3512 = vld [vmem:[#allocation3 + $0x13a] sm:$0xff]
      %v3513 = vld [vmem:[#allocation3 + $0x142] sm:$0xff]
      %v3514 = vld [vmem:[#allocation3 + $0x152] sm:$0xff]
      %v3515 = vld [vmem:[#allocation3 + $0x15a] sm:$0xff]
      %v3516 = vld [vmem:[#allocation3 + $0x16a] sm:$0xff]
      %v3517 = vld [vmem:[#allocation3 + $0x172] sm:$0xff]
      %v3518 = vld [vmem:[%s3180] sm:$0xff]
      %v3519 = vld [vmem:[%s3180 + $0x8] sm:$0xff]
      %v3520 = vld [vmem:[%s3180 + $0x18] sm:$0xff]
      %v3521 = vld [vmem:[%s3180 + $0x20] sm:$0xff]
      %v3522 = vld [vmem:[%s3180 + $0x30] sm:$0xff]
      %v3523 = vld [vmem:[%s3180 + $0x38] sm:$0xff]
      %v3524 = vld [vmem:[%s3180 + $0x48] sm:$0xff]
      %v3525 = vld [vmem:[%s3180 + $0x50] sm:$0xff]
      %v3526 = vld [vmem:[%s3180 + $0x60] sm:$0xff]
      %v3527 = vld [vmem:[%s3180 + $0x68] sm:$0xff]
      %v3528 = vld [vmem:[%s3180 + $0x78] sm:$0xff]
      %v3529 = vld [vmem:[%s3180 + $0x80] sm:$0xff]
      %v3530 = vld [vmem:[%s3180 + $0x90] sm:$0xff]
      %v3531 = vld [vmem:[%s3180 + $0x98] sm:$0xff]
      %v3532 = vld [vmem:[%s3180 + $0xa8] sm:$0xff]
      %v3533 = vld [vmem:[%s3180 + $0xb0] sm:$0xff]
      %v3534 = vld [vmem:[%s3180 + $0xc0] sm:$0xff]
      %v3535 = vld [vmem:[%s3180 + $0xc8] sm:$0xff]
      %v3536 = vld [vmem:[%s3180 + $0xd8] sm:$0xff]
      %v3537 = vld [vmem:[%s3180 + $0xe0] sm:$0xff]
      %v3538 = vld [vmem:[%s3180 + $0xf0] sm:$0xff]
      %v3539 = vld [vmem:[%s3180 + $0xf8] sm:$0xff]
      %v3540 = vld [vmem:[%s3180 + $0x108] sm:$0xff]
      %v3541 = vld [vmem:[%s3180 + $0x110] sm:$0xff]
      %v3542 = vld [vmem:[%s3180 + $0x120] sm:$0xff]
      %v3543 = vld [vmem:[%s3180 + $0x128] sm:$0xff]
      %v3544 = vld [vmem:[%s3180 + $0x138] sm:$0xff]
      %v3545 = vld [vmem:[%s3180 + $0x140] sm:$0xff]
      %v3546 = vld [vmem:[%s3180 + $0x150] sm:$0xff]
      %v3547 = vld [vmem:[%s3180 + $0x158] sm:$0xff]
      %v3548 = vld [vmem:[%s3180 + $0x168] sm:$0xff]
      %v3549 = vld [vmem:[%s3180 + $0x170] sm:$0xff]
      %v3550 = vld [vmem:[%s2220] sm:$0xff]
      %v3551 = vld [vmem:[%s2220 + $0x8] sm:$0xff]
      %v3552 = vld [vmem:[%s2220 + $0x18] sm:$0xff]
      %v3553 = vld [vmem:[%s2220 + $0x20] sm:$0xff]
      %v3554 = vld [vmem:[%s2220 + $0x30] sm:$0xff]
      %v3555 = vld [vmem:[%s2220 + $0x38] sm:$0xff]
      %v3556 = vld [vmem:[%s2220 + $0x48] sm:$0xff]
      %v3557 = vld [vmem:[%s2220 + $0x50] sm:$0xff]
      %v3558 = vld [vmem:[%s2220 + $0x60] sm:$0xff]
      %v3559 = vld [vmem:[%s2220 + $0x68] sm:$0xff]
      %v3560 = vld [vmem:[%s2220 + $0x78] sm:$0xff]
      %v3561 = vld [vmem:[%s2220 + $0x80] sm:$0xff]
      %v3562 = vld [vmem:[%s2220 + $0x90] sm:$0xff]
      %v3563 = vld [vmem:[%s2220 + $0x98] sm:$0xff]
      %v3564 = vld [vmem:[%s2220 + $0xa8] sm:$0xff]
      %v3565 = vld [vmem:[%s2220 + $0xb0] sm:$0xff]
      %v3566 = vld [vmem:[%s2220 + $0xc0] sm:$0xff]
      %v3567 = vld [vmem:[%s2220 + $0xc8] sm:$0xff]
      %v3568 = vld [vmem:[%s2220 + $0xd8] sm:$0xff]
      %v3569 = vld [vmem:[%s2220 + $0xe0] sm:$0xff]
      %v3570 = vld [vmem:[%s2220 + $0xf0] sm:$0xff]
      %v3571 = vld [vmem:[%s2220 + $0xf8] sm:$0xff]
      %v3572 = vld [vmem:[%s2220 + $0x108] sm:$0xff]
      %v3573 = vld [vmem:[%s2220 + $0x110] sm:$0xff]
      %v3574 = vld [vmem:[%s2220 + $0x120] sm:$0xff]
      %v3575 = vld [vmem:[%s2220 + $0x128] sm:$0xff]
      %v3576 = vld [vmem:[%s2220 + $0x138] sm:$0xff]
      %v3577 = vld [vmem:[%s2220 + $0x140] sm:$0xff]
      %v3578 = vld [vmem:[%s2220 + $0x150] sm:$0xff]
      %v3579 = vld [vmem:[%s2220 + $0x158] sm:$0xff]
      %v3580 = vld [vmem:[%s2220 + $0x168] sm:$0xff]
      %v3581 = vld [vmem:[%s2220 + $0x170] sm:$0xff]
      %v3582 = vld [vmem:[%s3180 + $0x1] sm:$0xff]
      %v3583 = vld [vmem:[%s3180 + $0x9] sm:$0xff]
      %v3584 = vld [vmem:[%s3180 + $0x19] sm:$0xff]
      %v3585 = vld [vmem:[%s3180 + $0x21] sm:$0xff]
      %v3586 = vld [vmem:[%s3180 + $0x31] sm:$0xff]
      %v3587 = vld [vmem:[%s3180 + $0x39] sm:$0xff]
      %v3588 = vld [vmem:[%s3180 + $0x49] sm:$0xff]
      %v3589 = vld [vmem:[%s3180 + $0x51] sm:$0xff]
      %v3590 = vld [vmem:[%s3180 + $0x61] sm:$0xff]
      %v3591 = vld [vmem:[%s3180 + $0x69] sm:$0xff]
      %v3592 = vld [vmem:[%s3180 + $0x79] sm:$0xff]
      %v3593 = vld [vmem:[%s3180 + $0x81] sm:$0xff]
      %v3594 = vld [vmem:[%s3180 + $0x91] sm:$0xff]
      %v3595 = vld [vmem:[%s3180 + $0x99] sm:$0xff]
      %v3596 = vld [vmem:[%s3180 + $0xa9] sm:$0xff]
      %v3597 = vld [vmem:[%s3180 + $0xb1] sm:$0xff]
      %v3598 = vld [vmem:[%s3180 + $0xc1] sm:$0xff]
      %v3599 = vld [vmem:[%s3180 + $0xc9] sm:$0xff]
      %v3600 = vld [vmem:[%s3180 + $0xd9] sm:$0xff]
      %v3601 = vld [vmem:[%s3180 + $0xe1] sm:$0xff]
      %v3602 = vld [vmem:[%s3180 + $0xf1] sm:$0xff]
      %v3603 = vld [vmem:[%s3180 + $0xf9] sm:$0xff]
      %v3604 = vld [vmem:[%s3180 + $0x109] sm:$0xff]
      %v3605 = vld [vmem:[%s3180 + $0x111] sm:$0xff]
      %v3606 = vld [vmem:[%s3180 + $0x121] sm:$0xff]
      %v3607 = vld [vmem:[%s3180 + $0x129] sm:$0xff]
      %v3608 = vld [vmem:[%s3180 + $0x139] sm:$0xff]
      %v3609 = vld [vmem:[%s3180 + $0x141] sm:$0xff]
      %v3610 = vld [vmem:[%s3180 + $0x151] sm:$0xff]
      %v3611 = vld [vmem:[%s3180 + $0x159] sm:$0xff]
      %v3612 = vld [vmem:[%s3180 + $0x169] sm:$0xff]
      %v3613 = vld [vmem:[%s3180 + $0x171] sm:$0xff]
      %v3614 = vld [vmem:[%s2220 + $0x1] sm:$0xff]
      %v3615 = vld [vmem:[%s2220 + $0x9] sm:$0xff]
      %v3616 = vld [vmem:[%s2220 + $0x19] sm:$0xff]
      %v3617 = vld [vmem:[%s2220 + $0x21] sm:$0xff]
      %v3618 = vld [vmem:[%s2220 + $0x31] sm:$0xff]
      %v3619 = vld [vmem:[%s2220 + $0x39] sm:$0xff]
      %v3620 = vld [vmem:[%s2220 + $0x49] sm:$0xff]
      %v3621 = vld [vmem:[%s2220 + $0x51] sm:$0xff]
      %v3622 = vld [vmem:[%s2220 + $0x61] sm:$0xff]
      %v3623 = vld [vmem:[%s2220 + $0x69] sm:$0xff]
      %v3624 = vld [vmem:[%s2220 + $0x79] sm:$0xff]
      %v3625 = vld [vmem:[%s2220 + $0x81] sm:$0xff]
      %v3626 = vld [vmem:[%s2220 + $0x91] sm:$0xff]
      %v3627 = vld [vmem:[%s2220 + $0x99] sm:$0xff]
      %v3628 = vld [vmem:[%s2220 + $0xa9] sm:$0xff]
      %v3629 = vld [vmem:[%s2220 + $0xb1] sm:$0xff]
      %v3630 = vld [vmem:[%s2220 + $0xc1] sm:$0xff]
      %v3631 = vld [vmem:[%s2220 + $0xc9] sm:$0xff]
      %v3632 = vld [vmem:[%s2220 + $0xd9] sm:$0xff]
      %v3633 = vld [vmem:[%s2220 + $0xe1] sm:$0xff]
      %v3634 = vld [vmem:[%s2220 + $0xf1] sm:$0xff]
      %v3635 = vld [vmem:[%s2220 + $0xf9] sm:$0xff]
      %v3636 = vld [vmem:[%s2220 + $0x109] sm:$0xff]
      %v3637 = vld [vmem:[%s2220 + $0x111] sm:$0xff]
      %v3638 = vld [vmem:[%s2220 + $0x121] sm:$0xff]
      %v3639 = vld [vmem:[%s2220 + $0x129] sm:$0xff]
      %v3640 = vld [vmem:[%s2220 + $0x139] sm:$0xff]
      %v3641 = vld [vmem:[%s2220 + $0x141] sm:$0xff]
      %v3642 = vld [vmem:[%s2220 + $0x151] sm:$0xff]
      %v3643 = vld [vmem:[%s2220 + $0x159] sm:$0xff]
      %v3644 = vld [vmem:[%s2220 + $0x169] sm:$0xff]
      %v3645 = vld [vmem:[%s2220 + $0x171] sm:$0xff]
      %v3646 = vld [vmem:[%s3180 + $0x2] sm:$0xff]
      %v3647 = vld [vmem:[%s3180 + $0xa] sm:$0xff]
      %v3648 = vld [vmem:[%s3180 + $0x1a] sm:$0xff]
      %v3649 = vld [vmem:[%s3180 + $0x22] sm:$0xff]
      %v3650 = vld [vmem:[%s3180 + $0x32] sm:$0xff]
      %v3651 = vld [vmem:[%s3180 + $0x3a] sm:$0xff]
      %v3652 = vld [vmem:[%s3180 + $0x4a] sm:$0xff]
      %v3653 = vld [vmem:[%s3180 + $0x52] sm:$0xff]
      %v3654 = vld [vmem:[%s3180 + $0x62] sm:$0xff]
      %v3655 = vld [vmem:[%s3180 + $0x6a] sm:$0xff]
      %v3656 = vld [vmem:[%s3180 + $0x7a] sm:$0xff]
      %v3657 = vld [vmem:[%s3180 + $0x82] sm:$0xff]
      %v3658 = vld [vmem:[%s3180 + $0x92] sm:$0xff]
      %v3659 = vld [vmem:[%s3180 + $0x9a] sm:$0xff]
      %v3660 = vld [vmem:[%s3180 + $0xaa] sm:$0xff]
      %v3661 = vld [vmem:[%s3180 + $0xb2] sm:$0xff]
      %v3662 = vld [vmem:[%s3180 + $0xc2] sm:$0xff]
      %v3663 = vld [vmem:[%s3180 + $0xca] sm:$0xff]
      %v3664 = vld [vmem:[%s3180 + $0xda] sm:$0xff]
      %v3665 = vld [vmem:[%s3180 + $0xe2] sm:$0xff]
      %v3666 = vld [vmem:[%s3180 + $0xf2] sm:$0xff]
      %v3667 = vld [vmem:[%s3180 + $0xfa] sm:$0xff]
      %v3668 = vld [vmem:[%s3180 + $0x10a] sm:$0xff]
      %v3669 = vld [vmem:[%s3180 + $0x112] sm:$0xff]
      %v3670 = vld [vmem:[%s3180 + $0x122] sm:$0xff]
      %v3671 = vld [vmem:[%s3180 + $0x12a] sm:$0xff]
      %v3672 = vld [vmem:[%s3180 + $0x13a] sm:$0xff]
      %v3673 = vld [vmem:[%s3180 + $0x142] sm:$0xff]
      %v3674 = vld [vmem:[%s3180 + $0x152] sm:$0xff]
      %v3675 = vld [vmem:[%s3180 + $0x15a] sm:$0xff]
      %v3676 = vld [vmem:[%s3180 + $0x16a] sm:$0xff]
      %v3677 = vld [vmem:[%s3180 + $0x172] sm:$0xff]
      %v3678 = vld [vmem:[%s2220 + $0x2] sm:$0xff]
      %v3679 = vld [vmem:[%s2220 + $0xa] sm:$0xff]
      %v3680 = vld [vmem:[%s2220 + $0x1a] sm:$0xff]
      %v3681 = vld [vmem:[%s2220 + $0x22] sm:$0xff]
      %v3682 = vld [vmem:[%s2220 + $0x32] sm:$0xff]
      %v3683 = vld [vmem:[%s2220 + $0x3a] sm:$0xff]
      %v3684 = vld [vmem:[%s2220 + $0x4a] sm:$0xff]
      %v3685 = vld [vmem:[%s2220 + $0x52] sm:$0xff]
      %v3686 = vld [vmem:[%s2220 + $0x62] sm:$0xff]
      %v3687 = vld [vmem:[%s2220 + $0x6a] sm:$0xff]
      %v3688 = vld [vmem:[%s2220 + $0x7a] sm:$0xff]
      %v3689 = vld [vmem:[%s2220 + $0x82] sm:$0xff]
      %v3690 = vld [vmem:[%s2220 + $0x92] sm:$0xff]
      %v3691 = vld [vmem:[%s2220 + $0x9a] sm:$0xff]
      %v3692 = vld [vmem:[%s2220 + $0xaa] sm:$0xff]
      %v3693 = vld [vmem:[%s2220 + $0xb2] sm:$0xff]
      %v3694 = vld [vmem:[%s2220 + $0xc2] sm:$0xff]
      %v3695 = vld [vmem:[%s2220 + $0xca] sm:$0xff]
      %v3696 = vld [vmem:[%s2220 + $0xda] sm:$0xff]
      %v3697 = vld [vmem:[%s2220 + $0xe2] sm:$0xff]
      %v3698 = vld [vmem:[%s2220 + $0xf2] sm:$0xff]
      %v3699 = vld [vmem:[%s2220 + $0xfa] sm:$0xff]
      %v3700 = vld [vmem:[%s2220 + $0x10a] sm:$0xff]
      %v3701 = vld [vmem:[%s2220 + $0x112] sm:$0xff]
      %v3702 = vld [vmem:[%s2220 + $0x122] sm:$0xff]
      %v3703 = vld [vmem:[%s2220 + $0x12a] sm:$0xff]
      %v3704 = vld [vmem:[%s2220 + $0x13a] sm:$0xff]
      %v3705 = vld [vmem:[%s2220 + $0x142] sm:$0xff]
      %v3706 = vld [vmem:[%s2220 + $0x152] sm:$0xff]
      %v3707 = vld [vmem:[%s2220 + $0x15a] sm:$0xff]
      %v3708 = vld [vmem:[%s2220 + $0x16a] sm:$0xff]
      %v3709 = vld [vmem:[%s2220 + $0x172] sm:$0xff]
      %v3710 = vld [vmem:[%s3269] sm:$0xff]
      %v3711 = vld [vmem:[%s3269 + $0x8] sm:$0xff]
      %v3712 = vld [vmem:[%s3269 + $0x18] sm:$0xff]
      %v3713 = vld [vmem:[%s3269 + $0x20] sm:$0xff]
      %v3714 = vld [vmem:[%s3269 + $0x30] sm:$0xff]
      %v3715 = vld [vmem:[%s3269 + $0x38] sm:$0xff]
      %v3716 = vld [vmem:[%s3269 + $0x48] sm:$0xff]
      %v3717 = vld [vmem:[%s3269 + $0x50] sm:$0xff]
      %v3718 = vld [vmem:[%s3269 + $0x60] sm:$0xff]
      %v3719 = vld [vmem:[%s3269 + $0x68] sm:$0xff]
      %v3720 = vld [vmem:[%s3269 + $0x78] sm:$0xff]
      %v3721 = vld [vmem:[%s3269 + $0x80] sm:$0xff]
      %v3722 = vld [vmem:[%s3269 + $0x90] sm:$0xff]
      %v3723 = vld [vmem:[%s3269 + $0x98] sm:$0xff]
      %v3724 = vld [vmem:[%s3269 + $0xa8] sm:$0xff]
      %v3725 = vld [vmem:[%s3269 + $0xb0] sm:$0xff]
      %v3726 = vld [vmem:[%s3269 + $0xc0] sm:$0xff]
      %v3727 = vld [vmem:[%s3269 + $0xc8] sm:$0xff]
      %v3728 = vld [vmem:[%s3269 + $0xd8] sm:$0xff]
      %v3729 = vld [vmem:[%s3269 + $0xe0] sm:$0xff]
      %v3730 = vld [vmem:[%s3269 + $0xf0] sm:$0xff]
      %v3731 = vld [vmem:[%s3269 + $0xf8] sm:$0xff]
      %v3732 = vld [vmem:[%s3269 + $0x108] sm:$0xff]
      %v3733 = vld [vmem:[%s3269 + $0x110] sm:$0xff]
      %v3734 = vld [vmem:[%s3269 + $0x120] sm:$0xff]
      %v3735 = vld [vmem:[%s3269 + $0x128] sm:$0xff]
      %v3736 = vld [vmem:[%s3269 + $0x138] sm:$0xff]
      %v3737 = vld [vmem:[%s3269 + $0x140] sm:$0xff]
      %v3738 = vld [vmem:[%s3269 + $0x150] sm:$0xff]
      %v3739 = vld [vmem:[%s3269 + $0x158] sm:$0xff]
      %v3740 = vld [vmem:[%s3269 + $0x168] sm:$0xff]
      %v3741 = vld [vmem:[%s3269 + $0x170] sm:$0xff]
      %v3742 = vld [vmem:[%s2285] sm:$0xff]
      %v3743 = vld [vmem:[%s2285 + $0x8] sm:$0xff]
      %v3744 = vld [vmem:[%s2285 + $0x18] sm:$0xff]
      %v3745 = vld [vmem:[%s2285 + $0x20] sm:$0xff]
      %v3746 = vld [vmem:[%s2285 + $0x30] sm:$0xff]
      %v3747 = vld [vmem:[%s2285 + $0x38] sm:$0xff]
      %v3748 = vld [vmem:[%s2285 + $0x48] sm:$0xff]
      %v3749 = vld [vmem:[%s2285 + $0x50] sm:$0xff]
      %v3750 = vld [vmem:[%s2285 + $0x60] sm:$0xff]
      %v3751 = vld [vmem:[%s2285 + $0x68] sm:$0xff]
      %v3752 = vld [vmem:[%s2285 + $0x78] sm:$0xff]
      %v3753 = vld [vmem:[%s2285 + $0x80] sm:$0xff]
      %v3754 = vld [vmem:[%s2285 + $0x90] sm:$0xff]
      %v3755 = vld [vmem:[%s2285 + $0x98] sm:$0xff]
      %v3756 = vld [vmem:[%s2285 + $0xa8] sm:$0xff]
      %v3757 = vld [vmem:[%s2285 + $0xb0] sm:$0xff]
      %v3758 = vld [vmem:[%s2285 + $0xc0] sm:$0xff]
      %v3759 = vld [vmem:[%s2285 + $0xc8] sm:$0xff]
      %v3760 = vld [vmem:[%s2285 + $0xd8] sm:$0xff]
      %v3761 = vld [vmem:[%s2285 + $0xe0] sm:$0xff]
      %v3762 = vld [vmem:[%s2285 + $0xf0] sm:$0xff]
      %v3763 = vld [vmem:[%s2285 + $0xf8] sm:$0xff]
      %v3764 = vld [vmem:[%s2285 + $0x108] sm:$0xff]
      %v3765 = vld [vmem:[%s2285 + $0x110] sm:$0xff]
      %v3766 = vld [vmem:[%s2285 + $0x120] sm:$0xff]
      %v3767 = vld [vmem:[%s2285 + $0x128] sm:$0xff]
      %v3768 = vld [vmem:[%s2285 + $0x138] sm:$0xff]
      %v3769 = vld [vmem:[%s2285 + $0x140] sm:$0xff]
      %v3770 = vld [vmem:[%s2285 + $0x150] sm:$0xff]
      %v3771 = vld [vmem:[%s2285 + $0x158] sm:$0xff]
      %v3772 = vld [vmem:[%s2285 + $0x168] sm:$0xff]
      %v3773 = vld [vmem:[%s2285 + $0x170] sm:$0xff]
      %v3774 = vld [vmem:[%s3269 + $0x1] sm:$0xff]
      %v3775 = vld [vmem:[%s3269 + $0x9] sm:$0xff]
      %v3776 = vld [vmem:[%s3269 + $0x19] sm:$0xff]
      %v3777 = vld [vmem:[%s3269 + $0x21] sm:$0xff]
      %v3778 = vld [vmem:[%s3269 + $0x31] sm:$0xff]
      %v3779 = vld [vmem:[%s3269 + $0x39] sm:$0xff]
      %v3780 = vld [vmem:[%s3269 + $0x49] sm:$0xff]
      %v3781 = vld [vmem:[%s3269 + $0x51] sm:$0xff]
      %v3782 = vld [vmem:[%s3269 + $0x61] sm:$0xff]
      %v3783 = vld [vmem:[%s3269 + $0x69] sm:$0xff]
      %v3784 = vld [vmem:[%s3269 + $0x79] sm:$0xff]
      %v3785 = vld [vmem:[%s3269 + $0x81] sm:$0xff]
      %v3786 = vld [vmem:[%s3269 + $0x91] sm:$0xff]
      %v3787 = vld [vmem:[%s3269 + $0x99] sm:$0xff]
      %v3788 = vld [vmem:[%s3269 + $0xa9] sm:$0xff]
      %v3789 = vld [vmem:[%s3269 + $0xb1] sm:$0xff]
      %v3790 = vld [vmem:[%s3269 + $0xc1] sm:$0xff]
      %v3791 = vld [vmem:[%s3269 + $0xc9] sm:$0xff]
      %v3792 = vld [vmem:[%s3269 + $0xd9] sm:$0xff]
      %v3793 = vld [vmem:[%s3269 + $0xe1] sm:$0xff]
      %v3794 = vld [vmem:[%s3269 + $0xf1] sm:$0xff]
      %v3795 = vld [vmem:[%s3269 + $0xf9] sm:$0xff]
      %v3796 = vld [vmem:[%s3269 + $0x109] sm:$0xff]
      %v3797 = vld [vmem:[%s3269 + $0x111] sm:$0xff]
      %v3798 = vld [vmem:[%s3269 + $0x121] sm:$0xff]
      %v3799 = vld [vmem:[%s3269 + $0x129] sm:$0xff]
      %v3800 = vld [vmem:[%s3269 + $0x139] sm:$0xff]
      %v3801 = vld [vmem:[%s3269 + $0x141] sm:$0xff]
      %v3802 = vld [vmem:[%s3269 + $0x151] sm:$0xff]
      %v3803 = vld [vmem:[%s3269 + $0x159] sm:$0xff]
      %v3804 = vld [vmem:[%s3269 + $0x169] sm:$0xff]
      %v3805 = vld [vmem:[%s3269 + $0x171] sm:$0xff]
      %v3806 = vld [vmem:[%s2285 + $0x1] sm:$0xff]
      %v3807 = vld [vmem:[%s2285 + $0x9] sm:$0xff]
      %v3808 = vld [vmem:[%s2285 + $0x19] sm:$0xff]
      %v3809 = vld [vmem:[%s2285 + $0x21] sm:$0xff]
      %v3810 = vld [vmem:[%s2285 + $0x31] sm:$0xff]
      %v3811 = vld [vmem:[%s2285 + $0x39] sm:$0xff]
      %v3812 = vld [vmem:[%s2285 + $0x49] sm:$0xff]
      %v3813 = vld [vmem:[%s2285 + $0x51] sm:$0xff]
      %v3814 = vld [vmem:[%s2285 + $0x61] sm:$0xff]
      %v3815 = vld [vmem:[%s2285 + $0x69] sm:$0xff]
      %v3816 = vld [vmem:[%s2285 + $0x79] sm:$0xff]
      %v3817 = vld [vmem:[%s2285 + $0x81] sm:$0xff]
      %v3818 = vld [vmem:[%s2285 + $0x91] sm:$0xff]
      %v3819 = vld [vmem:[%s2285 + $0x99] sm:$0xff]
      %v3820 = vld [vmem:[%s2285 + $0xa9] sm:$0xff]
      %v3821 = vld [vmem:[%s2285 + $0xb1] sm:$0xff]
      %v3822 = vld [vmem:[%s2285 + $0xc1] sm:$0xff]
      %v3823 = vld [vmem:[%s2285 + $0xc9] sm:$0xff]
      %v3824 = vld [vmem:[%s2285 + $0xd9] sm:$0xff]
      %v3825 = vld [vmem:[%s2285 + $0xe1] sm:$0xff]
      %v3826 = vld [vmem:[%s2285 + $0xf1] sm:$0xff]
      %v3827 = vld [vmem:[%s2285 + $0xf9] sm:$0xff]
      %v3828 = vld [vmem:[%s2285 + $0x109] sm:$0xff]
      %v3829 = vld [vmem:[%s2285 + $0x111] sm:$0xff]
      %v3830 = vld [vmem:[%s2285 + $0x121] sm:$0xff]
      %v3831 = vld [vmem:[%s2285 + $0x129] sm:$0xff]
      %v3832 = vld [vmem:[%s2285 + $0x139] sm:$0xff]
      %v3833 = vld [vmem:[%s2285 + $0x141] sm:$0xff]
      %v3834 = vld [vmem:[%s2285 + $0x151] sm:$0xff]
      %v3835 = vld [vmem:[%s2285 + $0x159] sm:$0xff]
      %v3836 = vld [vmem:[%s2285 + $0x169] sm:$0xff]
      %v3837 = vld [vmem:[%s2285 + $0x171] sm:$0xff]
      %v3838 = vld [vmem:[%s3269 + $0x2] sm:$0xff]
      %v3839 = vld [vmem:[%s3269 + $0xa] sm:$0xff]
      %v3840 = vld [vmem:[%s3269 + $0x1a] sm:$0xff]
      %v3841 = vld [vmem:[%s3269 + $0x22] sm:$0xff]
      %v3842 = vld [vmem:[%s3269 + $0x32] sm:$0xff]
      %v3843 = vld [vmem:[%s3269 + $0x3a] sm:$0xff]
      %v3844 = vld [vmem:[%s3269 + $0x4a] sm:$0xff]
      %v3845 = vld [vmem:[%s3269 + $0x52] sm:$0xff]
      %v3846 = vld [vmem:[%s3269 + $0x62] sm:$0xff]
      %v3847 = vld [vmem:[%s3269 + $0x6a] sm:$0xff]
      %v3848 = vld [vmem:[%s3269 + $0x7a] sm:$0xff]
      %v3849 = vld [vmem:[%s3269 + $0x82] sm:$0xff]
      %v3850 = vld [vmem:[%s3269 + $0x92] sm:$0xff]
      %v3851 = vld [vmem:[%s3269 + $0x9a] sm:$0xff]
      %v3852 = vld [vmem:[%s3269 + $0xaa] sm:$0xff]
      %v3853 = vld [vmem:[%s3269 + $0xb2] sm:$0xff]
      %v3854 = vld [vmem:[%s3269 + $0xc2] sm:$0xff]
      %v3855 = vld [vmem:[%s3269 + $0xca] sm:$0xff]
      %v3856 = vld [vmem:[%s3269 + $0xda] sm:$0xff]
      %v3857 = vld [vmem:[%s3269 + $0xe2] sm:$0xff]
      %v3858 = vld [vmem:[%s3269 + $0xf2] sm:$0xff]
      %v3859 = vld [vmem:[%s3269 + $0xfa] sm:$0xff]
      %v3860 = vld [vmem:[%s3269 + $0x10a] sm:$0xff]
      %v3861 = vld [vmem:[%s3269 + $0x112] sm:$0xff]
      %v3862 = vld [vmem:[%s3269 + $0x122] sm:$0xff]
      %v3863 = vld [vmem:[%s3269 + $0x12a] sm:$0xff]
      %v3864 = vld [vmem:[%s3269 + $0x13a] sm:$0xff]
      %v3865 = vld [vmem:[%s3269 + $0x142] sm:$0xff]
      %v3866 = vld [vmem:[%s3269 + $0x152] sm:$0xff]
      %v3867 = vld [vmem:[%s3269 + $0x15a] sm:$0xff]
      %v3868 = vld [vmem:[%s3269 + $0x16a] sm:$0xff]
      %v3869 = vld [vmem:[%s3269 + $0x172] sm:$0xff]
      %v3870 = vld [vmem:[%s2285 + $0x2] sm:$0xff]
      %v3871 = vld [vmem:[%s2285 + $0xa] sm:$0xff]
      %v3872 = vld [vmem:[%s2285 + $0x1a] sm:$0xff]
      %v3873 = vld [vmem:[%s2285 + $0x22] sm:$0xff]
      %v3874 = vld [vmem:[%s2285 + $0x32] sm:$0xff]
      %v3875 = vld [vmem:[%s2285 + $0x3a] sm:$0xff]
      %v3876 = vld [vmem:[%s2285 + $0x4a] sm:$0xff]
      %v3877 = vld [vmem:[%s2285 + $0x52] sm:$0xff]
      %v3878 = vld [vmem:[%s2285 + $0x62] sm:$0xff]
      %v3879 = vld [vmem:[%s2285 + $0x6a] sm:$0xff]
      %v3880 = vld [vmem:[%s2285 + $0x7a] sm:$0xff]
      %v3881 = vld [vmem:[%s2285 + $0x82] sm:$0xff]
      %v3882 = vld [vmem:[%s2285 + $0x92] sm:$0xff]
      %v3883 = vld [vmem:[%s2285 + $0x9a] sm:$0xff]
      %v3884 = vld [vmem:[%s2285 + $0xaa] sm:$0xff]
      %v3885 = vld [vmem:[%s2285 + $0xb2] sm:$0xff]
      %v3886 = vld [vmem:[%s2285 + $0xc2] sm:$0xff]
      %v3887 = vld [vmem:[%s2285 + $0xca] sm:$0xff]
      %v3888 = vld [vmem:[%s2285 + $0xda] sm:$0xff]
      %v3889 = vld [vmem:[%s2285 + $0xe2] sm:$0xff]
      %v3890 = vld [vmem:[%s2285 + $0xf2] sm:$0xff]
      %v3891 = vld [vmem:[%s2285 + $0xfa] sm:$0xff]
      %v3892 = vld [vmem:[%s2285 + $0x10a] sm:$0xff]
      %v3893 = vld [vmem:[%s2285 + $0x112] sm:$0xff]
      %v3894 = vld [vmem:[%s2285 + $0x122] sm:$0xff]
      %v3895 = vld [vmem:[%s2285 + $0x12a] sm:$0xff]
      %v3896 = vld [vmem:[%s2285 + $0x13a] sm:$0xff]
      %v3897 = vld [vmem:[%s2285 + $0x142] sm:$0xff]
      %v3898 = vld [vmem:[%s2285 + $0x152] sm:$0xff]
      %v3899 = vld [vmem:[%s2285 + $0x15a] sm:$0xff]
      %v3900 = vld [vmem:[%s2285 + $0x16a] sm:$0xff]
      %v3901 = vld [vmem:[%s2285 + $0x172] sm:$0xff]
      %3934 = vrot.lane.b32.xlu0 %v3358, 32
      %v3935 = vpop.permute.xlu0 %3934
      %3936 = vrot.lane.b32.xlu0 %v3359, 32
      %v3937 = vpop.permute.xlu0 %3936
      %3938 = vrot.lane.b32.xlu0 %v3360, 32
      %v3939 = vpop.permute.xlu0 %3938
      %3940 = vrot.lane.b32.xlu0 %v3361, 32
      %v3941 = vpop.permute.xlu0 %3940
      %3942 = vrot.lane.b32.xlu0 %v3362, 32
      %v3943 = vpop.permute.xlu0 %3942
      %3944 = vrot.lane.b32.xlu0 %v3363, 32
      %v3945 = vpop.permute.xlu0 %3944
      %3946 = vrot.lane.b32.xlu0 %v3364, 32
      %v3947 = vpop.permute.xlu0 %3946
      %3948 = vrot.lane.b32.xlu0 %v3365, 32
      %v3949 = vpop.permute.xlu0 %3948
      %3950 = vrot.lane.b32.xlu0 %v3366, 32
      %v3951 = vpop.permute.xlu0 %3950
      %3952 = vrot.lane.b32.xlu0 %v3367, 32
      %v3953 = vpop.permute.xlu0 %3952
      %3954 = vrot.lane.b32.xlu0 %v3368, 32
      %v3955 = vpop.permute.xlu0 %3954
      %3956 = vrot.lane.b32.xlu0 %v3369, 32
      %v3957 = vpop.permute.xlu0 %3956
      %3958 = vrot.lane.b32.xlu0 %v3370, 32
      %v3959 = vpop.permute.xlu0 %3958
      %3960 = vrot.lane.b32.xlu0 %v3371, 32
      %v3961 = vpop.permute.xlu0 %3960
      %3962 = vrot.lane.b32.xlu0 %v3372, 32
      %v3963 = vpop.permute.xlu0 %3962
      %3964 = vrot.lane.b32.xlu0 %v3373, 32
      %v3965 = vpop.permute.xlu0 %3964
      %3966 = vrot.lane.b32.xlu0 %v3374, 32
      %v3967 = vpop.permute.xlu0 %3966
      %3968 = vrot.lane.b32.xlu0 %v3375, 32
      %v3969 = vpop.permute.xlu0 %3968
      %3970 = vrot.lane.b32.xlu0 %v3376, 32
      %v3971 = vpop.permute.xlu0 %3970
      %3972 = vrot.lane.b32.xlu0 %v3377, 32
      %v3973 = vpop.permute.xlu0 %3972
      %3974 = vrot.lane.b32.xlu0 %v3378, 32
      %v3975 = vpop.permute.xlu0 %3974
      %3976 = vrot.lane.b32.xlu0 %v3379, 32
      %v3977 = vpop.permute.xlu0 %3976
      %3978 = vrot.lane.b32.xlu0 %v3380, 32
      %v3979 = vpop.permute.xlu0 %3978
      %3980 = vrot.lane.b32.xlu0 %v3381, 32
      %v3981 = vpop.permute.xlu0 %3980
      %3982 = vrot.lane.b32.xlu0 %v3382, 32
      %v3983 = vpop.permute.xlu0 %3982
      %3984 = vrot.lane.b32.xlu0 %v3383, 32
      %v3985 = vpop.permute.xlu0 %3984
      %3986 = vrot.lane.b32.xlu0 %v3384, 32
      %v3987 = vpop.permute.xlu0 %3986
      %3988 = vrot.lane.b32.xlu0 %v3385, 32
      %v3989 = vpop.permute.xlu0 %3988
      %3990 = vrot.lane.b32.xlu0 %v3386, 32
      %v3991 = vpop.permute.xlu0 %3990
      %3992 = vrot.lane.b32.xlu0 %v3387, 32
      %v3993 = vpop.permute.xlu0 %3992
      %3994 = vrot.lane.b32.xlu0 %v3388, 32
      %v3995 = vpop.permute.xlu0 %3994
      %3996 = vrot.lane.b32.xlu0 %v3389, 32
      %v3997 = vpop.permute.xlu0 %3996
      %4062 = vrot.lane.b32.xlu0 %v3390, 64
      %v4063 = vpop.permute.xlu0 %4062
      %4064 = vrot.lane.b32.xlu0 %v3391, 64
      %v4065 = vpop.permute.xlu0 %4064
      %4066 = vrot.lane.b32.xlu0 %v3392, 64
      %v4067 = vpop.permute.xlu0 %4066
      %4068 = vrot.lane.b32.xlu0 %v3393, 64
      %v4069 = vpop.permute.xlu0 %4068
      %4070 = vrot.lane.b32.xlu0 %v3394, 64
      %v4071 = vpop.permute.xlu0 %4070
      %4072 = vrot.lane.b32.xlu0 %v3395, 64
      %v4073 = vpop.permute.xlu0 %4072
      %4074 = vrot.lane.b32.xlu0 %v3396, 64
      %v4075 = vpop.permute.xlu0 %4074
      %4076 = vrot.lane.b32.xlu0 %v3397, 64
      %v4077 = vpop.permute.xlu0 %4076
      %4078 = vrot.lane.b32.xlu0 %v3398, 64
      %v4079 = vpop.permute.xlu0 %4078
      %4080 = vrot.lane.b32.xlu0 %v3399, 64
      %v4081 = vpop.permute.xlu0 %4080
      %4082 = vrot.lane.b32.xlu0 %v3400, 64
      %v4083 = vpop.permute.xlu0 %4082
      %4084 = vrot.lane.b32.xlu0 %v3401, 64
      %v4085 = vpop.permute.xlu0 %4084
      %4086 = vrot.lane.b32.xlu0 %v3402, 64
      %v4087 = vpop.permute.xlu0 %4086
      %4088 = vrot.lane.b32.xlu0 %v3403, 64
      %v4089 = vpop.permute.xlu0 %4088
      %4090 = vrot.lane.b32.xlu0 %v3404, 64
      %v4091 = vpop.permute.xlu0 %4090
      %4092 = vrot.lane.b32.xlu0 %v3405, 64
      %v4093 = vpop.permute.xlu0 %4092
      %4094 = vrot.lane.b32.xlu0 %v3406, 64
      %v4095 = vpop.permute.xlu0 %4094
      %4096 = vrot.lane.b32.xlu0 %v3407, 64
      %v4097 = vpop.permute.xlu0 %4096
      %4098 = vrot.lane.b32.xlu0 %v3408, 64
      %v4099 = vpop.permute.xlu0 %4098
      %4100 = vrot.lane.b32.xlu0 %v3409, 64
      %v4101 = vpop.permute.xlu0 %4100
      %4102 = vrot.lane.b32.xlu0 %v3410, 64
      %v4103 = vpop.permute.xlu0 %4102
      %4104 = vrot.lane.b32.xlu0 %v3411, 64
      %v4105 = vpop.permute.xlu0 %4104
      %4106 = vrot.lane.b32.xlu0 %v3412, 64
      %v4107 = vpop.permute.xlu0 %4106
      %4108 = vrot.lane.b32.xlu0 %v3413, 64
      %v4109 = vpop.permute.xlu0 %4108
      %4110 = vrot.lane.b32.xlu0 %v3414, 64
      %v4111 = vpop.permute.xlu0 %4110
      %4112 = vrot.lane.b32.xlu0 %v3415, 64
      %v4113 = vpop.permute.xlu0 %4112
      %4114 = vrot.lane.b32.xlu0 %v3416, 64
      %v4115 = vpop.permute.xlu0 %4114
      %4116 = vrot.lane.b32.xlu0 %v3417, 64
      %v4117 = vpop.permute.xlu0 %4116
      %4118 = vrot.lane.b32.xlu0 %v3418, 64
      %v4119 = vpop.permute.xlu0 %4118
      %4120 = vrot.lane.b32.xlu0 %v3419, 64
      %v4121 = vpop.permute.xlu0 %4120
      %4122 = vrot.lane.b32.xlu0 %v3420, 64
      %v4123 = vpop.permute.xlu0 %4122
      %4124 = vrot.lane.b32.xlu0 %v3421, 64
      %v4125 = vpop.permute.xlu0 %4124
      %4190 = vrot.lane.b32.xlu0 %v3422, 96
      %v4191 = vpop.permute.xlu0 %4190
      %4192 = vrot.lane.b32.xlu0 %v3423, 96
      %v4193 = vpop.permute.xlu0 %4192
      %4194 = vrot.lane.b32.xlu0 %v3424, 96
      %v4195 = vpop.permute.xlu0 %4194
      %4196 = vrot.lane.b32.xlu0 %v3425, 96
      %v4197 = vpop.permute.xlu0 %4196
      %4198 = vrot.lane.b32.xlu0 %v3426, 96
      %v4199 = vpop.permute.xlu0 %4198
      %4200 = vrot.lane.b32.xlu0 %v3427, 96
      %v4201 = vpop.permute.xlu0 %4200
      %4202 = vrot.lane.b32.xlu0 %v3428, 96
      %v4203 = vpop.permute.xlu0 %4202
      %4204 = vrot.lane.b32.xlu0 %v3429, 96
      %v4205 = vpop.permute.xlu0 %4204
      %4206 = vrot.lane.b32.xlu0 %v3430, 96
      %v4207 = vpop.permute.xlu0 %4206
      %4208 = vrot.lane.b32.xlu0 %v3431, 96
      %v4209 = vpop.permute.xlu0 %4208
      %4210 = vrot.lane.b32.xlu0 %v3432, 96
      %v4211 = vpop.permute.xlu0 %4210
      %4212 = vrot.lane.b32.xlu0 %v3433, 96
      %v4213 = vpop.permute.xlu0 %4212
      %4214 = vrot.lane.b32.xlu0 %v3434, 96
      %v4215 = vpop.permute.xlu0 %4214
      %4216 = vrot.lane.b32.xlu0 %v3435, 96
      %v4217 = vpop.permute.xlu0 %4216
      %4218 = vrot.lane.b32.xlu0 %v3436, 96
      %v4219 = vpop.permute.xlu0 %4218
      %4220 = vrot.lane.b32.xlu0 %v3437, 96
      %v4221 = vpop.permute.xlu0 %4220
      %4222 = vrot.lane.b32.xlu0 %v3438, 96
      %v4223 = vpop.permute.xlu0 %4222
      %4224 = vrot.lane.b32.xlu0 %v3439, 96
      %v4225 = vpop.permute.xlu0 %4224
      %4226 = vrot.lane.b32.xlu0 %v3440, 96
      %v4227 = vpop.permute.xlu0 %4226
      %4228 = vrot.lane.b32.xlu0 %v3441, 96
      %v4229 = vpop.permute.xlu0 %4228
      %4230 = vrot.lane.b32.xlu0 %v3442, 96
      %v4231 = vpop.permute.xlu0 %4230
      %4232 = vrot.lane.b32.xlu0 %v3443, 96
      %v4233 = vpop.permute.xlu0 %4232
      %4234 = vrot.lane.b32.xlu0 %v3444, 96
      %v4235 = vpop.permute.xlu0 %4234
      %4236 = vrot.lane.b32.xlu0 %v3445, 96
      %v4237 = vpop.permute.xlu0 %4236
      %4238 = vrot.lane.b32.xlu0 %v3446, 96
      %v4239 = vpop.permute.xlu0 %4238
      %4240 = vrot.lane.b32.xlu0 %v3447, 96
      %v4241 = vpop.permute.xlu0 %4240
      %4242 = vrot.lane.b32.xlu0 %v3448, 96
      %v4243 = vpop.permute.xlu0 %4242
      %4244 = vrot.lane.b32.xlu0 %v3449, 96
      %v4245 = vpop.permute.xlu0 %4244
      %4246 = vrot.lane.b32.xlu0 %v3450, 96
      %v4247 = vpop.permute.xlu0 %4246
      %4248 = vrot.lane.b32.xlu0 %v3451, 96
      %v4249 = vpop.permute.xlu0 %4248
      %4250 = vrot.lane.b32.xlu0 %v3452, 96
      %v4251 = vpop.permute.xlu0 %4250
      %4252 = vrot.lane.b32.xlu0 %v3453, 96
      %v4253 = vpop.permute.xlu0 %4252
      %4318 = vrot.lane.b32.xlu0 %v3486, 32
      %v4319 = vpop.permute.xlu0 %4318
      %4320 = vrot.lane.b32.xlu0 %v3487, 32
      %v4321 = vpop.permute.xlu0 %4320
      %4322 = vrot.lane.b32.xlu0 %v3488, 32
      %v4323 = vpop.permute.xlu0 %4322
      %4324 = vrot.lane.b32.xlu0 %v3489, 32
      %v4325 = vpop.permute.xlu0 %4324
      %4326 = vrot.lane.b32.xlu0 %v3490, 32
      %v4327 = vpop.permute.xlu0 %4326
      %4328 = vrot.lane.b32.xlu0 %v3491, 32
      %v4329 = vpop.permute.xlu0 %4328
      %4330 = vrot.lane.b32.xlu0 %v3492, 32
      %v4331 = vpop.permute.xlu0 %4330
      %4332 = vrot.lane.b32.xlu0 %v3493, 32
      %v4333 = vpop.permute.xlu0 %4332
      %4334 = vrot.lane.b32.xlu0 %v3494, 32
      %v4335 = vpop.permute.xlu0 %4334
      %4336 = vrot.lane.b32.xlu0 %v3495, 32
      %v4337 = vpop.permute.xlu0 %4336
      %4338 = vrot.lane.b32.xlu0 %v3496, 32
      %v4339 = vpop.permute.xlu0 %4338
      %4340 = vrot.lane.b32.xlu0 %v3497, 32
      %v4341 = vpop.permute.xlu0 %4340
      %4342 = vrot.lane.b32.xlu0 %v3498, 32
      %v4343 = vpop.permute.xlu0 %4342
      %4344 = vrot.lane.b32.xlu0 %v3499, 32
      %v4345 = vpop.permute.xlu0 %4344
      %4346 = vrot.lane.b32.xlu0 %v3500, 32
      %v4347 = vpop.permute.xlu0 %4346
      %4348 = vrot.lane.b32.xlu0 %v3501, 32
      %v4349 = vpop.permute.xlu0 %4348
      %4350 = vrot.lane.b32.xlu0 %v3502, 32
      %v4351 = vpop.permute.xlu0 %4350
      %4352 = vrot.lane.b32.xlu0 %v3503, 32
      %v4353 = vpop.permute.xlu0 %4352
      %4354 = vrot.lane.b32.xlu0 %v3504, 32
      %v4355 = vpop.permute.xlu0 %4354
      %4356 = vrot.lane.b32.xlu0 %v3505, 32
      %v4357 = vpop.permute.xlu0 %4356
      %4358 = vrot.lane.b32.xlu0 %v3506, 32
      %v4359 = vpop.permute.xlu0 %4358
      %4360 = vrot.lane.b32.xlu0 %v3507, 32
      %v4361 = vpop.permute.xlu0 %4360
      %4362 = vrot.lane.b32.xlu0 %v3508, 32
      %v4363 = vpop.permute.xlu0 %4362
      %4364 = vrot.lane.b32.xlu0 %v3509, 32
      %v4365 = vpop.permute.xlu0 %4364
      %4366 = vrot.lane.b32.xlu0 %v3510, 32
      %v4367 = vpop.permute.xlu0 %4366
      %4368 = vrot.lane.b32.xlu0 %v3511, 32
      %v4369 = vpop.permute.xlu0 %4368
      %4370 = vrot.lane.b32.xlu0 %v3512, 32
      %v4371 = vpop.permute.xlu0 %4370
      %4372 = vrot.lane.b32.xlu0 %v3513, 32
      %v4373 = vpop.permute.xlu0 %4372
      %4374 = vrot.lane.b32.xlu0 %v3514, 32
      %v4375 = vpop.permute.xlu0 %4374
      %4376 = vrot.lane.b32.xlu0 %v3515, 32
      %v4377 = vpop.permute.xlu0 %4376
      %4378 = vrot.lane.b32.xlu0 %v3516, 32
      %v4379 = vpop.permute.xlu0 %4378
      %4380 = vrot.lane.b32.xlu0 %v3517, 32
      %v4381 = vpop.permute.xlu0 %4380
      %4446 = vrot.lane.b32.xlu0 %v3518, 64
      %v4447 = vpop.permute.xlu0 %4446
      %4448 = vrot.lane.b32.xlu0 %v3519, 64
      %v4449 = vpop.permute.xlu0 %4448
      %4450 = vrot.lane.b32.xlu0 %v3520, 64
      %v4451 = vpop.permute.xlu0 %4450
      %4452 = vrot.lane.b32.xlu0 %v3521, 64
      %v4453 = vpop.permute.xlu0 %4452
      %4454 = vrot.lane.b32.xlu0 %v3522, 64
      %v4455 = vpop.permute.xlu0 %4454
      %4456 = vrot.lane.b32.xlu0 %v3523, 64
      %v4457 = vpop.permute.xlu0 %4456
      %4458 = vrot.lane.b32.xlu0 %v3524, 64
      %v4459 = vpop.permute.xlu0 %4458
      %4460 = vrot.lane.b32.xlu0 %v3525, 64
      %v4461 = vpop.permute.xlu0 %4460
      %4462 = vrot.lane.b32.xlu0 %v3526, 64
      %v4463 = vpop.permute.xlu0 %4462
      %4464 = vrot.lane.b32.xlu0 %v3527, 64
      %v4465 = vpop.permute.xlu0 %4464
      %4466 = vrot.lane.b32.xlu0 %v3528, 64
      %v4467 = vpop.permute.xlu0 %4466
      %4468 = vrot.lane.b32.xlu0 %v3529, 64
      %v4469 = vpop.permute.xlu0 %4468
      %4470 = vrot.lane.b32.xlu0 %v3530, 64
      %v4471 = vpop.permute.xlu0 %4470
      %4472 = vrot.lane.b32.xlu0 %v3531, 64
      %v4473 = vpop.permute.xlu0 %4472
      %4474 = vrot.lane.b32.xlu0 %v3532, 64
      %v4475 = vpop.permute.xlu0 %4474
      %4476 = vrot.lane.b32.xlu0 %v3533, 64
      %v4477 = vpop.permute.xlu0 %4476
      %4478 = vrot.lane.b32.xlu0 %v3534, 64
      %v4479 = vpop.permute.xlu0 %4478
      %4480 = vrot.lane.b32.xlu0 %v3535, 64
      %v4481 = vpop.permute.xlu0 %4480
      %4482 = vrot.lane.b32.xlu0 %v3536, 64
      %v4483 = vpop.permute.xlu0 %4482
      %4484 = vrot.lane.b32.xlu0 %v3537, 64
      %v4485 = vpop.permute.xlu0 %4484
      %4486 = vrot.lane.b32.xlu0 %v3538, 64
      %v4487 = vpop.permute.xlu0 %4486
      %4488 = vrot.lane.b32.xlu0 %v3539, 64
      %v4489 = vpop.permute.xlu0 %4488
      %4490 = vrot.lane.b32.xlu0 %v3540, 64
      %v4491 = vpop.permute.xlu0 %4490
      %4492 = vrot.lane.b32.xlu0 %v3541, 64
      %v4493 = vpop.permute.xlu0 %4492
      %4494 = vrot.lane.b32.xlu0 %v3542, 64
      %v4495 = vpop.permute.xlu0 %4494
      %4496 = vrot.lane.b32.xlu0 %v3543, 64
      %v4497 = vpop.permute.xlu0 %4496
      %4498 = vrot.lane.b32.xlu0 %v3544, 64
      %v4499 = vpop.permute.xlu0 %4498
      %4500 = vrot.lane.b32.xlu0 %v3545, 64
      %v4501 = vpop.permute.xlu0 %4500
      %4502 = vrot.lane.b32.xlu0 %v3546, 64
      %v4503 = vpop.permute.xlu0 %4502
      %4504 = vrot.lane.b32.xlu0 %v3547, 64
      %v4505 = vpop.permute.xlu0 %4504
      %4506 = vrot.lane.b32.xlu0 %v3548, 64
      %v4507 = vpop.permute.xlu0 %4506
      %4508 = vrot.lane.b32.xlu0 %v3549, 64
      %v4509 = vpop.permute.xlu0 %4508
      %4574 = vrot.lane.b32.xlu0 %v3550, 96
      %v4575 = vpop.permute.xlu0 %4574
      %4576 = vrot.lane.b32.xlu0 %v3551, 96
      %v4577 = vpop.permute.xlu0 %4576
      %4578 = vrot.lane.b32.xlu0 %v3552, 96
      %v4579 = vpop.permute.xlu0 %4578
      %4580 = vrot.lane.b32.xlu0 %v3553, 96
      %v4581 = vpop.permute.xlu0 %4580
      %4582 = vrot.lane.b32.xlu0 %v3554, 96
      %v4583 = vpop.permute.xlu0 %4582
      %4584 = vrot.lane.b32.xlu0 %v3555, 96
      %v4585 = vpop.permute.xlu0 %4584
      %4586 = vrot.lane.b32.xlu0 %v3556, 96
      %v4587 = vpop.permute.xlu0 %4586
      %4588 = vrot.lane.b32.xlu0 %v3557, 96
      %v4589 = vpop.permute.xlu0 %4588
      %4590 = vrot.lane.b32.xlu0 %v3558, 96
      %v4591 = vpop.permute.xlu0 %4590
      %4592 = vrot.lane.b32.xlu0 %v3559, 96
      %v4593 = vpop.permute.xlu0 %4592
      %4594 = vrot.lane.b32.xlu0 %v3560, 96
      %v4595 = vpop.permute.xlu0 %4594
      %4596 = vrot.lane.b32.xlu0 %v3561, 96
      %v4597 = vpop.permute.xlu0 %4596
      %4598 = vrot.lane.b32.xlu0 %v3562, 96
      %v4599 = vpop.permute.xlu0 %4598
      %4600 = vrot.lane.b32.xlu0 %v3563, 96
      %v4601 = vpop.permute.xlu0 %4600
      %4602 = vrot.lane.b32.xlu0 %v3564, 96
      %v4603 = vpop.permute.xlu0 %4602
      %4604 = vrot.lane.b32.xlu0 %v3565, 96
      %v4605 = vpop.permute.xlu0 %4604
      %4606 = vrot.lane.b32.xlu0 %v3566, 96
      %v4607 = vpop.permute.xlu0 %4606
      %4608 = vrot.lane.b32.xlu0 %v3567, 96
      %v4609 = vpop.permute.xlu0 %4608
      %4610 = vrot.lane.b32.xlu0 %v3568, 96
      %v4611 = vpop.permute.xlu0 %4610
      %4612 = vrot.lane.b32.xlu0 %v3569, 96
      %v4613 = vpop.permute.xlu0 %4612
      %4614 = vrot.lane.b32.xlu0 %v3570, 96
      %v4615 = vpop.permute.xlu0 %4614
      %4616 = vrot.lane.b32.xlu0 %v3571, 96
      %v4617 = vpop.permute.xlu0 %4616
      %4618 = vrot.lane.b32.xlu0 %v3572, 96
      %v4619 = vpop.permute.xlu0 %4618
      %4620 = vrot.lane.b32.xlu0 %v3573, 96
      %v4621 = vpop.permute.xlu0 %4620
      %4622 = vrot.lane.b32.xlu0 %v3574, 96
      %v4623 = vpop.permute.xlu0 %4622
      %4624 = vrot.lane.b32.xlu0 %v3575, 96
      %v4625 = vpop.permute.xlu0 %4624
      %4626 = vrot.lane.b32.xlu0 %v3576, 96
      %v4627 = vpop.permute.xlu0 %4626
      %4628 = vrot.lane.b32.xlu0 %v3577, 96
      %v4629 = vpop.permute.xlu0 %4628
      %4630 = vrot.lane.b32.xlu0 %v3578, 96
      %v4631 = vpop.permute.xlu0 %4630
      %4632 = vrot.lane.b32.xlu0 %v3579, 96
      %v4633 = vpop.permute.xlu0 %4632
      %4634 = vrot.lane.b32.xlu0 %v3580, 96
      %v4635 = vpop.permute.xlu0 %4634
      %4636 = vrot.lane.b32.xlu0 %v3581, 96
      %v4637 = vpop.permute.xlu0 %4636
      %4702 = vrot.lane.b32.xlu0 %v3614, 32
      %v4703 = vpop.permute.xlu0 %4702
      %4704 = vrot.lane.b32.xlu0 %v3615, 32
      %v4705 = vpop.permute.xlu0 %4704
      %4706 = vrot.lane.b32.xlu0 %v3616, 32
      %v4707 = vpop.permute.xlu0 %4706
      %4708 = vrot.lane.b32.xlu0 %v3617, 32
      %v4709 = vpop.permute.xlu0 %4708
      %4710 = vrot.lane.b32.xlu0 %v3618, 32
      %v4711 = vpop.permute.xlu0 %4710
      %4712 = vrot.lane.b32.xlu0 %v3619, 32
      %v4713 = vpop.permute.xlu0 %4712
      %4714 = vrot.lane.b32.xlu0 %v3620, 32
      %v4715 = vpop.permute.xlu0 %4714
      %4716 = vrot.lane.b32.xlu0 %v3621, 32
      %v4717 = vpop.permute.xlu0 %4716
      %4718 = vrot.lane.b32.xlu0 %v3622, 32
      %v4719 = vpop.permute.xlu0 %4718
      %4720 = vrot.lane.b32.xlu0 %v3623, 32
      %v4721 = vpop.permute.xlu0 %4720
      %4722 = vrot.lane.b32.xlu0 %v3624, 32
      %v4723 = vpop.permute.xlu0 %4722
      %4724 = vrot.lane.b32.xlu0 %v3625, 32
      %v4725 = vpop.permute.xlu0 %4724
      %4726 = vrot.lane.b32.xlu0 %v3626, 32
      %v4727 = vpop.permute.xlu0 %4726
      %4728 = vrot.lane.b32.xlu0 %v3627, 32
      %v4729 = vpop.permute.xlu0 %4728
      %4730 = vrot.lane.b32.xlu0 %v3628, 32
      %v4731 = vpop.permute.xlu0 %4730
      %4732 = vrot.lane.b32.xlu0 %v3629, 32
      %v4733 = vpop.permute.xlu0 %4732
      %4734 = vrot.lane.b32.xlu0 %v3630, 32
      %v4735 = vpop.permute.xlu0 %4734
      %4736 = vrot.lane.b32.xlu0 %v3631, 32
      %v4737 = vpop.permute.xlu0 %4736
      %4738 = vrot.lane.b32.xlu0 %v3632, 32
      %v4739 = vpop.permute.xlu0 %4738
      %4740 = vrot.lane.b32.xlu0 %v3633, 32
      %v4741 = vpop.permute.xlu0 %4740
      %4742 = vrot.lane.b32.xlu0 %v3634, 32
      %v4743 = vpop.permute.xlu0 %4742
      %4744 = vrot.lane.b32.xlu0 %v3635, 32
      %v4745 = vpop.permute.xlu0 %4744
      %4746 = vrot.lane.b32.xlu0 %v3636, 32
      %v4747 = vpop.permute.xlu0 %4746
      %4748 = vrot.lane.b32.xlu0 %v3637, 32
      %v4749 = vpop.permute.xlu0 %4748
      %4750 = vrot.lane.b32.xlu0 %v3638, 32
      %v4751 = vpop.permute.xlu0 %4750
      %4752 = vrot.lane.b32.xlu0 %v3639, 32
      %v4753 = vpop.permute.xlu0 %4752
      %4754 = vrot.lane.b32.xlu0 %v3640, 32
      %v4755 = vpop.permute.xlu0 %4754
      %4756 = vrot.lane.b32.xlu0 %v3641, 32
      %v4757 = vpop.permute.xlu0 %4756
      %4758 = vrot.lane.b32.xlu0 %v3642, 32
      %v4759 = vpop.permute.xlu0 %4758
      %4760 = vrot.lane.b32.xlu0 %v3643, 32
      %v4761 = vpop.permute.xlu0 %4760
      %4762 = vrot.lane.b32.xlu0 %v3644, 32
      %v4763 = vpop.permute.xlu0 %4762
      %4764 = vrot.lane.b32.xlu0 %v3645, 32
      %v4765 = vpop.permute.xlu0 %4764
      %4830 = vrot.lane.b32.xlu0 %v3646, 64
      %v4831 = vpop.permute.xlu0 %4830
      %4832 = vrot.lane.b32.xlu0 %v3647, 64
      %v4833 = vpop.permute.xlu0 %4832
      %4834 = vrot.lane.b32.xlu0 %v3648, 64
      %v4835 = vpop.permute.xlu0 %4834
      %4836 = vrot.lane.b32.xlu0 %v3649, 64
      %v4837 = vpop.permute.xlu0 %4836
      %4838 = vrot.lane.b32.xlu0 %v3650, 64
      %v4839 = vpop.permute.xlu0 %4838
      %4840 = vrot.lane.b32.xlu0 %v3651, 64
      %v4841 = vpop.permute.xlu0 %4840
      %4842 = vrot.lane.b32.xlu0 %v3652, 64
      %v4843 = vpop.permute.xlu0 %4842
      %4844 = vrot.lane.b32.xlu0 %v3653, 64
      %v4845 = vpop.permute.xlu0 %4844
      %4846 = vrot.lane.b32.xlu0 %v3654, 64
      %v4847 = vpop.permute.xlu0 %4846
      %4848 = vrot.lane.b32.xlu0 %v3655, 64
      %v4849 = vpop.permute.xlu0 %4848
      %4850 = vrot.lane.b32.xlu0 %v3656, 64
      %v4851 = vpop.permute.xlu0 %4850
      %4852 = vrot.lane.b32.xlu0 %v3657, 64
      %v4853 = vpop.permute.xlu0 %4852
      %4854 = vrot.lane.b32.xlu0 %v3658, 64
      %v4855 = vpop.permute.xlu0 %4854
      %4856 = vrot.lane.b32.xlu0 %v3659, 64
      %v4857 = vpop.permute.xlu0 %4856
      %4858 = vrot.lane.b32.xlu0 %v3660, 64
      %v4859 = vpop.permute.xlu0 %4858
      %4860 = vrot.lane.b32.xlu0 %v3661, 64
      %v4861 = vpop.permute.xlu0 %4860
      %4862 = vrot.lane.b32.xlu0 %v3662, 64
      %v4863 = vpop.permute.xlu0 %4862
      %4864 = vrot.lane.b32.xlu0 %v3663, 64
      %v4865 = vpop.permute.xlu0 %4864
      %4866 = vrot.lane.b32.xlu0 %v3664, 64
      %v4867 = vpop.permute.xlu0 %4866
      %4868 = vrot.lane.b32.xlu0 %v3665, 64
      %v4869 = vpop.permute.xlu0 %4868
      %4870 = vrot.lane.b32.xlu0 %v3666, 64
      %v4871 = vpop.permute.xlu0 %4870
      %4872 = vrot.lane.b32.xlu0 %v3667, 64
      %v4873 = vpop.permute.xlu0 %4872
      %4874 = vrot.lane.b32.xlu0 %v3668, 64
      %v4875 = vpop.permute.xlu0 %4874
      %4876 = vrot.lane.b32.xlu0 %v3669, 64
      %v4877 = vpop.permute.xlu0 %4876
      %4878 = vrot.lane.b32.xlu0 %v3670, 64
      %v4879 = vpop.permute.xlu0 %4878
      %4880 = vrot.lane.b32.xlu0 %v3671, 64
      %v4881 = vpop.permute.xlu0 %4880
      %4882 = vrot.lane.b32.xlu0 %v3672, 64
      %v4883 = vpop.permute.xlu0 %4882
      %4884 = vrot.lane.b32.xlu0 %v3673, 64
      %v4885 = vpop.permute.xlu0 %4884
      %4886 = vrot.lane.b32.xlu0 %v3674, 64
      %v4887 = vpop.permute.xlu0 %4886
      %4888 = vrot.lane.b32.xlu0 %v3675, 64
      %v4889 = vpop.permute.xlu0 %4888
      %4890 = vrot.lane.b32.xlu0 %v3676, 64
      %v4891 = vpop.permute.xlu0 %4890
      %4892 = vrot.lane.b32.xlu0 %v3677, 64
      %v4893 = vpop.permute.xlu0 %4892
      %4958 = vrot.lane.b32.xlu0 %v3678, 96
      %v4959 = vpop.permute.xlu0 %4958
      %4960 = vrot.lane.b32.xlu0 %v3679, 96
      %v4961 = vpop.permute.xlu0 %4960
      %4962 = vrot.lane.b32.xlu0 %v3680, 96
      %v4963 = vpop.permute.xlu0 %4962
      %4964 = vrot.lane.b32.xlu0 %v3681, 96
      %v4965 = vpop.permute.xlu0 %4964
      %4966 = vrot.lane.b32.xlu0 %v3682, 96
      %v4967 = vpop.permute.xlu0 %4966
      %4968 = vrot.lane.b32.xlu0 %v3683, 96
      %v4969 = vpop.permute.xlu0 %4968
      %4970 = vrot.lane.b32.xlu0 %v3684, 96
      %v4971 = vpop.permute.xlu0 %4970
      %4972 = vrot.lane.b32.xlu0 %v3685, 96
      %v4973 = vpop.permute.xlu0 %4972
      %4974 = vrot.lane.b32.xlu0 %v3686, 96
      %v4975 = vpop.permute.xlu0 %4974
      %4976 = vrot.lane.b32.xlu0 %v3687, 96
      %v4977 = vpop.permute.xlu0 %4976
      %4978 = vrot.lane.b32.xlu0 %v3688, 96
      %v4979 = vpop.permute.xlu0 %4978
      %4980 = vrot.lane.b32.xlu0 %v3689, 96
      %v4981 = vpop.permute.xlu0 %4980
      %4982 = vrot.lane.b32.xlu0 %v3690, 96
      %v4983 = vpop.permute.xlu0 %4982
      %4984 = vrot.lane.b32.xlu0 %v3691, 96
      %v4985 = vpop.permute.xlu0 %4984
      %4986 = vrot.lane.b32.xlu0 %v3692, 96
      %v4987 = vpop.permute.xlu0 %4986
      %4988 = vrot.lane.b32.xlu0 %v3693, 96
      %v4989 = vpop.permute.xlu0 %4988
      %4990 = vrot.lane.b32.xlu0 %v3694, 96
      %v4991 = vpop.permute.xlu0 %4990
      %4992 = vrot.lane.b32.xlu0 %v3695, 96
      %v4993 = vpop.permute.xlu0 %4992
      %4994 = vrot.lane.b32.xlu0 %v3696, 96
      %v4995 = vpop.permute.xlu0 %4994
      %4996 = vrot.lane.b32.xlu0 %v3697, 96
      %v4997 = vpop.permute.xlu0 %4996
      %4998 = vrot.lane.b32.xlu0 %v3698, 96
      %v4999 = vpop.permute.xlu0 %4998
      %5000 = vrot.lane.b32.xlu0 %v3699, 96
      %v5001 = vpop.permute.xlu0 %5000
      %5002 = vrot.lane.b32.xlu0 %v3700, 96
      %v5003 = vpop.permute.xlu0 %5002
      %5004 = vrot.lane.b32.xlu0 %v3701, 96
      %v5005 = vpop.permute.xlu0 %5004
      %5006 = vrot.lane.b32.xlu0 %v3702, 96
      %v5007 = vpop.permute.xlu0 %5006
      %5008 = vrot.lane.b32.xlu0 %v3703, 96
      %v5009 = vpop.permute.xlu0 %5008
      %5010 = vrot.lane.b32.xlu0 %v3704, 96
      %v5011 = vpop.permute.xlu0 %5010
      %5012 = vrot.lane.b32.xlu0 %v3705, 96
      %v5013 = vpop.permute.xlu0 %5012
      %5014 = vrot.lane.b32.xlu0 %v3706, 96
      %v5015 = vpop.permute.xlu0 %5014
      %5016 = vrot.lane.b32.xlu0 %v3707, 96
      %v5017 = vpop.permute.xlu0 %5016
      %5018 = vrot.lane.b32.xlu0 %v3708, 96
      %v5019 = vpop.permute.xlu0 %5018
      %5020 = vrot.lane.b32.xlu0 %v3709, 96
      %v5021 = vpop.permute.xlu0 %5020
      %5086 = vrot.lane.b32.xlu0 %v3742, 32
      %v5087 = vpop.permute.xlu0 %5086
      %5088 = vrot.lane.b32.xlu0 %v3743, 32
      %v5089 = vpop.permute.xlu0 %5088
      %5090 = vrot.lane.b32.xlu0 %v3744, 32
      %v5091 = vpop.permute.xlu0 %5090
      %5092 = vrot.lane.b32.xlu0 %v3745, 32
      %v5093 = vpop.permute.xlu0 %5092
      %5094 = vrot.lane.b32.xlu0 %v3746, 32
      %v5095 = vpop.permute.xlu0 %5094
      %5096 = vrot.lane.b32.xlu0 %v3747, 32
      %v5097 = vpop.permute.xlu0 %5096
      %5098 = vrot.lane.b32.xlu0 %v3748, 32
      %v5099 = vpop.permute.xlu0 %5098
      %5100 = vrot.lane.b32.xlu0 %v3749, 32
      %v5101 = vpop.permute.xlu0 %5100
      %5102 = vrot.lane.b32.xlu0 %v3750, 32
      %v5103 = vpop.permute.xlu0 %5102
      %5104 = vrot.lane.b32.xlu0 %v3751, 32
      %v5105 = vpop.permute.xlu0 %5104
      %5106 = vrot.lane.b32.xlu0 %v3752, 32
      %v5107 = vpop.permute.xlu0 %5106
      %5108 = vrot.lane.b32.xlu0 %v3753, 32
      %v5109 = vpop.permute.xlu0 %5108
      %5110 = vrot.lane.b32.xlu0 %v3754, 32
      %v5111 = vpop.permute.xlu0 %5110
      %5112 = vrot.lane.b32.xlu0 %v3755, 32
      %v5113 = vpop.permute.xlu0 %5112
      %5114 = vrot.lane.b32.xlu0 %v3756, 32
      %v5115 = vpop.permute.xlu0 %5114
      %5116 = vrot.lane.b32.xlu0 %v3757, 32
      %v5117 = vpop.permute.xlu0 %5116
      %5118 = vrot.lane.b32.xlu0 %v3758, 32
      %v5119 = vpop.permute.xlu0 %5118
      %5120 = vrot.lane.b32.xlu0 %v3759, 32
      %v5121 = vpop.permute.xlu0 %5120
      %5122 = vrot.lane.b32.xlu0 %v3760, 32
      %v5123 = vpop.permute.xlu0 %5122
      %5124 = vrot.lane.b32.xlu0 %v3761, 32
      %v5125 = vpop.permute.xlu0 %5124
      %5126 = vrot.lane.b32.xlu0 %v3762, 32
      %v5127 = vpop.permute.xlu0 %5126
      %5128 = vrot.lane.b32.xlu0 %v3763, 32
      %v5129 = vpop.permute.xlu0 %5128
      %5130 = vrot.lane.b32.xlu0 %v3764, 32
      %v5131 = vpop.permute.xlu0 %5130
      %5132 = vrot.lane.b32.xlu0 %v3765, 32
      %v5133 = vpop.permute.xlu0 %5132
      %5134 = vrot.lane.b32.xlu0 %v3766, 32
      %v5135 = vpop.permute.xlu0 %5134
      %5136 = vrot.lane.b32.xlu0 %v3767, 32
      %v5137 = vpop.permute.xlu0 %5136
      %5138 = vrot.lane.b32.xlu0 %v3768, 32
      %v5139 = vpop.permute.xlu0 %5138
      %5140 = vrot.lane.b32.xlu0 %v3769, 32
      %v5141 = vpop.permute.xlu0 %5140
      %5142 = vrot.lane.b32.xlu0 %v3770, 32
      %v5143 = vpop.permute.xlu0 %5142
      %5144 = vrot.lane.b32.xlu0 %v3771, 32
      %v5145 = vpop.permute.xlu0 %5144
      %5146 = vrot.lane.b32.xlu0 %v3772, 32
      %v5147 = vpop.permute.xlu0 %5146
      %5148 = vrot.lane.b32.xlu0 %v3773, 32
      %v5149 = vpop.permute.xlu0 %5148
      %5214 = vrot.lane.b32.xlu0 %v3774, 64
      %v5215 = vpop.permute.xlu0 %5214
      %5216 = vrot.lane.b32.xlu0 %v3775, 64
      %v5217 = vpop.permute.xlu0 %5216
      %5218 = vrot.lane.b32.xlu0 %v3776, 64
      %v5219 = vpop.permute.xlu0 %5218
      %5220 = vrot.lane.b32.xlu0 %v3777, 64
      %v5221 = vpop.permute.xlu0 %5220
      %5222 = vrot.lane.b32.xlu0 %v3778, 64
      %v5223 = vpop.permute.xlu0 %5222
      %5224 = vrot.lane.b32.xlu0 %v3779, 64
      %v5225 = vpop.permute.xlu0 %5224
      %5226 = vrot.lane.b32.xlu0 %v3780, 64
      %v5227 = vpop.permute.xlu0 %5226
      %5228 = vrot.lane.b32.xlu0 %v3781, 64
      %v5229 = vpop.permute.xlu0 %5228
      %5230 = vrot.lane.b32.xlu0 %v3782, 64
      %v5231 = vpop.permute.xlu0 %5230
      %5232 = vrot.lane.b32.xlu0 %v3783, 64
      %v5233 = vpop.permute.xlu0 %5232
      %5234 = vrot.lane.b32.xlu0 %v3784, 64
      %v5235 = vpop.permute.xlu0 %5234
      %5236 = vrot.lane.b32.xlu0 %v3785, 64
      %v5237 = vpop.permute.xlu0 %5236
      %5238 = vrot.lane.b32.xlu0 %v3786, 64
      %v5239 = vpop.permute.xlu0 %5238
      %5240 = vrot.lane.b32.xlu0 %v3787, 64
      %v5241 = vpop.permute.xlu0 %5240
      %5242 = vrot.lane.b32.xlu0 %v3788, 64
      %v5243 = vpop.permute.xlu0 %5242
      %5244 = vrot.lane.b32.xlu0 %v3789, 64
      %v5245 = vpop.permute.xlu0 %5244
      %5246 = vrot.lane.b32.xlu0 %v3790, 64
      %v5247 = vpop.permute.xlu0 %5246
      %5248 = vrot.lane.b32.xlu0 %v3791, 64
      %v5249 = vpop.permute.xlu0 %5248
      %5250 = vrot.lane.b32.xlu0 %v3792, 64
      %v5251 = vpop.permute.xlu0 %5250
      %5252 = vrot.lane.b32.xlu0 %v3793, 64
      %v5253 = vpop.permute.xlu0 %5252
      %5254 = vrot.lane.b32.xlu0 %v3794, 64
      %v5255 = vpop.permute.xlu0 %5254
      %5256 = vrot.lane.b32.xlu0 %v3795, 64
      %v5257 = vpop.permute.xlu0 %5256
      %5258 = vrot.lane.b32.xlu0 %v3796, 64
      %v5259 = vpop.permute.xlu0 %5258
      %5260 = vrot.lane.b32.xlu0 %v3797, 64
      %v5261 = vpop.permute.xlu0 %5260
      %5262 = vrot.lane.b32.xlu0 %v3798, 64
      %v5263 = vpop.permute.xlu0 %5262
      %5264 = vrot.lane.b32.xlu0 %v3799, 64
      %v5265 = vpop.permute.xlu0 %5264
      %5266 = vrot.lane.b32.xlu0 %v3800, 64
      %v5267 = vpop.permute.xlu0 %5266
      %5268 = vrot.lane.b32.xlu0 %v3801, 64
      %v5269 = vpop.permute.xlu0 %5268
      %5270 = vrot.lane.b32.xlu0 %v3802, 64
      %v5271 = vpop.permute.xlu0 %5270
      %5272 = vrot.lane.b32.xlu0 %v3803, 64
      %v5273 = vpop.permute.xlu0 %5272
      %5274 = vrot.lane.b32.xlu0 %v3804, 64
      %v5275 = vpop.permute.xlu0 %5274
      %5276 = vrot.lane.b32.xlu0 %v3805, 64
      %v5277 = vpop.permute.xlu0 %5276
      %5342 = vrot.lane.b32.xlu0 %v3806, 96
      %v5343 = vpop.permute.xlu0 %5342
      %5344 = vrot.lane.b32.xlu0 %v3807, 96
      %v5345 = vpop.permute.xlu0 %5344
      %5346 = vrot.lane.b32.xlu0 %v3808, 96
      %v5347 = vpop.permute.xlu0 %5346
      %5348 = vrot.lane.b32.xlu0 %v3809, 96
      %v5349 = vpop.permute.xlu0 %5348
      %5350 = vrot.lane.b32.xlu0 %v3810, 96
      %v5351 = vpop.permute.xlu0 %5350
      %5352 = vrot.lane.b32.xlu0 %v3811, 96
      %v5353 = vpop.permute.xlu0 %5352
      %5354 = vrot.lane.b32.xlu0 %v3812, 96
      %v5355 = vpop.permute.xlu0 %5354
      %5356 = vrot.lane.b32.xlu0 %v3813, 96
      %v5357 = vpop.permute.xlu0 %5356
      %5358 = vrot.lane.b32.xlu0 %v3814, 96
      %v5359 = vpop.permute.xlu0 %5358
      %5360 = vrot.lane.b32.xlu0 %v3815, 96
      %v5361 = vpop.permute.xlu0 %5360
      %5362 = vrot.lane.b32.xlu0 %v3816, 96
      %v5363 = vpop.permute.xlu0 %5362
      %5364 = vrot.lane.b32.xlu0 %v3817, 96
      %v5365 = vpop.permute.xlu0 %5364
      %5366 = vrot.lane.b32.xlu0 %v3818, 96
      %v5367 = vpop.permute.xlu0 %5366
      %5368 = vrot.lane.b32.xlu0 %v3819, 96
      %v5369 = vpop.permute.xlu0 %5368
      %5370 = vrot.lane.b32.xlu0 %v3820, 96
      %v5371 = vpop.permute.xlu0 %5370
      %5372 = vrot.lane.b32.xlu0 %v3821, 96
      %v5373 = vpop.permute.xlu0 %5372
      %5374 = vrot.lane.b32.xlu0 %v3822, 96
      %v5375 = vpop.permute.xlu0 %5374
      %5376 = vrot.lane.b32.xlu0 %v3823, 96
      %v5377 = vpop.permute.xlu0 %5376
      %5378 = vrot.lane.b32.xlu0 %v3824, 96
      %v5379 = vpop.permute.xlu0 %5378
      %5380 = vrot.lane.b32.xlu0 %v3825, 96
      %v5381 = vpop.permute.xlu0 %5380
      %5382 = vrot.lane.b32.xlu0 %v3826, 96
      %v5383 = vpop.permute.xlu0 %5382
      %5384 = vrot.lane.b32.xlu0 %v3827, 96
      %v5385 = vpop.permute.xlu0 %5384
      %5386 = vrot.lane.b32.xlu0 %v3828, 96
      %v5387 = vpop.permute.xlu0 %5386
      %5388 = vrot.lane.b32.xlu0 %v3829, 96
      %v5389 = vpop.permute.xlu0 %5388
      %5390 = vrot.lane.b32.xlu0 %v3830, 96
      %v5391 = vpop.permute.xlu0 %5390
      %5392 = vrot.lane.b32.xlu0 %v3831, 96
      %v5393 = vpop.permute.xlu0 %5392
      %5394 = vrot.lane.b32.xlu0 %v3832, 96
      %v5395 = vpop.permute.xlu0 %5394
      %5396 = vrot.lane.b32.xlu0 %v3833, 96
      %v5397 = vpop.permute.xlu0 %5396
      %5398 = vrot.lane.b32.xlu0 %v3834, 96
      %v5399 = vpop.permute.xlu0 %5398
      %5400 = vrot.lane.b32.xlu0 %v3835, 96
      %v5401 = vpop.permute.xlu0 %5400
      %5402 = vrot.lane.b32.xlu0 %v3836, 96
      %v5403 = vpop.permute.xlu0 %5402
      %5404 = vrot.lane.b32.xlu0 %v3837, 96
      %v5405 = vpop.permute.xlu0 %5404
      %v5438 = vsel %vm1853, %v3326, %v3935
      %v5439 = vsel %vm1853, %v3327, %v3937
      %v5440 = vsel %vm1853, %v3328, %v3939
      %v5441 = vsel %vm1853, %v3329, %v3941
      %v5442 = vsel %vm1853, %v3330, %v3943
      %v5443 = vsel %vm1853, %v3331, %v3945
      %v5444 = vsel %vm1853, %v3332, %v3947
      %v5445 = vsel %vm1853, %v3333, %v3949
      %v5446 = vsel %vm1853, %v3334, %v3951
      %v5447 = vsel %vm1853, %v3335, %v3953
      %v5448 = vsel %vm1853, %v3336, %v3955
      %v5449 = vsel %vm1853, %v3337, %v3957
      %v5450 = vsel %vm1853, %v3338, %v3959
      %v5451 = vsel %vm1853, %v3339, %v3961
      %v5452 = vsel %vm1853, %v3340, %v3963
      %v5453 = vsel %vm1853, %v3341, %v3965
      %v5454 = vsel %vm1853, %v3342, %v3967
      %v5455 = vsel %vm1853, %v3343, %v3969
      %v5456 = vsel %vm1853, %v3344, %v3971
      %v5457 = vsel %vm1853, %v3345, %v3973
      %v5458 = vsel %vm1853, %v3346, %v3975
      %v5459 = vsel %vm1853, %v3347, %v3977
      %v5460 = vsel %vm1853, %v3348, %v3979
      %v5461 = vsel %vm1853, %v3349, %v3981
      %v5462 = vsel %vm1853, %v3350, %v3983
      %v5463 = vsel %vm1853, %v3351, %v3985
      %v5464 = vsel %vm1853, %v3352, %v3987
      %v5465 = vsel %vm1853, %v3353, %v3989
      %v5466 = vsel %vm1853, %v3354, %v3991
      %v5467 = vsel %vm1853, %v3355, %v3993
      %v5468 = vsel %vm1853, %v3356, %v3995
      %v5469 = vsel %vm1853, %v3357, %v3997
      %v5470 = vsel %vm2649, %v5438, %v4063
      %v5471 = vsel %vm2649, %v5439, %v4065
      %v5472 = vsel %vm2649, %v5440, %v4067
      %v5473 = vsel %vm2649, %v5441, %v4069
      %v5474 = vsel %vm2649, %v5442, %v4071
      %v5475 = vsel %vm2649, %v5443, %v4073
      %v5476 = vsel %vm2649, %v5444, %v4075
      %v5477 = vsel %vm2649, %v5445, %v4077
      %v5478 = vsel %vm2649, %v5446, %v4079
      %v5479 = vsel %vm2649, %v5447, %v4081
      %v5480 = vsel %vm2649, %v5448, %v4083
      %v5481 = vsel %vm2649, %v5449, %v4085
      %v5482 = vsel %vm2649, %v5450, %v4087
      %v5483 = vsel %vm2649, %v5451, %v4089
      %v5484 = vsel %vm2649, %v5452, %v4091
      %v5485 = vsel %vm2649, %v5453, %v4093
      %v5486 = vsel %vm2649, %v5454, %v4095
      %v5487 = vsel %vm2649, %v5455, %v4097
      %v5488 = vsel %vm2649, %v5456, %v4099
      %v5489 = vsel %vm2649, %v5457, %v4101
      %v5490 = vsel %vm2649, %v5458, %v4103
      %v5491 = vsel %vm2649, %v5459, %v4105
      %v5492 = vsel %vm2649, %v5460, %v4107
      %v5493 = vsel %vm2649, %v5461, %v4109
      %v5494 = vsel %vm2649, %v5462, %v4111
      %v5495 = vsel %vm2649, %v5463, %v4113
      %v5496 = vsel %vm2649, %v5464, %v4115
      %v5497 = vsel %vm2649, %v5465, %v4117
      %v5498 = vsel %vm2649, %v5466, %v4119
      %v5499 = vsel %vm2649, %v5467, %v4121
      %v5500 = vsel %vm2649, %v5468, %v4123
      %v5501 = vsel %vm2649, %v5469, %v4125
      %v5502 = vsel %vm2658, %v5470, %v4191
      %v5503 = vsel %vm2658, %v5471, %v4193
      %v5504 = vsel %vm2658, %v5472, %v4195
      %v5505 = vsel %vm2658, %v5473, %v4197
      %v5506 = vsel %vm2658, %v5474, %v4199
      %v5507 = vsel %vm2658, %v5475, %v4201
      %v5508 = vsel %vm2658, %v5476, %v4203
      %v5509 = vsel %vm2658, %v5477, %v4205
      %v5510 = vsel %vm2658, %v5478, %v4207
      %v5511 = vsel %vm2658, %v5479, %v4209
      %v5512 = vsel %vm2658, %v5480, %v4211
      %v5513 = vsel %vm2658, %v5481, %v4213
      %v5514 = vsel %vm2658, %v5482, %v4215
      %v5515 = vsel %vm2658, %v5483, %v4217
      %v5516 = vsel %vm2658, %v5484, %v4219
      %v5517 = vsel %vm2658, %v5485, %v4221
      %v5518 = vsel %vm2658, %v5486, %v4223
      %v5519 = vsel %vm2658, %v5487, %v4225
      %v5520 = vsel %vm2658, %v5488, %v4227
      %v5521 = vsel %vm2658, %v5489, %v4229
      %v5522 = vsel %vm2658, %v5490, %v4231
      %v5523 = vsel %vm2658, %v5491, %v4233
      %v5524 = vsel %vm2658, %v5492, %v4235
      %v5525 = vsel %vm2658, %v5493, %v4237
      %v5526 = vsel %vm2658, %v5494, %v4239
      %v5527 = vsel %vm2658, %v5495, %v4241
      %v5528 = vsel %vm2658, %v5496, %v4243
      %v5529 = vsel %vm2658, %v5497, %v4245
      %v5530 = vsel %vm2658, %v5498, %v4247
      %v5531 = vsel %vm2658, %v5499, %v4249
      %v5532 = vsel %vm2658, %v5500, %v4251
      %v5533 = vsel %vm2658, %v5501, %v4253
      %v5534 = vsel %vm1853, %v3454, %v4319
      %v5535 = vsel %vm1853, %v3455, %v4321
      %v5536 = vsel %vm1853, %v3456, %v4323
      %v5537 = vsel %vm1853, %v3457, %v4325
      %v5538 = vsel %vm1853, %v3458, %v4327
      %v5539 = vsel %vm1853, %v3459, %v4329
      %v5540 = vsel %vm1853, %v3460, %v4331
      %v5541 = vsel %vm1853, %v3461, %v4333
      %v5542 = vsel %vm1853, %v3462, %v4335
      %v5543 = vsel %vm1853, %v3463, %v4337
      %v5544 = vsel %vm1853, %v3464, %v4339
      %v5545 = vsel %vm1853, %v3465, %v4341
      %v5546 = vsel %vm1853, %v3466, %v4343
      %v5547 = vsel %vm1853, %v3467, %v4345
      %v5548 = vsel %vm1853, %v3468, %v4347
      %v5549 = vsel %vm1853, %v3469, %v4349
      %v5550 = vsel %vm1853, %v3470, %v4351
      %v5551 = vsel %vm1853, %v3471, %v4353
      %v5552 = vsel %vm1853, %v3472, %v4355
      %v5553 = vsel %vm1853, %v3473, %v4357
      %v5554 = vsel %vm1853, %v3474, %v4359
      %v5555 = vsel %vm1853, %v3475, %v4361
      %v5556 = vsel %vm1853, %v3476, %v4363
      %v5557 = vsel %vm1853, %v3477, %v4365
      %v5558 = vsel %vm1853, %v3478, %v4367
      %v5559 = vsel %vm1853, %v3479, %v4369
      %v5560 = vsel %vm1853, %v3480, %v4371
      %v5561 = vsel %vm1853, %v3481, %v4373
      %v5562 = vsel %vm1853, %v3482, %v4375
      %v5563 = vsel %vm1853, %v3483, %v4377
      %v5564 = vsel %vm1853, %v3484, %v4379
      %v5565 = vsel %vm1853, %v3485, %v4381
      %v5566 = vsel %vm2649, %v5534, %v4447
      %v5567 = vsel %vm2649, %v5535, %v4449
      %v5568 = vsel %vm2649, %v5536, %v4451
      %v5569 = vsel %vm2649, %v5537, %v4453
      %v5570 = vsel %vm2649, %v5538, %v4455
      %v5571 = vsel %vm2649, %v5539, %v4457
      %v5572 = vsel %vm2649, %v5540, %v4459
      %v5573 = vsel %vm2649, %v5541, %v4461
      %v5574 = vsel %vm2649, %v5542, %v4463
      %v5575 = vsel %vm2649, %v5543, %v4465
      %v5576 = vsel %vm2649, %v5544, %v4467
      %v5577 = vsel %vm2649, %v5545, %v4469
      %v5578 = vsel %vm2649, %v5546, %v4471
      %v5579 = vsel %vm2649, %v5547, %v4473
      %v5580 = vsel %vm2649, %v5548, %v4475
      %v5581 = vsel %vm2649, %v5549, %v4477
      %v5582 = vsel %vm2649, %v5550, %v4479
      %v5583 = vsel %vm2649, %v5551, %v4481
      %v5584 = vsel %vm2649, %v5552, %v4483
      %v5585 = vsel %vm2649, %v5553, %v4485
      %v5586 = vsel %vm2649, %v5554, %v4487
      %v5587 = vsel %vm2649, %v5555, %v4489
      %v5588 = vsel %vm2649, %v5556, %v4491
      %v5589 = vsel %vm2649, %v5557, %v4493
      %v5590 = vsel %vm2649, %v5558, %v4495
      %v5591 = vsel %vm2649, %v5559, %v4497
      %v5592 = vsel %vm2649, %v5560, %v4499
      %v5593 = vsel %vm2649, %v5561, %v4501
      %v5594 = vsel %vm2649, %v5562, %v4503
      %v5595 = vsel %vm2649, %v5563, %v4505
      %v5596 = vsel %vm2649, %v5564, %v4507
      %v5597 = vsel %vm2649, %v5565, %v4509
      %v5598 = vsel %vm2658, %v5566, %v4575
      %v5599 = vsel %vm2658, %v5567, %v4577
      %v5600 = vsel %vm2658, %v5568, %v4579
      %v5601 = vsel %vm2658, %v5569, %v4581
      %v5602 = vsel %vm2658, %v5570, %v4583
      %v5603 = vsel %vm2658, %v5571, %v4585
      %v5604 = vsel %vm2658, %v5572, %v4587
      %v5605 = vsel %vm2658, %v5573, %v4589
      %v5606 = vsel %vm2658, %v5574, %v4591
      %v5607 = vsel %vm2658, %v5575, %v4593
      %v5608 = vsel %vm2658, %v5576, %v4595
      %v5609 = vsel %vm2658, %v5577, %v4597
      %v5610 = vsel %vm2658, %v5578, %v4599
      %v5611 = vsel %vm2658, %v5579, %v4601
      %v5612 = vsel %vm2658, %v5580, %v4603
      %v5613 = vsel %vm2658, %v5581, %v4605
      %v5614 = vsel %vm2658, %v5582, %v4607
      %v5615 = vsel %vm2658, %v5583, %v4609
      %v5616 = vsel %vm2658, %v5584, %v4611
      %v5617 = vsel %vm2658, %v5585, %v4613
      %v5618 = vsel %vm2658, %v5586, %v4615
      %v5619 = vsel %vm2658, %v5587, %v4617
      %v5620 = vsel %vm2658, %v5588, %v4619
      %v5621 = vsel %vm2658, %v5589, %v4621
      %v5622 = vsel %vm2658, %v5590, %v4623
      %v5623 = vsel %vm2658, %v5591, %v4625
      %v5624 = vsel %vm2658, %v5592, %v4627
      %v5625 = vsel %vm2658, %v5593, %v4629
      %v5626 = vsel %vm2658, %v5594, %v4631
      %v5627 = vsel %vm2658, %v5595, %v4633
      %v5628 = vsel %vm2658, %v5596, %v4635
      %v5629 = vsel %vm2658, %v5597, %v4637
      %v5630 = vsel %vm1853, %v3582, %v4703
      %v5631 = vsel %vm1853, %v3583, %v4705
      %v5632 = vsel %vm1853, %v3584, %v4707
      %v5633 = vsel %vm1853, %v3585, %v4709
      %v5634 = vsel %vm1853, %v3586, %v4711
      %v5635 = vsel %vm1853, %v3587, %v4713
      %v5636 = vsel %vm1853, %v3588, %v4715
      %v5637 = vsel %vm1853, %v3589, %v4717
      %v5638 = vsel %vm1853, %v3590, %v4719
      %v5639 = vsel %vm1853, %v3591, %v4721
      %v5640 = vsel %vm1853, %v3592, %v4723
      %v5641 = vsel %vm1853, %v3593, %v4725
      %v5642 = vsel %vm1853, %v3594, %v4727
      %v5643 = vsel %vm1853, %v3595, %v4729
      %v5644 = vsel %vm1853, %v3596, %v4731
      %v5645 = vsel %vm1853, %v3597, %v4733
      %v5646 = vsel %vm1853, %v3598, %v4735
      %v5647 = vsel %vm1853, %v3599, %v4737
      %v5648 = vsel %vm1853, %v3600, %v4739
      %v5649 = vsel %vm1853, %v3601, %v4741
      %v5650 = vsel %vm1853, %v3602, %v4743
      %v5651 = vsel %vm1853, %v3603, %v4745
      %v5652 = vsel %vm1853, %v3604, %v4747
      %v5653 = vsel %vm1853, %v3605, %v4749
      %v5654 = vsel %vm1853, %v3606, %v4751
      %v5655 = vsel %vm1853, %v3607, %v4753
      %v5656 = vsel %vm1853, %v3608, %v4755
      %v5657 = vsel %vm1853, %v3609, %v4757
      %v5658 = vsel %vm1853, %v3610, %v4759
      %v5659 = vsel %vm1853, %v3611, %v4761
      %v5660 = vsel %vm1853, %v3612, %v4763
      %v5661 = vsel %vm1853, %v3613, %v4765
      %v5662 = vsel %vm2649, %v5630, %v4831
      %v5663 = vsel %vm2649, %v5631, %v4833
      %v5664 = vsel %vm2649, %v5632, %v4835
      %v5665 = vsel %vm2649, %v5633, %v4837
      %v5666 = vsel %vm2649, %v5634, %v4839
      %v5667 = vsel %vm2649, %v5635, %v4841
      %v5668 = vsel %vm2649, %v5636, %v4843
      %v5669 = vsel %vm2649, %v5637, %v4845
      %v5670 = vsel %vm2649, %v5638, %v4847
      %v5671 = vsel %vm2649, %v5639, %v4849
      %v5672 = vsel %vm2649, %v5640, %v4851
      %v5673 = vsel %vm2649, %v5641, %v4853
      %v5674 = vsel %vm2649, %v5642, %v4855
      %v5675 = vsel %vm2649, %v5643, %v4857
      %v5676 = vsel %vm2649, %v5644, %v4859
      %v5677 = vsel %vm2649, %v5645, %v4861
      %v5678 = vsel %vm2649, %v5646, %v4863
      %v5679 = vsel %vm2649, %v5647, %v4865
      %v5680 = vsel %vm2649, %v5648, %v4867
      %v5681 = vsel %vm2649, %v5649, %v4869
      %v5682 = vsel %vm2649, %v5650, %v4871
      %v5683 = vsel %vm2649, %v5651, %v4873
      %v5684 = vsel %vm2649, %v5652, %v4875
      %v5685 = vsel %vm2649, %v5653, %v4877
      %v5686 = vsel %vm2649, %v5654, %v4879
      %v5687 = vsel %vm2649, %v5655, %v4881
      %v5688 = vsel %vm2649, %v5656, %v4883
      %v5689 = vsel %vm2649, %v5657, %v4885
      %v5690 = vsel %vm2649, %v5658, %v4887
      %v5691 = vsel %vm2649, %v5659, %v4889
      %v5692 = vsel %vm2649, %v5660, %v4891
      %v5693 = vsel %vm2649, %v5661, %v4893
      %v5694 = vsel %vm2658, %v5662, %v4959
      %v5695 = vsel %vm2658, %v5663, %v4961
      %v5696 = vsel %vm2658, %v5664, %v4963
      %v5697 = vsel %vm2658, %v5665, %v4965
      %v5698 = vsel %vm2658, %v5666, %v4967
      %v5699 = vsel %vm2658, %v5667, %v4969
      %v5700 = vsel %vm2658, %v5668, %v4971
      %v5701 = vsel %vm2658, %v5669, %v4973
      %v5702 = vsel %vm2658, %v5670, %v4975
      %v5703 = vsel %vm2658, %v5671, %v4977
      %v5704 = vsel %vm2658, %v5672, %v4979
      %v5705 = vsel %vm2658, %v5673, %v4981
      %v5706 = vsel %vm2658, %v5674, %v4983
      %v5707 = vsel %vm2658, %v5675, %v4985
      %v5708 = vsel %vm2658, %v5676, %v4987
      %v5709 = vsel %vm2658, %v5677, %v4989
      %v5710 = vsel %vm2658, %v5678, %v4991
      %v5711 = vsel %vm2658, %v5679, %v4993
      %v5712 = vsel %vm2658, %v5680, %v4995
      %v5713 = vsel %vm2658, %v5681, %v4997
      %v5714 = vsel %vm2658, %v5682, %v4999
      %v5715 = vsel %vm2658, %v5683, %v5001
      %v5716 = vsel %vm2658, %v5684, %v5003
      %v5717 = vsel %vm2658, %v5685, %v5005
      %v5718 = vsel %vm2658, %v5686, %v5007
      %v5719 = vsel %vm2658, %v5687, %v5009
      %v5720 = vsel %vm2658, %v5688, %v5011
      %v5721 = vsel %vm2658, %v5689, %v5013
      %v5722 = vsel %vm2658, %v5690, %v5015
      %v5723 = vsel %vm2658, %v5691, %v5017
      %v5724 = vsel %vm2658, %v5692, %v5019
      %v5725 = vsel %vm2658, %v5693, %v5021
      %v5726 = vsel %vm1853, %v3710, %v5087
      %v5727 = vsel %vm1853, %v3711, %v5089
      %v5728 = vsel %vm1853, %v3712, %v5091
      %v5729 = vsel %vm1853, %v3713, %v5093
      %v5730 = vsel %vm1853, %v3714, %v5095
      %v5731 = vsel %vm1853, %v3715, %v5097
      %v5732 = vsel %vm1853, %v3716, %v5099
      %v5733 = vsel %vm1853, %v3717, %v5101
      %v5734 = vsel %vm1853, %v3718, %v5103
      %v5735 = vsel %vm1853, %v3719, %v5105
      %v5736 = vsel %vm1853, %v3720, %v5107
      %v5737 = vsel %vm1853, %v3721, %v5109
      %v5738 = vsel %vm1853, %v3722, %v5111
      %v5739 = vsel %vm1853, %v3723, %v5113
      %v5740 = vsel %vm1853, %v3724, %v5115
      %v5741 = vsel %vm1853, %v3725, %v5117
      %v5742 = vsel %vm1853, %v3726, %v5119
      %v5743 = vsel %vm1853, %v3727, %v5121
      %v5744 = vsel %vm1853, %v3728, %v5123
      %v5745 = vsel %vm1853, %v3729, %v5125
      %v5746 = vsel %vm1853, %v3730, %v5127
      %v5747 = vsel %vm1853, %v3731, %v5129
      %v5748 = vsel %vm1853, %v3732, %v5131
      %v5749 = vsel %vm1853, %v3733, %v5133
      %v5750 = vsel %vm1853, %v3734, %v5135
      %v5751 = vsel %vm1853, %v3735, %v5137
      %v5752 = vsel %vm1853, %v3736, %v5139
      %v5753 = vsel %vm1853, %v3737, %v5141
      %v5754 = vsel %vm1853, %v3738, %v5143
      %v5755 = vsel %vm1853, %v3739, %v5145
      %v5756 = vsel %vm1853, %v3740, %v5147
      %v5757 = vsel %vm1853, %v3741, %v5149
      %v5758 = vsel %vm2649, %v5726, %v5215
      %v5759 = vsel %vm2649, %v5727, %v5217
      %v5760 = vsel %vm2649, %v5728, %v5219
      %v5761 = vsel %vm2649, %v5729, %v5221
      %v5762 = vsel %vm2649, %v5730, %v5223
      %v5763 = vsel %vm2649, %v5731, %v5225
      %v5764 = vsel %vm2649, %v5732, %v5227
      %v5765 = vsel %vm2649, %v5733, %v5229
      %v5766 = vsel %vm2649, %v5734, %v5231
      %v5767 = vsel %vm2649, %v5735, %v5233
      %v5768 = vsel %vm2649, %v5736, %v5235
      %v5769 = vsel %vm2649, %v5737, %v5237
      %v5770 = vsel %vm2649, %v5738, %v5239
      %v5771 = vsel %vm2649, %v5739, %v5241
      %v5772 = vsel %vm2649, %v5740, %v5243
      %v5773 = vsel %vm2649, %v5741, %v5245
      %v5774 = vsel %vm2649, %v5742, %v5247
      %v5775 = vsel %vm2649, %v5743, %v5249
      %v5776 = vsel %vm2649, %v5744, %v5251
      %v5777 = vsel %vm2649, %v5745, %v5253
      %v5778 = vsel %vm2649, %v5746, %v5255
      %v5779 = vsel %vm2649, %v5747, %v5257
      %v5780 = vsel %vm2649, %v5748, %v5259
      %v5781 = vsel %vm2649, %v5749, %v5261
      %v5782 = vsel %vm2649, %v5750, %v5263
      %v5783 = vsel %vm2649, %v5751, %v5265
      %v5784 = vsel %vm2649, %v5752, %v5267
      %v5785 = vsel %vm2649, %v5753, %v5269
      %v5786 = vsel %vm2649, %v5754, %v5271
      %v5787 = vsel %vm2649, %v5755, %v5273
      %v5788 = vsel %vm2649, %v5756, %v5275
      %v5789 = vsel %vm2649, %v5757, %v5277
      %v5790 = vsel %vm2658, %v5758, %v5343
      %v5791 = vsel %vm2658, %v5759, %v5345
      %v5792 = vsel %vm2658, %v5760, %v5347
      %v5793 = vsel %vm2658, %v5761, %v5349
      %v5794 = vsel %vm2658, %v5762, %v5351
      %v5795 = vsel %vm2658, %v5763, %v5353
      %v5796 = vsel %vm2658, %v5764, %v5355
      %v5797 = vsel %vm2658, %v5765, %v5357
      %v5798 = vsel %vm2658, %v5766, %v5359
      %v5799 = vsel %vm2658, %v5767, %v5361
      %v5800 = vsel %vm2658, %v5768, %v5363
      %v5801 = vsel %vm2658, %v5769, %v5365
      %v5802 = vsel %vm2658, %v5770, %v5367
      %v5803 = vsel %vm2658, %v5771, %v5369
      %v5804 = vsel %vm2658, %v5772, %v5371
      %v5805 = vsel %vm2658, %v5773, %v5373
      %v5806 = vsel %vm2658, %v5774, %v5375
      %v5807 = vsel %vm2658, %v5775, %v5377
      %v5808 = vsel %vm2658, %v5776, %v5379
      %v5809 = vsel %vm2658, %v5777, %v5381
      %v5810 = vsel %vm2658, %v5778, %v5383
      %v5811 = vsel %vm2658, %v5779, %v5385
      %v5812 = vsel %vm2658, %v5780, %v5387
      %v5813 = vsel %vm2658, %v5781, %v5389
      %v5814 = vsel %vm2658, %v5782, %v5391
      %v5815 = vsel %vm2658, %v5783, %v5393
      %v5816 = vsel %vm2658, %v5784, %v5395
      %v5817 = vsel %vm2658, %v5785, %v5397
      %v5818 = vsel %vm2658, %v5786, %v5399
      %v5819 = vsel %vm2658, %v5787, %v5401
      %v5820 = vsel %vm2658, %v5788, %v5403
      %v5821 = vsel %vm2658, %v5789, %v5405
      %5854 = vrot.lane.b32.xlu0 %v3870, 32
      %v5855 = vpop.permute.xlu0 %5854
      %5856 = vrot.lane.b32.xlu0 %v3871, 32
      %v5857 = vpop.permute.xlu0 %5856
      %5858 = vrot.lane.b32.xlu0 %v3872, 32
      %v5859 = vpop.permute.xlu0 %5858
      %5860 = vrot.lane.b32.xlu0 %v3873, 32
      %v5861 = vpop.permute.xlu0 %5860
      %5862 = vrot.lane.b32.xlu0 %v3874, 32
      %v5863 = vpop.permute.xlu0 %5862
      %5864 = vrot.lane.b32.xlu0 %v3875, 32
      %v5865 = vpop.permute.xlu0 %5864
      %5866 = vrot.lane.b32.xlu0 %v3876, 32
      %v5867 = vpop.permute.xlu0 %5866
      %5868 = vrot.lane.b32.xlu0 %v3877, 32
      %v5869 = vpop.permute.xlu0 %5868
      %5870 = vrot.lane.b32.xlu0 %v3878, 32
      %v5871 = vpop.permute.xlu0 %5870
      %5872 = vrot.lane.b32.xlu0 %v3879, 32
      %v5873 = vpop.permute.xlu0 %5872
      %5874 = vrot.lane.b32.xlu0 %v3880, 32
      %v5875 = vpop.permute.xlu0 %5874
      %5876 = vrot.lane.b32.xlu0 %v3881, 32
      %v5877 = vpop.permute.xlu0 %5876
      %5878 = vrot.lane.b32.xlu0 %v3882, 32
      %v5879 = vpop.permute.xlu0 %5878
      %5880 = vrot.lane.b32.xlu0 %v3883, 32
      %v5881 = vpop.permute.xlu0 %5880
      %5882 = vrot.lane.b32.xlu0 %v3884, 32
      %v5883 = vpop.permute.xlu0 %5882
      %5884 = vrot.lane.b32.xlu0 %v3885, 32
      %v5885 = vpop.permute.xlu0 %5884
      %5886 = vrot.lane.b32.xlu0 %v3886, 32
      %v5887 = vpop.permute.xlu0 %5886
      %5888 = vrot.lane.b32.xlu0 %v3887, 32
      %v5889 = vpop.permute.xlu0 %5888
      %5890 = vrot.lane.b32.xlu0 %v3888, 32
      %v5891 = vpop.permute.xlu0 %5890
      %5892 = vrot.lane.b32.xlu0 %v3889, 32
      %v5893 = vpop.permute.xlu0 %5892
      %5894 = vrot.lane.b32.xlu0 %v3890, 32
      %v5895 = vpop.permute.xlu0 %5894
      %5896 = vrot.lane.b32.xlu0 %v3891, 32
      %v5897 = vpop.permute.xlu0 %5896
      %5898 = vrot.lane.b32.xlu0 %v3892, 32
      %v5899 = vpop.permute.xlu0 %5898
      %5900 = vrot.lane.b32.xlu0 %v3893, 32
      %v5901 = vpop.permute.xlu0 %5900
      %5902 = vrot.lane.b32.xlu0 %v3894, 32
      %v5903 = vpop.permute.xlu0 %5902
      %5904 = vrot.lane.b32.xlu0 %v3895, 32
      %v5905 = vpop.permute.xlu0 %5904
      %5906 = vrot.lane.b32.xlu0 %v3896, 32
      %v5907 = vpop.permute.xlu0 %5906
      %5908 = vrot.lane.b32.xlu0 %v3897, 32
      %v5909 = vpop.permute.xlu0 %5908
      %5910 = vrot.lane.b32.xlu0 %v3898, 32
      %v5911 = vpop.permute.xlu0 %5910
      %5912 = vrot.lane.b32.xlu0 %v3899, 32
      %v5913 = vpop.permute.xlu0 %5912
      %5914 = vrot.lane.b32.xlu0 %v3900, 32
      %v5915 = vpop.permute.xlu0 %5914
      %5916 = vrot.lane.b32.xlu0 %v3901, 32
      %v5917 = vpop.permute.xlu0 %5916
      %v5950 = vsel %vm1853, %v3838, %v5855
      %v5951 = vsel %vm1853, %v3839, %v5857
      %v5952 = vsel %vm1853, %v3840, %v5859
      %v5953 = vsel %vm1853, %v3841, %v5861
      %v5954 = vsel %vm1853, %v3842, %v5863
      %v5955 = vsel %vm1853, %v3843, %v5865
      %v5956 = vsel %vm1853, %v3844, %v5867
      %v5957 = vsel %vm1853, %v3845, %v5869
      %v5958 = vsel %vm1853, %v3846, %v5871
      %v5959 = vsel %vm1853, %v3847, %v5873
      %v5960 = vsel %vm1853, %v3848, %v5875
      %v5961 = vsel %vm1853, %v3849, %v5877
      %v5962 = vsel %vm1853, %v3850, %v5879
      %v5963 = vsel %vm1853, %v3851, %v5881
      %v5964 = vsel %vm1853, %v3852, %v5883
      %v5965 = vsel %vm1853, %v3853, %v5885
      %v5966 = vsel %vm1853, %v3854, %v5887
      %v5967 = vsel %vm1853, %v3855, %v5889
      %v5968 = vsel %vm1853, %v3856, %v5891
      %v5969 = vsel %vm1853, %v3857, %v5893
      %v5970 = vsel %vm1853, %v3858, %v5895
      %v5971 = vsel %vm1853, %v3859, %v5897
      %v5972 = vsel %vm1853, %v3860, %v5899
      %v5973 = vsel %vm1853, %v3861, %v5901
      %v5974 = vsel %vm1853, %v3862, %v5903
      %v5975 = vsel %vm1853, %v3863, %v5905
      %v5976 = vsel %vm1853, %v3864, %v5907
      %v5977 = vsel %vm1853, %v3865, %v5909
      %v5978 = vsel %vm1853, %v3866, %v5911
      %v5979 = vsel %vm1853, %v3867, %v5913
      %v5980 = vsel %vm1853, %v3868, %v5915
      %v5981 = vsel %vm1853, %v3869, %v5917
      %v5982 = vpack.c.bf16 %v5503, %v5502
      %v5983 = vpack.c.bf16 %v5599, %v5598
      %v5984 = vpack.c.bf16 %v5695, %v5694
      %v5985 = vpack.c.bf16 %v5791, %v5790
      %v5986 = vpack.c.bf16 %v5951, %v5950
      %v5987 = vpack.c.bf16 %v5505, %v5504
      %v5988 = vpack.c.bf16 %v5601, %v5600
      %v5989 = vpack.c.bf16 %v5697, %v5696
      %v5990 = vpack.c.bf16 %v5793, %v5792
      %v5991 = vpack.c.bf16 %v5953, %v5952
      %v5992 = vpack.c.bf16 %v5507, %v5506
      %v5993 = vpack.c.bf16 %v5603, %v5602
      %v5994 = vpack.c.bf16 %v5699, %v5698
      %v5995 = vpack.c.bf16 %v5795, %v5794
      %v5996 = vpack.c.bf16 %v5955, %v5954
      %v5997 = vpack.c.bf16 %v5509, %v5508
      %v5998 = vpack.c.bf16 %v5605, %v5604
      %v5999 = vpack.c.bf16 %v5701, %v5700
      %v6000 = vpack.c.bf16 %v5797, %v5796
      %v6001 = vpack.c.bf16 %v5957, %v5956
      %v6002 = vpack.c.bf16 %v5511, %v5510
      %v6003 = vpack.c.bf16 %v5607, %v5606
      %v6004 = vpack.c.bf16 %v5703, %v5702
      %v6005 = vpack.c.bf16 %v5799, %v5798
      %v6006 = vpack.c.bf16 %v5959, %v5958
      %v6007 = vpack.c.bf16 %v5513, %v5512
      %v6008 = vpack.c.bf16 %v5609, %v5608
      %v6009 = vpack.c.bf16 %v5705, %v5704
      %v6010 = vpack.c.bf16 %v5801, %v5800
      %v6011 = vpack.c.bf16 %v5961, %v5960
      %v6012 = vpack.c.bf16 %v5515, %v5514
      %v6013 = vpack.c.bf16 %v5611, %v5610
      %v6014 = vpack.c.bf16 %v5707, %v5706
      %v6015 = vpack.c.bf16 %v5803, %v5802
      %v6016 = vpack.c.bf16 %v5963, %v5962
      %v6017 = vpack.c.bf16 %v5517, %v5516
      %v6018 = vpack.c.bf16 %v5613, %v5612
      %v6019 = vpack.c.bf16 %v5709, %v5708
      %v6020 = vpack.c.bf16 %v5805, %v5804
      %v6021 = vpack.c.bf16 %v5965, %v5964
      %v6022 = vpack.c.bf16 %v5519, %v5518
      %v6023 = vpack.c.bf16 %v5615, %v5614
      %v6024 = vpack.c.bf16 %v5711, %v5710
      %v6025 = vpack.c.bf16 %v5807, %v5806
      %v6026 = vpack.c.bf16 %v5967, %v5966
      %v6027 = vpack.c.bf16 %v5521, %v5520
      %v6028 = vpack.c.bf16 %v5617, %v5616
      %v6029 = vpack.c.bf16 %v5713, %v5712
      %v6030 = vpack.c.bf16 %v5809, %v5808
      %v6031 = vpack.c.bf16 %v5969, %v5968
      %v6032 = vpack.c.bf16 %v5523, %v5522
      %v6033 = vpack.c.bf16 %v5619, %v5618
      %v6034 = vpack.c.bf16 %v5715, %v5714
      %v6035 = vpack.c.bf16 %v5811, %v5810
      %v6036 = vpack.c.bf16 %v5971, %v5970
      %v6037 = vpack.c.bf16 %v5525, %v5524
      %v6038 = vpack.c.bf16 %v5621, %v5620
      %v6039 = vpack.c.bf16 %v5717, %v5716
      %v6040 = vpack.c.bf16 %v5813, %v5812
      %v6041 = vpack.c.bf16 %v5973, %v5972
      %v6042 = vpack.c.bf16 %v5527, %v5526
      %v6043 = vpack.c.bf16 %v5623, %v5622
      %v6044 = vpack.c.bf16 %v5719, %v5718
      %v6045 = vpack.c.bf16 %v5815, %v5814
      %v6046 = vpack.c.bf16 %v5975, %v5974
      %v6047 = vpack.c.bf16 %v5529, %v5528
      %v6048 = vpack.c.bf16 %v5625, %v5624
      %v6049 = vpack.c.bf16 %v5721, %v5720
      %v6050 = vpack.c.bf16 %v5817, %v5816
      %v6051 = vpack.c.bf16 %v5977, %v5976
      %v6052 = vpack.c.bf16 %v5531, %v5530
      %v6053 = vpack.c.bf16 %v5627, %v5626
      %v6054 = vpack.c.bf16 %v5723, %v5722
      %v6055 = vpack.c.bf16 %v5819, %v5818
      %v6056 = vpack.c.bf16 %v5979, %v5978
      %v6057 = vpack.c.bf16 %v5533, %v5532
      %v6058 = vpack.c.bf16 %v5629, %v5628
      %v6059 = vpack.c.bf16 %v5725, %v5724
      %v6060 = vpack.c.bf16 %v5821, %v5820
      %v6061 = vpack.c.bf16 %v5981, %v5980
      %s6062 = scalar_lea.vmem %s1, 864
      %v6063 = vld [vmem:[%s6062] sm:$0xf]
      %v6064 = vld [vmem:[%s6062 + $0x4] sm:$0xf]
      %v6065 = vld [vmem:[%s6062 + $0x8] sm:$0xf]
      %v6066 = vld [vmem:[%s6062 + $0xc] sm:$0xf]
      %v6067 = vld [vmem:[%s6062 + $0x10] sm:$0xf]
      %v6068 = vld [vmem:[%s6062 + $0x14] sm:$0xf]
      %v6069 = vld [vmem:[%s6062 + $0x18] sm:$0xf]
      %v6070 = vld [vmem:[%s6062 + $0x1c] sm:$0xf]
      %v6071 = vld [vmem:[%s6062 + $0x20] sm:$0xf]
      %v6072 = vld [vmem:[%s6062 + $0x24] sm:$0xf]
      %v6073 = vld [vmem:[%s6062 + $0x28] sm:$0xf]
      %v6074 = vld [vmem:[%s6062 + $0x2c] sm:$0xf]
      %v6075 = vld [vmem:[%s6062 + $0x30] sm:$0xf]
      %v6076 = vld [vmem:[%s6062 + $0x34] sm:$0xf]
      %v6077 = vld [vmem:[%s6062 + $0x38] sm:$0xf]
      %v6078 = vld [vmem:[%s6062 + $0x3c] sm:$0xf]
      %v6079 = vld [vmem:[%s6062 + $0x40] sm:$0xf]
      %v6080 = vld [vmem:[%s6062 + $0x44] sm:$0xf]
      %v6081 = vld [vmem:[%s6062 + $0x48] sm:$0xf]
      %v6082 = vld [vmem:[%s6062 + $0x4c] sm:$0xf]
      %v6083 = vld [vmem:[%s6062 + $0x50] sm:$0xf]
      %v6084 = vld [vmem:[%s6062 + $0x54] sm:$0xf]
      %v6085 = vld [vmem:[%s6062 + $0x58] sm:$0xf]
      %v6086 = vld [vmem:[%s6062 + $0x5c] sm:$0xf]
      %v6087 = vld [vmem:[%s6062 + $0x60] sm:$0xf]
      %v6088 = vld [vmem:[%s6062 + $0x64] sm:$0xf]
      %v6089 = vld [vmem:[%s6062 + $0x68] sm:$0xf]
      %v6090 = vld [vmem:[%s6062 + $0x6c] sm:$0xf]
      %v6091 = vld [vmem:[%s6062 + $0x70] sm:$0xf]
      %v6092 = vld [vmem:[%s6062 + $0x74] sm:$0xf]
      %v6093 = vld [vmem:[%s6062 + $0x78] sm:$0xf]
      %v6094 = vld [vmem:[%s6062 + $0x7c] sm:$0xf]
      %v6095 = vld [vmem:[%s6062 + $0x80] sm:$0xf]
      %v6096 = vld [vmem:[%s6062 + $0x84] sm:$0xf]
      %v6097 = vld [vmem:[%s6062 + $0x88] sm:$0xf]
      %v6098 = vld [vmem:[%s6062 + $0x8c] sm:$0xf]
      %v6099 = vld [vmem:[%s6062 + $0x90] sm:$0xf]
      %v6100 = vld [vmem:[%s6062 + $0x94] sm:$0xf]
      %v6101 = vld [vmem:[%s6062 + $0x98] sm:$0xf]
      %v6102 = vld [vmem:[%s6062 + $0x9c] sm:$0xf]
      %v6103 = vld [vmem:[%s6062 + $0xa0] sm:$0xf]
      %v6104 = vld [vmem:[%s6062 + $0xa4] sm:$0xf]
      %v6105 = vld [vmem:[%s6062 + $0xa8] sm:$0xf]
      %v6106 = vld [vmem:[%s6062 + $0xac] sm:$0xf]
      %v6107 = vld [vmem:[%s6062 + $0xb0] sm:$0xf]
      %v6108 = vld [vmem:[%s6062 + $0xb4] sm:$0xf]
      %v6109 = vld [vmem:[%s6062 + $0xb8] sm:$0xf]
      %v6110 = vld [vmem:[%s6062 + $0xbc] sm:$0xf]
      %v6111 = vld [vmem:[%s6062 + $0xc0] sm:$0xf]
      %v6112 = vld [vmem:[%s6062 + $0xc4] sm:$0xf]
      %v6113 = vld [vmem:[%s6062 + $0xc8] sm:$0xf]
      %v6114 = vld [vmem:[%s6062 + $0xcc] sm:$0xf]
      %v6115 = vld [vmem:[%s6062 + $0xd0] sm:$0xf]
      %v6116 = vld [vmem:[%s6062 + $0xd4] sm:$0xf]
      %v6117 = vld [vmem:[%s6062 + $0xd8] sm:$0xf]
      %v6118 = vld [vmem:[%s6062 + $0xdc] sm:$0xf]
      %v6119 = vld [vmem:[%s6062 + $0xe0] sm:$0xf]
      %v6120 = vld [vmem:[%s6062 + $0xe4] sm:$0xf]
      %v6121 = vld [vmem:[%s6062 + $0xe8] sm:$0xf]
      %v6122 = vld [vmem:[%s6062 + $0xec] sm:$0xf]
      %v6123 = vld [vmem:[%s6062 + $0xf0] sm:$0xf]
      %v6124 = vld [vmem:[%s6062 + $0xf4] sm:$0xf]
      %v6125 = vld [vmem:[%s6062 + $0xf8] sm:$0xf]
      %v6126 = vld [vmem:[%s6062 + $0xfc] sm:$0xf]
      %v6127 = vld [vmem:[%s6062 + $0x100] sm:$0xf]
      %v6128 = vld [vmem:[%s6062 + $0x104] sm:$0xf]
      %v6129 = vld [vmem:[%s6062 + $0x108] sm:$0xf]
      %v6130 = vld [vmem:[%s6062 + $0x10c] sm:$0xf]
      %v6131 = vld [vmem:[%s6062 + $0x110] sm:$0xf]
      %v6132 = vld [vmem:[%s6062 + $0x114] sm:$0xf]
      %v6133 = vld [vmem:[%s6062 + $0x118] sm:$0xf]
      %v6134 = vld [vmem:[%s6062 + $0x11c] sm:$0xf]
      %v6135 = vld [vmem:[%s2 + $0x1] sm:$0x1]
      %v6137 = vlaneseq
      %v6138 = vshrl.u32 %v6137, 7
      %v6139 = vsub.s32 0, %v6138
      %v6140 = vrot.slane %v6135, %v6139
      %v6213 = vunpack.c.l.b16 %v6063
      %v6214 = vunpack.c.l.b16 %v6064
      %v6215 = vunpack.c.l.b16 %v6065
      %v6216 = vunpack.c.l.b16 %v6066
      %v6217 = vunpack.c.l.b16 %v6067
      %v6218 = vunpack.c.l.b16 %v6068
      %v6219 = vunpack.c.l.b16 %v6069
      %v6220 = vunpack.c.l.b16 %v6070
      %v6221 = vunpack.c.l.b16 %v6071
      %v6222 = vunpack.c.l.b16 %v6072
      %v6223 = vunpack.c.l.b16 %v6073
      %v6224 = vunpack.c.l.b16 %v6074
      %v6225 = vunpack.c.l.b16 %v6075
      %v6226 = vunpack.c.l.b16 %v6076
      %v6227 = vunpack.c.l.b16 %v6077
      %v6228 = vunpack.c.l.b16 %v6078
      %v6229 = vunpack.c.l.b16 %v6079
      %v6230 = vunpack.c.l.b16 %v6080
      %v6231 = vunpack.c.l.b16 %v6081
      %v6232 = vunpack.c.l.b16 %v6082
      %v6233 = vunpack.c.l.b16 %v6083
      %v6234 = vunpack.c.l.b16 %v6084
      %v6235 = vunpack.c.l.b16 %v6085
      %v6236 = vunpack.c.l.b16 %v6086
      %v6237 = vunpack.c.l.b16 %v6087
      %v6238 = vunpack.c.l.b16 %v6088
      %v6239 = vunpack.c.l.b16 %v6089
      %v6240 = vunpack.c.l.b16 %v6090
      %v6241 = vunpack.c.l.b16 %v6091
      %v6242 = vunpack.c.l.b16 %v6092
      %v6243 = vunpack.c.l.b16 %v6093
      %v6244 = vunpack.c.l.b16 %v6094
      %v6245 = vunpack.c.l.b16 %v6095
      %v6246 = vunpack.c.l.b16 %v6096
      %v6247 = vunpack.c.l.b16 %v6097
      %v6248 = vunpack.c.l.b16 %v6098
      %v6249 = vunpack.c.l.b16 %v6099
      %v6250 = vunpack.c.l.b16 %v6100
      %v6251 = vunpack.c.l.b16 %v6101
      %v6252 = vunpack.c.l.b16 %v6102
      %v6253 = vunpack.c.l.b16 %v6103
      %v6254 = vunpack.c.l.b16 %v6104
      %v6255 = vunpack.c.l.b16 %v6105
      %v6256 = vunpack.c.l.b16 %v6106
      %v6257 = vunpack.c.l.b16 %v6107
      %v6258 = vunpack.c.l.b16 %v6108
      %v6259 = vunpack.c.l.b16 %v6109
      %v6260 = vunpack.c.l.b16 %v6110
      %v6261 = vunpack.c.l.b16 %v6111
      %v6262 = vunpack.c.l.b16 %v6112
      %v6263 = vunpack.c.l.b16 %v6113
      %v6264 = vunpack.c.l.b16 %v6114
      %v6265 = vunpack.c.l.b16 %v6115
      %v6266 = vunpack.c.l.b16 %v6116
      %v6267 = vunpack.c.l.b16 %v6117
      %v6268 = vunpack.c.l.b16 %v6118
      %v6269 = vunpack.c.l.b16 %v6119
      %v6270 = vunpack.c.l.b16 %v6120
      %v6271 = vunpack.c.l.b16 %v6121
      %v6272 = vunpack.c.l.b16 %v6122
      %v6273 = vunpack.c.l.b16 %v6123
      %v6274 = vunpack.c.l.b16 %v6124
      %v6275 = vunpack.c.l.b16 %v6125
      %v6276 = vunpack.c.l.b16 %v6126
      %v6277 = vunpack.c.l.b16 %v6127
      %v6278 = vunpack.c.l.b16 %v6128
      %v6279 = vunpack.c.l.b16 %v6129
      %v6280 = vunpack.c.l.b16 %v6130
      %v6281 = vunpack.c.l.b16 %v6131
      %v6282 = vunpack.c.l.b16 %v6132
      %v6283 = vunpack.c.l.b16 %v6133
      %v6284 = vunpack.c.l.b16 %v6134
      %v6285 = vpack.c.b16 %v6214, %v6213
      %v6286 = vpack.c.b16 %v6216, %v6215
      %v6287 = vpack.c.b16 %v6218, %v6217
      %v6288 = vpack.c.b16 %v6220, %v6219
      %v6289 = vpack.c.b16 %v6222, %v6221
      %v6290 = vpack.c.b16 %v6224, %v6223
      %v6291 = vpack.c.b16 %v6226, %v6225
      %v6292 = vpack.c.b16 %v6228, %v6227
      %v6293 = vpack.c.b16 %v6230, %v6229
      %v6294 = vpack.c.b16 %v6232, %v6231
      %v6295 = vpack.c.b16 %v6234, %v6233
      %v6296 = vpack.c.b16 %v6236, %v6235
      %v6297 = vpack.c.b16 %v6238, %v6237
      %v6298 = vpack.c.b16 %v6240, %v6239
      %v6299 = vpack.c.b16 %v6242, %v6241
      %v6300 = vpack.c.b16 %v6244, %v6243
      %v6301 = vpack.c.b16 %v6246, %v6245
      %v6302 = vpack.c.b16 %v6248, %v6247
      %v6303 = vpack.c.b16 %v6250, %v6249
      %v6304 = vpack.c.b16 %v6252, %v6251
      %v6305 = vpack.c.b16 %v6254, %v6253
      %v6306 = vpack.c.b16 %v6256, %v6255
      %v6307 = vpack.c.b16 %v6258, %v6257
      %v6308 = vpack.c.b16 %v6260, %v6259
      %v6309 = vpack.c.b16 %v6262, %v6261
      %v6310 = vpack.c.b16 %v6264, %v6263
      %v6311 = vpack.c.b16 %v6266, %v6265
      %v6312 = vpack.c.b16 %v6268, %v6267
      %v6313 = vpack.c.b16 %v6270, %v6269
      %v6314 = vpack.c.b16 %v6272, %v6271
      %v6315 = vpack.c.b16 %v6274, %v6273
      %v6316 = vpack.c.b16 %v6276, %v6275
      %v6317 = vpack.c.b16 %v6278, %v6277
      %v6318 = vpack.c.b16 %v6280, %v6279
      %v6319 = vpack.c.b16 %v6282, %v6281
      %v6320 = vpack.c.b16 %v6284, %v6283
      %6357 = vrot.lane.b32.xlu0 %v6140, 32
      %v6358 = vpop.permute.xlu0 %6357
      %v6361 = vsel %vm2649, %v5986, 0
      %v6364 = vsel %vm2649, %v5991, 0
      %v6367 = vsel %vm2649, %v5996, 0
      %v6370 = vsel %vm2649, %v6001, 0
      %v6373 = vsel %vm2649, %v6006, 0
      %v6376 = vsel %vm2649, %v6011, 0
      %v6379 = vsel %vm2649, %v6016, 0
      %v6382 = vsel %vm2649, %v6021, 0
      %v6385 = vsel %vm2649, %v6026, 0
      %v6388 = vsel %vm2649, %v6031, 0
      %v6391 = vsel %vm2649, %v6036, 0
      %v6394 = vsel %vm2649, %v6041, 0
      %v6397 = vsel %vm2649, %v6046, 0
      %v6400 = vsel %vm2649, %v6051, 0
      %v6403 = vsel %vm2649, %v6056, 0
      %v6406 = vsel %vm2649, %v6061, 0
      %6408 = vmatprep.subr.bf16.mxu0 0
      %6409 = vmatpush1.bf16.msra.mxu0 %v6292
      %6410 = vmatprep.subr.bf16.mxu0 0
      %6411 = vmatpush1.bf16.msra.mxu0 %v6291
      %6412 = vmatprep.subr.bf16.mxu0 0
      %6413 = vmatpush1.bf16.msra.mxu0 %v6290
      %6414 = vmatprep.subr.bf16.mxu0 0
      %6415 = vmatpush1.bf16.msra.mxu0 %v6289
      %6416 = vmatprep.subr.bf16.mxu0 0
      %6417 = vmatpush1.bf16.msra.mxu0 %v6288
      %6418 = vmatprep.subr.bf16.mxu0 0
      %6419 = vmatpush1.bf16.msra.mxu0 %v6287
      %6420 = vmatprep.subr.bf16.mxu0 0
      %6421 = vmatpush1.bf16.msra.mxu0 %v6286
      %6422 = vmatprep.subr.bf16.mxu0 0
      %6423 = vmatpush1.bf16.msra.mxu0 %v6285
      %6424 = vmatprep.subr.bf16.mxu0 0
      %6425 = vmatpush2.bf16.msra.mxu0 %v6300
      %6426 = vmatprep.subr.bf16.mxu0 0
      %6427 = vmatpush2.bf16.msra.mxu0 %v6299
      %6428 = vmatprep.subr.bf16.mxu0 0
      %6429 = vmatpush2.bf16.msra.mxu0 %v6298
      %6430 = vmatprep.subr.bf16.mxu0 0
      %6431 = vmatpush2.bf16.msra.mxu0 %v6297
      %6432 = vmatprep.subr.bf16.mxu0 0
      %6433 = vmatpush2.bf16.msra.mxu0 %v6296
      %6434 = vmatprep.subr.bf16.mxu0 0
      %6435 = vmatpush2.bf16.msra.mxu0 %v6295
      %6436 = vmatprep.subr.bf16.mxu0 0
      %6437 = vmatpush2.bf16.msra.mxu0 %v6294
      %6438 = vmatprep.subr.bf16.mxu0 0
      %6439 = vmatpush2.bf16.msra.mxu0 %v6293
      %6440 = vmatprep.mubr.bf16.mxu0 %v5983
      %6441 = vmatmul.mubr.bf16.gmra.mxu0 %v5982
      %v6442 = vpop.f32.mrf.mxu0
      %v6443 = vadd.f32 %v6358, %v6442
      %v6444 = vpop.f32.mrf.mxu0
      %v6445 = vpop.f32.mrf.mxu0
      %v6446 = vadd.f32 %v6358, %v6445
      %v6447 = vpop.f32.mrf.mxu0
      %6448 = vmatprep.mubr.bf16.mxu0 %v5988
      %6449 = vmatmul.mubr.bf16.gmra.mxu0 %v5987
      %v6450 = vpop.f32.mrf.mxu0
      %v6451 = vadd.f32 %v6358, %v6450
      %v6452 = vpop.f32.mrf.mxu0
      %v6453 = vpop.f32.mrf.mxu0
      %v6454 = vadd.f32 %v6358, %v6453
      %v6455 = vpop.f32.mrf.mxu0
      %6456 = vmatprep.mubr.bf16.mxu0 %v5993
      %6457 = vmatmul.mubr.bf16.gmra.mxu0 %v5992
      %v6458 = vpop.f32.mrf.mxu0
      %v6459 = vadd.f32 %v6358, %v6458
      %v6460 = vpop.f32.mrf.mxu0
      %v6461 = vpop.f32.mrf.mxu0
      %v6462 = vadd.f32 %v6358, %v6461
      %v6463 = vpop.f32.mrf.mxu0
      %6464 = vmatprep.mubr.bf16.mxu0 %v5998
      %6465 = vmatmul.mubr.bf16.gmra.mxu0 %v5997
      %v6466 = vpop.f32.mrf.mxu0
      %v6467 = vadd.f32 %v6358, %v6466
      %v6468 = vpop.f32.mrf.mxu0
      %v6469 = vpop.f32.mrf.mxu0
      %v6470 = vadd.f32 %v6358, %v6469
      %v6471 = vpop.f32.mrf.mxu0
      %6472 = vmatprep.mubr.bf16.mxu0 %v6003
      %6473 = vmatmul.mubr.bf16.gmra.mxu0 %v6002
      %v6474 = vpop.f32.mrf.mxu0
      %v6475 = vadd.f32 %v6358, %v6474
      %v6476 = vpop.f32.mrf.mxu0
      %v6477 = vpop.f32.mrf.mxu0
      %v6478 = vadd.f32 %v6358, %v6477
      %v6479 = vpop.f32.mrf.mxu0
      %6480 = vmatprep.mubr.bf16.mxu0 %v6008
      %6481 = vmatmul.mubr.bf16.gmra.mxu0 %v6007
      %v6482 = vpop.f32.mrf.mxu0
      %v6483 = vadd.f32 %v6358, %v6482
      %v6484 = vpop.f32.mrf.mxu0
      %v6485 = vpop.f32.mrf.mxu0
      %v6486 = vadd.f32 %v6358, %v6485
      %v6487 = vpop.f32.mrf.mxu0
      %6488 = vmatprep.mubr.bf16.mxu0 %v6013
      %6489 = vmatmul.mubr.bf16.gmra.mxu0 %v6012
      %v6490 = vpop.f32.mrf.mxu0
      %v6491 = vadd.f32 %v6358, %v6490
      %v6492 = vpop.f32.mrf.mxu0
      %v6493 = vpop.f32.mrf.mxu0
      %v6494 = vadd.f32 %v6358, %v6493
      %v6495 = vpop.f32.mrf.mxu0
      %6496 = vmatprep.mubr.bf16.mxu0 %v6018
      %6497 = vmatmul.mubr.bf16.gmra.mxu0 %v6017
      %v6498 = vpop.f32.mrf.mxu0
      %v6499 = vadd.f32 %v6358, %v6498
      %v6500 = vpop.f32.mrf.mxu0
      %v6501 = vpop.f32.mrf.mxu0
      %v6502 = vadd.f32 %v6358, %v6501
      %v6503 = vpop.f32.mrf.mxu0
      %6504 = vmatprep.mubr.bf16.mxu0 %v6023
      %6505 = vmatmul.mubr.bf16.gmra.mxu0 %v6022
      %v6506 = vpop.f32.mrf.mxu0
      %v6507 = vadd.f32 %v6358, %v6506
      %v6508 = vpop.f32.mrf.mxu0
      %v6509 = vpop.f32.mrf.mxu0
      %v6510 = vadd.f32 %v6358, %v6509
      %v6511 = vpop.f32.mrf.mxu0
      %6512 = vmatprep.mubr.bf16.mxu0 %v6028
      %6513 = vmatmul.mubr.bf16.gmra.mxu0 %v6027
      %v6514 = vpop.f32.mrf.mxu0
      %v6515 = vadd.f32 %v6358, %v6514
      %v6516 = vpop.f32.mrf.mxu0
      %v6517 = vpop.f32.mrf.mxu0
      %v6518 = vadd.f32 %v6358, %v6517
      %v6519 = vpop.f32.mrf.mxu0
      %6520 = vmatprep.mubr.bf16.mxu0 %v6033
      %6521 = vmatmul.mubr.bf16.gmra.mxu0 %v6032
      %v6522 = vpop.f32.mrf.mxu0
      %v6523 = vadd.f32 %v6358, %v6522
      %v6524 = vpop.f32.mrf.mxu0
      %v6525 = vpop.f32.mrf.mxu0
      %v6526 = vadd.f32 %v6358, %v6525
      %v6527 = vpop.f32.mrf.mxu0
      %6528 = vmatprep.mubr.bf16.mxu0 %v6038
      %6529 = vmatmul.mubr.bf16.gmra.mxu0 %v6037
      %v6530 = vpop.f32.mrf.mxu0
      %v6531 = vadd.f32 %v6358, %v6530
      %v6532 = vpop.f32.mrf.mxu0
      %v6533 = vpop.f32.mrf.mxu0
      %v6534 = vadd.f32 %v6358, %v6533
      %v6535 = vpop.f32.mrf.mxu0
      %6536 = vmatprep.mubr.bf16.mxu0 %v6043
      %6537 = vmatmul.mubr.bf16.gmra.mxu0 %v6042
      %v6538 = vpop.f32.mrf.mxu0
      %v6539 = vadd.f32 %v6358, %v6538
      %v6540 = vpop.f32.mrf.mxu0
      %v6541 = vpop.f32.mrf.mxu0
      %v6542 = vadd.f32 %v6358, %v6541
      %v6543 = vpop.f32.mrf.mxu0
      %6544 = vmatprep.mubr.bf16.mxu0 %v6048
      %6545 = vmatmul.mubr.bf16.gmra.mxu0 %v6047
      %v6546 = vpop.f32.mrf.mxu0
      %v6547 = vadd.f32 %v6358, %v6546
      %v6548 = vpop.f32.mrf.mxu0
      %v6549 = vpop.f32.mrf.mxu0
      %v6550 = vadd.f32 %v6358, %v6549
      %v6551 = vpop.f32.mrf.mxu0
      %6552 = vmatprep.mubr.bf16.mxu0 %v6053
      %6553 = vmatmul.mubr.bf16.gmra.mxu0 %v6052
      %v6554 = vpop.f32.mrf.mxu0
      %v6555 = vadd.f32 %v6358, %v6554
      %v6556 = vpop.f32.mrf.mxu0
      %v6557 = vpop.f32.mrf.mxu0
      %v6558 = vadd.f32 %v6358, %v6557
      %v6559 = vpop.f32.mrf.mxu0
      %6560 = vmatprep.mubr.bf16.mxu0 %v6058
      %6561 = vmatmul.mubr.bf16.gmra.mxu0 %v6057
      %v6562 = vpop.f32.mrf.mxu0
      %v6563 = vadd.f32 %v6358, %v6562
      %v6564 = vpop.f32.mrf.mxu0
      %v6565 = vpop.f32.mrf.mxu0
      %v6566 = vadd.f32 %v6358, %v6565
      %v6567 = vpop.f32.mrf.mxu0
      %6568 = vdwg.mxu0
      %6569 = vmatprep.subr.bf16.mxu0 0
      %6570 = vmatpush1.bf16.msra.mxu0 %v6308
      %6571 = vmatprep.subr.bf16.mxu0 0
      %6572 = vmatpush1.bf16.msra.mxu0 %v6307
      %6573 = vmatprep.subr.bf16.mxu0 0
      %6574 = vmatpush1.bf16.msra.mxu0 %v6306
      %6575 = vmatprep.subr.bf16.mxu0 0
      %6576 = vmatpush1.bf16.msra.mxu0 %v6305
      %6577 = vmatprep.subr.bf16.mxu0 0
      %6578 = vmatpush1.bf16.msra.mxu0 %v6304
      %6579 = vmatprep.subr.bf16.mxu0 0
      %6580 = vmatpush1.bf16.msra.mxu0 %v6303
      %6581 = vmatprep.subr.bf16.mxu0 0
      %6582 = vmatpush1.bf16.msra.mxu0 %v6302
      %6583 = vmatprep.subr.bf16.mxu0 0
      %6584 = vmatpush1.bf16.msra.mxu0 %v6301
      %6585 = vmatprep.subr.bf16.mxu0 0
      %6586 = vmatpush2.bf16.msra.mxu0 %v6316
      %6587 = vmatprep.subr.bf16.mxu0 0
      %6588 = vmatpush2.bf16.msra.mxu0 %v6315
      %6589 = vmatprep.subr.bf16.mxu0 0
      %6590 = vmatpush2.bf16.msra.mxu0 %v6314
      %6591 = vmatprep.subr.bf16.mxu0 0
      %6592 = vmatpush2.bf16.msra.mxu0 %v6313
      %6593 = vmatprep.subr.bf16.mxu0 0
      %6594 = vmatpush2.bf16.msra.mxu0 %v6312
      %6595 = vmatprep.subr.bf16.mxu0 0
      %6596 = vmatpush2.bf16.msra.mxu0 %v6311
      %6597 = vmatprep.subr.bf16.mxu0 0
      %6598 = vmatpush2.bf16.msra.mxu0 %v6310
      %6599 = vmatprep.subr.bf16.mxu0 0
      %6600 = vmatpush2.bf16.msra.mxu0 %v6309
      %6601 = vmatprep.mubr.bf16.mxu0 %v5985
      %6602 = vmatmul.mubr.bf16.gmra.mxu0 %v5984
      %v6603 = vpop.f32.mrf.mxu0
      %v6604 = vadd.f32 %v6443, %v6603
      %v6605 = vpop.f32.mrf.mxu0
      %v6606 = vpop.f32.mrf.mxu0
      %v6607 = vadd.f32 %v6446, %v6606
      %v6608 = vpop.f32.mrf.mxu0
      %6609 = vmatprep.mubr.bf16.mxu0 %v5990
      %6610 = vmatmul.mubr.bf16.gmra.mxu0 %v5989
      %v6611 = vpop.f32.mrf.mxu0
      %v6612 = vadd.f32 %v6451, %v6611
      %v6613 = vpop.f32.mrf.mxu0
      %v6614 = vpop.f32.mrf.mxu0
      %v6615 = vadd.f32 %v6454, %v6614
      %v6616 = vpop.f32.mrf.mxu0
      %6617 = vmatprep.mubr.bf16.mxu0 %v5995
      %6618 = vmatmul.mubr.bf16.gmra.mxu0 %v5994
      %v6619 = vpop.f32.mrf.mxu0
      %v6620 = vadd.f32 %v6459, %v6619
      %v6621 = vpop.f32.mrf.mxu0
      %v6622 = vpop.f32.mrf.mxu0
      %v6623 = vadd.f32 %v6462, %v6622
      %v6624 = vpop.f32.mrf.mxu0
      %6625 = vmatprep.mubr.bf16.mxu0 %v6000
      %6626 = vmatmul.mubr.bf16.gmra.mxu0 %v5999
      %v6627 = vpop.f32.mrf.mxu0
      %v6628 = vadd.f32 %v6467, %v6627
      %v6629 = vpop.f32.mrf.mxu0
      %v6630 = vpop.f32.mrf.mxu0
      %v6631 = vadd.f32 %v6470, %v6630
      %v6632 = vpop.f32.mrf.mxu0
      %6633 = vmatprep.mubr.bf16.mxu0 %v6005
      %6634 = vmatmul.mubr.bf16.gmra.mxu0 %v6004
      %v6635 = vpop.f32.mrf.mxu0
      %v6636 = vadd.f32 %v6475, %v6635
      %v6637 = vpop.f32.mrf.mxu0
      %v6638 = vpop.f32.mrf.mxu0
      %v6639 = vadd.f32 %v6478, %v6638
      %v6640 = vpop.f32.mrf.mxu0
      %6641 = vmatprep.mubr.bf16.mxu0 %v6010
      %6642 = vmatmul.mubr.bf16.gmra.mxu0 %v6009
      %v6643 = vpop.f32.mrf.mxu0
      %v6644 = vadd.f32 %v6483, %v6643
      %v6645 = vpop.f32.mrf.mxu0
      %v6646 = vpop.f32.mrf.mxu0
      %v6647 = vadd.f32 %v6486, %v6646
      %v6648 = vpop.f32.mrf.mxu0
      %6649 = vmatprep.mubr.bf16.mxu0 %v6015
      %6650 = vmatmul.mubr.bf16.gmra.mxu0 %v6014
      %v6651 = vpop.f32.mrf.mxu0
      %v6652 = vadd.f32 %v6491, %v6651
      %v6653 = vpop.f32.mrf.mxu0
      %v6654 = vpop.f32.mrf.mxu0
      %v6655 = vadd.f32 %v6494, %v6654
      %v6656 = vpop.f32.mrf.mxu0
      %6657 = vmatprep.mubr.bf16.mxu0 %v6020
      %6658 = vmatmul.mubr.bf16.gmra.mxu0 %v6019
      %v6659 = vpop.f32.mrf.mxu0
      %v6660 = vadd.f32 %v6499, %v6659
      %v6661 = vpop.f32.mrf.mxu0
      %v6662 = vpop.f32.mrf.mxu0
      %v6663 = vadd.f32 %v6502, %v6662
      %v6664 = vpop.f32.mrf.mxu0
      %6665 = vmatprep.mubr.bf16.mxu0 %v6025
      %6666 = vmatmul.mubr.bf16.gmra.mxu0 %v6024
      %v6667 = vpop.f32.mrf.mxu0
      %v6668 = vadd.f32 %v6507, %v6667
      %v6669 = vpop.f32.mrf.mxu0
      %v6670 = vpop.f32.mrf.mxu0
      %v6671 = vadd.f32 %v6510, %v6670
      %v6672 = vpop.f32.mrf.mxu0
      %6673 = vmatprep.mubr.bf16.mxu0 %v6030
      %6674 = vmatmul.mubr.bf16.gmra.mxu0 %v6029
      %v6675 = vpop.f32.mrf.mxu0
      %v6676 = vadd.f32 %v6515, %v6675
      %v6677 = vpop.f32.mrf.mxu0
      %v6678 = vpop.f32.mrf.mxu0
      %v6679 = vadd.f32 %v6518, %v6678
      %v6680 = vpop.f32.mrf.mxu0
      %6681 = vmatprep.mubr.bf16.mxu0 %v6035
      %6682 = vmatmul.mubr.bf16.gmra.mxu0 %v6034
      %v6683 = vpop.f32.mrf.mxu0
      %v6684 = vadd.f32 %v6523, %v6683
      %v6685 = vpop.f32.mrf.mxu0
      %v6686 = vpop.f32.mrf.mxu0
      %v6687 = vadd.f32 %v6526, %v6686
      %v6688 = vpop.f32.mrf.mxu0
      %6689 = vmatprep.mubr.bf16.mxu0 %v6040
      %6690 = vmatmul.mubr.bf16.gmra.mxu0 %v6039
      %v6691 = vpop.f32.mrf.mxu0
      %v6692 = vadd.f32 %v6531, %v6691
      %v6693 = vpop.f32.mrf.mxu0
      %v6694 = vpop.f32.mrf.mxu0
      %v6695 = vadd.f32 %v6534, %v6694
      %v6696 = vpop.f32.mrf.mxu0
      %6697 = vmatprep.mubr.bf16.mxu0 %v6045
      %6698 = vmatmul.mubr.bf16.gmra.mxu0 %v6044
      %v6699 = vpop.f32.mrf.mxu0
      %v6700 = vadd.f32 %v6539, %v6699
      %v6701 = vpop.f32.mrf.mxu0
      %v6702 = vpop.f32.mrf.mxu0
      %v6703 = vadd.f32 %v6542, %v6702
      %v6704 = vpop.f32.mrf.mxu0
      %6705 = vmatprep.mubr.bf16.mxu0 %v6050
      %6706 = vmatmul.mubr.bf16.gmra.mxu0 %v6049
      %v6707 = vpop.f32.mrf.mxu0
      %v6708 = vadd.f32 %v6547, %v6707
      %v6709 = vpop.f32.mrf.mxu0
      %v6710 = vpop.f32.mrf.mxu0
      %v6711 = vadd.f32 %v6550, %v6710
      %v6712 = vpop.f32.mrf.mxu0
      %6713 = vmatprep.mubr.bf16.mxu0 %v6055
      %6714 = vmatmul.mubr.bf16.gmra.mxu0 %v6054
      %v6715 = vpop.f32.mrf.mxu0
      %v6716 = vadd.f32 %v6555, %v6715
      %v6717 = vpop.f32.mrf.mxu0
      %v6718 = vpop.f32.mrf.mxu0
      %v6719 = vadd.f32 %v6558, %v6718
      %v6720 = vpop.f32.mrf.mxu0
      %6721 = vmatprep.mubr.bf16.mxu0 %v6060
      %6722 = vmatmul.mubr.bf16.gmra.mxu0 %v6059
      %v6723 = vpop.f32.mrf.mxu0
      %v6724 = vadd.f32 %v6563, %v6723
      %v6725 = vpop.f32.mrf.mxu0
      %v6726 = vpop.f32.mrf.mxu0
      %v6727 = vadd.f32 %v6566, %v6726
      %v6728 = vpop.f32.mrf.mxu0
      %6729 = vdwg.mxu0
      %6730 = vmatprep.subr.bf16.mxu0 0
      %6731 = vmatpush1.bf16.msra.mxu0 0
      %6732 = vmatprep.subr.bf16.mxu0 0
      %6733 = vmatpush1.bf16.msra.mxu0 0
      %6734 = vmatprep.subr.bf16.mxu0 0
      %6735 = vmatpush1.bf16.msra.mxu0 0
      %6736 = vmatprep.subr.bf16.mxu0 0
      %6737 = vmatpush1.bf16.msra.mxu0 0
      %6738 = vmatprep.subr.bf16.mxu0 0
      %6739 = vmatpush1.bf16.msra.mxu0 %v6320
      %6740 = vmatprep.subr.bf16.mxu0 0
      %6741 = vmatpush1.bf16.msra.mxu0 %v6319
      %6742 = vmatprep.subr.bf16.mxu0 0
      %6743 = vmatpush1.bf16.msra.mxu0 %v6318
      %6744 = vmatprep.subr.bf16.mxu0 0
      %6745 = vmatpush1.bf16.msra.mxu0 %v6317
      %6746 = vmatprep.subr.bf16.mxu0 0
      %6747 = vmatpush2.bf16.msra.mxu0 0
      %6748 = vmatprep.subr.bf16.mxu0 0
      %6749 = vmatpush2.bf16.msra.mxu0 0
      %6750 = vmatprep.subr.bf16.mxu0 0
      %6751 = vmatpush2.bf16.msra.mxu0 0
      %6752 = vmatprep.subr.bf16.mxu0 0
      %6753 = vmatpush2.bf16.msra.mxu0 0
      %6754 = vmatprep.subr.bf16.mxu0 0
      %6755 = vmatpush2.bf16.msra.mxu0 0
      %6756 = vmatprep.subr.bf16.mxu0 0
      %6757 = vmatpush2.bf16.msra.mxu0 0
      %6758 = vmatprep.subr.bf16.mxu0 0
      %6759 = vmatpush2.bf16.msra.mxu0 0
      %6760 = vmatprep.subr.bf16.mxu0 0
      %6761 = vmatpush2.bf16.msra.mxu0 0
      %6762 = vmatprep.mubr.bf16.mxu0 0
      %6763 = vmatmul.mubr.bf16.gmra.mxu0 %v6361
      %v6764 = vpop.f32.mrf.mxu0
      %v6765 = vadd.f32 %v6604, %v6764
      %v6766 = vpop.f32.mrf.mxu0
      %v6767 = vpop.f32.mrf.mxu0
      %v6768 = vadd.f32 %v6607, %v6767
      %v6769 = vpop.f32.mrf.mxu0
      %6770 = vmatprep.mubr.bf16.mxu0 0
      %6771 = vmatmul.mubr.bf16.gmra.mxu0 %v6364
      %v6772 = vpop.f32.mrf.mxu0
      %v6773 = vadd.f32 %v6612, %v6772
      %v6774 = vpop.f32.mrf.mxu0
      %v6775 = vpop.f32.mrf.mxu0
      %v6776 = vadd.f32 %v6615, %v6775
      %v6777 = vpop.f32.mrf.mxu0
      %6778 = vmatprep.mubr.bf16.mxu0 0
      %6779 = vmatmul.mubr.bf16.gmra.mxu0 %v6367
      %v6780 = vpop.f32.mrf.mxu0
      %v6781 = vadd.f32 %v6620, %v6780
      %v6782 = vpop.f32.mrf.mxu0
      %v6783 = vpop.f32.mrf.mxu0
      %v6784 = vadd.f32 %v6623, %v6783
      %v6785 = vpop.f32.mrf.mxu0
      %6786 = vmatprep.mubr.bf16.mxu0 0
      %6787 = vmatmul.mubr.bf16.gmra.mxu0 %v6370
      %v6788 = vpop.f32.mrf.mxu0
      %v6789 = vadd.f32 %v6628, %v6788
      %v6790 = vpop.f32.mrf.mxu0
      %v6791 = vpop.f32.mrf.mxu0
      %v6792 = vadd.f32 %v6631, %v6791
      %v6793 = vpop.f32.mrf.mxu0
      %6794 = vmatprep.mubr.bf16.mxu0 0
      %6795 = vmatmul.mubr.bf16.gmra.mxu0 %v6373
      %v6796 = vpop.f32.mrf.mxu0
      %v6797 = vadd.f32 %v6636, %v6796
      %v6798 = vpop.f32.mrf.mxu0
      %v6799 = vpop.f32.mrf.mxu0
      %v6800 = vadd.f32 %v6639, %v6799
      %v6801 = vpop.f32.mrf.mxu0
      %6802 = vmatprep.mubr.bf16.mxu0 0
      %6803 = vmatmul.mubr.bf16.gmra.mxu0 %v6376
      %v6804 = vpop.f32.mrf.mxu0
      %v6805 = vadd.f32 %v6644, %v6804
      %v6806 = vpop.f32.mrf.mxu0
      %v6807 = vpop.f32.mrf.mxu0
      %v6808 = vadd.f32 %v6647, %v6807
      %v6809 = vpop.f32.mrf.mxu0
      %6810 = vmatprep.mubr.bf16.mxu0 0
      %6811 = vmatmul.mubr.bf16.gmra.mxu0 %v6379
      %v6812 = vpop.f32.mrf.mxu0
      %v6813 = vadd.f32 %v6652, %v6812
      %v6814 = vpop.f32.mrf.mxu0
      %v6815 = vpop.f32.mrf.mxu0
      %v6816 = vadd.f32 %v6655, %v6815
      %v6817 = vpop.f32.mrf.mxu0
      %6818 = vmatprep.mubr.bf16.mxu0 0
      %6819 = vmatmul.mubr.bf16.gmra.mxu0 %v6382
      %v6820 = vpop.f32.mrf.mxu0
      %v6821 = vadd.f32 %v6660, %v6820
      %v6822 = vpop.f32.mrf.mxu0
      %v6823 = vpop.f32.mrf.mxu0
      %v6824 = vadd.f32 %v6663, %v6823
      %v6825 = vpop.f32.mrf.mxu0
      %6826 = vmatprep.mubr.bf16.mxu0 0
      %6827 = vmatmul.mubr.bf16.gmra.mxu0 %v6385
      %v6828 = vpop.f32.mrf.mxu0
      %v6829 = vadd.f32 %v6668, %v6828
      %v6830 = vpop.f32.mrf.mxu0
      %v6831 = vpop.f32.mrf.mxu0
      %v6832 = vadd.f32 %v6671, %v6831
      %v6833 = vpop.f32.mrf.mxu0
      %6834 = vmatprep.mubr.bf16.mxu0 0
      %6835 = vmatmul.mubr.bf16.gmra.mxu0 %v6388
      %v6836 = vpop.f32.mrf.mxu0
      %v6837 = vadd.f32 %v6676, %v6836
      %v6838 = vpop.f32.mrf.mxu0
      %v6839 = vpop.f32.mrf.mxu0
      %v6840 = vadd.f32 %v6679, %v6839
      %v6841 = vpop.f32.mrf.mxu0
      %6842 = vmatprep.mubr.bf16.mxu0 0
      %6843 = vmatmul.mubr.bf16.gmra.mxu0 %v6391
      %v6844 = vpop.f32.mrf.mxu0
      %v6845 = vadd.f32 %v6684, %v6844
      %v6846 = vpop.f32.mrf.mxu0
      %v6847 = vpop.f32.mrf.mxu0
      %v6848 = vadd.f32 %v6687, %v6847
      %v6849 = vpop.f32.mrf.mxu0
      %6850 = vmatprep.mubr.bf16.mxu0 0
      %6851 = vmatmul.mubr.bf16.gmra.mxu0 %v6394
      %v6852 = vpop.f32.mrf.mxu0
      %v6853 = vadd.f32 %v6692, %v6852
      %v6854 = vpop.f32.mrf.mxu0
      %v6855 = vpop.f32.mrf.mxu0
      %v6856 = vadd.f32 %v6695, %v6855
      %v6857 = vpop.f32.mrf.mxu0
      %6858 = vmatprep.mubr.bf16.mxu0 0
      %6859 = vmatmul.mubr.bf16.gmra.mxu0 %v6397
      %v6860 = vpop.f32.mrf.mxu0
      %v6861 = vadd.f32 %v6700, %v6860
      %v6862 = vpop.f32.mrf.mxu0
      %v6863 = vpop.f32.mrf.mxu0
      %v6864 = vadd.f32 %v6703, %v6863
      %v6865 = vpop.f32.mrf.mxu0
      %6866 = vmatprep.mubr.bf16.mxu0 0
      %6867 = vmatmul.mubr.bf16.gmra.mxu0 %v6400
      %v6868 = vpop.f32.mrf.mxu0
      %v6869 = vadd.f32 %v6708, %v6868
      %v6870 = vpop.f32.mrf.mxu0
      %v6871 = vpop.f32.mrf.mxu0
      %v6872 = vadd.f32 %v6711, %v6871
      %v6873 = vpop.f32.mrf.mxu0
      %6874 = vmatprep.mubr.bf16.mxu0 0
      %6875 = vmatmul.mubr.bf16.gmra.mxu0 %v6403
      %v6876 = vpop.f32.mrf.mxu0
      %v6877 = vadd.f32 %v6716, %v6876
      %v6878 = vpop.f32.mrf.mxu0
      %v6879 = vpop.f32.mrf.mxu0
      %v6880 = vadd.f32 %v6719, %v6879
      %v6881 = vpop.f32.mrf.mxu0
      %6882 = vmatprep.mubr.bf16.mxu0 0
      %6883 = vmatmul.mubr.bf16.gmra.mxu0 %v6406
      %v6884 = vpop.f32.mrf.mxu0
      %v6885 = vadd.f32 %v6724, %v6884
      %v6886 = vpop.f32.mrf.mxu0
      %v6887 = vpop.f32.mrf.mxu0
      %v6888 = vadd.f32 %v6727, %v6887
      %v6889 = vpop.f32.mrf.mxu0
      %6890 = vdwg.mxu0
      %v6891 = vmax.f32 %v6765, 0.0
      %v6892 = vmax.f32 %v6768, 0.0
      %v6893 = vmax.f32 %v6773, 0.0
      %v6894 = vmax.f32 %v6776, 0.0
      %v6895 = vmax.f32 %v6781, 0.0
      %v6896 = vmax.f32 %v6784, 0.0
      %v6897 = vmax.f32 %v6789, 0.0
      %v6898 = vmax.f32 %v6792, 0.0
      %v6899 = vmax.f32 %v6797, 0.0
      %v6900 = vmax.f32 %v6800, 0.0
      %v6901 = vmax.f32 %v6805, 0.0
      %v6902 = vmax.f32 %v6808, 0.0
      %v6903 = vmax.f32 %v6813, 0.0
      %v6904 = vmax.f32 %v6816, 0.0
      %v6905 = vmax.f32 %v6821, 0.0
      %v6906 = vmax.f32 %v6824, 0.0
      %v6907 = vmax.f32 %v6829, 0.0
      %v6908 = vmax.f32 %v6832, 0.0
      %v6909 = vmax.f32 %v6837, 0.0
      %v6910 = vmax.f32 %v6840, 0.0
      %v6911 = vmax.f32 %v6845, 0.0
      %v6912 = vmax.f32 %v6848, 0.0
      %v6913 = vmax.f32 %v6853, 0.0
      %v6914 = vmax.f32 %v6856, 0.0
      %v6915 = vmax.f32 %v6861, 0.0
      %v6916 = vmax.f32 %v6864, 0.0
      %v6917 = vmax.f32 %v6869, 0.0
      %v6918 = vmax.f32 %v6872, 0.0
      %v6919 = vmax.f32 %v6877, 0.0
      %v6920 = vmax.f32 %v6880, 0.0
      %v6921 = vmax.f32 %v6885, 0.0
      %v6922 = vmax.f32 %v6888, 0.0
      %s6923 = scalar_lea.vmem %s1, 1152
      %v6924 = vld [vmem:[%s6923] sm:$0x3]
      %v6925 = vpack.c.bf16 %v6892, %v6891
      %v6926 = vpack.c.bf16 %v6894, %v6893
      %v6927 = vpack.c.bf16 %v6896, %v6895
      %v6928 = vpack.c.bf16 %v6898, %v6897
      %v6929 = vpack.c.bf16 %v6900, %v6899
      %v6930 = vpack.c.bf16 %v6902, %v6901
      %v6931 = vpack.c.bf16 %v6904, %v6903
      %v6932 = vpack.c.bf16 %v6906, %v6905
      %v6933 = vpack.c.bf16 %v6908, %v6907
      %v6934 = vpack.c.bf16 %v6910, %v6909
      %v6935 = vpack.c.bf16 %v6912, %v6911
      %v6936 = vpack.c.bf16 %v6914, %v6913
      %v6937 = vpack.c.bf16 %v6916, %v6915
      %v6938 = vpack.c.bf16 %v6918, %v6917
      %v6939 = vpack.c.bf16 %v6920, %v6919
      %v6940 = vpack.c.bf16 %v6922, %v6921
      %v6941 = vld [vmem:[%s3] sm:$0xf]
      %6943 = vset.pattern.permute.xlu0 0
      %6944 = vperm.xlu0 %6943, %v6941
      %v6945 = vpop.permute.xlu0 %6944
      %v6948 = vsel %vm1853, %v6924, 0
      %v6951 = vsel %vm1853, %v6925, 0
      %v6954 = vsel %vm1853, %v6926, 0
      %v6957 = vsel %vm1853, %v6927, 0
      %v6960 = vsel %vm1853, %v6928, 0
      %v6963 = vsel %vm1853, %v6929, 0
      %v6966 = vsel %vm1853, %v6930, 0
      %v6969 = vsel %vm1853, %v6931, 0
      %v6972 = vsel %vm1853, %v6932, 0
      %v6975 = vsel %vm1853, %v6933, 0
      %v6978 = vsel %vm1853, %v6934, 0
      %v6981 = vsel %vm1853, %v6935, 0
      %v6984 = vsel %vm1853, %v6936, 0
      %v6987 = vsel %vm1853, %v6937, 0
      %v6990 = vsel %vm1853, %v6938, 0
      %v6993 = vsel %vm1853, %v6939, 0
      %v6996 = vsel %vm1853, %v6940, 0
      %6998 = vmatprep.subr.bf16.mxu0 0
      %6999 = vmatpush1.bf16.xpose.msra.mxu0 %v6972
      %7000 = vmatprep.subr.bf16.mxu0 0
      %7001 = vmatpush1.bf16.xpose.msra.mxu0 %v6969
      %7002 = vmatprep.subr.bf16.mxu0 0
      %7003 = vmatpush1.bf16.xpose.msra.mxu0 %v6966
      %7004 = vmatprep.subr.bf16.mxu0 0
      %7005 = vmatpush1.bf16.xpose.msra.mxu0 %v6963
      %7006 = vmatprep.subr.bf16.mxu0 0
      %7007 = vmatpush1.bf16.xpose.msra.mxu0 %v6960
      %7008 = vmatprep.subr.bf16.mxu0 0
      %7009 = vmatpush1.bf16.xpose.msra.mxu0 %v6957
      %7010 = vmatprep.subr.bf16.mxu0 0
      %7011 = vmatpush1.bf16.xpose.msra.mxu0 %v6954
      %7012 = vmatprep.subr.bf16.mxu0 0
      %7013 = vmatpush1.bf16.xpose.msra.mxu0 %v6951
      %7014 = vmatprep.subr.bf16.mxu0 0
      %7015 = vmatpush2.bf16.xpose.msra.mxu0 %v6996
      %7016 = vmatprep.subr.bf16.mxu0 0
      %7017 = vmatpush2.bf16.xpose.msra.mxu0 %v6993
      %7018 = vmatprep.subr.bf16.mxu0 0
      %7019 = vmatpush2.bf16.xpose.msra.mxu0 %v6990
      %7020 = vmatprep.subr.bf16.mxu0 0
      %7021 = vmatpush2.bf16.xpose.msra.mxu0 %v6987
      %7022 = vmatprep.subr.bf16.mxu0 0
      %7023 = vmatpush2.bf16.xpose.msra.mxu0 %v6984
      %7024 = vmatprep.subr.bf16.mxu0 0
      %7025 = vmatpush2.bf16.xpose.msra.mxu0 %v6981
      %7026 = vmatprep.subr.bf16.mxu0 0
      %7027 = vmatpush2.bf16.xpose.msra.mxu0 %v6978
      %7028 = vmatprep.subr.bf16.mxu0 0
      %7029 = vmatpush2.bf16.xpose.msra.mxu0 %v6975
      %7030 = vmatprep.mubr.bf16.mxu0 0
      %7031 = vmatmul.mubr.bf16.gmra.mxu0 %v6948
      %v7032 = vpop.f32.mrf.mxu0
      %v7033 = vadd.f32 %v6945, %v7032
      %v7034 = vpop.f32.mrf.mxu0
      %v7035 = vadd.f32 %v6945, %v7034
      %v7036 = vpop.f32.mrf.mxu0
      %v7037 = vpop.f32.mrf.mxu0
      %7038 = vdwg.mxu0
      %v7039 = vxor.u32 %v7033, 2147483648
      %v7040 = vxor.u32 %v7035, 2147483648
      %v7041 = vmul.f32 %v7039, 1.442695
      %v7042 = vpow.pop %v7041
      %v7043 = vmul.f32 %v7040, 1.442695
      %v7044 = vpow.pop %v7043
      %v7045 = vadd.f32 %v7042, 1.0
      %v7046 = vadd.f32 %v7044, 1.0
      %v7047 = vrcp.pop %v7045
      %v7048 = vmul.f32 1.0, %v7047
      %v7049 = vrcp.pop %v7046
      %v7050 = vmul.f32 1.0, %v7049
      %v7053 = vcombine.low %v7048, %v7050
      %7055 = vst [vmem:[%s197] sm:$0xff] %v7053
      %p7056 = scmp.lt.s32.totalorder %s15, 1
      %s7057 = scalar_select %p7056, %s15, 1
      %s7058 = smul.addr %s7057, 2
      %s7059 = smul.addr %s7058, 4
      %s7060 = scalar_lea.vmem %s4, %s7059
      // Predicated region
      $region37: #{unet_simple_forward.1} parent=35 // pred_check
        %p7061 = pneg %p122
      $region38: #{unet_simple_forward.1} parent=35 // pred_check_branch
        %7063 = sbr.rel (%p7061) target = $region40
      $region39: #{unet_simple_forward.1} parent=35 // pred_region
        _
      $region40: #{unet_simple_forward.1} parent=35 // pred_fallthru
        _
    $region36: #{unet_simple_forward.1} parent=5 // pred_fallthru
      _
    %p7064 = scmp.le.s32.totalorder 2, %s10
    // Predicated region
    $region41: #{unet_simple_forward.1} parent=5 // pred_check
      %p7065 = pneg %p7064
    $region42: #{unet_simple_forward.1} parent=5 // pred_check_branch
      %7067 = sbr.rel (%p7065) target = $region44
    $region43: #{unet_simple_forward.1} parent=5 // pred_region
      %s7068 = ssub.s32 %s10, 2
      // Predicated region
      $region45: #{unet_simple_forward.1} parent=43 // pred_check
        %p7069 = pneg %p128
      $region46: #{unet_simple_forward.1} parent=43 // pred_check_branch
        %7071 = sbr.rel (%p7069) target = $region48
      $region47: #{unet_simple_forward.1} parent=43 // pred_region
        %p7072 = scmp.lt.s32.totalorder %s16, 1
        %s7073 = scalar_select %p7072, %s16, 1
        %s7074 = smul.addr %s7073, 2
        %s7075 = smul.addr %s7074, 4
        %s7076 = scalar_lea.vmem %s4, %s7075
      $region48: #{unet_simple_forward.1} parent=43 // pred_fallthru
        _
    $region44: #{unet_simple_forward.1} parent=5 // pred_fallthru
      _
  $region6: #{unet_simple_forward.1} parent=0 // loop_footer
    %s14 = sadd.s32 1, %s10
  $region7: #{unet_simple_forward.1} parent=0 // loop_footer_branch
    %9 = sbr.rel target = $region3
  $region8: #{unet_simple_forward.1} parent=0 // loop_exit
    _

</llo_original>
